<compile_context>
chip_gen: v6e
topology: v6e:2x2x1
jax: 0.10.0
libtpu: 0.0.40
codegen_flags: <defaults>
</compile_context>

<pallas_src>
import math
from functools import partial

import jax
import jax.numpy as jnp
from jax.experimental import pallas as pl
from jax.experimental.pallas import tpu as pltpu


# --------------------------------- kernel ----------------------------------

def _make_resblk_kernel(H, W, Cin, Cout, downsample, learned_sc):
    Hp, Wp = (H // 2, W // 2) if downsample else (H, W)
    inv_sqrt2 = 1.0 / math.sqrt(2.0)

    def lrelu(v):
        return jnp.where(v >= 0.0, v, 0.2 * v)

    def conv3x3(load_tap, w_ref, b_ref, h, w, cout):
        """3x3 conv as 9 per-tap MXU dots (bf16 operands, f32 accumulation)."""
        acc = jnp.zeros((h * w, cout), jnp.float32)
        t = 0
        for kh in range(3):
            for kw in range(3):
                p = lrelu(load_tap(kh, kw))                       # (h, w, Cin) f32
                acc = acc + jnp.dot(
                    p.reshape(h * w, p.shape[-1]).astype(jnp.bfloat16),
                    w_ref[t],                                     # (Cin, cout) bf16
                    preferred_element_type=jnp.float32)
                t += 1
        return acc + b_ref[...]                                   # (h*w, cout) f32

    def pool2x2(v, rbuf_ref, h, w):
        """2x2 average pool of an (h, w, C) value.

        Row pairs are summed on the value (leading-dim-only reshape, layout
        safe); column pairs via strided reads of a small (h//2, w, C) scratch.
        """
        v4 = v.reshape(h // 2, 2, w, v.shape[-1])
        rbuf_ref[...] = v4[:, 0] + v4[:, 1]                       # (h//2, w, C)
        return (rbuf_ref[:, pl.ds(0, w // 2, 2), :]
                + rbuf_ref[:, pl.ds(1, w // 2, 2), :]) * 0.25

    def kernel(*refs):
        if learned_sc:
            x_ref, w1_ref, b1_ref, w2_ref, b2_ref, wsc_ref = refs[:6]
            rest = refs[6:]
        else:
            x_ref, w1_ref, b1_ref, w2_ref, b2_ref = refs[:5]
            wsc_ref = None
            rest = refs[5:]
        if downsample:
            o_ref, xpad_ref, rpad_ref, rbuf_ref = rest
        else:
            o_ref, xpad_ref, rpad_ref = rest
            rbuf_ref = None

        # -- stage x into a zero-padded VMEM tile (conv1 halo; lrelu(0) = 0) --
        xpad_ref[...] = jnp.zeros_like(xpad_ref)
        xpad_ref[1:H + 1, 1:W + 1, :] = x_ref[0]

        # ------- residual, first half: LeakyReLU -> conv1 [-> avg-pool] -------
        r = conv3x3(lambda kh, kw: xpad_ref[kh:kh + H, kw:kw + W, :],
                    w1_ref, b1_ref, H, W, Cin).reshape(H, W, Cin)

        rpad_ref[...] = jnp.zeros_like(rpad_ref)                  # conv2 halo
        if downsample:
            r1 = pool2x2(r, rbuf_ref, H, W)                       # (Hp, Wp, Cin)
        else:
            r1 = r
        rpad_ref[1:Hp + 1, 1:Wp + 1, :] = r1                      # stays in VMEM

        # ------------ residual, second half: LeakyReLU -> conv2 ---------------
        r2 = conv3x3(lambda kh, kw: rpad_ref[kh:kh + Hp, kw:kw + Wp, :],
                     w2_ref, b2_ref, Hp, Wp, Cout).reshape(Hp, Wp, Cout)

        # ---- shortcut (x still resident in VMEM; never written back to HBM) ----
        # avg-pool commutes with the bias-free 1x1 conv -> pool first (4x fewer
        # MXU flops, no (H, W, Cout) intermediate).
        if downsample:
            sc = pool2x2(x_ref[0], rbuf_ref, H, W)                # (Hp, Wp, Cin)
        else:
            sc = x_ref[0]                                         # identity view
        if learned_sc:
            sc = jnp.dot(sc.reshape(Hp * Wp, Cin).astype(jnp.bfloat16),
                         wsc_ref[...],
                         preferred_element_type=jnp.float32).reshape(Hp, Wp, Cout)

        o_ref[0] = ((sc + r2) * inv_sqrt2).astype(o_ref.dtype)    # fused add+scale

    return kernel


# ------------------------------- host wrappers -------------------------------

@partial(jax.jit, static_argnames=("downsample",))
def resblk_forward_nhwc(params, x, *, downsample=False):
    """ResBlk.forward in NHWC (native kernel layout).  normalize=False only."""
    x = x.astype(jnp.float32)
    N, H, W, Cin = x.shape
    learned_sc = 'sc_w' in params
    Cout = params['conv2_w'].shape[-1]
    assert learned_sc or Cin == Cout, "identity shortcut needs dim_in == dim_out"
    Hp, Wp = (H // 2, W // 2) if downsample else (H, W)

    # Per-tap weight layout (9, Cin, Cout); bf16 MXU operands, f32 accumulation.
    w1 = params['conv1_w'].reshape(9, Cin, Cin).astype(jnp.bfloat16)
    w2 = params['conv2_w'].reshape(9, Cin, Cout).astype(jnp.bfloat16)
    b1 = params['conv1_b'].reshape(1, Cin).astype(jnp.float32)
    b2 = params['conv2_b'].reshape(1, Cout).astype(jnp.float32)

    in_specs = [
        pl.BlockSpec((1, H, W, Cin), lambda n: (n, 0, 0, 0)),
        pl.BlockSpec((9, Cin, Cin), lambda n: (0, 0, 0)),
        pl.BlockSpec((1, Cin), lambda n: (0, 0)),
        pl.BlockSpec((9, Cin, Cout), lambda n: (0, 0, 0)),
        pl.BlockSpec((1, Cout), lambda n: (0, 0)),
    ]
    args = [x, w1, b1, w2, b2]
    if learned_sc:
        in_specs.append(pl.BlockSpec((Cin, Cout), lambda n: (0, 0)))
        args.append(params['sc_w'].astype(jnp.bfloat16))

    scratch_shapes = [
        pltpu.VMEM((H + 2, W + 2, Cin), jnp.float32),     # zero-padded x (conv1 halo)
        pltpu.VMEM((Hp + 2, Wp + 2, Cin), jnp.float32),   # zero-padded conv1 out (conv2 halo)
    ]
    if downsample:
        scratch_shapes.append(pltpu.VMEM((Hp, W, Cin), jnp.float32))  # pool row-sums

    return pl.pallas_call(
        _make_resblk_kernel(H, W, Cin, Cout, downsample, learned_sc),
        out_shape=jax.ShapeDtypeStruct((N, Hp, Wp, Cout), jnp.float32),
        grid=(N,),
        in_specs=in_specs,
        out_specs=pl.BlockSpec((1, Hp, Wp, Cout), lambda n: (n, 0, 0, 0)),
        scratch_shapes=scratch_shapes,
        compiler_params=pltpu.CompilerParams(dimension_semantics=("parallel",)),
    )(*args)


@partial(jax.jit, static_argnames=("downsample",))
def resblk_forward(params, x_nchw, *, downsample=False):
    """PyTorch-convention entry: (N, Cin, H, W) -> (N, Cout, H', W').

    Stacked ResBlks should call resblk_forward_nhwc directly and keep the whole
    network in NHWC; these transposes exist only to match the nn.Module API.
    """
    x = jnp.transpose(x_nchw, (0, 2, 3, 1))
    out = resblk_forward_nhwc(params, x, downsample=downsample)
    return jnp.transpose(out, (0, 3, 1, 2))


# ---------------------------- pure-JAX reference -----------------------------

def ref_forward(params, x_nchw, *, downsample=False):
    """Same math (bf16 MXU operands, f32 accumulation) via XLA convs."""
    x = jnp.transpose(x_nchw, (0, 2, 3, 1)).astype(jnp.float32)

    def lrelu(v):
        return jnp.where(v >= 0, v, 0.2 * v)

    def conv3(v, w, b):
        out = jax.lax.conv_general_dilated(
            v.astype(jnp.bfloat16), w.astype(jnp.bfloat16), (1, 1), [(1, 1), (1, 1)],
            dimension_numbers=('NHWC', 'HWIO', 'NHWC'),
            preferred_element_type=jnp.float32)
        return out + b

    def pool(v):
        return 0.25 * (v[:, 0::2, 0::2] + v[:, 0::2, 1::2]
                       + v[:, 1::2, 0::2] + v[:, 1::2, 1::2])

    # Shortcut: avg-pool commutes exactly with the bias-free 1x1 conv, so
    # pooling first is the same math as the PyTorch order; doing it here in the
    # kernel's order mirrors the kernel's bf16 rounding points.
    s = x
    if downsample:
        s = pool(s)
    if 'sc_w' in params:
        s = jnp.einsum('nhwc,cd->nhwd', s.astype(jnp.bfloat16),
                       params['sc_w'].astype(jnp.bfloat16),
                       preferred_element_type=jnp.float32)

    r = lrelu(x)
    r = conv3(r, params['conv1_w'], params['conv1_b'])
    if downsample:
        r = pool(r)
    r = lrelu(r)
    r = conv3(r, params['conv2_w'], params['conv2_b'])

    out = (s + r) / math.sqrt(2.0)
    return jnp.transpose(out, (0, 3, 1, 2))


# ------------------------------ parameter init -------------------------------

def init_params(key, dim_in, dim_out):
    ks = jax.random.split(key, 5)

    def conv_w(k, kh, kw, ci, co):
        return jax.random.normal(k, (kh, kw, ci, co), jnp.float32) / math.sqrt(kh * kw * ci)

    p = {
        'conv1_w': conv_w(ks[0], 3, 3, dim_in, dim_in),          # HWIO
        'conv1_b': 0.01 * jax.random.normal(ks[1], (dim_in,), jnp.float32),
        'conv2_w': conv_w(ks[2], 3, 3, dim_in, dim_out),
        'conv2_b': 0.01 * jax.random.normal(ks[3], (dim_out,), jnp.float32),
    }
    if dim_in != dim_out:                                        # learned 1x1 shortcut, no bias
        p['sc_w'] = jax.random.normal(ks[4], (dim_in, dim_out), jnp.float32) / math.sqrt(dim_in)
    return p


# ------------------------------------ main ------------------------------------

if __name__ == "__main__":
    key = jax.random.PRNGKey(0)
    kp1, kp2, kx = jax.random.split(key, 3)

    N, H, W = 2, 16, 16
    dim_in, dim_out = 128, 256       # lane-dense channel counts (multiples of 128)
    x = jax.random.normal(kx, (N, dim_in, H, W), jnp.float32)    # NCHW like PyTorch

    # Config 1: learned 1x1 shortcut + downsample (discriminator-style ResBlk).
    params = init_params(kp1, dim_in, dim_out)
    out = resblk_forward(params, x, downsample=True)
    out = jax.block_until_ready(out)
    ref = ref_forward(params, x, downsample=True)
    assert out.shape == (N, dim_out, H // 2, W // 2), out.shape
    err = float(jnp.max(jnp.abs(out - ref)))
    assert jnp.allclose(out, ref, atol=5e-3, rtol=5e-3), err

    # Config 2: identity shortcut, no downsample (dim_in == dim_out).
    params2 = init_params(kp2, dim_in, dim_in)
    out2 = resblk_forward(params2, x, downsample=False)
    out2 = jax.block_until_ready(out2)
    ref2 = ref_forward(params2, x, downsample=False)
    assert out2.shape == (N, dim_in, H, W), out2.shape
    err2 = float(jnp.max(jnp.abs(out2 - ref2)))
    assert jnp.allclose(out2, ref2, atol=5e-3, rtol=5e-3), err2

    print("KERNEL_OK")
</pallas_src>

<mosaic_0001>
module attributes {stable_mosaic.version = 11 : i64} {
  func.func @kernel(%arg0: i32, %arg1: memref<1x16x16x128xf32, #tpu.memory_space<vmem>>, %arg2: memref<9x128x128xbf16, #tpu.memory_space<vmem>>, %arg3: memref<1x128xf32, #tpu.memory_space<vmem>>, %arg4: memref<9x128x256xbf16, #tpu.memory_space<vmem>>, %arg5: memref<1x256xf32, #tpu.memory_space<vmem>>, %arg6: memref<128x256xbf16, #tpu.memory_space<vmem>>, %arg7: memref<1x8x8x256xf32, #tpu.memory_space<vmem>>, %arg8: memref<18x18x128xf32, #tpu.memory_space<vmem>>, %arg9: memref<10x10x128xf32, #tpu.memory_space<vmem>>, %arg10: memref<8x16x128xf32, #tpu.memory_space<vmem>>) attributes {dimension_semantics = [#tpu.dimension_semantics<parallel>], iteration_bounds = array<i64: 2>, scalar_prefetch = 0 : i64, scratch_operands = 3 : i64, tpu.core_type = #tpu.core_type<tc>, window_params = [{transform_indices = @transform_0, window_bounds = array<i64: 1, 16, 16, 128>}, {pipeline_mode = #tpu.pipeline_mode<synchronous>, transform_indices = @transform_1, window_bounds = array<i64: 9, 128, 128>}, {pipeline_mode = #tpu.pipeline_mode<synchronous>, transform_indices = @transform_2, window_bounds = array<i64: 1, 128>}, {pipeline_mode = #tpu.pipeline_mode<synchronous>, transform_indices = @transform_3, window_bounds = array<i64: 9, 128, 256>}, {pipeline_mode = #tpu.pipeline_mode<synchronous>, transform_indices = @transform_4, window_bounds = array<i64: 1, 256>}, {pipeline_mode = #tpu.pipeline_mode<synchronous>, transform_indices = @transform_5, window_bounds = array<i64: 128, 256>}, {transform_indices = @transform_6, window_bounds = array<i64: 1, 8, 8, 256>}]} {
    %cst = arith.constant 0.000000e+00 : f32
    %0 = vector.broadcast %cst : f32 to vector<18x18x128xf32>
    %c0 = arith.constant 0 : index
    %c0_0 = arith.constant 0 : index
    %c0_1 = arith.constant 0 : index
    %1 = vector.load %arg8[%c0, %c0_0, %c0_1] : memref<18x18x128xf32, #tpu.memory_space<vmem>>, vector<18x18x128xf32>
    tpu.vector_store %arg8[%c0, %c0_0, %c0_1], %0 {strides = array<i32>} : memref<18x18x128xf32, #tpu.memory_space<vmem>>, vector<18x18x128xf32>,
    %c0_2 = arith.constant 0 : index
    %c0_3 = arith.constant 0 : index
    %c0_4 = arith.constant 0 : index
    %c0_5 = arith.constant 0 : index
    %2 = vector.load %arg1[%c0_2, %c0_3, %c0_4, %c0_5] : memref<1x16x16x128xf32, #tpu.memory_space<vmem>>, vector<1x16x16x128xf32>
    %3 = vector.shape_cast %2 : vector<1x16x16x128xf32> to vector<16x16x128xf32>
    %c1 = arith.constant 1 : index
    %c1_6 = arith.constant 1 : index
    %c0_7 = arith.constant 0 : index
    %4 = vector.load %arg8[%c1, %c1_6, %c0_7] : memref<18x18x128xf32, #tpu.memory_space<vmem>>, vector<16x16x128xf32>
    tpu.vector_store %arg8[%c1, %c1_6, %c0_7], %3 {strides = array<i32>} : memref<18x18x128xf32, #tpu.memory_space<vmem>>, vector<16x16x128xf32>,
    %cst_8 = arith.constant 0.000000e+00 : f32
    %5 = vector.broadcast %cst_8 : f32 to vector<256x128xf32>
    %c0_9 = arith.constant 0 : index
    %c0_10 = arith.constant 0 : index
    %c0_11 = arith.constant 0 : index
    %6 = vector.load %arg8[%c0_9, %c0_10, %c0_11] : memref<18x18x128xf32, #tpu.memory_space<vmem>>, vector<16x16x128xf32>
    %cst_12 = arith.constant 0.000000e+00 : f32
    %7 = vector.broadcast %cst_12 : f32 to vector<16x16x128xf32>
    %8 = arith.cmpf oge, %6, %7 : vector<16x16x128xf32>
    %cst_13 = arith.constant 2.000000e-01 : f32
    %9 = vector.broadcast %cst_13 : f32 to vector<16x16x128xf32>
    %10 = arith.mulf %9, %6 : vector<16x16x128xf32>
    %11 = arith.select %8, %6, %10 : vector<16x16x128xi1>, vector<16x16x128xf32>
    %12 = vector.shape_cast %11 : vector<16x16x128xf32> to vector<256x128xf32>
    %13 = arith.truncf %12 : vector<256x128xf32> to vector<256x128xbf16>
    %c0_14 = arith.constant 0 : index
    %c0_15 = arith.constant 0 : index
    %c0_16 = arith.constant 0 : index
    %14 = vector.load %arg2[%c0_14, %c0_15, %c0_16] : memref<9x128x128xbf16, #tpu.memory_space<vmem>>, vector<1x128x128xbf16>
    %15 = vector.shape_cast %14 : vector<1x128x128xbf16> to vector<128x128xbf16>
    %cst_17 = arith.constant dense<0.000000e+00> : vector<256x128xf32>
    %16 = tpu.matmul %13, %15, %cst_17 {dimension_numbers = #tpu.dot_dimension_numbers<[1], [0], [0], [1], [0, 0, 1, 1], [], []>} : vector<256x128xbf16>, vector<128x128xbf16>, vector<256x128xf32> -> vector<256x128xf32>
    %17 = arith.addf %5, %16 : vector<256x128xf32>
    %c0_18 = arith.constant 0 : index
    %c1_19 = arith.constant 1 : index
    %c0_20 = arith.constant 0 : index
    %18 = vector.load %arg8[%c0_18, %c1_19, %c0_20] : memref<18x18x128xf32, #tpu.memory_space<vmem>>, vector<16x16x128xf32>
    %cst_21 = arith.constant 0.000000e+00 : f32
    %19 = vector.broadcast %cst_21 : f32 to vector<16x16x128xf32>
    %20 = arith.cmpf oge, %18, %19 : vector<16x16x128xf32>
    %cst_22 = arith.constant 2.000000e-01 : f32
    %21 = vector.broadcast %cst_22 : f32 to vector<16x16x128xf32>
    %22 = arith.mulf %21, %18 : vector<16x16x128xf32>
    %23 = arith.select %20, %18, %22 : vector<16x16x128xi1>, vector<16x16x128xf32>
    %24 = vector.shape_cast %23 : vector<16x16x128xf32> to vector<256x128xf32>
    %25 = arith.truncf %24 : vector<256x128xf32> to vector<256x128xbf16>
    %c1_23 = arith.constant 1 : index
    %c0_24 = arith.constant 0 : index
    %c0_25 = arith.constant 0 : index
    %26 = vector.load %arg2[%c1_23, %c0_24, %c0_25] : memref<9x128x128xbf16, #tpu.memory_space<vmem>>, vector<1x128x128xbf16>
    %27 = vector.shape_cast %26 : vector<1x128x128xbf16> to vector<128x128xbf16>
    %cst_26 = arith.constant dense<0.000000e+00> : vector<256x128xf32>
    %28 = tpu.matmul %25, %27, %cst_26 {dimension_numbers = #tpu.dot_dimension_numbers<[1], [0], [0], [1], [0, 0, 1, 1], [], []>} : vector<256x128xbf16>, vector<128x128xbf16>, vector<256x128xf32> -> vector<256x128xf32>
    %29 = arith.addf %17, %28 : vector<256x128xf32>
    %c0_27 = arith.constant 0 : index
    %c2 = arith.constant 2 : index
    %c0_28 = arith.constant 0 : index
    %30 = vector.load %arg8[%c0_27, %c2, %c0_28] : memref<18x18x128xf32, #tpu.memory_space<vmem>>, vector<16x16x128xf32>
    %cst_29 = arith.constant 0.000000e+00 : f32
    %31 = vector.broadcast %cst_29 : f32 to vector<16x16x128xf32>
    %32 = arith.cmpf oge, %30, %31 : vector<16x16x128xf32>
    %cst_30 = arith.constant 2.000000e-01 : f32
    %33 = vector.broadcast %cst_30 : f32 to vector<16x16x128xf32>
    %34 = arith.mulf %33, %30 : vector<16x16x128xf32>
    %35 = arith.select %32, %30, %34 : vector<16x16x128xi1>, vector<16x16x128xf32>
    %36 = vector.shape_cast %35 : vector<16x16x128xf32> to vector<256x128xf32>
    %37 = arith.truncf %36 : vector<256x128xf32> to vector<256x128xbf16>
    %c2_31 = arith.constant 2 : index
    %c0_32 = arith.constant 0 : index
    %c0_33 = arith.constant 0 : index
    %38 = vector.load %arg2[%c2_31, %c0_32, %c0_33] : memref<9x128x128xbf16, #tpu.memory_space<vmem>>, vector<1x128x128xbf16>
    %39 = vector.shape_cast %38 : vector<1x128x128xbf16> to vector<128x128xbf16>
    %cst_34 = arith.constant dense<0.000000e+00> : vector<256x128xf32>
    %40 = tpu.matmul %37, %39, %cst_34 {dimension_numbers = #tpu.dot_dimension_numbers<[1], [0], [0], [1], [0, 0, 1, 1], [], []>} : vector<256x128xbf16>, vector<128x128xbf16>, vector<256x128xf32> -> vector<256x128xf32>
    %41 = arith.addf %29, %40 : vector<256x128xf32>
    %c1_35 = arith.constant 1 : index
    %c0_36 = arith.constant 0 : index
    %c0_37 = arith.constant 0 : index
    %42 = vector.load %arg8[%c1_35, %c0_36, %c0_37] : memref<18x18x128xf32, #tpu.memory_space<vmem>>, vector<16x16x128xf32>
    %cst_38 = arith.constant 0.000000e+00 : f32
    %43 = vector.broadcast %cst_38 : f32 to vector<16x16x128xf32>
    %44 = arith.cmpf oge, %42, %43 : vector<16x16x128xf32>
    %cst_39 = arith.constant 2.000000e-01 : f32
    %45 = vector.broadcast %cst_39 : f32 to vector<16x16x128xf32>
    %46 = arith.mulf %45, %42 : vector<16x16x128xf32>
    %47 = arith.select %44, %42, %46 : vector<16x16x128xi1>, vector<16x16x128xf32>
    %48 = vector.shape_cast %47 : vector<16x16x128xf32> to vector<256x128xf32>
    %49 = arith.truncf %48 : vector<256x128xf32> to vector<256x128xbf16>
    %c3 = arith.constant 3 : index
    %c0_40 = arith.constant 0 : index
    %c0_41 = arith.constant 0 : index
    %50 = vector.load %arg2[%c3, %c0_40, %c0_41] : memref<9x128x128xbf16, #tpu.memory_space<vmem>>, vector<1x128x128xbf16>
    %51 = vector.shape_cast %50 : vector<1x128x128xbf16> to vector<128x128xbf16>
    %cst_42 = arith.constant dense<0.000000e+00> : vector<256x128xf32>
    %52 = tpu.matmul %49, %51, %cst_42 {dimension_numbers = #tpu.dot_dimension_numbers<[1], [0], [0], [1], [0, 0, 1, 1], [], []>} : vector<256x128xbf16>, vector<128x128xbf16>, vector<256x128xf32> -> vector<256x128xf32>
    %53 = arith.addf %41, %52 : vector<256x128xf32>
    %c1_43 = arith.constant 1 : index
    %c1_44 = arith.constant 1 : index
    %c0_45 = arith.constant 0 : index
    %54 = vector.load %arg8[%c1_43, %c1_44, %c0_45] : memref<18x18x128xf32, #tpu.memory_space<vmem>>, vector<16x16x128xf32>
    %cst_46 = arith.constant 0.000000e+00 : f32
    %55 = vector.broadcast %cst_46 : f32 to vector<16x16x128xf32>
    %56 = arith.cmpf oge, %54, %55 : vector<16x16x128xf32>
    %cst_47 = arith.constant 2.000000e-01 : f32
    %57 = vector.broadcast %cst_47 : f32 to vector<16x16x128xf32>
    %58 = arith.mulf %57, %54 : vector<16x16x128xf32>
    %59 = arith.select %56, %54, %58 : vector<16x16x128xi1>, vector<16x16x128xf32>
    %60 = vector.shape_cast %59 : vector<16x16x128xf32> to vector<256x128xf32>
    %61 = arith.truncf %60 : vector<256x128xf32> to vector<256x128xbf16>
    %c4 = arith.constant 4 : index
    %c0_48 = arith.constant 0 : index
    %c0_49 = arith.constant 0 : index
    %62 = vector.load %arg2[%c4, %c0_48, %c0_49] : memref<9x128x128xbf16, #tpu.memory_space<vmem>>, vector<1x128x128xbf16>
    %63 = vector.shape_cast %62 : vector<1x128x128xbf16> to vector<128x128xbf16>
    %cst_50 = arith.constant dense<0.000000e+00> : vector<256x128xf32>
    %64 = tpu.matmul %61, %63, %cst_50 {dimension_numbers = #tpu.dot_dimension_numbers<[1], [0], [0], [1], [0, 0, 1, 1], [], []>} : vector<256x128xbf16>, vector<128x128xbf16>, vector<256x128xf32> -> vector<256x128xf32>
    %65 = arith.addf %53, %64 : vector<256x128xf32>
    %c1_51 = arith.constant 1 : index
    %c2_52 = arith.constant 2 : index
    %c0_53 = arith.constant 0 : index
    %66 = vector.load %arg8[%c1_51, %c2_52, %c0_53] : memref<18x18x128xf32, #tpu.memory_space<vmem>>, vector<16x16x128xf32>
    %cst_54 = arith.constant 0.000000e+00 : f32
    %67 = vector.broadcast %cst_54 : f32 to vector<16x16x128xf32>
    %68 = arith.cmpf oge, %66, %67 : vector<16x16x128xf32>
    %cst_55 = arith.constant 2.000000e-01 : f32
    %69 = vector.broadcast %cst_55 : f32 to vector<16x16x128xf32>
    %70 = arith.mulf %69, %66 : vector<16x16x128xf32>
    %71 = arith.select %68, %66, %70 : vector<16x16x128xi1>, vector<16x16x128xf32>
    %72 = vector.shape_cast %71 : vector<16x16x128xf32> to vector<256x128xf32>
    %73 = arith.truncf %72 : vector<256x128xf32> to vector<256x128xbf16>
    %c5 = arith.constant 5 : index
    %c0_56 = arith.constant 0 : index
    %c0_57 = arith.constant 0 : index
    %74 = vector.load %arg2[%c5, %c0_56, %c0_57] : memref<9x128x128xbf16, #tpu.memory_space<vmem>>, vector<1x128x128xbf16>
    %75 = vector.shape_cast %74 : vector<1x128x128xbf16> to vector<128x128xbf16>
    %cst_58 = arith.constant dense<0.000000e+00> : vector<256x128xf32>
    %76 = tpu.matmul %73, %75, %cst_58 {dimension_numbers = #tpu.dot_dimension_numbers<[1], [0], [0], [1], [0, 0, 1, 1], [], []>} : vector<256x128xbf16>, vector<128x128xbf16>, vector<256x128xf32> -> vector<256x128xf32>
    %77 = arith.addf %65, %76 : vector<256x128xf32>
    %c2_59 = arith.constant 2 : index
    %c0_60 = arith.constant 0 : index
    %c0_61 = arith.constant 0 : index
    %78 = vector.load %arg8[%c2_59, %c0_60, %c0_61] : memref<18x18x128xf32, #tpu.memory_space<vmem>>, vector<16x16x128xf32>
    %cst_62 = arith.constant 0.000000e+00 : f32
    %79 = vector.broadcast %cst_62 : f32 to vector<16x16x128xf32>
    %80 = arith.cmpf oge, %78, %79 : vector<16x16x128xf32>
    %cst_63 = arith.constant 2.000000e-01 : f32
    %81 = vector.broadcast %cst_63 : f32 to vector<16x16x128xf32>
    %82 = arith.mulf %81, %78 : vector<16x16x128xf32>
    %83 = arith.select %80, %78, %82 : vector<16x16x128xi1>, vector<16x16x128xf32>
    %84 = vector.shape_cast %83 : vector<16x16x128xf32> to vector<256x128xf32>
    %85 = arith.truncf %84 : vector<256x128xf32> to vector<256x128xbf16>
    %c6 = arith.constant 6 : index
    %c0_64 = arith.constant 0 : index
    %c0_65 = arith.constant 0 : index
    %86 = vector.load %arg2[%c6, %c0_64, %c0_65] : memref<9x128x128xbf16, #tpu.memory_space<vmem>>, vector<1x128x128xbf16>
    %87 = vector.shape_cast %86 : vector<1x128x128xbf16> to vector<128x128xbf16>
    %cst_66 = arith.constant dense<0.000000e+00> : vector<256x128xf32>
    %88 = tpu.matmul %85, %87, %cst_66 {dimension_numbers = #tpu.dot_dimension_numbers<[1], [0], [0], [1], [0, 0, 1, 1], [], []>} : vector<256x128xbf16>, vector<128x128xbf16>, vector<256x128xf32> -> vector<256x128xf32>
    %89 = arith.addf %77, %88 : vector<256x128xf32>
    %c2_67 = arith.constant 2 : index
    %c1_68 = arith.constant 1 : index
    %c0_69 = arith.constant 0 : index
    %90 = vector.load %arg8[%c2_67, %c1_68, %c0_69] : memref<18x18x128xf32, #tpu.memory_space<vmem>>, vector<16x16x128xf32>
    %cst_70 = arith.constant 0.000000e+00 : f32
    %91 = vector.broadcast %cst_70 : f32 to vector<16x16x128xf32>
    %92 = arith.cmpf oge, %90, %91 : vector<16x16x128xf32>
    %cst_71 = arith.constant 2.000000e-01 : f32
    %93 = vector.broadcast %cst_71 : f32 to vector<16x16x128xf32>
    %94 = arith.mulf %93, %90 : vector<16x16x128xf32>
    %95 = arith.select %92, %90, %94 : vector<16x16x128xi1>, vector<16x16x128xf32>
    %96 = vector.shape_cast %95 : vector<16x16x128xf32> to vector<256x128xf32>
    %97 = arith.truncf %96 : vector<256x128xf32> to vector<256x128xbf16>
    %c7 = arith.constant 7 : index
    %c0_72 = arith.constant 0 : index
    %c0_73 = arith.constant 0 : index
    %98 = vector.load %arg2[%c7, %c0_72, %c0_73] : memref<9x128x128xbf16, #tpu.memory_space<vmem>>, vector<1x128x128xbf16>
    %99 = vector.shape_cast %98 : vector<1x128x128xbf16> to vector<128x128xbf16>
    %cst_74 = arith.constant dense<0.000000e+00> : vector<256x128xf32>
    %100 = tpu.matmul %97, %99, %cst_74 {dimension_numbers = #tpu.dot_dimension_numbers<[1], [0], [0], [1], [0, 0, 1, 1], [], []>} : vector<256x128xbf16>, vector<128x128xbf16>, vector<256x128xf32> -> vector<256x128xf32>
    %101 = arith.addf %89, %100 : vector<256x128xf32>
    %c2_75 = arith.constant 2 : index
    %c2_76 = arith.constant 2 : index
    %c0_77 = arith.constant 0 : index
    %102 = vector.load %arg8[%c2_75, %c2_76, %c0_77] : memref<18x18x128xf32, #tpu.memory_space<vmem>>, vector<16x16x128xf32>
    %cst_78 = arith.constant 0.000000e+00 : f32
    %103 = vector.broadcast %cst_78 : f32 to vector<16x16x128xf32>
    %104 = arith.cmpf oge, %102, %103 : vector<16x16x128xf32>
    %cst_79 = arith.constant 2.000000e-01 : f32
    %105 = vector.broadcast %cst_79 : f32 to vector<16x16x128xf32>
    %106 = arith.mulf %105, %102 : vector<16x16x128xf32>
    %107 = arith.select %104, %102, %106 : vector<16x16x128xi1>, vector<16x16x128xf32>
    %108 = vector.shape_cast %107 : vector<16x16x128xf32> to vector<256x128xf32>
    %109 = arith.truncf %108 : vector<256x128xf32> to vector<256x128xbf16>
    %c8 = arith.constant 8 : index
    %c0_80 = arith.constant 0 : index
    %c0_81 = arith.constant 0 : index
    %110 = vector.load %arg2[%c8, %c0_80, %c0_81] : memref<9x128x128xbf16, #tpu.memory_space<vmem>>, vector<1x128x128xbf16>
    %111 = vector.shape_cast %110 : vector<1x128x128xbf16> to vector<128x128xbf16>
    %cst_82 = arith.constant dense<0.000000e+00> : vector<256x128xf32>
    %112 = tpu.matmul %109, %111, %cst_82 {dimension_numbers = #tpu.dot_dimension_numbers<[1], [0], [0], [1], [0, 0, 1, 1], [], []>} : vector<256x128xbf16>, vector<128x128xbf16>, vector<256x128xf32> -> vector<256x128xf32>
    %113 = arith.addf %101, %112 : vector<256x128xf32>
    %c0_83 = arith.constant 0 : index
    %c0_84 = arith.constant 0 : index
    %114 = vector.load %arg3[%c0_83, %c0_84] : memref<1x128xf32, #tpu.memory_space<vmem>>, vector<1x128xf32>
    %115 = vector.broadcast %114 : vector<1x128xf32> to vector<256x128xf32>
    %116 = arith.addf %113, %115 : vector<256x128xf32>
    %117 = vector.shape_cast %116 : vector<256x128xf32> to vector<16x16x128xf32>
    %cst_85 = arith.constant 0.000000e+00 : f32
    %118 = vector.broadcast %cst_85 : f32 to vector<10x10x128xf32>
    %c0_86 = arith.constant 0 : index
    %c0_87 = arith.constant 0 : index
    %c0_88 = arith.constant 0 : index
    %119 = vector.load %arg9[%c0_86, %c0_87, %c0_88] : memref<10x10x128xf32, #tpu.memory_space<vmem>>, vector<10x10x128xf32>
    tpu.vector_store %arg9[%c0_86, %c0_87, %c0_88], %118 {strides = array<i32>} : memref<10x10x128xf32, #tpu.memory_space<vmem>>, vector<10x10x128xf32>,
    %120 = vector.shape_cast %117 : vector<16x16x128xf32> to vector<8x2x16x128xf32>
    %121 = vector.extract_strided_slice %120 {offsets = [0, 0, 0, 0], sizes = [8, 1, 16, 128], strides = [1, 1, 1, 1]} : vector<8x2x16x128xf32> to vector<8x1x16x128xf32>
    %122 = vector.shape_cast %121 : vector<8x1x16x128xf32> to vector<8x16x128xf32>
    %123 = vector.extract_strided_slice %120 {offsets = [0, 1, 0, 0], sizes = [8, 1, 16, 128], strides = [1, 1, 1, 1]} : vector<8x2x16x128xf32> to vector<8x1x16x128xf32>
    %124 = vector.shape_cast %123 : vector<8x1x16x128xf32> to vector<8x16x128xf32>
    %125 = arith.addf %122, %124 : vector<8x16x128xf32>
    %c0_89 = arith.constant 0 : index
    %c0_90 = arith.constant 0 : index
    %c0_91 = arith.constant 0 : index
    %126 = vector.load %arg10[%c0_89, %c0_90, %c0_91] : memref<8x16x128xf32, #tpu.memory_space<vmem>>, vector<8x16x128xf32>
    tpu.vector_store %arg10[%c0_89, %c0_90, %c0_91], %125 {strides = array<i32>} : memref<8x16x128xf32, #tpu.memory_space<vmem>>, vector<8x16x128xf32>,
    %c0_92 = arith.constant 0 : index
    %c0_93 = arith.constant 0 : index
    %c0_94 = arith.constant 0 : index
    %127 = tpu.strided_load %arg10[%c0_92, %c0_93, %c0_94] {strides = array<i32: 1, 2, 1>} : memref<8x16x128xf32, #tpu.memory_space<vmem>>, vector<8x8x128xf32>
    %c0_95 = arith.constant 0 : index
    %c1_96 = arith.constant 1 : index
    %c0_97 = arith.constant 0 : index
    %128 = tpu.strided_load %arg10[%c0_95, %c1_96, %c0_97] {strides = array<i32: 1, 2, 1>} : memref<8x16x128xf32, #tpu.memory_space<vmem>>, vector<8x8x128xf32>
    %129 = arith.addf %127, %128 : vector<8x8x128xf32>
    %cst_98 = arith.constant 2.500000e-01 : f32
    %130 = vector.broadcast %cst_98 : f32 to vector<8x8x128xf32>
    %131 = arith.mulf %129, %130 : vector<8x8x128xf32>
    %c1_99 = arith.constant 1 : index
    %c1_100 = arith.constant 1 : index
    %c0_101 = arith.constant 0 : index
    %132 = vector.load %arg9[%c1_99, %c1_100, %c0_101] : memref<10x10x128xf32, #tpu.memory_space<vmem>>, vector<8x8x128xf32>
    tpu.vector_store %arg9[%c1_99, %c1_100, %c0_101], %131 {strides = array<i32>} : memref<10x10x128xf32, #tpu.memory_space<vmem>>, vector<8x8x128xf32>,
    %cst_102 = arith.constant 0.000000e+00 : f32
    %133 = vector.broadcast %cst_102 : f32 to vector<64x256xf32>
    %c0_103 = arith.constant 0 : index
    %c0_104 = arith.constant 0 : index
    %c0_105 = arith.constant 0 : index
    %134 = vector.load %arg9[%c0_103, %c0_104, %c0_105] : memref<10x10x128xf32, #tpu.memory_space<vmem>>, vector<8x8x128xf32>
    %cst_106 = arith.constant 0.000000e+00 : f32
    %135 = vector.broadcast %cst_106 : f32 to vector<8x8x128xf32>
    %136 = arith.cmpf oge, %134, %135 : vector<8x8x128xf32>
    %cst_107 = arith.constant 2.000000e-01 : f32
    %137 = vector.broadcast %cst_107 : f32 to vector<8x8x128xf32>
    %138 = arith.mulf %137, %134 : vector<8x8x128xf32>
    %139 = arith.select %136, %134, %138 : vector<8x8x128xi1>, vector<8x8x128xf32>
    %140 = vector.shape_cast %139 : vector<8x8x128xf32> to vector<64x128xf32>
    %141 = arith.truncf %140 : vector<64x128xf32> to vector<64x128xbf16>
    %c0_108 = arith.constant 0 : index
    %c0_109 = arith.constant 0 : index
    %c0_110 = arith.constant 0 : index
    %142 = vector.load %arg4[%c0_108, %c0_109, %c0_110] : memref<9x128x256xbf16, #tpu.memory_space<vmem>>, vector<1x128x256xbf16>
    %143 = vector.shape_cast %142 : vector<1x128x256xbf16> to vector<128x256xbf16>
    %cst_111 = arith.constant dense<0.000000e+00> : vector<64x256xf32>
    %144 = tpu.matmul %141, %143, %cst_111 {dimension_numbers = #tpu.dot_dimension_numbers<[1], [0], [0], [1], [0, 0, 1, 1], [], []>} : vector<64x128xbf16>, vector<128x256xbf16>, vector<64x256xf32> -> vector<64x256xf32>
    %145 = arith.addf %133, %144 : vector<64x256xf32>
    %c0_112 = arith.constant 0 : index
    %c1_113 = arith.constant 1 : index
    %c0_114 = arith.constant 0 : index
    %146 = vector.load %arg9[%c0_112, %c1_113, %c0_114] : memref<10x10x128xf32, #tpu.memory_space<vmem>>, vector<8x8x128xf32>
    %cst_115 = arith.constant 0.000000e+00 : f32
    %147 = vector.broadcast %cst_115 : f32 to vector<8x8x128xf32>
    %148 = arith.cmpf oge, %146, %147 : vector<8x8x128xf32>
    %cst_116 = arith.constant 2.000000e-01 : f32
    %149 = vector.broadcast %cst_116 : f32 to vector<8x8x128xf32>
    %150 = arith.mulf %149, %146 : vector<8x8x128xf32>
    %151 = arith.select %148, %146, %150 : vector<8x8x128xi1>, vector<8x8x128xf32>
    %152 = vector.shape_cast %151 : vector<8x8x128xf32> to vector<64x128xf32>
    %153 = arith.truncf %152 : vector<64x128xf32> to vector<64x128xbf16>
    %c1_117 = arith.constant 1 : index
    %c0_118 = arith.constant 0 : index
    %c0_119 = arith.constant 0 : index
    %154 = vector.load %arg4[%c1_117, %c0_118, %c0_119] : memref<9x128x256xbf16, #tpu.memory_space<vmem>>, vector<1x128x256xbf16>
    %155 = vector.shape_cast %154 : vector<1x128x256xbf16> to vector<128x256xbf16>
    %cst_120 = arith.constant dense<0.000000e+00> : vector<64x256xf32>
    %156 = tpu.matmul %153, %155, %cst_120 {dimension_numbers = #tpu.dot_dimension_numbers<[1], [0], [0], [1], [0, 0, 1, 1], [], []>} : vector<64x128xbf16>, vector<128x256xbf16>, vector<64x256xf32> -> vector<64x256xf32>
    %157 = arith.addf %145, %156 : vector<64x256xf32>
    %c0_121 = arith.constant 0 : index
    %c2_122 = arith.constant 2 : index
    %c0_123 = arith.constant 0 : index
    %158 = vector.load %arg9[%c0_121, %c2_122, %c0_123] : memref<10x10x128xf32, #tpu.memory_space<vmem>>, vector<8x8x128xf32>
    %cst_124 = arith.constant 0.000000e+00 : f32
    %159 = vector.broadcast %cst_124 : f32 to vector<8x8x128xf32>
    %160 = arith.cmpf oge, %158, %159 : vector<8x8x128xf32>
    %cst_125 = arith.constant 2.000000e-01 : f32
    %161 = vector.broadcast %cst_125 : f32 to vector<8x8x128xf32>
    %162 = arith.mulf %161, %158 : vector<8x8x128xf32>
    %163 = arith.select %160, %158, %162 : vector<8x8x128xi1>, vector<8x8x128xf32>
    %164 = vector.shape_cast %163 : vector<8x8x128xf32> to vector<64x128xf32>
    %165 = arith.truncf %164 : vector<64x128xf32> to vector<64x128xbf16>
    %c2_126 = arith.constant 2 : index
    %c0_127 = arith.constant 0 : index
    %c0_128 = arith.constant 0 : index
    %166 = vector.load %arg4[%c2_126, %c0_127, %c0_128] : memref<9x128x256xbf16, #tpu.memory_space<vmem>>, vector<1x128x256xbf16>
    %167 = vector.shape_cast %166 : vector<1x128x256xbf16> to vector<128x256xbf16>
    %cst_129 = arith.constant dense<0.000000e+00> : vector<64x256xf32>
    %168 = tpu.matmul %165, %167, %cst_129 {dimension_numbers = #tpu.dot_dimension_numbers<[1], [0], [0], [1], [0, 0, 1, 1], [], []>} : vector<64x128xbf16>, vector<128x256xbf16>, vector<64x256xf32> -> vector<64x256xf32>
    %169 = arith.addf %157, %168 : vector<64x256xf32>
    %c1_130 = arith.constant 1 : index
    %c0_131 = arith.constant 0 : index
    %c0_132 = arith.constant 0 : index
    %170 = vector.load %arg9[%c1_130, %c0_131, %c0_132] : memref<10x10x128xf32, #tpu.memory_space<vmem>>, vector<8x8x128xf32>
    %cst_133 = arith.constant 0.000000e+00 : f32
    %171 = vector.broadcast %cst_133 : f32 to vector<8x8x128xf32>
    %172 = arith.cmpf oge, %170, %171 : vector<8x8x128xf32>
    %cst_134 = arith.constant 2.000000e-01 : f32
    %173 = vector.broadcast %cst_134 : f32 to vector<8x8x128xf32>
    %174 = arith.mulf %173, %170 : vector<8x8x128xf32>
    %175 = arith.select %172, %170, %174 : vector<8x8x128xi1>, vector<8x8x128xf32>
    %176 = vector.shape_cast %175 : vector<8x8x128xf32> to vector<64x128xf32>
    %177 = arith.truncf %176 : vector<64x128xf32> to vector<64x128xbf16>
    %c3_135 = arith.constant 3 : index
    %c0_136 = arith.constant 0 : index
    %c0_137 = arith.constant 0 : index
    %178 = vector.load %arg4[%c3_135, %c0_136, %c0_137] : memref<9x128x256xbf16, #tpu.memory_space<vmem>>, vector<1x128x256xbf16>
    %179 = vector.shape_cast %178 : vector<1x128x256xbf16> to vector<128x256xbf16>
    %cst_138 = arith.constant dense<0.000000e+00> : vector<64x256xf32>
    %180 = tpu.matmul %177, %179, %cst_138 {dimension_numbers = #tpu.dot_dimension_numbers<[1], [0], [0], [1], [0, 0, 1, 1], [], []>} : vector<64x128xbf16>, vector<128x256xbf16>, vector<64x256xf32> -> vector<64x256xf32>
    %181 = arith.addf %169, %180 : vector<64x256xf32>
    %c1_139 = arith.constant 1 : index
    %c1_140 = arith.constant 1 : index
    %c0_141 = arith.constant 0 : index
    %182 = vector.load %arg9[%c1_139, %c1_140, %c0_141] : memref<10x10x128xf32, #tpu.memory_space<vmem>>, vector<8x8x128xf32>
    %cst_142 = arith.constant 0.000000e+00 : f32
    %183 = vector.broadcast %cst_142 : f32 to vector<8x8x128xf32>
    %184 = arith.cmpf oge, %182, %183 : vector<8x8x128xf32>
    %cst_143 = arith.constant 2.000000e-01 : f32
    %185 = vector.broadcast %cst_143 : f32 to vector<8x8x128xf32>
    %186 = arith.mulf %185, %182 : vector<8x8x128xf32>
    %187 = arith.select %184, %182, %186 : vector<8x8x128xi1>, vector<8x8x128xf32>
    %188 = vector.shape_cast %187 : vector<8x8x128xf32> to vector<64x128xf32>
    %189 = arith.truncf %188 : vector<64x128xf32> to vector<64x128xbf16>
    %c4_144 = arith.constant 4 : index
    %c0_145 = arith.constant 0 : index
    %c0_146 = arith.constant 0 : index
    %190 = vector.load %arg4[%c4_144, %c0_145, %c0_146] : memref<9x128x256xbf16, #tpu.memory_space<vmem>>, vector<1x128x256xbf16>
    %191 = vector.shape_cast %190 : vector<1x128x256xbf16> to vector<128x256xbf16>
    %cst_147 = arith.constant dense<0.000000e+00> : vector<64x256xf32>
    %192 = tpu.matmul %189, %191, %cst_147 {dimension_numbers = #tpu.dot_dimension_numbers<[1], [0], [0], [1], [0, 0, 1, 1], [], []>} : vector<64x128xbf16>, vector<128x256xbf16>, vector<64x256xf32> -> vector<64x256xf32>
    %193 = arith.addf %181, %192 : vector<64x256xf32>
    %c1_148 = arith.constant 1 : index
    %c2_149 = arith.constant 2 : index
    %c0_150 = arith.constant 0 : index
    %194 = vector.load %arg9[%c1_148, %c2_149, %c0_150] : memref<10x10x128xf32, #tpu.memory_space<vmem>>, vector<8x8x128xf32>
    %cst_151 = arith.constant 0.000000e+00 : f32
    %195 = vector.broadcast %cst_151 : f32 to vector<8x8x128xf32>
    %196 = arith.cmpf oge, %194, %195 : vector<8x8x128xf32>
    %cst_152 = arith.constant 2.000000e-01 : f32
    %197 = vector.broadcast %cst_152 : f32 to vector<8x8x128xf32>
    %198 = arith.mulf %197, %194 : vector<8x8x128xf32>
    %199 = arith.select %196, %194, %198 : vector<8x8x128xi1>, vector<8x8x128xf32>
    %200 = vector.shape_cast %199 : vector<8x8x128xf32> to vector<64x128xf32>
    %201 = arith.truncf %200 : vector<64x128xf32> to vector<64x128xbf16>
    %c5_153 = arith.constant 5 : index
    %c0_154 = arith.constant 0 : index
    %c0_155 = arith.constant 0 : index
    %202 = vector.load %arg4[%c5_153, %c0_154, %c0_155] : memref<9x128x256xbf16, #tpu.memory_space<vmem>>, vector<1x128x256xbf16>
    %203 = vector.shape_cast %202 : vector<1x128x256xbf16> to vector<128x256xbf16>
    %cst_156 = arith.constant dense<0.000000e+00> : vector<64x256xf32>
    %204 = tpu.matmul %201, %203, %cst_156 {dimension_numbers = #tpu.dot_dimension_numbers<[1], [0], [0], [1], [0, 0, 1, 1], [], []>} : vector<64x128xbf16>, vector<128x256xbf16>, vector<64x256xf32> -> vector<64x256xf32>
    %205 = arith.addf %193, %204 : vector<64x256xf32>
    %c2_157 = arith.constant 2 : index
    %c0_158 = arith.constant 0 : index
    %c0_159 = arith.constant 0 : index
    %206 = vector.load %arg9[%c2_157, %c0_158, %c0_159] : memref<10x10x128xf32, #tpu.memory_space<vmem>>, vector<8x8x128xf32>
    %cst_160 = arith.constant 0.000000e+00 : f32
    %207 = vector.broadcast %cst_160 : f32 to vector<8x8x128xf32>
    %208 = arith.cmpf oge, %206, %207 : vector<8x8x128xf32>
    %cst_161 = arith.constant 2.000000e-01 : f32
    %209 = vector.broadcast %cst_161 : f32 to vector<8x8x128xf32>
    %210 = arith.mulf %209, %206 : vector<8x8x128xf32>
    %211 = arith.select %208, %206, %210 : vector<8x8x128xi1>, vector<8x8x128xf32>
    %212 = vector.shape_cast %211 : vector<8x8x128xf32> to vector<64x128xf32>
    %213 = arith.truncf %212 : vector<64x128xf32> to vector<64x128xbf16>
    %c6_162 = arith.constant 6 : index
    %c0_163 = arith.constant 0 : index
    %c0_164 = arith.constant 0 : index
    %214 = vector.load %arg4[%c6_162, %c0_163, %c0_164] : memref<9x128x256xbf16, #tpu.memory_space<vmem>>, vector<1x128x256xbf16>
    %215 = vector.shape_cast %214 : vector<1x128x256xbf16> to vector<128x256xbf16>
    %cst_165 = arith.constant dense<0.000000e+00> : vector<64x256xf32>
    %216 = tpu.matmul %213, %215, %cst_165 {dimension_numbers = #tpu.dot_dimension_numbers<[1], [0], [0], [1], [0, 0, 1, 1], [], []>} : vector<64x128xbf16>, vector<128x256xbf16>, vector<64x256xf32> -> vector<64x256xf32>
    %217 = arith.addf %205, %216 : vector<64x256xf32>
    %c2_166 = arith.constant 2 : index
    %c1_167 = arith.constant 1 : index
    %c0_168 = arith.constant 0 : index
    %218 = vector.load %arg9[%c2_166, %c1_167, %c0_168] : memref<10x10x128xf32, #tpu.memory_space<vmem>>, vector<8x8x128xf32>
    %cst_169 = arith.constant 0.000000e+00 : f32
    %219 = vector.broadcast %cst_169 : f32 to vector<8x8x128xf32>
    %220 = arith.cmpf oge, %218, %219 : vector<8x8x128xf32>
    %cst_170 = arith.constant 2.000000e-01 : f32
    %221 = vector.broadcast %cst_170 : f32 to vector<8x8x128xf32>
    %222 = arith.mulf %221, %218 : vector<8x8x128xf32>
    %223 = arith.select %220, %218, %222 : vector<8x8x128xi1>, vector<8x8x128xf32>
    %224 = vector.shape_cast %223 : vector<8x8x128xf32> to vector<64x128xf32>
    %225 = arith.truncf %224 : vector<64x128xf32> to vector<64x128xbf16>
    %c7_171 = arith.constant 7 : index
    %c0_172 = arith.constant 0 : index
    %c0_173 = arith.constant 0 : index
    %226 = vector.load %arg4[%c7_171, %c0_172, %c0_173] : memref<9x128x256xbf16, #tpu.memory_space<vmem>>, vector<1x128x256xbf16>
    %227 = vector.shape_cast %226 : vector<1x128x256xbf16> to vector<128x256xbf16>
    %cst_174 = arith.constant dense<0.000000e+00> : vector<64x256xf32>
    %228 = tpu.matmul %225, %227, %cst_174 {dimension_numbers = #tpu.dot_dimension_numbers<[1], [0], [0], [1], [0, 0, 1, 1], [], []>} : vector<64x128xbf16>, vector<128x256xbf16>, vector<64x256xf32> -> vector<64x256xf32>
    %229 = arith.addf %217, %228 : vector<64x256xf32>
    %c2_175 = arith.constant 2 : index
    %c2_176 = arith.constant 2 : index
    %c0_177 = arith.constant 0 : index
    %230 = vector.load %arg9[%c2_175, %c2_176, %c0_177] : memref<10x10x128xf32, #tpu.memory_space<vmem>>, vector<8x8x128xf32>
    %cst_178 = arith.constant 0.000000e+00 : f32
    %231 = vector.broadcast %cst_178 : f32 to vector<8x8x128xf32>
    %232 = arith.cmpf oge, %230, %231 : vector<8x8x128xf32>
    %cst_179 = arith.constant 2.000000e-01 : f32
    %233 = vector.broadcast %cst_179 : f32 to vector<8x8x128xf32>
    %234 = arith.mulf %233, %230 : vector<8x8x128xf32>
    %235 = arith.select %232, %230, %234 : vector<8x8x128xi1>, vector<8x8x128xf32>
    %236 = vector.shape_cast %235 : vector<8x8x128xf32> to vector<64x128xf32>
    %237 = arith.truncf %236 : vector<64x128xf32> to vector<64x128xbf16>
    %c8_180 = arith.constant 8 : index
    %c0_181 = arith.constant 0 : index
    %c0_182 = arith.constant 0 : index
    %238 = vector.load %arg4[%c8_180, %c0_181, %c0_182] : memref<9x128x256xbf16, #tpu.memory_space<vmem>>, vector<1x128x256xbf16>
    %239 = vector.shape_cast %238 : vector<1x128x256xbf16> to vector<128x256xbf16>
    %cst_183 = arith.constant dense<0.000000e+00> : vector<64x256xf32>
    %240 = tpu.matmul %237, %239, %cst_183 {dimension_numbers = #tpu.dot_dimension_numbers<[1], [0], [0], [1], [0, 0, 1, 1], [], []>} : vector<64x128xbf16>, vector<128x256xbf16>, vector<64x256xf32> -> vector<64x256xf32>
    %241 = arith.addf %229, %240 : vector<64x256xf32>
    %c0_184 = arith.constant 0 : index
    %c0_185 = arith.constant 0 : index
    %242 = vector.load %arg5[%c0_184, %c0_185] : memref<1x256xf32, #tpu.memory_space<vmem>>, vector<1x256xf32>
    %243 = vector.broadcast %242 : vector<1x256xf32> to vector<64x256xf32>
    %244 = arith.addf %241, %243 : vector<64x256xf32>
    %245 = vector.shape_cast %244 : vector<64x256xf32> to vector<8x8x256xf32>
    %c0_186 = arith.constant 0 : index
    %c0_187 = arith.constant 0 : index
    %c0_188 = arith.constant 0 : index
    %c0_189 = arith.constant 0 : index
    %246 = vector.load %arg1[%c0_186, %c0_187, %c0_188, %c0_189] : memref<1x16x16x128xf32, #tpu.memory_space<vmem>>, vector<1x16x16x128xf32>
    %247 = vector.shape_cast %246 : vector<1x16x16x128xf32> to vector<16x16x128xf32>
    %248 = vector.shape_cast %247 : vector<16x16x128xf32> to vector<8x2x16x128xf32>
    %249 = vector.extract_strided_slice %248 {offsets = [0, 0, 0, 0], sizes = [8, 1, 16, 128], strides = [1, 1, 1, 1]} : vector<8x2x16x128xf32> to vector<8x1x16x128xf32>
    %250 = vector.shape_cast %249 : vector<8x1x16x128xf32> to vector<8x16x128xf32>
    %251 = vector.extract_strided_slice %248 {offsets = [0, 1, 0, 0], sizes = [8, 1, 16, 128], strides = [1, 1, 1, 1]} : vector<8x2x16x128xf32> to vector<8x1x16x128xf32>
    %252 = vector.shape_cast %251 : vector<8x1x16x128xf32> to vector<8x16x128xf32>
    %253 = arith.addf %250, %252 : vector<8x16x128xf32>
    %c0_190 = arith.constant 0 : index
    %c0_191 = arith.constant 0 : index
    %c0_192 = arith.constant 0 : index
    %254 = vector.load %arg10[%c0_190, %c0_191, %c0_192] : memref<8x16x128xf32, #tpu.memory_space<vmem>>, vector<8x16x128xf32>
    tpu.vector_store %arg10[%c0_190, %c0_191, %c0_192], %253 {strides = array<i32>} : memref<8x16x128xf32, #tpu.memory_space<vmem>>, vector<8x16x128xf32>,
    %c0_193 = arith.constant 0 : index
    %c0_194 = arith.constant 0 : index
    %c0_195 = arith.constant 0 : index
    %255 = tpu.strided_load %arg10[%c0_193, %c0_194, %c0_195] {strides = array<i32: 1, 2, 1>} : memref<8x16x128xf32, #tpu.memory_space<vmem>>, vector<8x8x128xf32>
    %c0_196 = arith.constant 0 : index
    %c1_197 = arith.constant 1 : index
    %c0_198 = arith.constant 0 : index
    %256 = tpu.strided_load %arg10[%c0_196, %c1_197, %c0_198] {strides = array<i32: 1, 2, 1>} : memref<8x16x128xf32, #tpu.memory_space<vmem>>, vector<8x8x128xf32>
    %257 = arith.addf %255, %256 : vector<8x8x128xf32>
    %cst_199 = arith.constant 2.500000e-01 : f32
    %258 = vector.broadcast %cst_199 : f32 to vector<8x8x128xf32>
    %259 = arith.mulf %257, %258 : vector<8x8x128xf32>
    %260 = vector.shape_cast %259 : vector<8x8x128xf32> to vector<64x128xf32>
    %261 = arith.truncf %260 : vector<64x128xf32> to vector<64x128xbf16>
    %c0_200 = arith.constant 0 : index
    %c0_201 = arith.constant 0 : index
    %262 = vector.load %arg6[%c0_200, %c0_201] : memref<128x256xbf16, #tpu.memory_space<vmem>>, vector<128x256xbf16>
    %cst_202 = arith.constant dense<0.000000e+00> : vector<64x256xf32>
    %263 = tpu.matmul %261, %262, %cst_202 {dimension_numbers = #tpu.dot_dimension_numbers<[1], [0], [0], [1], [0, 0, 1, 1], [], []>} : vector<64x128xbf16>, vector<128x256xbf16>, vector<64x256xf32> -> vector<64x256xf32>
    %264 = vector.shape_cast %263 : vector<64x256xf32> to vector<8x8x256xf32>
    %265 = arith.addf %264, %245 : vector<8x8x256xf32>
    %cst_203 = arith.constant 0.707106769 : f32
    %266 = vector.broadcast %cst_203 : f32 to vector<8x8x256xf32>
    %267 = arith.mulf %265, %266 : vector<8x8x256xf32>
    %c0_204 = arith.constant 0 : index
    %c0_205 = arith.constant 0 : index
    %c0_206 = arith.constant 0 : index
    %c0_207 = arith.constant 0 : index
    %268 = vector.load %arg7[%c0_204, %c0_205, %c0_206, %c0_207] : memref<1x8x8x256xf32, #tpu.memory_space<vmem>>, vector<1x8x8x256xf32>
    %269 = vector.shape_cast %268 : vector<1x8x8x256xf32> to vector<8x8x256xf32>
    %270 = vector.shape_cast %267 : vector<8x8x256xf32> to vector<1x8x8x256xf32>
    tpu.vector_store %arg7[%c0_204, %c0_205, %c0_206, %c0_207], %270 {strides = array<i32>} : memref<1x8x8x256xf32, #tpu.memory_space<vmem>>, vector<1x8x8x256xf32>,
    return
  }
  func.func @transform_0(%arg0: i32) -> (i32, i32, i32, i32) {
    %c0_i32 = arith.constant 0 : i32
    %c0_i32_0 = arith.constant 0 : i32
    %c0_i32_1 = arith.constant 0 : i32
    %c0_i32_2 = arith.constant 0 : i32
    return %arg0, %c0_i32, %c0_i32_0, %c0_i32_1 : i32, i32, i32, i32
  }
  func.func @transform_1(%arg0: i32) -> (i32, i32, i32) {
    %c0_i32 = arith.constant 0 : i32
    %c0_i32_0 = arith.constant 0 : i32
    %c0_i32_1 = arith.constant 0 : i32
    %c0_i32_2 = arith.constant 0 : i32
    return %c0_i32, %c0_i32_0, %c0_i32_1 : i32, i32, i32
  }
  func.func @transform_2(%arg0: i32) -> (i32, i32) {
    %c0_i32 = arith.constant 0 : i32
    %c0_i32_0 = arith.constant 0 : i32
    %c0_i32_1 = arith.constant 0 : i32
    return %c0_i32, %c0_i32_0 : i32, i32
  }
  func.func @transform_3(%arg0: i32) -> (i32, i32, i32) {
    %c0_i32 = arith.constant 0 : i32
    %c0_i32_0 = arith.constant 0 : i32
    %c0_i32_1 = arith.constant 0 : i32
    %c0_i32_2 = arith.constant 0 : i32
    return %c0_i32, %c0_i32_0, %c0_i32_1 : i32, i32, i32
  }
  func.func @transform_4(%arg0: i32) -> (i32, i32) {
    %c0_i32 = arith.constant 0 : i32
    %c0_i32_0 = arith.constant 0 : i32
    %c0_i32_1 = arith.constant 0 : i32
    return %c0_i32, %c0_i32_0 : i32, i32
  }
  func.func @transform_5(%arg0: i32) -> (i32, i32) {
    %c0_i32 = arith.constant 0 : i32
    %c0_i32_0 = arith.constant 0 : i32
    %c0_i32_1 = arith.constant 0 : i32
    return %c0_i32, %c0_i32_0 : i32, i32
  }
  func.func @transform_6(%arg0: i32) -> (i32, i32, i32, i32) {
    %c0_i32 = arith.constant 0 : i32
    %c0_i32_0 = arith.constant 0 : i32
    %c0_i32_1 = arith.constant 0 : i32
    %c0_i32_2 = arith.constant 0 : i32
    return %arg0, %c0_i32, %c0_i32_0, %c0_i32_1 : i32, i32, i32, i32
  }
}

</mosaic_0001>

<llo_original>
// kernel: resblk_forward_nhwc.1
$region0: #{resblk_forward_nhwc.1}
  #allocation0 [shape = 'u32[]', space=smem, size = 0x4, offset = 0x4, fixed_abs, tag = 'smem constant byte address 0x4 - core index']
  #allocation1 [shape = 'u32[144,128]{1,0:T(1,128)}', space=vmem, size = 0x12000, scoped, tag = 'internal scratch']
  #allocation2 [shape = 'f32[18,18,128]{2,1,0:T(8,128)}', space=vmem, size = 0x36000, scoped, tag = 'scratch operand']
  #allocation3 [shape = 'f32[10,10,128]{2,1,0:T(8,128)}', space=vmem, size = 0x14000, scoped, tag = 'scratch operand']
  #allocation4 [shape = 'f32[8,16,128]{2,1,0:T(8,128)}', space=vmem, size = 0x10000, scoped, tag = 'scratch operand']
  %s0 = inlined_call_operand.vmem [shape: f32[2,16,16,128], index: 0, kind: input, shape index: {}]
  %s1 = inlined_call_operand.vmem [shape: bf16[9,128,128], index: 1, kind: input, shape index: {}]
  %s2 = inlined_call_operand.vmem [shape: f32[1,128], index: 2, kind: input, shape index: {}]
  %s3 = inlined_call_operand.vmem [shape: bf16[9,128,256], index: 3, kind: input, shape index: {}]
  %s4 = inlined_call_operand.vmem [shape: f32[1,256], index: 4, kind: input, shape index: {}]
  %s5 = inlined_call_operand.vmem [shape: bf16[128,256], index: 5, kind: input, shape index: {}]
  %s6 = inlined_call_operand.hbm [shape: f32[2,8,8,256], index: 6, kind: output, shape index: {}]
  %s7 = sld [smem:[#allocation0]]
  $region57: #{resblk_forward_nhwc.1} parent=0
    _
  %s9 = ssub.s32 1, %s7
  %s10 = scalar_select 0, %s9, %s7
  $region1: #{resblk_forward_nhwc.1} parent=0
    #allocation5 [shape = 'u8[131072]{0}', space=vmem, size = 0x20000, scoped, tag = 'output window, operand 0']
    #allocation6 [shape = 's32[2]{0}', space=sflag, size = 0x8, scoped, tag = 'scoped memory for resblk_forward_nhwc.1']
    %11 = vsyncpa [#allocation6], 0
    %s12 = scalar_lea.sflag [#allocation6], 1
    %13 = vsyncpa %s12, 0
    loop: start=0, step=1, limit=4
    $region2: #{resblk_forward_nhwc.1} parent=1 // loop_pre_header
      _
    $region3: #{resblk_forward_nhwc.1} parent=1 // loop_header
      %s15 = sphi 0, %s19
      %p16 = scmp.ge.s32.totalorder %s15, 4
      %s25 = sphi 0, %s27
      %s28 = sphi 0, %s25
      %s29 = sphi 0, %s28
      %s45 = sphi 0, %s29
      %s49 = sphi 0, %s49
      %s51 = sphi 0, %s49
      %s52 = sphi 0, %s51
      %s66 = sphi 0, %s52
      %s70 = sphi 0, %s70
      %s72 = sphi 0, %s70
      %s73 = sphi 0, %s72
      %s87 = sphi 0, %s73
      %s91 = sphi 0, %s91
      %s93 = sphi 0, %s91
      %s94 = sphi 0, %s93
      %s108 = sphi 0, %s94
      %s112 = sphi 0, %s112
      %s114 = sphi 0, %s112
      %s115 = sphi 0, %s114
      %s129 = sphi 0, %s115
      %s133 = sphi 0, %s133
      %s135 = sphi 0, %s133
      %s136 = sphi 0, %s135
      %s150 = sphi 0, %s136
      %s156 = sphi 0, %s158
      %s159 = sphi 0, %s156
      %s160 = sphi 0, %s159
      %s176 = sphi 0, %s160
    $region4: #{resblk_forward_nhwc.1} parent=1 // loop_header_branch
      %18 = sbr.rel (%p16) target = $region8
    $region5: #{resblk_forward_nhwc.1} parent=1 // loop_body
      %s20 = ssub.s32 %s15, 1
      %s21 = ssub.s32 %s15, 2
      %s22 = sadd.s32 %s15, 1
      %s23 = ssub.s32 %s15, %s22
      %p24 = scmp.eq.s32.totalorder %s23, 0
      %s26 = sadd.s32 %s25, 1
      %s27 = scalar_select %p24, %s25, %s26
      %p30 = pneg %p24
      %p31 = scmp.eq.s32.totalorder %s15, 1
      %p32 = por %p30, %p31
      %p33 = scmp.ne.s32.totalorder %s25, %s28
      %p34 = scmp.eq.s32.totalorder %s15, 0
      %p35 = por %p33, %p34
      %p36 = scmp.ne.s32.totalorder %s25, %s28
      %p37 = scmp.eq.s32.totalorder %s20, 1
      %p38 = por %p36, %p37
      %p39 = scmp.ne.s32.totalorder %s28, %s29
      %p40 = scmp.eq.s32.totalorder %s20, 0
      %p41 = por %p39, %p40
      %p42 = scmp.ne.s32.totalorder %s28, %s29
      %p43 = scmp.eq.s32.totalorder %s21, 1
      %p44 = por %p42, %p43
      %p46 = scmp.ne.s32.totalorder %s29, %s45
      %p47 = scmp.eq.s32.totalorder %s21, 0
      %p48 = por %p46, %p47
      %s50 = sadd.s32 %s49, 1
      %p53 = scmp.eq.s32.totalorder %s15, 1
      %p54 = scmp.ne.s32.totalorder %s49, %s51
      %p55 = scmp.eq.s32.totalorder %s15, 0
      %p56 = por %p54, %p55
      %p57 = scmp.ne.s32.totalorder %s49, %s51
      %p58 = scmp.eq.s32.totalorder %s20, 1
      %p59 = por %p57, %p58
      %p60 = scmp.ne.s32.totalorder %s51, %s52
      %p61 = scmp.eq.s32.totalorder %s20, 0
      %p62 = por %p60, %p61
      %p63 = scmp.ne.s32.totalorder %s51, %s52
      %p64 = scmp.eq.s32.totalorder %s21, 1
      %p65 = por %p63, %p64
      %p67 = scmp.ne.s32.totalorder %s52, %s66
      %p68 = scmp.eq.s32.totalorder %s21, 0
      %p69 = por %p67, %p68
      %s71 = sadd.s32 %s70, 1
      %p74 = scmp.eq.s32.totalorder %s15, 1
      %p75 = scmp.ne.s32.totalorder %s70, %s72
      %p76 = scmp.eq.s32.totalorder %s15, 0
      %p77 = por %p75, %p76
      %p78 = scmp.ne.s32.totalorder %s70, %s72
      %p79 = scmp.eq.s32.totalorder %s20, 1
      %p80 = por %p78, %p79
      %p81 = scmp.ne.s32.totalorder %s72, %s73
      %p82 = scmp.eq.s32.totalorder %s20, 0
      %p83 = por %p81, %p82
      %p84 = scmp.ne.s32.totalorder %s72, %s73
      %p85 = scmp.eq.s32.totalorder %s21, 1
      %p86 = por %p84, %p85
      %p88 = scmp.ne.s32.totalorder %s73, %s87
      %p89 = scmp.eq.s32.totalorder %s21, 0
      %p90 = por %p88, %p89
      %s92 = sadd.s32 %s91, 1
      %p95 = scmp.eq.s32.totalorder %s15, 1
      %p96 = scmp.ne.s32.totalorder %s91, %s93
      %p97 = scmp.eq.s32.totalorder %s15, 0
      %p98 = por %p96, %p97
      %p99 = scmp.ne.s32.totalorder %s91, %s93
      %p100 = scmp.eq.s32.totalorder %s20, 1
      %p101 = por %p99, %p100
      %p102 = scmp.ne.s32.totalorder %s93, %s94
      %p103 = scmp.eq.s32.totalorder %s20, 0
      %p104 = por %p102, %p103
      %p105 = scmp.ne.s32.totalorder %s93, %s94
      %p106 = scmp.eq.s32.totalorder %s21, 1
      %p107 = por %p105, %p106
      %p109 = scmp.ne.s32.totalorder %s94, %s108
      %p110 = scmp.eq.s32.totalorder %s21, 0
      %p111 = por %p109, %p110
      %s113 = sadd.s32 %s112, 1
      %p116 = scmp.eq.s32.totalorder %s15, 1
      %p117 = scmp.ne.s32.totalorder %s112, %s114
      %p118 = scmp.eq.s32.totalorder %s15, 0
      %p119 = por %p117, %p118
      %p120 = scmp.ne.s32.totalorder %s112, %s114
      %p121 = scmp.eq.s32.totalorder %s20, 1
      %p122 = por %p120, %p121
      %p123 = scmp.ne.s32.totalorder %s114, %s115
      %p124 = scmp.eq.s32.totalorder %s20, 0
      %p125 = por %p123, %p124
      %p126 = scmp.ne.s32.totalorder %s114, %s115
      %p127 = scmp.eq.s32.totalorder %s21, 1
      %p128 = por %p126, %p127
      %p130 = scmp.ne.s32.totalorder %s115, %s129
      %p131 = scmp.eq.s32.totalorder %s21, 0
      %p132 = por %p130, %p131
      %s134 = sadd.s32 %s133, 1
      %p137 = scmp.eq.s32.totalorder %s15, 1
      %p138 = scmp.ne.s32.totalorder %s133, %s135
      %p139 = scmp.eq.s32.totalorder %s15, 0
      %p140 = por %p138, %p139
      %p141 = scmp.ne.s32.totalorder %s133, %s135
      %p142 = scmp.eq.s32.totalorder %s20, 1
      %p143 = por %p141, %p142
      %p144 = scmp.ne.s32.totalorder %s135, %s136
      %p145 = scmp.eq.s32.totalorder %s20, 0
      %p146 = por %p144, %p145
      %p147 = scmp.ne.s32.totalorder %s135, %s136
      %p148 = scmp.eq.s32.totalorder %s21, 1
      %p149 = por %p147, %p148
      %p151 = scmp.ne.s32.totalorder %s136, %s150
      %p152 = scmp.eq.s32.totalorder %s21, 0
      %p153 = por %p151, %p152
      %s154 = ssub.s32 %s15, %s22
      %p155 = scmp.eq.s32.totalorder %s154, 0
      %s157 = sadd.s32 %s156, 1
      %s158 = scalar_select %p155, %s156, %s157
      %p161 = pneg %p155
      %p162 = scmp.eq.s32.totalorder %s15, 1
      %p163 = por %p161, %p162
      %p164 = scmp.ne.s32.totalorder %s156, %s159
      %p165 = scmp.eq.s32.totalorder %s15, 0
      %p166 = por %p164, %p165
      %p167 = scmp.ne.s32.totalorder %s156, %s159
      %p168 = scmp.eq.s32.totalorder %s20, 1
      %p169 = por %p167, %p168
      %p170 = scmp.ne.s32.totalorder %s159, %s160
      %p171 = scmp.eq.s32.totalorder %s20, 0
      %p172 = por %p170, %p171
      %p173 = scmp.ne.s32.totalorder %s159, %s160
      %p174 = scmp.eq.s32.totalorder %s21, 1
      %p175 = por %p173, %p174
      %p177 = scmp.ne.s32.totalorder %s160, %s176
      %p178 = scmp.eq.s32.totalorder %s21, 0
      %p179 = por %p177, %p178
      %p180 = scmp.le.s32.totalorder 1, %s15
      %p181 = scmp.lt.s32.totalorder %s15, 3
      %p182 = pnand %p180, %p181
      %p183 = pneg %p182
      // Predicated region
      $region9: #{resblk_forward_nhwc.1} parent=5 // pred_check
        _
      $region10: #{resblk_forward_nhwc.1} parent=5 // pred_check_branch
        %185 = sbr.rel (%p182) target = $region12
      $region11: #{resblk_forward_nhwc.1} parent=5 // pred_region
        %s186 = ssub.s32 %s15, 1
        // Predicated region
        $region13: #{resblk_forward_nhwc.1} parent=11 // pred_check
          %p187 = pneg %p62
        $region14: #{resblk_forward_nhwc.1} parent=11 // pred_check_branch
          %189 = sbr.rel (%p187) target = $region16
        $region15: #{resblk_forward_nhwc.1} parent=11 // pred_region
          _
        $region16: #{resblk_forward_nhwc.1} parent=11 // pred_fallthru
          _
        // Predicated region
        $region17: #{resblk_forward_nhwc.1} parent=11 // pred_check
          %p190 = pneg %p83
        $region18: #{resblk_forward_nhwc.1} parent=11 // pred_check_branch
          %192 = sbr.rel (%p190) target = $region20
        $region19: #{resblk_forward_nhwc.1} parent=11 // pred_region
          _
        $region20: #{resblk_forward_nhwc.1} parent=11 // pred_fallthru
          _
        // Predicated region
        $region21: #{resblk_forward_nhwc.1} parent=11 // pred_check
          %p193 = pneg %p104
        $region22: #{resblk_forward_nhwc.1} parent=11 // pred_check_branch
          %195 = sbr.rel (%p193) target = $region24
        $region23: #{resblk_forward_nhwc.1} parent=11 // pred_region
          _
        $region24: #{resblk_forward_nhwc.1} parent=11 // pred_fallthru
          _
        // Predicated region
        $region25: #{resblk_forward_nhwc.1} parent=11 // pred_check
          %p196 = pneg %p125
        $region26: #{resblk_forward_nhwc.1} parent=11 // pred_check_branch
          %198 = sbr.rel (%p196) target = $region28
        $region27: #{resblk_forward_nhwc.1} parent=11 // pred_region
          _
        $region28: #{resblk_forward_nhwc.1} parent=11 // pred_fallthru
          _
        // Predicated region
        $region29: #{resblk_forward_nhwc.1} parent=11 // pred_check
          %p199 = pneg %p146
        $region30: #{resblk_forward_nhwc.1} parent=11 // pred_check_branch
          %201 = sbr.rel (%p199) target = $region32
        $region31: #{resblk_forward_nhwc.1} parent=11 // pred_region
          _
        $region32: #{resblk_forward_nhwc.1} parent=11 // pred_fallthru
          _
      $region12: #{resblk_forward_nhwc.1} parent=5 // pred_fallthru
        _
      %p202 = scmp.lt.s32.totalorder %s15, 2
      // Predicated region
      $region33: #{resblk_forward_nhwc.1} parent=5 // pred_check
        %p203 = pneg %p202
      $region34: #{resblk_forward_nhwc.1} parent=5 // pred_check_branch
        %205 = sbr.rel (%p203) target = $region36
      $region35: #{resblk_forward_nhwc.1} parent=5 // pred_region
        // Predicated region
        $region37: #{resblk_forward_nhwc.1} parent=35 // pred_check
          %p206 = pneg %p35
        $region38: #{resblk_forward_nhwc.1} parent=35 // pred_check_branch
          %208 = sbr.rel (%p206) target = $region40
        $region39: #{resblk_forward_nhwc.1} parent=35 // pred_region
          %p209 = scmp.lt.s32.totalorder %s15, 1
          %s210 = scalar_select %p209, %s15, 1
          %s211 = smul.addr %s210, 32
          %s212 = smul.addr %s211, 8
          %s213 = scalar_lea.vmem %s0, %s212
        $region40: #{resblk_forward_nhwc.1} parent=35 // pred_fallthru
          _
      $region36: #{resblk_forward_nhwc.1} parent=5 // pred_fallthru
        _
      %p214 = scmp.le.s32.totalorder 1, %s15
      %p215 = scmp.lt.s32.totalorder %s15, 3
      %p216 = pnand %p214, %p215
      %p217 = pneg %p216
      // Predicated region
      $region41: #{resblk_forward_nhwc.1} parent=5 // pred_check
        _
      $region42: #{resblk_forward_nhwc.1} parent=5 // pred_check_branch
        %219 = sbr.rel (%p216) target = $region44
      $region43: #{resblk_forward_nhwc.1} parent=5 // pred_region
        %s220 = ssub.s32 %s15, 1
        %p221 = scmp.lt.s32.totalorder %s20, 1
        %s222 = scalar_select %p221, %s20, 1
        %s223 = smul.addr %s222, 32
        %s224 = smul.addr %s223, 8
        %s225 = scalar_lea.vmem %s0, %s224
        %p226 = pneg %p41
        %p227 = pneg %p38
        %p228 = pneg %p62
        %p229 = pneg %p59
        %p230 = pneg %p83
        %p231 = pneg %p80
        %p232 = pneg %p104
        %p233 = pneg %p101
        %p234 = pneg %p125
        %p235 = pneg %p122
        %p236 = pneg %p146
        %p237 = pneg %p143
        %p238 = pneg %p172
        %p239 = pneg %p169
        %s240 = sand.u32 %s159, 1
        %s241 = scalar_lea.sflag [#allocation6], %s240
        %s242 = sand.u32 %s159, 1
        %s243 = smul.addr %s242, 128
        %s244 = scalar_lea.vmem [#allocation5], %s243
        %p245 = scmp.lt.s32.totalorder %s20, 1
        %s246 = scalar_select %p245, %s20, 1
        %s247 = smul.addr %s246, 32
        %s248 = smul.addr %s247, 8
        %s249 = scalar_lea.vmem %s0, %s248
        %251 = vst [vmem:[#allocation2] sm:$0xff] 0.0
        %252 = vst [vmem:[#allocation2 + $0x8] sm:$0xff] 0.0
        %253 = vst [vmem:[#allocation2 + $0x10] sm:$0x3] 0.0
        %254 = vst [vmem:[#allocation2 + $0x18] sm:$0xff] 0.0
        %255 = vst [vmem:[#allocation2 + $0x20] sm:$0xff] 0.0
        %256 = vst [vmem:[#allocation2 + $0x28] sm:$0x3] 0.0
        %257 = vst [vmem:[#allocation2 + $0x30] sm:$0xff] 0.0
        %258 = vst [vmem:[#allocation2 + $0x38] sm:$0xff] 0.0
        %259 = vst [vmem:[#allocation2 + $0x40] sm:$0x3] 0.0
        %260 = vst [vmem:[#allocation2 + $0x48] sm:$0xff] 0.0
        %261 = vst [vmem:[#allocation2 + $0x50] sm:$0xff] 0.0
        %262 = vst [vmem:[#allocation2 + $0x58] sm:$0x3] 0.0
        %263 = vst [vmem:[#allocation2 + $0x60] sm:$0xff] 0.0
        %264 = vst [vmem:[#allocation2 + $0x68] sm:$0xff] 0.0
        %265 = vst [vmem:[#allocation2 + $0x70] sm:$0x3] 0.0
        %266 = vst [vmem:[#allocation2 + $0x78] sm:$0xff] 0.0
        %267 = vst [vmem:[#allocation2 + $0x80] sm:$0xff] 0.0
        %268 = vst [vmem:[#allocation2 + $0x88] sm:$0x3] 0.0
        %269 = vst [vmem:[#allocation2 + $0x90] sm:$0xff] 0.0
        %270 = vst [vmem:[#allocation2 + $0x98] sm:$0xff] 0.0
        %271 = vst [vmem:[#allocation2 + $0xa0] sm:$0x3] 0.0
        %272 = vst [vmem:[#allocation2 + $0xa8] sm:$0xff] 0.0
        %273 = vst [vmem:[#allocation2 + $0xb0] sm:$0xff] 0.0
        %274 = vst [vmem:[#allocation2 + $0xb8] sm:$0x3] 0.0
        %275 = vst [vmem:[#allocation2 + $0xc0] sm:$0xff] 0.0
        %276 = vst [vmem:[#allocation2 + $0xc8] sm:$0xff] 0.0
        %277 = vst [vmem:[#allocation2 + $0xd0] sm:$0x3] 0.0
        %278 = vst [vmem:[#allocation2 + $0xd8] sm:$0xff] 0.0
        %279 = vst [vmem:[#allocation2 + $0xe0] sm:$0xff] 0.0
        %280 = vst [vmem:[#allocation2 + $0xe8] sm:$0x3] 0.0
        %281 = vst [vmem:[#allocation2 + $0xf0] sm:$0xff] 0.0
        %282 = vst [vmem:[#allocation2 + $0xf8] sm:$0xff] 0.0
        %283 = vst [vmem:[#allocation2 + $0x100] sm:$0x3] 0.0
        %284 = vst [vmem:[#allocation2 + $0x108] sm:$0xff] 0.0
        %285 = vst [vmem:[#allocation2 + $0x110] sm:$0xff] 0.0
        %286 = vst [vmem:[#allocation2 + $0x118] sm:$0x3] 0.0
        %287 = vst [vmem:[#allocation2 + $0x120] sm:$0xff] 0.0
        %288 = vst [vmem:[#allocation2 + $0x128] sm:$0xff] 0.0
        %289 = vst [vmem:[#allocation2 + $0x130] sm:$0x3] 0.0
        %290 = vst [vmem:[#allocation2 + $0x138] sm:$0xff] 0.0
        %291 = vst [vmem:[#allocation2 + $0x140] sm:$0xff] 0.0
        %292 = vst [vmem:[#allocation2 + $0x148] sm:$0x3] 0.0
        %293 = vst [vmem:[#allocation2 + $0x150] sm:$0xff] 0.0
        %294 = vst [vmem:[#allocation2 + $0x158] sm:$0xff] 0.0
        %295 = vst [vmem:[#allocation2 + $0x160] sm:$0x3] 0.0
        %296 = vst [vmem:[#allocation2 + $0x168] sm:$0xff] 0.0
        %297 = vst [vmem:[#allocation2 + $0x170] sm:$0xff] 0.0
        %298 = vst [vmem:[#allocation2 + $0x178] sm:$0x3] 0.0
        %299 = vst [vmem:[#allocation2 + $0x180] sm:$0xff] 0.0
        %300 = vst [vmem:[#allocation2 + $0x188] sm:$0xff] 0.0
        %301 = vst [vmem:[#allocation2 + $0x190] sm:$0x3] 0.0
        %302 = vst [vmem:[#allocation2 + $0x198] sm:$0xff] 0.0
        %303 = vst [vmem:[#allocation2 + $0x1a0] sm:$0xff] 0.0
        %304 = vst [vmem:[#allocation2 + $0x1a8] sm:$0x3] 0.0
        %v305 = vld [vmem:[%s249] sm:$0xff]
        %v306 = vld [vmem:[%s249 + $0x8] sm:$0xff]
        %v307 = vld [vmem:[%s249 + $0x10] sm:$0xff]
        %v308 = vld [vmem:[%s249 + $0x18] sm:$0xff]
        %v309 = vld [vmem:[%s249 + $0x20] sm:$0xff]
        %v310 = vld [vmem:[%s249 + $0x28] sm:$0xff]
        %v311 = vld [vmem:[%s249 + $0x30] sm:$0xff]
        %v312 = vld [vmem:[%s249 + $0x38] sm:$0xff]
        %v313 = vld [vmem:[%s249 + $0x40] sm:$0xff]
        %v314 = vld [vmem:[%s249 + $0x48] sm:$0xff]
        %v315 = vld [vmem:[%s249 + $0x50] sm:$0xff]
        %v316 = vld [vmem:[%s249 + $0x58] sm:$0xff]
        %v317 = vld [vmem:[%s249 + $0x60] sm:$0xff]
        %v318 = vld [vmem:[%s249 + $0x68] sm:$0xff]
        %v319 = vld [vmem:[%s249 + $0x70] sm:$0xff]
        %v320 = vld [vmem:[%s249 + $0x78] sm:$0xff]
        %v321 = vld [vmem:[%s249 + $0x80] sm:$0xff]
        %v322 = vld [vmem:[%s249 + $0x88] sm:$0xff]
        %v323 = vld [vmem:[%s249 + $0x90] sm:$0xff]
        %v324 = vld [vmem:[%s249 + $0x98] sm:$0xff]
        %v325 = vld [vmem:[%s249 + $0xa0] sm:$0xff]
        %v326 = vld [vmem:[%s249 + $0xa8] sm:$0xff]
        %v327 = vld [vmem:[%s249 + $0xb0] sm:$0xff]
        %v328 = vld [vmem:[%s249 + $0xb8] sm:$0xff]
        %v329 = vld [vmem:[%s249 + $0xc0] sm:$0xff]
        %v330 = vld [vmem:[%s249 + $0xc8] sm:$0xff]
        %v331 = vld [vmem:[%s249 + $0xd0] sm:$0xff]
        %v332 = vld [vmem:[%s249 + $0xd8] sm:$0xff]
        %v333 = vld [vmem:[%s249 + $0xe0] sm:$0xff]
        %v334 = vld [vmem:[%s249 + $0xe8] sm:$0xff]
        %v335 = vld [vmem:[%s249 + $0xf0] sm:$0xff]
        %v336 = vld [vmem:[%s249 + $0xf8] sm:$0xff]
        %s337 = scalar_lea.vmem [#allocation2], 24
        %338 = vst [vmem:[%s337 + $0x1] sm:$0xff] %v305
        %339 = vst [vmem:[%s337 + $0x9] sm:$0xff] %v306
        %340 = vst [vmem:[%s337 + $0x19] sm:$0xff] %v307
        %341 = vst [vmem:[%s337 + $0x21] sm:$0xff] %v308
        %342 = vst [vmem:[%s337 + $0x31] sm:$0xff] %v309
        %343 = vst [vmem:[%s337 + $0x39] sm:$0xff] %v310
        %344 = vst [vmem:[%s337 + $0x49] sm:$0xff] %v311
        %345 = vst [vmem:[%s337 + $0x51] sm:$0xff] %v312
        %346 = vst [vmem:[%s337 + $0x61] sm:$0xff] %v313
        %347 = vst [vmem:[%s337 + $0x69] sm:$0xff] %v314
        %348 = vst [vmem:[%s337 + $0x79] sm:$0xff] %v315
        %349 = vst [vmem:[%s337 + $0x81] sm:$0xff] %v316
        %350 = vst [vmem:[%s337 + $0x91] sm:$0xff] %v317
        %351 = vst [vmem:[%s337 + $0x99] sm:$0xff] %v318
        %352 = vst [vmem:[%s337 + $0xa9] sm:$0xff] %v319
        %353 = vst [vmem:[%s337 + $0xb1] sm:$0xff] %v320
        %354 = vst [vmem:[%s337 + $0xc1] sm:$0xff] %v321
        %355 = vst [vmem:[%s337 + $0xc9] sm:$0xff] %v322
        %356 = vst [vmem:[%s337 + $0xd9] sm:$0xff] %v323
        %357 = vst [vmem:[%s337 + $0xe1] sm:$0xff] %v324
        %358 = vst [vmem:[%s337 + $0xf1] sm:$0xff] %v325
        %359 = vst [vmem:[%s337 + $0xf9] sm:$0xff] %v326
        %360 = vst [vmem:[%s337 + $0x109] sm:$0xff] %v327
        %361 = vst [vmem:[%s337 + $0x111] sm:$0xff] %v328
        %362 = vst [vmem:[%s337 + $0x121] sm:$0xff] %v329
        %363 = vst [vmem:[%s337 + $0x129] sm:$0xff] %v330
        %364 = vst [vmem:[%s337 + $0x139] sm:$0xff] %v331
        %365 = vst [vmem:[%s337 + $0x141] sm:$0xff] %v332
        %366 = vst [vmem:[%s337 + $0x151] sm:$0xff] %v333
        %367 = vst [vmem:[%s337 + $0x159] sm:$0xff] %v334
        %368 = vst [vmem:[%s337 + $0x169] sm:$0xff] %v335
        %369 = vst [vmem:[%s337 + $0x171] sm:$0xff] %v336
        %v370 = vld [vmem:[#allocation2] sm:$0xff]
        %v371 = vld [vmem:[#allocation2 + $0x8] sm:$0xff]
        %v372 = vld [vmem:[#allocation2 + $0x18] sm:$0xff]
        %v373 = vld [vmem:[#allocation2 + $0x20] sm:$0xff]
        %v374 = vld [vmem:[#allocation2 + $0x30] sm:$0xff]
        %v375 = vld [vmem:[#allocation2 + $0x38] sm:$0xff]
        %v376 = vld [vmem:[#allocation2 + $0x48] sm:$0xff]
        %v377 = vld [vmem:[#allocation2 + $0x50] sm:$0xff]
        %v378 = vld [vmem:[#allocation2 + $0x60] sm:$0xff]
        %v379 = vld [vmem:[#allocation2 + $0x68] sm:$0xff]
        %v380 = vld [vmem:[#allocation2 + $0x78] sm:$0xff]
        %v381 = vld [vmem:[#allocation2 + $0x80] sm:$0xff]
        %v382 = vld [vmem:[#allocation2 + $0x90] sm:$0xff]
        %v383 = vld [vmem:[#allocation2 + $0x98] sm:$0xff]
        %v384 = vld [vmem:[#allocation2 + $0xa8] sm:$0xff]
        %v385 = vld [vmem:[#allocation2 + $0xb0] sm:$0xff]
        %v386 = vld [vmem:[#allocation2 + $0xc0] sm:$0xff]
        %v387 = vld [vmem:[#allocation2 + $0xc8] sm:$0xff]
        %v388 = vld [vmem:[#allocation2 + $0xd8] sm:$0xff]
        %v389 = vld [vmem:[#allocation2 + $0xe0] sm:$0xff]
        %v390 = vld [vmem:[#allocation2 + $0xf0] sm:$0xff]
        %v391 = vld [vmem:[#allocation2 + $0xf8] sm:$0xff]
        %v392 = vld [vmem:[#allocation2 + $0x108] sm:$0xff]
        %v393 = vld [vmem:[#allocation2 + $0x110] sm:$0xff]
        %v394 = vld [vmem:[#allocation2 + $0x120] sm:$0xff]
        %v395 = vld [vmem:[#allocation2 + $0x128] sm:$0xff]
        %v396 = vld [vmem:[#allocation2 + $0x138] sm:$0xff]
        %v397 = vld [vmem:[#allocation2 + $0x140] sm:$0xff]
        %v398 = vld [vmem:[#allocation2 + $0x150] sm:$0xff]
        %v399 = vld [vmem:[#allocation2 + $0x158] sm:$0xff]
        %v400 = vld [vmem:[#allocation2 + $0x168] sm:$0xff]
        %v401 = vld [vmem:[#allocation2 + $0x170] sm:$0xff]
        %vm402 = vcmp.ge.f32.partialorder %v370, 0.0
        %vm403 = vcmp.ge.f32.partialorder %v371, 0.0
        %vm404 = vcmp.ge.f32.partialorder %v372, 0.0
        %vm405 = vcmp.ge.f32.partialorder %v373, 0.0
        %vm406 = vcmp.ge.f32.partialorder %v374, 0.0
        %vm407 = vcmp.ge.f32.partialorder %v375, 0.0
        %vm408 = vcmp.ge.f32.partialorder %v376, 0.0
        %vm409 = vcmp.ge.f32.partialorder %v377, 0.0
        %vm410 = vcmp.ge.f32.partialorder %v378, 0.0
        %vm411 = vcmp.ge.f32.partialorder %v379, 0.0
        %vm412 = vcmp.ge.f32.partialorder %v380, 0.0
        %vm413 = vcmp.ge.f32.partialorder %v381, 0.0
        %vm414 = vcmp.ge.f32.partialorder %v382, 0.0
        %vm415 = vcmp.ge.f32.partialorder %v383, 0.0
        %vm416 = vcmp.ge.f32.partialorder %v384, 0.0
        %vm417 = vcmp.ge.f32.partialorder %v385, 0.0
        %vm418 = vcmp.ge.f32.partialorder %v386, 0.0
        %vm419 = vcmp.ge.f32.partialorder %v387, 0.0
        %vm420 = vcmp.ge.f32.partialorder %v388, 0.0
        %vm421 = vcmp.ge.f32.partialorder %v389, 0.0
        %vm422 = vcmp.ge.f32.partialorder %v390, 0.0
        %vm423 = vcmp.ge.f32.partialorder %v391, 0.0
        %vm424 = vcmp.ge.f32.partialorder %v392, 0.0
        %vm425 = vcmp.ge.f32.partialorder %v393, 0.0
        %vm426 = vcmp.ge.f32.partialorder %v394, 0.0
        %vm427 = vcmp.ge.f32.partialorder %v395, 0.0
        %vm428 = vcmp.ge.f32.partialorder %v396, 0.0
        %vm429 = vcmp.ge.f32.partialorder %v397, 0.0
        %vm430 = vcmp.ge.f32.partialorder %v398, 0.0
        %vm431 = vcmp.ge.f32.partialorder %v399, 0.0
        %vm432 = vcmp.ge.f32.partialorder %v400, 0.0
        %vm433 = vcmp.ge.f32.partialorder %v401, 0.0
        %v434 = vmul.f32 %v370, 0.2
        %v435 = vmul.f32 %v371, 0.2
        %v436 = vmul.f32 %v372, 0.2
        %v437 = vmul.f32 %v373, 0.2
        %v438 = vmul.f32 %v374, 0.2
        %v439 = vmul.f32 %v375, 0.2
        %v440 = vmul.f32 %v376, 0.2
        %v441 = vmul.f32 %v377, 0.2
        %v442 = vmul.f32 %v378, 0.2
        %v443 = vmul.f32 %v379, 0.2
        %v444 = vmul.f32 %v380, 0.2
        %v445 = vmul.f32 %v381, 0.2
        %v446 = vmul.f32 %v382, 0.2
        %v447 = vmul.f32 %v383, 0.2
        %v448 = vmul.f32 %v384, 0.2
        %v449 = vmul.f32 %v385, 0.2
        %v450 = vmul.f32 %v386, 0.2
        %v451 = vmul.f32 %v387, 0.2
        %v452 = vmul.f32 %v388, 0.2
        %v453 = vmul.f32 %v389, 0.2
        %v454 = vmul.f32 %v390, 0.2
        %v455 = vmul.f32 %v391, 0.2
        %v456 = vmul.f32 %v392, 0.2
        %v457 = vmul.f32 %v393, 0.2
        %v458 = vmul.f32 %v394, 0.2
        %v459 = vmul.f32 %v395, 0.2
        %v460 = vmul.f32 %v396, 0.2
        %v461 = vmul.f32 %v397, 0.2
        %v462 = vmul.f32 %v398, 0.2
        %v463 = vmul.f32 %v399, 0.2
        %v464 = vmul.f32 %v400, 0.2
        %v465 = vmul.f32 %v401, 0.2
        %v466 = vsel %vm402, %v370, %v434
        %v467 = vsel %vm403, %v371, %v435
        %v468 = vsel %vm404, %v372, %v436
        %v469 = vsel %vm405, %v373, %v437
        %v470 = vsel %vm406, %v374, %v438
        %v471 = vsel %vm407, %v375, %v439
        %v472 = vsel %vm408, %v376, %v440
        %v473 = vsel %vm409, %v377, %v441
        %v474 = vsel %vm410, %v378, %v442
        %v475 = vsel %vm411, %v379, %v443
        %v476 = vsel %vm412, %v380, %v444
        %v477 = vsel %vm413, %v381, %v445
        %v478 = vsel %vm414, %v382, %v446
        %v479 = vsel %vm415, %v383, %v447
        %v480 = vsel %vm416, %v384, %v448
        %v481 = vsel %vm417, %v385, %v449
        %v482 = vsel %vm418, %v386, %v450
        %v483 = vsel %vm419, %v387, %v451
        %v484 = vsel %vm420, %v388, %v452
        %v485 = vsel %vm421, %v389, %v453
        %v486 = vsel %vm422, %v390, %v454
        %v487 = vsel %vm423, %v391, %v455
        %v488 = vsel %vm424, %v392, %v456
        %v489 = vsel %vm425, %v393, %v457
        %v490 = vsel %vm426, %v394, %v458
        %v491 = vsel %vm427, %v395, %v459
        %v492 = vsel %vm428, %v396, %v460
        %v493 = vsel %vm429, %v397, %v461
        %v494 = vsel %vm430, %v398, %v462
        %v495 = vsel %vm431, %v399, %v463
        %v496 = vsel %vm432, %v400, %v464
        %v497 = vsel %vm433, %v401, %v465
        %v498 = vpack.c.bf16 %v467, %v466
        %v499 = vpack.c.bf16 %v469, %v468
        %v500 = vpack.c.bf16 %v471, %v470
        %v501 = vpack.c.bf16 %v473, %v472
        %v502 = vpack.c.bf16 %v475, %v474
        %v503 = vpack.c.bf16 %v477, %v476
        %v504 = vpack.c.bf16 %v479, %v478
        %v505 = vpack.c.bf16 %v481, %v480
        %v506 = vpack.c.bf16 %v483, %v482
        %v507 = vpack.c.bf16 %v485, %v484
        %v508 = vpack.c.bf16 %v487, %v486
        %v509 = vpack.c.bf16 %v489, %v488
        %v510 = vpack.c.bf16 %v491, %v490
        %v511 = vpack.c.bf16 %v493, %v492
        %v512 = vpack.c.bf16 %v495, %v494
        %v513 = vpack.c.bf16 %v497, %v496
        %v514 = vld [vmem:[%s1] sm:$0xf]
        %v515 = vld [vmem:[%s1 + $0x4] sm:$0xf]
        %v516 = vld [vmem:[%s1 + $0x8] sm:$0xf]
        %v517 = vld [vmem:[%s1 + $0xc] sm:$0xf]
        %v518 = vld [vmem:[%s1 + $0x10] sm:$0xf]
        %v519 = vld [vmem:[%s1 + $0x14] sm:$0xf]
        %v520 = vld [vmem:[%s1 + $0x18] sm:$0xf]
        %v521 = vld [vmem:[%s1 + $0x1c] sm:$0xf]
        %v522 = vld [vmem:[%s1 + $0x20] sm:$0xf]
        %v523 = vld [vmem:[%s1 + $0x24] sm:$0xf]
        %v524 = vld [vmem:[%s1 + $0x28] sm:$0xf]
        %v525 = vld [vmem:[%s1 + $0x2c] sm:$0xf]
        %v526 = vld [vmem:[%s1 + $0x30] sm:$0xf]
        %v527 = vld [vmem:[%s1 + $0x34] sm:$0xf]
        %v528 = vld [vmem:[%s1 + $0x38] sm:$0xf]
        %v529 = vld [vmem:[%s1 + $0x3c] sm:$0xf]
        %v530 = vld [vmem:[#allocation2 + $0x1] sm:$0xff]
        %v531 = vld [vmem:[#allocation2 + $0x9] sm:$0xff]
        %v532 = vld [vmem:[#allocation2 + $0x19] sm:$0xff]
        %v533 = vld [vmem:[#allocation2 + $0x21] sm:$0xff]
        %v534 = vld [vmem:[#allocation2 + $0x31] sm:$0xff]
        %v535 = vld [vmem:[#allocation2 + $0x39] sm:$0xff]
        %v536 = vld [vmem:[#allocation2 + $0x49] sm:$0xff]
        %v537 = vld [vmem:[#allocation2 + $0x51] sm:$0xff]
        %v538 = vld [vmem:[#allocation2 + $0x61] sm:$0xff]
        %v539 = vld [vmem:[#allocation2 + $0x69] sm:$0xff]
        %v540 = vld [vmem:[#allocation2 + $0x79] sm:$0xff]
        %v541 = vld [vmem:[#allocation2 + $0x81] sm:$0xff]
        %v542 = vld [vmem:[#allocation2 + $0x91] sm:$0xff]
        %v543 = vld [vmem:[#allocation2 + $0x99] sm:$0xff]
        %v544 = vld [vmem:[#allocation2 + $0xa9] sm:$0xff]
        %v545 = vld [vmem:[#allocation2 + $0xb1] sm:$0xff]
        %v546 = vld [vmem:[#allocation2 + $0xc1] sm:$0xff]
        %v547 = vld [vmem:[#allocation2 + $0xc9] sm:$0xff]
        %v548 = vld [vmem:[#allocation2 + $0xd9] sm:$0xff]
        %v549 = vld [vmem:[#allocation2 + $0xe1] sm:$0xff]
        %v550 = vld [vmem:[#allocation2 + $0xf1] sm:$0xff]
        %v551 = vld [vmem:[#allocation2 + $0xf9] sm:$0xff]
        %v552 = vld [vmem:[#allocation2 + $0x109] sm:$0xff]
        %v553 = vld [vmem:[#allocation2 + $0x111] sm:$0xff]
        %v554 = vld [vmem:[#allocation2 + $0x121] sm:$0xff]
        %v555 = vld [vmem:[#allocation2 + $0x129] sm:$0xff]
        %v556 = vld [vmem:[#allocation2 + $0x139] sm:$0xff]
        %v557 = vld [vmem:[#allocation2 + $0x141] sm:$0xff]
        %v558 = vld [vmem:[#allocation2 + $0x151] sm:$0xff]
        %v559 = vld [vmem:[#allocation2 + $0x159] sm:$0xff]
        %v560 = vld [vmem:[#allocation2 + $0x169] sm:$0xff]
        %v561 = vld [vmem:[#allocation2 + $0x171] sm:$0xff]
        %vm562 = vcmp.ge.f32.partialorder %v530, 0.0
        %vm563 = vcmp.ge.f32.partialorder %v531, 0.0
        %vm564 = vcmp.ge.f32.partialorder %v532, 0.0
        %vm565 = vcmp.ge.f32.partialorder %v533, 0.0
        %vm566 = vcmp.ge.f32.partialorder %v534, 0.0
        %vm567 = vcmp.ge.f32.partialorder %v535, 0.0
        %vm568 = vcmp.ge.f32.partialorder %v536, 0.0
        %vm569 = vcmp.ge.f32.partialorder %v537, 0.0
        %vm570 = vcmp.ge.f32.partialorder %v538, 0.0
        %vm571 = vcmp.ge.f32.partialorder %v539, 0.0
        %vm572 = vcmp.ge.f32.partialorder %v540, 0.0
        %vm573 = vcmp.ge.f32.partialorder %v541, 0.0
        %vm574 = vcmp.ge.f32.partialorder %v542, 0.0
        %vm575 = vcmp.ge.f32.partialorder %v543, 0.0
        %vm576 = vcmp.ge.f32.partialorder %v544, 0.0
        %vm577 = vcmp.ge.f32.partialorder %v545, 0.0
        %vm578 = vcmp.ge.f32.partialorder %v546, 0.0
        %vm579 = vcmp.ge.f32.partialorder %v547, 0.0
        %vm580 = vcmp.ge.f32.partialorder %v548, 0.0
        %vm581 = vcmp.ge.f32.partialorder %v549, 0.0
        %vm582 = vcmp.ge.f32.partialorder %v550, 0.0
        %vm583 = vcmp.ge.f32.partialorder %v551, 0.0
        %vm584 = vcmp.ge.f32.partialorder %v552, 0.0
        %vm585 = vcmp.ge.f32.partialorder %v553, 0.0
        %vm586 = vcmp.ge.f32.partialorder %v554, 0.0
        %vm587 = vcmp.ge.f32.partialorder %v555, 0.0
        %vm588 = vcmp.ge.f32.partialorder %v556, 0.0
        %vm589 = vcmp.ge.f32.partialorder %v557, 0.0
        %vm590 = vcmp.ge.f32.partialorder %v558, 0.0
        %vm591 = vcmp.ge.f32.partialorder %v559, 0.0
        %vm592 = vcmp.ge.f32.partialorder %v560, 0.0
        %vm593 = vcmp.ge.f32.partialorder %v561, 0.0
        %v594 = vmul.f32 %v530, 0.2
        %v595 = vmul.f32 %v531, 0.2
        %v596 = vmul.f32 %v532, 0.2
        %v597 = vmul.f32 %v533, 0.2
        %v598 = vmul.f32 %v534, 0.2
        %v599 = vmul.f32 %v535, 0.2
        %v600 = vmul.f32 %v536, 0.2
        %v601 = vmul.f32 %v537, 0.2
        %v602 = vmul.f32 %v538, 0.2
        %v603 = vmul.f32 %v539, 0.2
        %v604 = vmul.f32 %v540, 0.2
        %v605 = vmul.f32 %v541, 0.2
        %v606 = vmul.f32 %v542, 0.2
        %v607 = vmul.f32 %v543, 0.2
        %v608 = vmul.f32 %v544, 0.2
        %v609 = vmul.f32 %v545, 0.2
        %v610 = vmul.f32 %v546, 0.2
        %v611 = vmul.f32 %v547, 0.2
        %v612 = vmul.f32 %v548, 0.2
        %v613 = vmul.f32 %v549, 0.2
        %v614 = vmul.f32 %v550, 0.2
        %v615 = vmul.f32 %v551, 0.2
        %v616 = vmul.f32 %v552, 0.2
        %v617 = vmul.f32 %v553, 0.2
        %v618 = vmul.f32 %v554, 0.2
        %v619 = vmul.f32 %v555, 0.2
        %v620 = vmul.f32 %v556, 0.2
        %v621 = vmul.f32 %v557, 0.2
        %v622 = vmul.f32 %v558, 0.2
        %v623 = vmul.f32 %v559, 0.2
        %v624 = vmul.f32 %v560, 0.2
        %v625 = vmul.f32 %v561, 0.2
        %v626 = vsel %vm562, %v530, %v594
        %v627 = vsel %vm563, %v531, %v595
        %v628 = vsel %vm564, %v532, %v596
        %v629 = vsel %vm565, %v533, %v597
        %v630 = vsel %vm566, %v534, %v598
        %v631 = vsel %vm567, %v535, %v599
        %v632 = vsel %vm568, %v536, %v600
        %v633 = vsel %vm569, %v537, %v601
        %v634 = vsel %vm570, %v538, %v602
        %v635 = vsel %vm571, %v539, %v603
        %v636 = vsel %vm572, %v540, %v604
        %v637 = vsel %vm573, %v541, %v605
        %v638 = vsel %vm574, %v542, %v606
        %v639 = vsel %vm575, %v543, %v607
        %v640 = vsel %vm576, %v544, %v608
        %v641 = vsel %vm577, %v545, %v609
        %v642 = vsel %vm578, %v546, %v610
        %v643 = vsel %vm579, %v547, %v611
        %v644 = vsel %vm580, %v548, %v612
        %v645 = vsel %vm581, %v549, %v613
        %v646 = vsel %vm582, %v550, %v614
        %v647 = vsel %vm583, %v551, %v615
        %v648 = vsel %vm584, %v552, %v616
        %v649 = vsel %vm585, %v553, %v617
        %v650 = vsel %vm586, %v554, %v618
        %v651 = vsel %vm587, %v555, %v619
        %v652 = vsel %vm588, %v556, %v620
        %v653 = vsel %vm589, %v557, %v621
        %v654 = vsel %vm590, %v558, %v622
        %v655 = vsel %vm591, %v559, %v623
        %v656 = vsel %vm592, %v560, %v624
        %v657 = vsel %vm593, %v561, %v625
        %v658 = vpack.c.bf16 %v627, %v626
        %v659 = vpack.c.bf16 %v629, %v628
        %v660 = vpack.c.bf16 %v631, %v630
        %v661 = vpack.c.bf16 %v633, %v632
        %v662 = vpack.c.bf16 %v635, %v634
        %v663 = vpack.c.bf16 %v637, %v636
        %v664 = vpack.c.bf16 %v639, %v638
        %v665 = vpack.c.bf16 %v641, %v640
        %v666 = vpack.c.bf16 %v643, %v642
        %v667 = vpack.c.bf16 %v645, %v644
        %v668 = vpack.c.bf16 %v647, %v646
        %v669 = vpack.c.bf16 %v649, %v648
        %v670 = vpack.c.bf16 %v651, %v650
        %v671 = vpack.c.bf16 %v653, %v652
        %v672 = vpack.c.bf16 %v655, %v654
        %v673 = vpack.c.bf16 %v657, %v656
        %s674 = scalar_lea.vmem %s1, 64
        %v675 = vld [vmem:[%s674] sm:$0xf]
        %v676 = vld [vmem:[%s674 + $0x4] sm:$0xf]
        %v677 = vld [vmem:[%s674 + $0x8] sm:$0xf]
        %v678 = vld [vmem:[%s674 + $0xc] sm:$0xf]
        %v679 = vld [vmem:[%s674 + $0x10] sm:$0xf]
        %v680 = vld [vmem:[%s674 + $0x14] sm:$0xf]
        %v681 = vld [vmem:[%s674 + $0x18] sm:$0xf]
        %v682 = vld [vmem:[%s674 + $0x1c] sm:$0xf]
        %v683 = vld [vmem:[%s674 + $0x20] sm:$0xf]
        %v684 = vld [vmem:[%s674 + $0x24] sm:$0xf]
        %v685 = vld [vmem:[%s674 + $0x28] sm:$0xf]
        %v686 = vld [vmem:[%s674 + $0x2c] sm:$0xf]
        %v687 = vld [vmem:[%s674 + $0x30] sm:$0xf]
        %v688 = vld [vmem:[%s674 + $0x34] sm:$0xf]
        %v689 = vld [vmem:[%s674 + $0x38] sm:$0xf]
        %v690 = vld [vmem:[%s674 + $0x3c] sm:$0xf]
        %v707 = vunpack.c.l.b16 %v675
        %v708 = vunpack.c.l.b16 %v676
        %v709 = vunpack.c.l.b16 %v677
        %v710 = vunpack.c.l.b16 %v678
        %v711 = vunpack.c.l.b16 %v679
        %v712 = vunpack.c.l.b16 %v680
        %v713 = vunpack.c.l.b16 %v681
        %v714 = vunpack.c.l.b16 %v682
        %v715 = vunpack.c.l.b16 %v683
        %v716 = vunpack.c.l.b16 %v684
        %v717 = vunpack.c.l.b16 %v685
        %v718 = vunpack.c.l.b16 %v686
        %v719 = vunpack.c.l.b16 %v687
        %v720 = vunpack.c.l.b16 %v688
        %v721 = vunpack.c.l.b16 %v689
        %v722 = vunpack.c.l.b16 %v690
        %v723 = vpack.c.b16 %v708, %v707
        %v724 = vpack.c.b16 %v710, %v709
        %v725 = vpack.c.b16 %v712, %v711
        %v726 = vpack.c.b16 %v714, %v713
        %v727 = vpack.c.b16 %v716, %v715
        %v728 = vpack.c.b16 %v718, %v717
        %v729 = vpack.c.b16 %v720, %v719
        %v730 = vpack.c.b16 %v722, %v721
        %739 = vmatprep.subr.bf16.mxu0 0
        %740 = vmatpush1.bf16.msra.mxu0 %v730
        %741 = vmatprep.subr.bf16.mxu0 0
        %742 = vmatpush1.bf16.msra.mxu0 %v729
        %743 = vmatprep.subr.bf16.mxu0 0
        %744 = vmatpush1.bf16.msra.mxu0 %v728
        %745 = vmatprep.subr.bf16.mxu0 0
        %746 = vmatpush1.bf16.msra.mxu0 %v727
        %747 = vmatprep.subr.bf16.mxu0 0
        %748 = vmatpush1.bf16.msra.mxu0 %v726
        %749 = vmatprep.subr.bf16.mxu0 0
        %750 = vmatpush1.bf16.msra.mxu0 %v725
        %751 = vmatprep.subr.bf16.mxu0 0
        %752 = vmatpush1.bf16.msra.mxu0 %v724
        %753 = vmatprep.subr.bf16.mxu0 0
        %754 = vmatpush1.bf16.msra.mxu0 %v723
        %755 = vmatprep.subr.bf16.mxu0 0
        %756 = vmatpush2.bf16.msra.mxu0 0
        %757 = vmatprep.subr.bf16.mxu0 0
        %758 = vmatpush2.bf16.msra.mxu0 0
        %759 = vmatprep.subr.bf16.mxu0 0
        %760 = vmatpush2.bf16.msra.mxu0 0
        %761 = vmatprep.subr.bf16.mxu0 0
        %762 = vmatpush2.bf16.msra.mxu0 0
        %763 = vmatprep.subr.bf16.mxu0 0
        %764 = vmatpush2.bf16.msra.mxu0 0
        %765 = vmatprep.subr.bf16.mxu0 0
        %766 = vmatpush2.bf16.msra.mxu0 0
        %767 = vmatprep.subr.bf16.mxu0 0
        %768 = vmatpush2.bf16.msra.mxu0 0
        %769 = vmatprep.subr.bf16.mxu0 0
        %770 = vmatpush2.bf16.msra.mxu0 0
        %771 = vmatprep.mubr.bf16.mxu0 0
        %772 = vmatmul.mubr.bf16.gmra.mxu0 %v658
        %v773 = vpop.f32.mrf.mxu0
        %v774 = vadd.f32 0.0, %v773
        %v775 = vpop.f32.mrf.mxu0
        %v776 = vpop.f32.mrf.mxu0
        %v777 = vadd.f32 0.0, %v776
        %v778 = vpop.f32.mrf.mxu0
        %779 = vmatprep.mubr.bf16.mxu0 0
        %780 = vmatmul.mubr.bf16.gmra.mxu0 %v659
        %v781 = vpop.f32.mrf.mxu0
        %v782 = vadd.f32 0.0, %v781
        %v783 = vpop.f32.mrf.mxu0
        %v784 = vpop.f32.mrf.mxu0
        %v785 = vadd.f32 0.0, %v784
        %v786 = vpop.f32.mrf.mxu0
        %787 = vmatprep.mubr.bf16.mxu0 0
        %788 = vmatmul.mubr.bf16.gmra.mxu0 %v660
        %v789 = vpop.f32.mrf.mxu0
        %v790 = vadd.f32 0.0, %v789
        %v791 = vpop.f32.mrf.mxu0
        %v792 = vpop.f32.mrf.mxu0
        %v793 = vadd.f32 0.0, %v792
        %v794 = vpop.f32.mrf.mxu0
        %795 = vmatprep.mubr.bf16.mxu0 0
        %796 = vmatmul.mubr.bf16.gmra.mxu0 %v661
        %v797 = vpop.f32.mrf.mxu0
        %v798 = vadd.f32 0.0, %v797
        %v799 = vpop.f32.mrf.mxu0
        %v800 = vpop.f32.mrf.mxu0
        %v801 = vadd.f32 0.0, %v800
        %v802 = vpop.f32.mrf.mxu0
        %803 = vmatprep.mubr.bf16.mxu0 0
        %804 = vmatmul.mubr.bf16.gmra.mxu0 %v662
        %v805 = vpop.f32.mrf.mxu0
        %v806 = vadd.f32 0.0, %v805
        %v807 = vpop.f32.mrf.mxu0
        %v808 = vpop.f32.mrf.mxu0
        %v809 = vadd.f32 0.0, %v808
        %v810 = vpop.f32.mrf.mxu0
        %811 = vmatprep.mubr.bf16.mxu0 0
        %812 = vmatmul.mubr.bf16.gmra.mxu0 %v663
        %v813 = vpop.f32.mrf.mxu0
        %v814 = vadd.f32 0.0, %v813
        %v815 = vpop.f32.mrf.mxu0
        %v816 = vpop.f32.mrf.mxu0
        %v817 = vadd.f32 0.0, %v816
        %v818 = vpop.f32.mrf.mxu0
        %819 = vmatprep.mubr.bf16.mxu0 0
        %820 = vmatmul.mubr.bf16.gmra.mxu0 %v664
        %v821 = vpop.f32.mrf.mxu0
        %v822 = vadd.f32 0.0, %v821
        %v823 = vpop.f32.mrf.mxu0
        %v824 = vpop.f32.mrf.mxu0
        %v825 = vadd.f32 0.0, %v824
        %v826 = vpop.f32.mrf.mxu0
        %827 = vmatprep.mubr.bf16.mxu0 0
        %828 = vmatmul.mubr.bf16.gmra.mxu0 %v665
        %v829 = vpop.f32.mrf.mxu0
        %v830 = vadd.f32 0.0, %v829
        %v831 = vpop.f32.mrf.mxu0
        %v832 = vpop.f32.mrf.mxu0
        %v833 = vadd.f32 0.0, %v832
        %v834 = vpop.f32.mrf.mxu0
        %835 = vmatprep.mubr.bf16.mxu0 0
        %836 = vmatmul.mubr.bf16.gmra.mxu0 %v666
        %v837 = vpop.f32.mrf.mxu0
        %v838 = vadd.f32 0.0, %v837
        %v839 = vpop.f32.mrf.mxu0
        %v840 = vpop.f32.mrf.mxu0
        %v841 = vadd.f32 0.0, %v840
        %v842 = vpop.f32.mrf.mxu0
        %843 = vmatprep.mubr.bf16.mxu0 0
        %844 = vmatmul.mubr.bf16.gmra.mxu0 %v667
        %v845 = vpop.f32.mrf.mxu0
        %v846 = vadd.f32 0.0, %v845
        %v847 = vpop.f32.mrf.mxu0
        %v848 = vpop.f32.mrf.mxu0
        %v849 = vadd.f32 0.0, %v848
        %v850 = vpop.f32.mrf.mxu0
        %851 = vmatprep.mubr.bf16.mxu0 0
        %852 = vmatmul.mubr.bf16.gmra.mxu0 %v668
        %v853 = vpop.f32.mrf.mxu0
        %v854 = vadd.f32 0.0, %v853
        %v855 = vpop.f32.mrf.mxu0
        %v856 = vpop.f32.mrf.mxu0
        %v857 = vadd.f32 0.0, %v856
        %v858 = vpop.f32.mrf.mxu0
        %859 = vmatprep.mubr.bf16.mxu0 0
        %860 = vmatmul.mubr.bf16.gmra.mxu0 %v669
        %v861 = vpop.f32.mrf.mxu0
        %v862 = vadd.f32 0.0, %v861
        %v863 = vpop.f32.mrf.mxu0
        %v864 = vpop.f32.mrf.mxu0
        %v865 = vadd.f32 0.0, %v864
        %v866 = vpop.f32.mrf.mxu0
        %867 = vmatprep.mubr.bf16.mxu0 0
        %868 = vmatmul.mubr.bf16.gmra.mxu0 %v670
        %v869 = vpop.f32.mrf.mxu0
        %v870 = vadd.f32 0.0, %v869
        %v871 = vpop.f32.mrf.mxu0
        %v872 = vpop.f32.mrf.mxu0
        %v873 = vadd.f32 0.0, %v872
        %v874 = vpop.f32.mrf.mxu0
        %875 = vmatprep.mubr.bf16.mxu0 0
        %876 = vmatmul.mubr.bf16.gmra.mxu0 %v671
        %v877 = vpop.f32.mrf.mxu0
        %v878 = vadd.f32 0.0, %v877
        %v879 = vpop.f32.mrf.mxu0
        %v880 = vpop.f32.mrf.mxu0
        %v881 = vadd.f32 0.0, %v880
        %v882 = vpop.f32.mrf.mxu0
        %883 = vmatprep.mubr.bf16.mxu0 0
        %884 = vmatmul.mubr.bf16.gmra.mxu0 %v672
        %v885 = vpop.f32.mrf.mxu0
        %v886 = vadd.f32 0.0, %v885
        %v887 = vpop.f32.mrf.mxu0
        %v888 = vpop.f32.mrf.mxu0
        %v889 = vadd.f32 0.0, %v888
        %v890 = vpop.f32.mrf.mxu0
        %891 = vmatprep.mubr.bf16.mxu0 0
        %892 = vmatmul.mubr.bf16.gmra.mxu0 %v673
        %v893 = vpop.f32.mrf.mxu0
        %v894 = vadd.f32 0.0, %v893
        %v895 = vpop.f32.mrf.mxu0
        %v896 = vpop.f32.mrf.mxu0
        %v897 = vadd.f32 0.0, %v896
        %v898 = vpop.f32.mrf.mxu0
        %899 = vdwg.mxu0
        %v916 = vunpack.c.l.b16 %v514
        %v917 = vunpack.c.l.b16 %v515
        %v918 = vunpack.c.l.b16 %v516
        %v919 = vunpack.c.l.b16 %v517
        %v920 = vunpack.c.l.b16 %v518
        %v921 = vunpack.c.l.b16 %v519
        %v922 = vunpack.c.l.b16 %v520
        %v923 = vunpack.c.l.b16 %v521
        %v924 = vunpack.c.l.b16 %v522
        %v925 = vunpack.c.l.b16 %v523
        %v926 = vunpack.c.l.b16 %v524
        %v927 = vunpack.c.l.b16 %v525
        %v928 = vunpack.c.l.b16 %v526
        %v929 = vunpack.c.l.b16 %v527
        %v930 = vunpack.c.l.b16 %v528
        %v931 = vunpack.c.l.b16 %v529
        %v932 = vpack.c.b16 %v917, %v916
        %v933 = vpack.c.b16 %v919, %v918
        %v934 = vpack.c.b16 %v921, %v920
        %v935 = vpack.c.b16 %v923, %v922
        %v936 = vpack.c.b16 %v925, %v924
        %v937 = vpack.c.b16 %v927, %v926
        %v938 = vpack.c.b16 %v929, %v928
        %v939 = vpack.c.b16 %v931, %v930
        %948 = vmatprep.subr.bf16.mxu0 0
        %949 = vmatpush1.bf16.msra.mxu0 %v939
        %950 = vmatprep.subr.bf16.mxu0 0
        %951 = vmatpush1.bf16.msra.mxu0 %v938
        %952 = vmatprep.subr.bf16.mxu0 0
        %953 = vmatpush1.bf16.msra.mxu0 %v937
        %954 = vmatprep.subr.bf16.mxu0 0
        %955 = vmatpush1.bf16.msra.mxu0 %v936
        %956 = vmatprep.subr.bf16.mxu0 0
        %957 = vmatpush1.bf16.msra.mxu0 %v935
        %958 = vmatprep.subr.bf16.mxu0 0
        %959 = vmatpush1.bf16.msra.mxu0 %v934
        %960 = vmatprep.subr.bf16.mxu0 0
        %961 = vmatpush1.bf16.msra.mxu0 %v933
        %962 = vmatprep.subr.bf16.mxu0 0
        %963 = vmatpush1.bf16.msra.mxu0 %v932
        %964 = vmatprep.subr.bf16.mxu0 0
        %965 = vmatpush2.bf16.msra.mxu0 0
        %966 = vmatprep.subr.bf16.mxu0 0
        %967 = vmatpush2.bf16.msra.mxu0 0
        %968 = vmatprep.subr.bf16.mxu0 0
        %969 = vmatpush2.bf16.msra.mxu0 0
        %970 = vmatprep.subr.bf16.mxu0 0
        %971 = vmatpush2.bf16.msra.mxu0 0
        %972 = vmatprep.subr.bf16.mxu0 0
        %973 = vmatpush2.bf16.msra.mxu0 0
        %974 = vmatprep.subr.bf16.mxu0 0
        %975 = vmatpush2.bf16.msra.mxu0 0
        %976 = vmatprep.subr.bf16.mxu0 0
        %977 = vmatpush2.bf16.msra.mxu0 0
        %978 = vmatprep.subr.bf16.mxu0 0
        %979 = vmatpush2.bf16.msra.mxu0 0
        %980 = vmatprep.mubr.bf16.mxu0 0
        %981 = vmatmul.mubr.bf16.gmra.mxu0 %v498
        %v982 = vpop.f32.mrf.mxu0
        %v983 = vadd.f32 %v774, %v982
        %v984 = vpop.f32.mrf.mxu0
        %v985 = vpop.f32.mrf.mxu0
        %v986 = vadd.f32 %v777, %v985
        %v987 = vpop.f32.mrf.mxu0
        %988 = vmatprep.mubr.bf16.mxu0 0
        %989 = vmatmul.mubr.bf16.gmra.mxu0 %v499
        %v990 = vpop.f32.mrf.mxu0
        %v991 = vadd.f32 %v782, %v990
        %v992 = vpop.f32.mrf.mxu0
        %v993 = vpop.f32.mrf.mxu0
        %v994 = vadd.f32 %v785, %v993
        %v995 = vpop.f32.mrf.mxu0
        %996 = vmatprep.mubr.bf16.mxu0 0
        %997 = vmatmul.mubr.bf16.gmra.mxu0 %v500
        %v998 = vpop.f32.mrf.mxu0
        %v999 = vadd.f32 %v790, %v998
        %v1000 = vpop.f32.mrf.mxu0
        %v1001 = vpop.f32.mrf.mxu0
        %v1002 = vadd.f32 %v793, %v1001
        %v1003 = vpop.f32.mrf.mxu0
        %1004 = vmatprep.mubr.bf16.mxu0 0
        %1005 = vmatmul.mubr.bf16.gmra.mxu0 %v501
        %v1006 = vpop.f32.mrf.mxu0
        %v1007 = vadd.f32 %v798, %v1006
        %v1008 = vpop.f32.mrf.mxu0
        %v1009 = vpop.f32.mrf.mxu0
        %v1010 = vadd.f32 %v801, %v1009
        %v1011 = vpop.f32.mrf.mxu0
        %1012 = vmatprep.mubr.bf16.mxu0 0
        %1013 = vmatmul.mubr.bf16.gmra.mxu0 %v502
        %v1014 = vpop.f32.mrf.mxu0
        %v1015 = vadd.f32 %v806, %v1014
        %v1016 = vpop.f32.mrf.mxu0
        %v1017 = vpop.f32.mrf.mxu0
        %v1018 = vadd.f32 %v809, %v1017
        %v1019 = vpop.f32.mrf.mxu0
        %1020 = vmatprep.mubr.bf16.mxu0 0
        %1021 = vmatmul.mubr.bf16.gmra.mxu0 %v503
        %v1022 = vpop.f32.mrf.mxu0
        %v1023 = vadd.f32 %v814, %v1022
        %v1024 = vpop.f32.mrf.mxu0
        %v1025 = vpop.f32.mrf.mxu0
        %v1026 = vadd.f32 %v817, %v1025
        %v1027 = vpop.f32.mrf.mxu0
        %1028 = vmatprep.mubr.bf16.mxu0 0
        %1029 = vmatmul.mubr.bf16.gmra.mxu0 %v504
        %v1030 = vpop.f32.mrf.mxu0
        %v1031 = vadd.f32 %v822, %v1030
        %v1032 = vpop.f32.mrf.mxu0
        %v1033 = vpop.f32.mrf.mxu0
        %v1034 = vadd.f32 %v825, %v1033
        %v1035 = vpop.f32.mrf.mxu0
        %1036 = vmatprep.mubr.bf16.mxu0 0
        %1037 = vmatmul.mubr.bf16.gmra.mxu0 %v505
        %v1038 = vpop.f32.mrf.mxu0
        %v1039 = vadd.f32 %v830, %v1038
        %v1040 = vpop.f32.mrf.mxu0
        %v1041 = vpop.f32.mrf.mxu0
        %v1042 = vadd.f32 %v833, %v1041
        %v1043 = vpop.f32.mrf.mxu0
        %1044 = vmatprep.mubr.bf16.mxu0 0
        %1045 = vmatmul.mubr.bf16.gmra.mxu0 %v506
        %v1046 = vpop.f32.mrf.mxu0
        %v1047 = vadd.f32 %v838, %v1046
        %v1048 = vpop.f32.mrf.mxu0
        %v1049 = vpop.f32.mrf.mxu0
        %v1050 = vadd.f32 %v841, %v1049
        %v1051 = vpop.f32.mrf.mxu0
        %1052 = vmatprep.mubr.bf16.mxu0 0
        %1053 = vmatmul.mubr.bf16.gmra.mxu0 %v507
        %v1054 = vpop.f32.mrf.mxu0
        %v1055 = vadd.f32 %v846, %v1054
        %v1056 = vpop.f32.mrf.mxu0
        %v1057 = vpop.f32.mrf.mxu0
        %v1058 = vadd.f32 %v849, %v1057
        %v1059 = vpop.f32.mrf.mxu0
        %1060 = vmatprep.mubr.bf16.mxu0 0
        %1061 = vmatmul.mubr.bf16.gmra.mxu0 %v508
        %v1062 = vpop.f32.mrf.mxu0
        %v1063 = vadd.f32 %v854, %v1062
        %v1064 = vpop.f32.mrf.mxu0
        %v1065 = vpop.f32.mrf.mxu0
        %v1066 = vadd.f32 %v857, %v1065
        %v1067 = vpop.f32.mrf.mxu0
        %1068 = vmatprep.mubr.bf16.mxu0 0
        %1069 = vmatmul.mubr.bf16.gmra.mxu0 %v509
        %v1070 = vpop.f32.mrf.mxu0
        %v1071 = vadd.f32 %v862, %v1070
        %v1072 = vpop.f32.mrf.mxu0
        %v1073 = vpop.f32.mrf.mxu0
        %v1074 = vadd.f32 %v865, %v1073
        %v1075 = vpop.f32.mrf.mxu0
        %1076 = vmatprep.mubr.bf16.mxu0 0
        %1077 = vmatmul.mubr.bf16.gmra.mxu0 %v510
        %v1078 = vpop.f32.mrf.mxu0
        %v1079 = vadd.f32 %v870, %v1078
        %v1080 = vpop.f32.mrf.mxu0
        %v1081 = vpop.f32.mrf.mxu0
        %v1082 = vadd.f32 %v873, %v1081
        %v1083 = vpop.f32.mrf.mxu0
        %1084 = vmatprep.mubr.bf16.mxu0 0
        %1085 = vmatmul.mubr.bf16.gmra.mxu0 %v511
        %v1086 = vpop.f32.mrf.mxu0
        %v1087 = vadd.f32 %v878, %v1086
        %v1088 = vpop.f32.mrf.mxu0
        %v1089 = vpop.f32.mrf.mxu0
        %v1090 = vadd.f32 %v881, %v1089
        %v1091 = vpop.f32.mrf.mxu0
        %1092 = vmatprep.mubr.bf16.mxu0 0
        %1093 = vmatmul.mubr.bf16.gmra.mxu0 %v512
        %v1094 = vpop.f32.mrf.mxu0
        %v1095 = vadd.f32 %v886, %v1094
        %v1096 = vpop.f32.mrf.mxu0
        %v1097 = vpop.f32.mrf.mxu0
        %v1098 = vadd.f32 %v889, %v1097
        %v1099 = vpop.f32.mrf.mxu0
        %1100 = vmatprep.mubr.bf16.mxu0 0
        %1101 = vmatmul.mubr.bf16.gmra.mxu0 %v513
        %v1102 = vpop.f32.mrf.mxu0
        %v1103 = vadd.f32 %v894, %v1102
        %v1104 = vpop.f32.mrf.mxu0
        %v1105 = vpop.f32.mrf.mxu0
        %v1106 = vadd.f32 %v897, %v1105
        %v1107 = vpop.f32.mrf.mxu0
        %1108 = vdwg.mxu0
        %v1109 = vld [vmem:[#allocation2 + $0x2] sm:$0xff]
        %v1110 = vld [vmem:[#allocation2 + $0xa] sm:$0xff]
        %v1111 = vld [vmem:[#allocation2 + $0x1a] sm:$0xff]
        %v1112 = vld [vmem:[#allocation2 + $0x22] sm:$0xff]
        %v1113 = vld [vmem:[#allocation2 + $0x32] sm:$0xff]
        %v1114 = vld [vmem:[#allocation2 + $0x3a] sm:$0xff]
        %v1115 = vld [vmem:[#allocation2 + $0x4a] sm:$0xff]
        %v1116 = vld [vmem:[#allocation2 + $0x52] sm:$0xff]
        %v1117 = vld [vmem:[#allocation2 + $0x62] sm:$0xff]
        %v1118 = vld [vmem:[#allocation2 + $0x6a] sm:$0xff]
        %v1119 = vld [vmem:[#allocation2 + $0x7a] sm:$0xff]
        %v1120 = vld [vmem:[#allocation2 + $0x82] sm:$0xff]
        %v1121 = vld [vmem:[#allocation2 + $0x92] sm:$0xff]
        %v1122 = vld [vmem:[#allocation2 + $0x9a] sm:$0xff]
        %v1123 = vld [vmem:[#allocation2 + $0xaa] sm:$0xff]
        %v1124 = vld [vmem:[#allocation2 + $0xb2] sm:$0xff]
        %v1125 = vld [vmem:[#allocation2 + $0xc2] sm:$0xff]
        %v1126 = vld [vmem:[#allocation2 + $0xca] sm:$0xff]
        %v1127 = vld [vmem:[#allocation2 + $0xda] sm:$0xff]
        %v1128 = vld [vmem:[#allocation2 + $0xe2] sm:$0xff]
        %v1129 = vld [vmem:[#allocation2 + $0xf2] sm:$0xff]
        %v1130 = vld [vmem:[#allocation2 + $0xfa] sm:$0xff]
        %v1131 = vld [vmem:[#allocation2 + $0x10a] sm:$0xff]
        %v1132 = vld [vmem:[#allocation2 + $0x112] sm:$0xff]
        %v1133 = vld [vmem:[#allocation2 + $0x122] sm:$0xff]
        %v1134 = vld [vmem:[#allocation2 + $0x12a] sm:$0xff]
        %v1135 = vld [vmem:[#allocation2 + $0x13a] sm:$0xff]
        %v1136 = vld [vmem:[#allocation2 + $0x142] sm:$0xff]
        %v1137 = vld [vmem:[#allocation2 + $0x152] sm:$0xff]
        %v1138 = vld [vmem:[#allocation2 + $0x15a] sm:$0xff]
        %v1139 = vld [vmem:[#allocation2 + $0x16a] sm:$0xff]
        %v1140 = vld [vmem:[#allocation2 + $0x172] sm:$0xff]
        %vm1141 = vcmp.ge.f32.partialorder %v1109, 0.0
        %vm1142 = vcmp.ge.f32.partialorder %v1110, 0.0
        %vm1143 = vcmp.ge.f32.partialorder %v1111, 0.0
        %vm1144 = vcmp.ge.f32.partialorder %v1112, 0.0
        %vm1145 = vcmp.ge.f32.partialorder %v1113, 0.0
        %vm1146 = vcmp.ge.f32.partialorder %v1114, 0.0
        %vm1147 = vcmp.ge.f32.partialorder %v1115, 0.0
        %vm1148 = vcmp.ge.f32.partialorder %v1116, 0.0
        %vm1149 = vcmp.ge.f32.partialorder %v1117, 0.0
        %vm1150 = vcmp.ge.f32.partialorder %v1118, 0.0
        %vm1151 = vcmp.ge.f32.partialorder %v1119, 0.0
        %vm1152 = vcmp.ge.f32.partialorder %v1120, 0.0
        %vm1153 = vcmp.ge.f32.partialorder %v1121, 0.0
        %vm1154 = vcmp.ge.f32.partialorder %v1122, 0.0
        %vm1155 = vcmp.ge.f32.partialorder %v1123, 0.0
        %vm1156 = vcmp.ge.f32.partialorder %v1124, 0.0
        %vm1157 = vcmp.ge.f32.partialorder %v1125, 0.0
        %vm1158 = vcmp.ge.f32.partialorder %v1126, 0.0
        %vm1159 = vcmp.ge.f32.partialorder %v1127, 0.0
        %vm1160 = vcmp.ge.f32.partialorder %v1128, 0.0
        %vm1161 = vcmp.ge.f32.partialorder %v1129, 0.0
        %vm1162 = vcmp.ge.f32.partialorder %v1130, 0.0
        %vm1163 = vcmp.ge.f32.partialorder %v1131, 0.0
        %vm1164 = vcmp.ge.f32.partialorder %v1132, 0.0
        %vm1165 = vcmp.ge.f32.partialorder %v1133, 0.0
        %vm1166 = vcmp.ge.f32.partialorder %v1134, 0.0
        %vm1167 = vcmp.ge.f32.partialorder %v1135, 0.0
        %vm1168 = vcmp.ge.f32.partialorder %v1136, 0.0
        %vm1169 = vcmp.ge.f32.partialorder %v1137, 0.0
        %vm1170 = vcmp.ge.f32.partialorder %v1138, 0.0
        %vm1171 = vcmp.ge.f32.partialorder %v1139, 0.0
        %vm1172 = vcmp.ge.f32.partialorder %v1140, 0.0
        %v1173 = vmul.f32 %v1109, 0.2
        %v1174 = vmul.f32 %v1110, 0.2
        %v1175 = vmul.f32 %v1111, 0.2
        %v1176 = vmul.f32 %v1112, 0.2
        %v1177 = vmul.f32 %v1113, 0.2
        %v1178 = vmul.f32 %v1114, 0.2
        %v1179 = vmul.f32 %v1115, 0.2
        %v1180 = vmul.f32 %v1116, 0.2
        %v1181 = vmul.f32 %v1117, 0.2
        %v1182 = vmul.f32 %v1118, 0.2
        %v1183 = vmul.f32 %v1119, 0.2
        %v1184 = vmul.f32 %v1120, 0.2
        %v1185 = vmul.f32 %v1121, 0.2
        %v1186 = vmul.f32 %v1122, 0.2
        %v1187 = vmul.f32 %v1123, 0.2
        %v1188 = vmul.f32 %v1124, 0.2
        %v1189 = vmul.f32 %v1125, 0.2
        %v1190 = vmul.f32 %v1126, 0.2
        %v1191 = vmul.f32 %v1127, 0.2
        %v1192 = vmul.f32 %v1128, 0.2
        %v1193 = vmul.f32 %v1129, 0.2
        %v1194 = vmul.f32 %v1130, 0.2
        %v1195 = vmul.f32 %v1131, 0.2
        %v1196 = vmul.f32 %v1132, 0.2
        %v1197 = vmul.f32 %v1133, 0.2
        %v1198 = vmul.f32 %v1134, 0.2
        %v1199 = vmul.f32 %v1135, 0.2
        %v1200 = vmul.f32 %v1136, 0.2
        %v1201 = vmul.f32 %v1137, 0.2
        %v1202 = vmul.f32 %v1138, 0.2
        %v1203 = vmul.f32 %v1139, 0.2
        %v1204 = vmul.f32 %v1140, 0.2
        %v1205 = vsel %vm1141, %v1109, %v1173
        %v1206 = vsel %vm1142, %v1110, %v1174
        %v1207 = vsel %vm1143, %v1111, %v1175
        %v1208 = vsel %vm1144, %v1112, %v1176
        %v1209 = vsel %vm1145, %v1113, %v1177
        %v1210 = vsel %vm1146, %v1114, %v1178
        %v1211 = vsel %vm1147, %v1115, %v1179
        %v1212 = vsel %vm1148, %v1116, %v1180
        %v1213 = vsel %vm1149, %v1117, %v1181
        %v1214 = vsel %vm1150, %v1118, %v1182
        %v1215 = vsel %vm1151, %v1119, %v1183
        %v1216 = vsel %vm1152, %v1120, %v1184
        %v1217 = vsel %vm1153, %v1121, %v1185
        %v1218 = vsel %vm1154, %v1122, %v1186
        %v1219 = vsel %vm1155, %v1123, %v1187
        %v1220 = vsel %vm1156, %v1124, %v1188
        %v1221 = vsel %vm1157, %v1125, %v1189
        %v1222 = vsel %vm1158, %v1126, %v1190
        %v1223 = vsel %vm1159, %v1127, %v1191
        %v1224 = vsel %vm1160, %v1128, %v1192
        %v1225 = vsel %vm1161, %v1129, %v1193
        %v1226 = vsel %vm1162, %v1130, %v1194
        %v1227 = vsel %vm1163, %v1131, %v1195
        %v1228 = vsel %vm1164, %v1132, %v1196
        %v1229 = vsel %vm1165, %v1133, %v1197
        %v1230 = vsel %vm1166, %v1134, %v1198
        %v1231 = vsel %vm1167, %v1135, %v1199
        %v1232 = vsel %vm1168, %v1136, %v1200
        %v1233 = vsel %vm1169, %v1137, %v1201
        %v1234 = vsel %vm1170, %v1138, %v1202
        %v1235 = vsel %vm1171, %v1139, %v1203
        %v1236 = vsel %vm1172, %v1140, %v1204
        %v1237 = vpack.c.bf16 %v1206, %v1205
        %v1238 = vpack.c.bf16 %v1208, %v1207
        %v1239 = vpack.c.bf16 %v1210, %v1209
        %v1240 = vpack.c.bf16 %v1212, %v1211
        %v1241 = vpack.c.bf16 %v1214, %v1213
        %v1242 = vpack.c.bf16 %v1216, %v1215
        %v1243 = vpack.c.bf16 %v1218, %v1217
        %v1244 = vpack.c.bf16 %v1220, %v1219
        %v1245 = vpack.c.bf16 %v1222, %v1221
        %v1246 = vpack.c.bf16 %v1224, %v1223
        %v1247 = vpack.c.bf16 %v1226, %v1225
        %v1248 = vpack.c.bf16 %v1228, %v1227
        %v1249 = vpack.c.bf16 %v1230, %v1229
        %v1250 = vpack.c.bf16 %v1232, %v1231
        %v1251 = vpack.c.bf16 %v1234, %v1233
        %v1252 = vpack.c.bf16 %v1236, %v1235
        %s1253 = scalar_lea.vmem %s1, 128
        %v1254 = vld [vmem:[%s1253] sm:$0xf]
        %v1255 = vld [vmem:[%s1253 + $0x4] sm:$0xf]
        %v1256 = vld [vmem:[%s1253 + $0x8] sm:$0xf]
        %v1257 = vld [vmem:[%s1253 + $0xc] sm:$0xf]
        %v1258 = vld [vmem:[%s1253 + $0x10] sm:$0xf]
        %v1259 = vld [vmem:[%s1253 + $0x14] sm:$0xf]
        %v1260 = vld [vmem:[%s1253 + $0x18] sm:$0xf]
        %v1261 = vld [vmem:[%s1253 + $0x1c] sm:$0xf]
        %v1262 = vld [vmem:[%s1253 + $0x20] sm:$0xf]
        %v1263 = vld [vmem:[%s1253 + $0x24] sm:$0xf]
        %v1264 = vld [vmem:[%s1253 + $0x28] sm:$0xf]
        %v1265 = vld [vmem:[%s1253 + $0x2c] sm:$0xf]
        %v1266 = vld [vmem:[%s1253 + $0x30] sm:$0xf]
        %v1267 = vld [vmem:[%s1253 + $0x34] sm:$0xf]
        %v1268 = vld [vmem:[%s1253 + $0x38] sm:$0xf]
        %v1269 = vld [vmem:[%s1253 + $0x3c] sm:$0xf]
        %v1286 = vunpack.c.l.b16 %v1254
        %v1287 = vunpack.c.l.b16 %v1255
        %v1288 = vunpack.c.l.b16 %v1256
        %v1289 = vunpack.c.l.b16 %v1257
        %v1290 = vunpack.c.l.b16 %v1258
        %v1291 = vunpack.c.l.b16 %v1259
        %v1292 = vunpack.c.l.b16 %v1260
        %v1293 = vunpack.c.l.b16 %v1261
        %v1294 = vunpack.c.l.b16 %v1262
        %v1295 = vunpack.c.l.b16 %v1263
        %v1296 = vunpack.c.l.b16 %v1264
        %v1297 = vunpack.c.l.b16 %v1265
        %v1298 = vunpack.c.l.b16 %v1266
        %v1299 = vunpack.c.l.b16 %v1267
        %v1300 = vunpack.c.l.b16 %v1268
        %v1301 = vunpack.c.l.b16 %v1269
        %v1302 = vpack.c.b16 %v1287, %v1286
        %v1303 = vpack.c.b16 %v1289, %v1288
        %v1304 = vpack.c.b16 %v1291, %v1290
        %v1305 = vpack.c.b16 %v1293, %v1292
        %v1306 = vpack.c.b16 %v1295, %v1294
        %v1307 = vpack.c.b16 %v1297, %v1296
        %v1308 = vpack.c.b16 %v1299, %v1298
        %v1309 = vpack.c.b16 %v1301, %v1300
        %1318 = vmatprep.subr.bf16.mxu0 0
        %1319 = vmatpush1.bf16.msra.mxu0 %v1309
        %1320 = vmatprep.subr.bf16.mxu0 0
        %1321 = vmatpush1.bf16.msra.mxu0 %v1308
        %1322 = vmatprep.subr.bf16.mxu0 0
        %1323 = vmatpush1.bf16.msra.mxu0 %v1307
        %1324 = vmatprep.subr.bf16.mxu0 0
        %1325 = vmatpush1.bf16.msra.mxu0 %v1306
        %1326 = vmatprep.subr.bf16.mxu0 0
        %1327 = vmatpush1.bf16.msra.mxu0 %v1305
        %1328 = vmatprep.subr.bf16.mxu0 0
        %1329 = vmatpush1.bf16.msra.mxu0 %v1304
        %1330 = vmatprep.subr.bf16.mxu0 0
        %1331 = vmatpush1.bf16.msra.mxu0 %v1303
        %1332 = vmatprep.subr.bf16.mxu0 0
        %1333 = vmatpush1.bf16.msra.mxu0 %v1302
        %1334 = vmatprep.subr.bf16.mxu0 0
        %1335 = vmatpush2.bf16.msra.mxu0 0
        %1336 = vmatprep.subr.bf16.mxu0 0
        %1337 = vmatpush2.bf16.msra.mxu0 0
        %1338 = vmatprep.subr.bf16.mxu0 0
        %1339 = vmatpush2.bf16.msra.mxu0 0
        %1340 = vmatprep.subr.bf16.mxu0 0
        %1341 = vmatpush2.bf16.msra.mxu0 0
        %1342 = vmatprep.subr.bf16.mxu0 0
        %1343 = vmatpush2.bf16.msra.mxu0 0
        %1344 = vmatprep.subr.bf16.mxu0 0
        %1345 = vmatpush2.bf16.msra.mxu0 0
        %1346 = vmatprep.subr.bf16.mxu0 0
        %1347 = vmatpush2.bf16.msra.mxu0 0
        %1348 = vmatprep.subr.bf16.mxu0 0
        %1349 = vmatpush2.bf16.msra.mxu0 0
        %1350 = vmatprep.mubr.bf16.mxu0 0
        %1351 = vmatmul.mubr.bf16.gmra.mxu0 %v1237
        %v1352 = vpop.f32.mrf.mxu0
        %v1353 = vadd.f32 0.0, %v1352
        %v1354 = vpop.f32.mrf.mxu0
        %v1355 = vpop.f32.mrf.mxu0
        %v1356 = vadd.f32 0.0, %v1355
        %v1357 = vpop.f32.mrf.mxu0
        %1358 = vmatprep.mubr.bf16.mxu0 0
        %1359 = vmatmul.mubr.bf16.gmra.mxu0 %v1238
        %v1360 = vpop.f32.mrf.mxu0
        %v1361 = vadd.f32 0.0, %v1360
        %v1362 = vpop.f32.mrf.mxu0
        %v1363 = vpop.f32.mrf.mxu0
        %v1364 = vadd.f32 0.0, %v1363
        %v1365 = vpop.f32.mrf.mxu0
        %1366 = vmatprep.mubr.bf16.mxu0 0
        %1367 = vmatmul.mubr.bf16.gmra.mxu0 %v1239
        %v1368 = vpop.f32.mrf.mxu0
        %v1369 = vadd.f32 0.0, %v1368
        %v1370 = vpop.f32.mrf.mxu0
        %v1371 = vpop.f32.mrf.mxu0
        %v1372 = vadd.f32 0.0, %v1371
        %v1373 = vpop.f32.mrf.mxu0
        %1374 = vmatprep.mubr.bf16.mxu0 0
        %1375 = vmatmul.mubr.bf16.gmra.mxu0 %v1240
        %v1376 = vpop.f32.mrf.mxu0
        %v1377 = vadd.f32 0.0, %v1376
        %v1378 = vpop.f32.mrf.mxu0
        %v1379 = vpop.f32.mrf.mxu0
        %v1380 = vadd.f32 0.0, %v1379
        %v1381 = vpop.f32.mrf.mxu0
        %1382 = vmatprep.mubr.bf16.mxu0 0
        %1383 = vmatmul.mubr.bf16.gmra.mxu0 %v1241
        %v1384 = vpop.f32.mrf.mxu0
        %v1385 = vadd.f32 0.0, %v1384
        %v1386 = vpop.f32.mrf.mxu0
        %v1387 = vpop.f32.mrf.mxu0
        %v1388 = vadd.f32 0.0, %v1387
        %v1389 = vpop.f32.mrf.mxu0
        %1390 = vmatprep.mubr.bf16.mxu0 0
        %1391 = vmatmul.mubr.bf16.gmra.mxu0 %v1242
        %v1392 = vpop.f32.mrf.mxu0
        %v1393 = vadd.f32 0.0, %v1392
        %v1394 = vpop.f32.mrf.mxu0
        %v1395 = vpop.f32.mrf.mxu0
        %v1396 = vadd.f32 0.0, %v1395
        %v1397 = vpop.f32.mrf.mxu0
        %1398 = vmatprep.mubr.bf16.mxu0 0
        %1399 = vmatmul.mubr.bf16.gmra.mxu0 %v1243
        %v1400 = vpop.f32.mrf.mxu0
        %v1401 = vadd.f32 0.0, %v1400
        %v1402 = vpop.f32.mrf.mxu0
        %v1403 = vpop.f32.mrf.mxu0
        %v1404 = vadd.f32 0.0, %v1403
        %v1405 = vpop.f32.mrf.mxu0
        %1406 = vmatprep.mubr.bf16.mxu0 0
        %1407 = vmatmul.mubr.bf16.gmra.mxu0 %v1244
        %v1408 = vpop.f32.mrf.mxu0
        %v1409 = vadd.f32 0.0, %v1408
        %v1410 = vpop.f32.mrf.mxu0
        %v1411 = vpop.f32.mrf.mxu0
        %v1412 = vadd.f32 0.0, %v1411
        %v1413 = vpop.f32.mrf.mxu0
        %1414 = vmatprep.mubr.bf16.mxu0 0
        %1415 = vmatmul.mubr.bf16.gmra.mxu0 %v1245
        %v1416 = vpop.f32.mrf.mxu0
        %v1417 = vadd.f32 0.0, %v1416
        %v1418 = vpop.f32.mrf.mxu0
        %v1419 = vpop.f32.mrf.mxu0
        %v1420 = vadd.f32 0.0, %v1419
        %v1421 = vpop.f32.mrf.mxu0
        %1422 = vmatprep.mubr.bf16.mxu0 0
        %1423 = vmatmul.mubr.bf16.gmra.mxu0 %v1246
        %v1424 = vpop.f32.mrf.mxu0
        %v1425 = vadd.f32 0.0, %v1424
        %v1426 = vpop.f32.mrf.mxu0
        %v1427 = vpop.f32.mrf.mxu0
        %v1428 = vadd.f32 0.0, %v1427
        %v1429 = vpop.f32.mrf.mxu0
        %1430 = vmatprep.mubr.bf16.mxu0 0
        %1431 = vmatmul.mubr.bf16.gmra.mxu0 %v1247
        %v1432 = vpop.f32.mrf.mxu0
        %v1433 = vadd.f32 0.0, %v1432
        %v1434 = vpop.f32.mrf.mxu0
        %v1435 = vpop.f32.mrf.mxu0
        %v1436 = vadd.f32 0.0, %v1435
        %v1437 = vpop.f32.mrf.mxu0
        %1438 = vmatprep.mubr.bf16.mxu0 0
        %1439 = vmatmul.mubr.bf16.gmra.mxu0 %v1248
        %v1440 = vpop.f32.mrf.mxu0
        %v1441 = vadd.f32 0.0, %v1440
        %v1442 = vpop.f32.mrf.mxu0
        %v1443 = vpop.f32.mrf.mxu0
        %v1444 = vadd.f32 0.0, %v1443
        %v1445 = vpop.f32.mrf.mxu0
        %1446 = vmatprep.mubr.bf16.mxu0 0
        %1447 = vmatmul.mubr.bf16.gmra.mxu0 %v1249
        %v1448 = vpop.f32.mrf.mxu0
        %v1449 = vadd.f32 0.0, %v1448
        %v1450 = vpop.f32.mrf.mxu0
        %v1451 = vpop.f32.mrf.mxu0
        %v1452 = vadd.f32 0.0, %v1451
        %v1453 = vpop.f32.mrf.mxu0
        %1454 = vmatprep.mubr.bf16.mxu0 0
        %1455 = vmatmul.mubr.bf16.gmra.mxu0 %v1250
        %v1456 = vpop.f32.mrf.mxu0
        %v1457 = vadd.f32 0.0, %v1456
        %v1458 = vpop.f32.mrf.mxu0
        %v1459 = vpop.f32.mrf.mxu0
        %v1460 = vadd.f32 0.0, %v1459
        %v1461 = vpop.f32.mrf.mxu0
        %1462 = vmatprep.mubr.bf16.mxu0 0
        %1463 = vmatmul.mubr.bf16.gmra.mxu0 %v1251
        %v1464 = vpop.f32.mrf.mxu0
        %v1465 = vadd.f32 0.0, %v1464
        %v1466 = vpop.f32.mrf.mxu0
        %v1467 = vpop.f32.mrf.mxu0
        %v1468 = vadd.f32 0.0, %v1467
        %v1469 = vpop.f32.mrf.mxu0
        %1470 = vmatprep.mubr.bf16.mxu0 0
        %1471 = vmatmul.mubr.bf16.gmra.mxu0 %v1252
        %v1472 = vpop.f32.mrf.mxu0
        %v1473 = vadd.f32 0.0, %v1472
        %v1474 = vpop.f32.mrf.mxu0
        %v1475 = vpop.f32.mrf.mxu0
        %v1476 = vadd.f32 0.0, %v1475
        %v1477 = vpop.f32.mrf.mxu0
        %1478 = vdwg.mxu0
        %v1479 = vadd.f32 %v983, %v1353
        %v1480 = vadd.f32 %v986, %v1356
        %v1481 = vadd.f32 %v991, %v1361
        %v1482 = vadd.f32 %v994, %v1364
        %v1483 = vadd.f32 %v999, %v1369
        %v1484 = vadd.f32 %v1002, %v1372
        %v1485 = vadd.f32 %v1007, %v1377
        %v1486 = vadd.f32 %v1010, %v1380
        %v1487 = vadd.f32 %v1015, %v1385
        %v1488 = vadd.f32 %v1018, %v1388
        %v1489 = vadd.f32 %v1023, %v1393
        %v1490 = vadd.f32 %v1026, %v1396
        %v1491 = vadd.f32 %v1031, %v1401
        %v1492 = vadd.f32 %v1034, %v1404
        %v1493 = vadd.f32 %v1039, %v1409
        %v1494 = vadd.f32 %v1042, %v1412
        %v1495 = vadd.f32 %v1047, %v1417
        %v1496 = vadd.f32 %v1050, %v1420
        %v1497 = vadd.f32 %v1055, %v1425
        %v1498 = vadd.f32 %v1058, %v1428
        %v1499 = vadd.f32 %v1063, %v1433
        %v1500 = vadd.f32 %v1066, %v1436
        %v1501 = vadd.f32 %v1071, %v1441
        %v1502 = vadd.f32 %v1074, %v1444
        %v1503 = vadd.f32 %v1079, %v1449
        %v1504 = vadd.f32 %v1082, %v1452
        %v1505 = vadd.f32 %v1087, %v1457
        %v1506 = vadd.f32 %v1090, %v1460
        %v1507 = vadd.f32 %v1095, %v1465
        %v1508 = vadd.f32 %v1098, %v1468
        %v1509 = vadd.f32 %v1103, %v1473
        %v1510 = vadd.f32 %v1106, %v1476
        %v1511 = vld [vmem:[%s337] sm:$0xff]
        %v1512 = vld [vmem:[%s337 + $0x8] sm:$0xff]
        %v1513 = vld [vmem:[%s337 + $0x18] sm:$0xff]
        %v1514 = vld [vmem:[%s337 + $0x20] sm:$0xff]
        %v1515 = vld [vmem:[%s337 + $0x30] sm:$0xff]
        %v1516 = vld [vmem:[%s337 + $0x38] sm:$0xff]
        %v1517 = vld [vmem:[%s337 + $0x48] sm:$0xff]
        %v1518 = vld [vmem:[%s337 + $0x50] sm:$0xff]
        %v1519 = vld [vmem:[%s337 + $0x60] sm:$0xff]
        %v1520 = vld [vmem:[%s337 + $0x68] sm:$0xff]
        %v1521 = vld [vmem:[%s337 + $0x78] sm:$0xff]
        %v1522 = vld [vmem:[%s337 + $0x80] sm:$0xff]
        %v1523 = vld [vmem:[%s337 + $0x90] sm:$0xff]
        %v1524 = vld [vmem:[%s337 + $0x98] sm:$0xff]
        %v1525 = vld [vmem:[%s337 + $0xa8] sm:$0xff]
        %v1526 = vld [vmem:[%s337 + $0xb0] sm:$0xff]
        %v1527 = vld [vmem:[%s337 + $0xc0] sm:$0xff]
        %v1528 = vld [vmem:[%s337 + $0xc8] sm:$0xff]
        %v1529 = vld [vmem:[%s337 + $0xd8] sm:$0xff]
        %v1530 = vld [vmem:[%s337 + $0xe0] sm:$0xff]
        %v1531 = vld [vmem:[%s337 + $0xf0] sm:$0xff]
        %v1532 = vld [vmem:[%s337 + $0xf8] sm:$0xff]
        %v1533 = vld [vmem:[%s337 + $0x108] sm:$0xff]
        %v1534 = vld [vmem:[%s337 + $0x110] sm:$0xff]
        %v1535 = vld [vmem:[%s337 + $0x120] sm:$0xff]
        %v1536 = vld [vmem:[%s337 + $0x128] sm:$0xff]
        %v1537 = vld [vmem:[%s337 + $0x138] sm:$0xff]
        %v1538 = vld [vmem:[%s337 + $0x140] sm:$0xff]
        %v1539 = vld [vmem:[%s337 + $0x150] sm:$0xff]
        %v1540 = vld [vmem:[%s337 + $0x158] sm:$0xff]
        %v1541 = vld [vmem:[%s337 + $0x168] sm:$0xff]
        %v1542 = vld [vmem:[%s337 + $0x170] sm:$0xff]
        %vm1543 = vcmp.ge.f32.partialorder %v1511, 0.0
        %vm1544 = vcmp.ge.f32.partialorder %v1512, 0.0
        %vm1545 = vcmp.ge.f32.partialorder %v1513, 0.0
        %vm1546 = vcmp.ge.f32.partialorder %v1514, 0.0
        %vm1547 = vcmp.ge.f32.partialorder %v1515, 0.0
        %vm1548 = vcmp.ge.f32.partialorder %v1516, 0.0
        %vm1549 = vcmp.ge.f32.partialorder %v1517, 0.0
        %vm1550 = vcmp.ge.f32.partialorder %v1518, 0.0
        %vm1551 = vcmp.ge.f32.partialorder %v1519, 0.0
        %vm1552 = vcmp.ge.f32.partialorder %v1520, 0.0
        %vm1553 = vcmp.ge.f32.partialorder %v1521, 0.0
        %vm1554 = vcmp.ge.f32.partialorder %v1522, 0.0
        %vm1555 = vcmp.ge.f32.partialorder %v1523, 0.0
        %vm1556 = vcmp.ge.f32.partialorder %v1524, 0.0
        %vm1557 = vcmp.ge.f32.partialorder %v1525, 0.0
        %vm1558 = vcmp.ge.f32.partialorder %v1526, 0.0
        %vm1559 = vcmp.ge.f32.partialorder %v1527, 0.0
        %vm1560 = vcmp.ge.f32.partialorder %v1528, 0.0
        %vm1561 = vcmp.ge.f32.partialorder %v1529, 0.0
        %vm1562 = vcmp.ge.f32.partialorder %v1530, 0.0
        %vm1563 = vcmp.ge.f32.partialorder %v1531, 0.0
        %vm1564 = vcmp.ge.f32.partialorder %v1532, 0.0
        %vm1565 = vcmp.ge.f32.partialorder %v1533, 0.0
        %vm1566 = vcmp.ge.f32.partialorder %v1534, 0.0
        %vm1567 = vcmp.ge.f32.partialorder %v1535, 0.0
        %vm1568 = vcmp.ge.f32.partialorder %v1536, 0.0
        %vm1569 = vcmp.ge.f32.partialorder %v1537, 0.0
        %vm1570 = vcmp.ge.f32.partialorder %v1538, 0.0
        %vm1571 = vcmp.ge.f32.partialorder %v1539, 0.0
        %vm1572 = vcmp.ge.f32.partialorder %v1540, 0.0
        %vm1573 = vcmp.ge.f32.partialorder %v1541, 0.0
        %vm1574 = vcmp.ge.f32.partialorder %v1542, 0.0
        %v1575 = vmul.f32 %v1511, 0.2
        %v1576 = vmul.f32 %v1512, 0.2
        %v1577 = vmul.f32 %v1513, 0.2
        %v1578 = vmul.f32 %v1514, 0.2
        %v1579 = vmul.f32 %v1515, 0.2
        %v1580 = vmul.f32 %v1516, 0.2
        %v1581 = vmul.f32 %v1517, 0.2
        %v1582 = vmul.f32 %v1518, 0.2
        %v1583 = vmul.f32 %v1519, 0.2
        %v1584 = vmul.f32 %v1520, 0.2
        %v1585 = vmul.f32 %v1521, 0.2
        %v1586 = vmul.f32 %v1522, 0.2
        %v1587 = vmul.f32 %v1523, 0.2
        %v1588 = vmul.f32 %v1524, 0.2
        %v1589 = vmul.f32 %v1525, 0.2
        %v1590 = vmul.f32 %v1526, 0.2
        %v1591 = vmul.f32 %v1527, 0.2
        %v1592 = vmul.f32 %v1528, 0.2
        %v1593 = vmul.f32 %v1529, 0.2
        %v1594 = vmul.f32 %v1530, 0.2
        %v1595 = vmul.f32 %v1531, 0.2
        %v1596 = vmul.f32 %v1532, 0.2
        %v1597 = vmul.f32 %v1533, 0.2
        %v1598 = vmul.f32 %v1534, 0.2
        %v1599 = vmul.f32 %v1535, 0.2
        %v1600 = vmul.f32 %v1536, 0.2
        %v1601 = vmul.f32 %v1537, 0.2
        %v1602 = vmul.f32 %v1538, 0.2
        %v1603 = vmul.f32 %v1539, 0.2
        %v1604 = vmul.f32 %v1540, 0.2
        %v1605 = vmul.f32 %v1541, 0.2
        %v1606 = vmul.f32 %v1542, 0.2
        %v1607 = vsel %vm1543, %v1511, %v1575
        %v1608 = vsel %vm1544, %v1512, %v1576
        %v1609 = vsel %vm1545, %v1513, %v1577
        %v1610 = vsel %vm1546, %v1514, %v1578
        %v1611 = vsel %vm1547, %v1515, %v1579
        %v1612 = vsel %vm1548, %v1516, %v1580
        %v1613 = vsel %vm1549, %v1517, %v1581
        %v1614 = vsel %vm1550, %v1518, %v1582
        %v1615 = vsel %vm1551, %v1519, %v1583
        %v1616 = vsel %vm1552, %v1520, %v1584
        %v1617 = vsel %vm1553, %v1521, %v1585
        %v1618 = vsel %vm1554, %v1522, %v1586
        %v1619 = vsel %vm1555, %v1523, %v1587
        %v1620 = vsel %vm1556, %v1524, %v1588
        %v1621 = vsel %vm1557, %v1525, %v1589
        %v1622 = vsel %vm1558, %v1526, %v1590
        %v1623 = vsel %vm1559, %v1527, %v1591
        %v1624 = vsel %vm1560, %v1528, %v1592
        %v1625 = vsel %vm1561, %v1529, %v1593
        %v1626 = vsel %vm1562, %v1530, %v1594
        %v1627 = vsel %vm1563, %v1531, %v1595
        %v1628 = vsel %vm1564, %v1532, %v1596
        %v1629 = vsel %vm1565, %v1533, %v1597
        %v1630 = vsel %vm1566, %v1534, %v1598
        %v1631 = vsel %vm1567, %v1535, %v1599
        %v1632 = vsel %vm1568, %v1536, %v1600
        %v1633 = vsel %vm1569, %v1537, %v1601
        %v1634 = vsel %vm1570, %v1538, %v1602
        %v1635 = vsel %vm1571, %v1539, %v1603
        %v1636 = vsel %vm1572, %v1540, %v1604
        %v1637 = vsel %vm1573, %v1541, %v1605
        %v1638 = vsel %vm1574, %v1542, %v1606
        %v1639 = vpack.c.bf16 %v1608, %v1607
        %v1640 = vpack.c.bf16 %v1610, %v1609
        %v1641 = vpack.c.bf16 %v1612, %v1611
        %v1642 = vpack.c.bf16 %v1614, %v1613
        %v1643 = vpack.c.bf16 %v1616, %v1615
        %v1644 = vpack.c.bf16 %v1618, %v1617
        %v1645 = vpack.c.bf16 %v1620, %v1619
        %v1646 = vpack.c.bf16 %v1622, %v1621
        %v1647 = vpack.c.bf16 %v1624, %v1623
        %v1648 = vpack.c.bf16 %v1626, %v1625
        %v1649 = vpack.c.bf16 %v1628, %v1627
        %v1650 = vpack.c.bf16 %v1630, %v1629
        %v1651 = vpack.c.bf16 %v1632, %v1631
        %v1652 = vpack.c.bf16 %v1634, %v1633
        %v1653 = vpack.c.bf16 %v1636, %v1635
        %v1654 = vpack.c.bf16 %v1638, %v1637
        %s1655 = scalar_lea.vmem %s1, 192
        %v1656 = vld [vmem:[%s1655] sm:$0xf]
        %v1657 = vld [vmem:[%s1655 + $0x4] sm:$0xf]
        %v1658 = vld [vmem:[%s1655 + $0x8] sm:$0xf]
        %v1659 = vld [vmem:[%s1655 + $0xc] sm:$0xf]
        %v1660 = vld [vmem:[%s1655 + $0x10] sm:$0xf]
        %v1661 = vld [vmem:[%s1655 + $0x14] sm:$0xf]
        %v1662 = vld [vmem:[%s1655 + $0x18] sm:$0xf]
        %v1663 = vld [vmem:[%s1655 + $0x1c] sm:$0xf]
        %v1664 = vld [vmem:[%s1655 + $0x20] sm:$0xf]
        %v1665 = vld [vmem:[%s1655 + $0x24] sm:$0xf]
        %v1666 = vld [vmem:[%s1655 + $0x28] sm:$0xf]
        %v1667 = vld [vmem:[%s1655 + $0x2c] sm:$0xf]
        %v1668 = vld [vmem:[%s1655 + $0x30] sm:$0xf]
        %v1669 = vld [vmem:[%s1655 + $0x34] sm:$0xf]
        %v1670 = vld [vmem:[%s1655 + $0x38] sm:$0xf]
        %v1671 = vld [vmem:[%s1655 + $0x3c] sm:$0xf]
        %v1688 = vunpack.c.l.b16 %v1656
        %v1689 = vunpack.c.l.b16 %v1657
        %v1690 = vunpack.c.l.b16 %v1658
        %v1691 = vunpack.c.l.b16 %v1659
        %v1692 = vunpack.c.l.b16 %v1660
        %v1693 = vunpack.c.l.b16 %v1661
        %v1694 = vunpack.c.l.b16 %v1662
        %v1695 = vunpack.c.l.b16 %v1663
        %v1696 = vunpack.c.l.b16 %v1664
        %v1697 = vunpack.c.l.b16 %v1665
        %v1698 = vunpack.c.l.b16 %v1666
        %v1699 = vunpack.c.l.b16 %v1667
        %v1700 = vunpack.c.l.b16 %v1668
        %v1701 = vunpack.c.l.b16 %v1669
        %v1702 = vunpack.c.l.b16 %v1670
        %v1703 = vunpack.c.l.b16 %v1671
        %v1704 = vpack.c.b16 %v1689, %v1688
        %v1705 = vpack.c.b16 %v1691, %v1690
        %v1706 = vpack.c.b16 %v1693, %v1692
        %v1707 = vpack.c.b16 %v1695, %v1694
        %v1708 = vpack.c.b16 %v1697, %v1696
        %v1709 = vpack.c.b16 %v1699, %v1698
        %v1710 = vpack.c.b16 %v1701, %v1700
        %v1711 = vpack.c.b16 %v1703, %v1702
        %1720 = vmatprep.subr.bf16.mxu0 0
        %1721 = vmatpush1.bf16.msra.mxu0 %v1711
        %1722 = vmatprep.subr.bf16.mxu0 0
        %1723 = vmatpush1.bf16.msra.mxu0 %v1710
        %1724 = vmatprep.subr.bf16.mxu0 0
        %1725 = vmatpush1.bf16.msra.mxu0 %v1709
        %1726 = vmatprep.subr.bf16.mxu0 0
        %1727 = vmatpush1.bf16.msra.mxu0 %v1708
        %1728 = vmatprep.subr.bf16.mxu0 0
        %1729 = vmatpush1.bf16.msra.mxu0 %v1707
        %1730 = vmatprep.subr.bf16.mxu0 0
        %1731 = vmatpush1.bf16.msra.mxu0 %v1706
        %1732 = vmatprep.subr.bf16.mxu0 0
        %1733 = vmatpush1.bf16.msra.mxu0 %v1705
        %1734 = vmatprep.subr.bf16.mxu0 0
        %1735 = vmatpush1.bf16.msra.mxu0 %v1704
        %1736 = vmatprep.subr.bf16.mxu0 0
        %1737 = vmatpush2.bf16.msra.mxu0 0
        %1738 = vmatprep.subr.bf16.mxu0 0
        %1739 = vmatpush2.bf16.msra.mxu0 0
        %1740 = vmatprep.subr.bf16.mxu0 0
        %1741 = vmatpush2.bf16.msra.mxu0 0
        %1742 = vmatprep.subr.bf16.mxu0 0
        %1743 = vmatpush2.bf16.msra.mxu0 0
        %1744 = vmatprep.subr.bf16.mxu0 0
        %1745 = vmatpush2.bf16.msra.mxu0 0
        %1746 = vmatprep.subr.bf16.mxu0 0
        %1747 = vmatpush2.bf16.msra.mxu0 0
        %1748 = vmatprep.subr.bf16.mxu0 0
        %1749 = vmatpush2.bf16.msra.mxu0 0
        %1750 = vmatprep.subr.bf16.mxu0 0
        %1751 = vmatpush2.bf16.msra.mxu0 0
        %1752 = vmatprep.mubr.bf16.mxu0 0
        %1753 = vmatmul.mubr.bf16.gmra.mxu0 %v1639
        %v1754 = vpop.f32.mrf.mxu0
        %v1755 = vadd.f32 0.0, %v1754
        %v1756 = vpop.f32.mrf.mxu0
        %v1757 = vpop.f32.mrf.mxu0
        %v1758 = vadd.f32 0.0, %v1757
        %v1759 = vpop.f32.mrf.mxu0
        %1760 = vmatprep.mubr.bf16.mxu0 0
        %1761 = vmatmul.mubr.bf16.gmra.mxu0 %v1640
        %v1762 = vpop.f32.mrf.mxu0
        %v1763 = vadd.f32 0.0, %v1762
        %v1764 = vpop.f32.mrf.mxu0
        %v1765 = vpop.f32.mrf.mxu0
        %v1766 = vadd.f32 0.0, %v1765
        %v1767 = vpop.f32.mrf.mxu0
        %1768 = vmatprep.mubr.bf16.mxu0 0
        %1769 = vmatmul.mubr.bf16.gmra.mxu0 %v1641
        %v1770 = vpop.f32.mrf.mxu0
        %v1771 = vadd.f32 0.0, %v1770
        %v1772 = vpop.f32.mrf.mxu0
        %v1773 = vpop.f32.mrf.mxu0
        %v1774 = vadd.f32 0.0, %v1773
        %v1775 = vpop.f32.mrf.mxu0
        %1776 = vmatprep.mubr.bf16.mxu0 0
        %1777 = vmatmul.mubr.bf16.gmra.mxu0 %v1642
        %v1778 = vpop.f32.mrf.mxu0
        %v1779 = vadd.f32 0.0, %v1778
        %v1780 = vpop.f32.mrf.mxu0
        %v1781 = vpop.f32.mrf.mxu0
        %v1782 = vadd.f32 0.0, %v1781
        %v1783 = vpop.f32.mrf.mxu0
        %1784 = vmatprep.mubr.bf16.mxu0 0
        %1785 = vmatmul.mubr.bf16.gmra.mxu0 %v1643
        %v1786 = vpop.f32.mrf.mxu0
        %v1787 = vadd.f32 0.0, %v1786
        %v1788 = vpop.f32.mrf.mxu0
        %v1789 = vpop.f32.mrf.mxu0
        %v1790 = vadd.f32 0.0, %v1789
        %v1791 = vpop.f32.mrf.mxu0
        %1792 = vmatprep.mubr.bf16.mxu0 0
        %1793 = vmatmul.mubr.bf16.gmra.mxu0 %v1644
        %v1794 = vpop.f32.mrf.mxu0
        %v1795 = vadd.f32 0.0, %v1794
        %v1796 = vpop.f32.mrf.mxu0
        %v1797 = vpop.f32.mrf.mxu0
        %v1798 = vadd.f32 0.0, %v1797
        %v1799 = vpop.f32.mrf.mxu0
        %1800 = vmatprep.mubr.bf16.mxu0 0
        %1801 = vmatmul.mubr.bf16.gmra.mxu0 %v1645
        %v1802 = vpop.f32.mrf.mxu0
        %v1803 = vadd.f32 0.0, %v1802
        %v1804 = vpop.f32.mrf.mxu0
        %v1805 = vpop.f32.mrf.mxu0
        %v1806 = vadd.f32 0.0, %v1805
        %v1807 = vpop.f32.mrf.mxu0
        %1808 = vmatprep.mubr.bf16.mxu0 0
        %1809 = vmatmul.mubr.bf16.gmra.mxu0 %v1646
        %v1810 = vpop.f32.mrf.mxu0
        %v1811 = vadd.f32 0.0, %v1810
        %v1812 = vpop.f32.mrf.mxu0
        %v1813 = vpop.f32.mrf.mxu0
        %v1814 = vadd.f32 0.0, %v1813
        %v1815 = vpop.f32.mrf.mxu0
        %1816 = vmatprep.mubr.bf16.mxu0 0
        %1817 = vmatmul.mubr.bf16.gmra.mxu0 %v1647
        %v1818 = vpop.f32.mrf.mxu0
        %v1819 = vadd.f32 0.0, %v1818
        %v1820 = vpop.f32.mrf.mxu0
        %v1821 = vpop.f32.mrf.mxu0
        %v1822 = vadd.f32 0.0, %v1821
        %v1823 = vpop.f32.mrf.mxu0
        %1824 = vmatprep.mubr.bf16.mxu0 0
        %1825 = vmatmul.mubr.bf16.gmra.mxu0 %v1648
        %v1826 = vpop.f32.mrf.mxu0
        %v1827 = vadd.f32 0.0, %v1826
        %v1828 = vpop.f32.mrf.mxu0
        %v1829 = vpop.f32.mrf.mxu0
        %v1830 = vadd.f32 0.0, %v1829
        %v1831 = vpop.f32.mrf.mxu0
        %1832 = vmatprep.mubr.bf16.mxu0 0
        %1833 = vmatmul.mubr.bf16.gmra.mxu0 %v1649
        %v1834 = vpop.f32.mrf.mxu0
        %v1835 = vadd.f32 0.0, %v1834
        %v1836 = vpop.f32.mrf.mxu0
        %v1837 = vpop.f32.mrf.mxu0
        %v1838 = vadd.f32 0.0, %v1837
        %v1839 = vpop.f32.mrf.mxu0
        %1840 = vmatprep.mubr.bf16.mxu0 0
        %1841 = vmatmul.mubr.bf16.gmra.mxu0 %v1650
        %v1842 = vpop.f32.mrf.mxu0
        %v1843 = vadd.f32 0.0, %v1842
        %v1844 = vpop.f32.mrf.mxu0
        %v1845 = vpop.f32.mrf.mxu0
        %v1846 = vadd.f32 0.0, %v1845
        %v1847 = vpop.f32.mrf.mxu0
        %1848 = vmatprep.mubr.bf16.mxu0 0
        %1849 = vmatmul.mubr.bf16.gmra.mxu0 %v1651
        %v1850 = vpop.f32.mrf.mxu0
        %v1851 = vadd.f32 0.0, %v1850
        %v1852 = vpop.f32.mrf.mxu0
        %v1853 = vpop.f32.mrf.mxu0
        %v1854 = vadd.f32 0.0, %v1853
        %v1855 = vpop.f32.mrf.mxu0
        %1856 = vmatprep.mubr.bf16.mxu0 0
        %1857 = vmatmul.mubr.bf16.gmra.mxu0 %v1652
        %v1858 = vpop.f32.mrf.mxu0
        %v1859 = vadd.f32 0.0, %v1858
        %v1860 = vpop.f32.mrf.mxu0
        %v1861 = vpop.f32.mrf.mxu0
        %v1862 = vadd.f32 0.0, %v1861
        %v1863 = vpop.f32.mrf.mxu0
        %1864 = vmatprep.mubr.bf16.mxu0 0
        %1865 = vmatmul.mubr.bf16.gmra.mxu0 %v1653
        %v1866 = vpop.f32.mrf.mxu0
        %v1867 = vadd.f32 0.0, %v1866
        %v1868 = vpop.f32.mrf.mxu0
        %v1869 = vpop.f32.mrf.mxu0
        %v1870 = vadd.f32 0.0, %v1869
        %v1871 = vpop.f32.mrf.mxu0
        %1872 = vmatprep.mubr.bf16.mxu0 0
        %1873 = vmatmul.mubr.bf16.gmra.mxu0 %v1654
        %v1874 = vpop.f32.mrf.mxu0
        %v1875 = vadd.f32 0.0, %v1874
        %v1876 = vpop.f32.mrf.mxu0
        %v1877 = vpop.f32.mrf.mxu0
        %v1878 = vadd.f32 0.0, %v1877
        %v1879 = vpop.f32.mrf.mxu0
        %1880 = vdwg.mxu0
        %v1881 = vadd.f32 %v1479, %v1755
        %v1882 = vadd.f32 %v1480, %v1758
        %v1883 = vadd.f32 %v1481, %v1763
        %v1884 = vadd.f32 %v1482, %v1766
        %v1885 = vadd.f32 %v1483, %v1771
        %v1886 = vadd.f32 %v1484, %v1774
        %v1887 = vadd.f32 %v1485, %v1779
        %v1888 = vadd.f32 %v1486, %v1782
        %v1889 = vadd.f32 %v1487, %v1787
        %v1890 = vadd.f32 %v1488, %v1790
        %v1891 = vadd.f32 %v1489, %v1795
        %v1892 = vadd.f32 %v1490, %v1798
        %v1893 = vadd.f32 %v1491, %v1803
        %v1894 = vadd.f32 %v1492, %v1806
        %v1895 = vadd.f32 %v1493, %v1811
        %v1896 = vadd.f32 %v1494, %v1814
        %v1897 = vadd.f32 %v1495, %v1819
        %v1898 = vadd.f32 %v1496, %v1822
        %v1899 = vadd.f32 %v1497, %v1827
        %v1900 = vadd.f32 %v1498, %v1830
        %v1901 = vadd.f32 %v1499, %v1835
        %v1902 = vadd.f32 %v1500, %v1838
        %v1903 = vadd.f32 %v1501, %v1843
        %v1904 = vadd.f32 %v1502, %v1846
        %v1905 = vadd.f32 %v1503, %v1851
        %v1906 = vadd.f32 %v1504, %v1854
        %v1907 = vadd.f32 %v1505, %v1859
        %v1908 = vadd.f32 %v1506, %v1862
        %v1909 = vadd.f32 %v1507, %v1867
        %v1910 = vadd.f32 %v1508, %v1870
        %v1911 = vadd.f32 %v1509, %v1875
        %v1912 = vadd.f32 %v1510, %v1878
        %v1913 = vld [vmem:[%s337 + $0x1] sm:$0xff]
        %v1914 = vld [vmem:[%s337 + $0x9] sm:$0xff]
        %v1915 = vld [vmem:[%s337 + $0x19] sm:$0xff]
        %v1916 = vld [vmem:[%s337 + $0x21] sm:$0xff]
        %v1917 = vld [vmem:[%s337 + $0x31] sm:$0xff]
        %v1918 = vld [vmem:[%s337 + $0x39] sm:$0xff]
        %v1919 = vld [vmem:[%s337 + $0x49] sm:$0xff]
        %v1920 = vld [vmem:[%s337 + $0x51] sm:$0xff]
        %v1921 = vld [vmem:[%s337 + $0x61] sm:$0xff]
        %v1922 = vld [vmem:[%s337 + $0x69] sm:$0xff]
        %v1923 = vld [vmem:[%s337 + $0x79] sm:$0xff]
        %v1924 = vld [vmem:[%s337 + $0x81] sm:$0xff]
        %v1925 = vld [vmem:[%s337 + $0x91] sm:$0xff]
        %v1926 = vld [vmem:[%s337 + $0x99] sm:$0xff]
        %v1927 = vld [vmem:[%s337 + $0xa9] sm:$0xff]
        %v1928 = vld [vmem:[%s337 + $0xb1] sm:$0xff]
        %v1929 = vld [vmem:[%s337 + $0xc1] sm:$0xff]
        %v1930 = vld [vmem:[%s337 + $0xc9] sm:$0xff]
        %v1931 = vld [vmem:[%s337 + $0xd9] sm:$0xff]
        %v1932 = vld [vmem:[%s337 + $0xe1] sm:$0xff]
        %v1933 = vld [vmem:[%s337 + $0xf1] sm:$0xff]
        %v1934 = vld [vmem:[%s337 + $0xf9] sm:$0xff]
        %v1935 = vld [vmem:[%s337 + $0x109] sm:$0xff]
        %v1936 = vld [vmem:[%s337 + $0x111] sm:$0xff]
        %v1937 = vld [vmem:[%s337 + $0x121] sm:$0xff]
        %v1938 = vld [vmem:[%s337 + $0x129] sm:$0xff]
        %v1939 = vld [vmem:[%s337 + $0x139] sm:$0xff]
        %v1940 = vld [vmem:[%s337 + $0x141] sm:$0xff]
        %v1941 = vld [vmem:[%s337 + $0x151] sm:$0xff]
        %v1942 = vld [vmem:[%s337 + $0x159] sm:$0xff]
        %v1943 = vld [vmem:[%s337 + $0x169] sm:$0xff]
        %v1944 = vld [vmem:[%s337 + $0x171] sm:$0xff]
        %vm1945 = vcmp.ge.f32.partialorder %v1913, 0.0
        %vm1946 = vcmp.ge.f32.partialorder %v1914, 0.0
        %vm1947 = vcmp.ge.f32.partialorder %v1915, 0.0
        %vm1948 = vcmp.ge.f32.partialorder %v1916, 0.0
        %vm1949 = vcmp.ge.f32.partialorder %v1917, 0.0
        %vm1950 = vcmp.ge.f32.partialorder %v1918, 0.0
        %vm1951 = vcmp.ge.f32.partialorder %v1919, 0.0
        %vm1952 = vcmp.ge.f32.partialorder %v1920, 0.0
        %vm1953 = vcmp.ge.f32.partialorder %v1921, 0.0
        %vm1954 = vcmp.ge.f32.partialorder %v1922, 0.0
        %vm1955 = vcmp.ge.f32.partialorder %v1923, 0.0
        %vm1956 = vcmp.ge.f32.partialorder %v1924, 0.0
        %vm1957 = vcmp.ge.f32.partialorder %v1925, 0.0
        %vm1958 = vcmp.ge.f32.partialorder %v1926, 0.0
        %vm1959 = vcmp.ge.f32.partialorder %v1927, 0.0
        %vm1960 = vcmp.ge.f32.partialorder %v1928, 0.0
        %vm1961 = vcmp.ge.f32.partialorder %v1929, 0.0
        %vm1962 = vcmp.ge.f32.partialorder %v1930, 0.0
        %vm1963 = vcmp.ge.f32.partialorder %v1931, 0.0
        %vm1964 = vcmp.ge.f32.partialorder %v1932, 0.0
        %vm1965 = vcmp.ge.f32.partialorder %v1933, 0.0
        %vm1966 = vcmp.ge.f32.partialorder %v1934, 0.0
        %vm1967 = vcmp.ge.f32.partialorder %v1935, 0.0
        %vm1968 = vcmp.ge.f32.partialorder %v1936, 0.0
        %vm1969 = vcmp.ge.f32.partialorder %v1937, 0.0
        %vm1970 = vcmp.ge.f32.partialorder %v1938, 0.0
        %vm1971 = vcmp.ge.f32.partialorder %v1939, 0.0
        %vm1972 = vcmp.ge.f32.partialorder %v1940, 0.0
        %vm1973 = vcmp.ge.f32.partialorder %v1941, 0.0
        %vm1974 = vcmp.ge.f32.partialorder %v1942, 0.0
        %vm1975 = vcmp.ge.f32.partialorder %v1943, 0.0
        %vm1976 = vcmp.ge.f32.partialorder %v1944, 0.0
        %v1977 = vmul.f32 %v1913, 0.2
        %v1978 = vmul.f32 %v1914, 0.2
        %v1979 = vmul.f32 %v1915, 0.2
        %v1980 = vmul.f32 %v1916, 0.2
        %v1981 = vmul.f32 %v1917, 0.2
        %v1982 = vmul.f32 %v1918, 0.2
        %v1983 = vmul.f32 %v1919, 0.2
        %v1984 = vmul.f32 %v1920, 0.2
        %v1985 = vmul.f32 %v1921, 0.2
        %v1986 = vmul.f32 %v1922, 0.2
        %v1987 = vmul.f32 %v1923, 0.2
        %v1988 = vmul.f32 %v1924, 0.2
        %v1989 = vmul.f32 %v1925, 0.2
        %v1990 = vmul.f32 %v1926, 0.2
        %v1991 = vmul.f32 %v1927, 0.2
        %v1992 = vmul.f32 %v1928, 0.2
        %v1993 = vmul.f32 %v1929, 0.2
        %v1994 = vmul.f32 %v1930, 0.2
        %v1995 = vmul.f32 %v1931, 0.2
        %v1996 = vmul.f32 %v1932, 0.2
        %v1997 = vmul.f32 %v1933, 0.2
        %v1998 = vmul.f32 %v1934, 0.2
        %v1999 = vmul.f32 %v1935, 0.2
        %v2000 = vmul.f32 %v1936, 0.2
        %v2001 = vmul.f32 %v1937, 0.2
        %v2002 = vmul.f32 %v1938, 0.2
        %v2003 = vmul.f32 %v1939, 0.2
        %v2004 = vmul.f32 %v1940, 0.2
        %v2005 = vmul.f32 %v1941, 0.2
        %v2006 = vmul.f32 %v1942, 0.2
        %v2007 = vmul.f32 %v1943, 0.2
        %v2008 = vmul.f32 %v1944, 0.2
        %v2009 = vsel %vm1945, %v1913, %v1977
        %v2010 = vsel %vm1946, %v1914, %v1978
        %v2011 = vsel %vm1947, %v1915, %v1979
        %v2012 = vsel %vm1948, %v1916, %v1980
        %v2013 = vsel %vm1949, %v1917, %v1981
        %v2014 = vsel %vm1950, %v1918, %v1982
        %v2015 = vsel %vm1951, %v1919, %v1983
        %v2016 = vsel %vm1952, %v1920, %v1984
        %v2017 = vsel %vm1953, %v1921, %v1985
        %v2018 = vsel %vm1954, %v1922, %v1986
        %v2019 = vsel %vm1955, %v1923, %v1987
        %v2020 = vsel %vm1956, %v1924, %v1988
        %v2021 = vsel %vm1957, %v1925, %v1989
        %v2022 = vsel %vm1958, %v1926, %v1990
        %v2023 = vsel %vm1959, %v1927, %v1991
        %v2024 = vsel %vm1960, %v1928, %v1992
        %v2025 = vsel %vm1961, %v1929, %v1993
        %v2026 = vsel %vm1962, %v1930, %v1994
        %v2027 = vsel %vm1963, %v1931, %v1995
        %v2028 = vsel %vm1964, %v1932, %v1996
        %v2029 = vsel %vm1965, %v1933, %v1997
        %v2030 = vsel %vm1966, %v1934, %v1998
        %v2031 = vsel %vm1967, %v1935, %v1999
        %v2032 = vsel %vm1968, %v1936, %v2000
        %v2033 = vsel %vm1969, %v1937, %v2001
        %v2034 = vsel %vm1970, %v1938, %v2002
        %v2035 = vsel %vm1971, %v1939, %v2003
        %v2036 = vsel %vm1972, %v1940, %v2004
        %v2037 = vsel %vm1973, %v1941, %v2005
        %v2038 = vsel %vm1974, %v1942, %v2006
        %v2039 = vsel %vm1975, %v1943, %v2007
        %v2040 = vsel %vm1976, %v1944, %v2008
        %v2041 = vpack.c.bf16 %v2010, %v2009
        %v2042 = vpack.c.bf16 %v2012, %v2011
        %v2043 = vpack.c.bf16 %v2014, %v2013
        %v2044 = vpack.c.bf16 %v2016, %v2015
        %v2045 = vpack.c.bf16 %v2018, %v2017
        %v2046 = vpack.c.bf16 %v2020, %v2019
        %v2047 = vpack.c.bf16 %v2022, %v2021
        %v2048 = vpack.c.bf16 %v2024, %v2023
        %v2049 = vpack.c.bf16 %v2026, %v2025
        %v2050 = vpack.c.bf16 %v2028, %v2027
        %v2051 = vpack.c.bf16 %v2030, %v2029
        %v2052 = vpack.c.bf16 %v2032, %v2031
        %v2053 = vpack.c.bf16 %v2034, %v2033
        %v2054 = vpack.c.bf16 %v2036, %v2035
        %v2055 = vpack.c.bf16 %v2038, %v2037
        %v2056 = vpack.c.bf16 %v2040, %v2039
        %s2057 = scalar_lea.vmem %s1, 256
        %v2058 = vld [vmem:[%s2057] sm:$0xf]
        %v2059 = vld [vmem:[%s2057 + $0x4] sm:$0xf]
        %v2060 = vld [vmem:[%s2057 + $0x8] sm:$0xf]
        %v2061 = vld [vmem:[%s2057 + $0xc] sm:$0xf]
        %v2062 = vld [vmem:[%s2057 + $0x10] sm:$0xf]
        %v2063 = vld [vmem:[%s2057 + $0x14] sm:$0xf]
        %v2064 = vld [vmem:[%s2057 + $0x18] sm:$0xf]
        %v2065 = vld [vmem:[%s2057 + $0x1c] sm:$0xf]
        %v2066 = vld [vmem:[%s2057 + $0x20] sm:$0xf]
        %v2067 = vld [vmem:[%s2057 + $0x24] sm:$0xf]
        %v2068 = vld [vmem:[%s2057 + $0x28] sm:$0xf]
        %v2069 = vld [vmem:[%s2057 + $0x2c] sm:$0xf]
        %v2070 = vld [vmem:[%s2057 + $0x30] sm:$0xf]
        %v2071 = vld [vmem:[%s2057 + $0x34] sm:$0xf]
        %v2072 = vld [vmem:[%s2057 + $0x38] sm:$0xf]
        %v2073 = vld [vmem:[%s2057 + $0x3c] sm:$0xf]
        %v2090 = vunpack.c.l.b16 %v2058
        %v2091 = vunpack.c.l.b16 %v2059
        %v2092 = vunpack.c.l.b16 %v2060
        %v2093 = vunpack.c.l.b16 %v2061
        %v2094 = vunpack.c.l.b16 %v2062
        %v2095 = vunpack.c.l.b16 %v2063
        %v2096 = vunpack.c.l.b16 %v2064
        %v2097 = vunpack.c.l.b16 %v2065
        %v2098 = vunpack.c.l.b16 %v2066
        %v2099 = vunpack.c.l.b16 %v2067
        %v2100 = vunpack.c.l.b16 %v2068
        %v2101 = vunpack.c.l.b16 %v2069
        %v2102 = vunpack.c.l.b16 %v2070
        %v2103 = vunpack.c.l.b16 %v2071
        %v2104 = vunpack.c.l.b16 %v2072
        %v2105 = vunpack.c.l.b16 %v2073
        %v2106 = vpack.c.b16 %v2091, %v2090
        %v2107 = vpack.c.b16 %v2093, %v2092
        %v2108 = vpack.c.b16 %v2095, %v2094
        %v2109 = vpack.c.b16 %v2097, %v2096
        %v2110 = vpack.c.b16 %v2099, %v2098
        %v2111 = vpack.c.b16 %v2101, %v2100
        %v2112 = vpack.c.b16 %v2103, %v2102
        %v2113 = vpack.c.b16 %v2105, %v2104
        %2122 = vmatprep.subr.bf16.mxu0 0
        %2123 = vmatpush1.bf16.msra.mxu0 %v2113
        %2124 = vmatprep.subr.bf16.mxu0 0
        %2125 = vmatpush1.bf16.msra.mxu0 %v2112
        %2126 = vmatprep.subr.bf16.mxu0 0
        %2127 = vmatpush1.bf16.msra.mxu0 %v2111
        %2128 = vmatprep.subr.bf16.mxu0 0
        %2129 = vmatpush1.bf16.msra.mxu0 %v2110
        %2130 = vmatprep.subr.bf16.mxu0 0
        %2131 = vmatpush1.bf16.msra.mxu0 %v2109
        %2132 = vmatprep.subr.bf16.mxu0 0
        %2133 = vmatpush1.bf16.msra.mxu0 %v2108
        %2134 = vmatprep.subr.bf16.mxu0 0
        %2135 = vmatpush1.bf16.msra.mxu0 %v2107
        %2136 = vmatprep.subr.bf16.mxu0 0
        %2137 = vmatpush1.bf16.msra.mxu0 %v2106
        %2138 = vmatprep.subr.bf16.mxu0 0
        %2139 = vmatpush2.bf16.msra.mxu0 0
        %2140 = vmatprep.subr.bf16.mxu0 0
        %2141 = vmatpush2.bf16.msra.mxu0 0
        %2142 = vmatprep.subr.bf16.mxu0 0
        %2143 = vmatpush2.bf16.msra.mxu0 0
        %2144 = vmatprep.subr.bf16.mxu0 0
        %2145 = vmatpush2.bf16.msra.mxu0 0
        %2146 = vmatprep.subr.bf16.mxu0 0
        %2147 = vmatpush2.bf16.msra.mxu0 0
        %2148 = vmatprep.subr.bf16.mxu0 0
        %2149 = vmatpush2.bf16.msra.mxu0 0
        %2150 = vmatprep.subr.bf16.mxu0 0
        %2151 = vmatpush2.bf16.msra.mxu0 0
        %2152 = vmatprep.subr.bf16.mxu0 0
        %2153 = vmatpush2.bf16.msra.mxu0 0
        %2154 = vmatprep.mubr.bf16.mxu0 0
        %2155 = vmatmul.mubr.bf16.gmra.mxu0 %v2041
        %v2156 = vpop.f32.mrf.mxu0
        %v2157 = vadd.f32 0.0, %v2156
        %v2158 = vpop.f32.mrf.mxu0
        %v2159 = vpop.f32.mrf.mxu0
        %v2160 = vadd.f32 0.0, %v2159
        %v2161 = vpop.f32.mrf.mxu0
        %2162 = vmatprep.mubr.bf16.mxu0 0
        %2163 = vmatmul.mubr.bf16.gmra.mxu0 %v2042
        %v2164 = vpop.f32.mrf.mxu0
        %v2165 = vadd.f32 0.0, %v2164
        %v2166 = vpop.f32.mrf.mxu0
        %v2167 = vpop.f32.mrf.mxu0
        %v2168 = vadd.f32 0.0, %v2167
        %v2169 = vpop.f32.mrf.mxu0
        %2170 = vmatprep.mubr.bf16.mxu0 0
        %2171 = vmatmul.mubr.bf16.gmra.mxu0 %v2043
        %v2172 = vpop.f32.mrf.mxu0
        %v2173 = vadd.f32 0.0, %v2172
        %v2174 = vpop.f32.mrf.mxu0
        %v2175 = vpop.f32.mrf.mxu0
        %v2176 = vadd.f32 0.0, %v2175
        %v2177 = vpop.f32.mrf.mxu0
        %2178 = vmatprep.mubr.bf16.mxu0 0
        %2179 = vmatmul.mubr.bf16.gmra.mxu0 %v2044
        %v2180 = vpop.f32.mrf.mxu0
        %v2181 = vadd.f32 0.0, %v2180
        %v2182 = vpop.f32.mrf.mxu0
        %v2183 = vpop.f32.mrf.mxu0
        %v2184 = vadd.f32 0.0, %v2183
        %v2185 = vpop.f32.mrf.mxu0
        %2186 = vmatprep.mubr.bf16.mxu0 0
        %2187 = vmatmul.mubr.bf16.gmra.mxu0 %v2045
        %v2188 = vpop.f32.mrf.mxu0
        %v2189 = vadd.f32 0.0, %v2188
        %v2190 = vpop.f32.mrf.mxu0
        %v2191 = vpop.f32.mrf.mxu0
        %v2192 = vadd.f32 0.0, %v2191
        %v2193 = vpop.f32.mrf.mxu0
        %2194 = vmatprep.mubr.bf16.mxu0 0
        %2195 = vmatmul.mubr.bf16.gmra.mxu0 %v2046
        %v2196 = vpop.f32.mrf.mxu0
        %v2197 = vadd.f32 0.0, %v2196
        %v2198 = vpop.f32.mrf.mxu0
        %v2199 = vpop.f32.mrf.mxu0
        %v2200 = vadd.f32 0.0, %v2199
        %v2201 = vpop.f32.mrf.mxu0
        %2202 = vmatprep.mubr.bf16.mxu0 0
        %2203 = vmatmul.mubr.bf16.gmra.mxu0 %v2047
        %v2204 = vpop.f32.mrf.mxu0
        %v2205 = vadd.f32 0.0, %v2204
        %v2206 = vpop.f32.mrf.mxu0
        %v2207 = vpop.f32.mrf.mxu0
        %v2208 = vadd.f32 0.0, %v2207
        %v2209 = vpop.f32.mrf.mxu0
        %2210 = vmatprep.mubr.bf16.mxu0 0
        %2211 = vmatmul.mubr.bf16.gmra.mxu0 %v2048
        %v2212 = vpop.f32.mrf.mxu0
        %v2213 = vadd.f32 0.0, %v2212
        %v2214 = vpop.f32.mrf.mxu0
        %v2215 = vpop.f32.mrf.mxu0
        %v2216 = vadd.f32 0.0, %v2215
        %v2217 = vpop.f32.mrf.mxu0
        %2218 = vmatprep.mubr.bf16.mxu0 0
        %2219 = vmatmul.mubr.bf16.gmra.mxu0 %v2049
        %v2220 = vpop.f32.mrf.mxu0
        %v2221 = vadd.f32 0.0, %v2220
        %v2222 = vpop.f32.mrf.mxu0
        %v2223 = vpop.f32.mrf.mxu0
        %v2224 = vadd.f32 0.0, %v2223
        %v2225 = vpop.f32.mrf.mxu0
        %2226 = vmatprep.mubr.bf16.mxu0 0
        %2227 = vmatmul.mubr.bf16.gmra.mxu0 %v2050
        %v2228 = vpop.f32.mrf.mxu0
        %v2229 = vadd.f32 0.0, %v2228
        %v2230 = vpop.f32.mrf.mxu0
        %v2231 = vpop.f32.mrf.mxu0
        %v2232 = vadd.f32 0.0, %v2231
        %v2233 = vpop.f32.mrf.mxu0
        %2234 = vmatprep.mubr.bf16.mxu0 0
        %2235 = vmatmul.mubr.bf16.gmra.mxu0 %v2051
        %v2236 = vpop.f32.mrf.mxu0
        %v2237 = vadd.f32 0.0, %v2236
        %v2238 = vpop.f32.mrf.mxu0
        %v2239 = vpop.f32.mrf.mxu0
        %v2240 = vadd.f32 0.0, %v2239
        %v2241 = vpop.f32.mrf.mxu0
        %2242 = vmatprep.mubr.bf16.mxu0 0
        %2243 = vmatmul.mubr.bf16.gmra.mxu0 %v2052
        %v2244 = vpop.f32.mrf.mxu0
        %v2245 = vadd.f32 0.0, %v2244
        %v2246 = vpop.f32.mrf.mxu0
        %v2247 = vpop.f32.mrf.mxu0
        %v2248 = vadd.f32 0.0, %v2247
        %v2249 = vpop.f32.mrf.mxu0
        %2250 = vmatprep.mubr.bf16.mxu0 0
        %2251 = vmatmul.mubr.bf16.gmra.mxu0 %v2053
        %v2252 = vpop.f32.mrf.mxu0
        %v2253 = vadd.f32 0.0, %v2252
        %v2254 = vpop.f32.mrf.mxu0
        %v2255 = vpop.f32.mrf.mxu0
        %v2256 = vadd.f32 0.0, %v2255
        %v2257 = vpop.f32.mrf.mxu0
        %2258 = vmatprep.mubr.bf16.mxu0 0
        %2259 = vmatmul.mubr.bf16.gmra.mxu0 %v2054
        %v2260 = vpop.f32.mrf.mxu0
        %v2261 = vadd.f32 0.0, %v2260
        %v2262 = vpop.f32.mrf.mxu0
        %v2263 = vpop.f32.mrf.mxu0
        %v2264 = vadd.f32 0.0, %v2263
        %v2265 = vpop.f32.mrf.mxu0
        %2266 = vmatprep.mubr.bf16.mxu0 0
        %2267 = vmatmul.mubr.bf16.gmra.mxu0 %v2055
        %v2268 = vpop.f32.mrf.mxu0
        %v2269 = vadd.f32 0.0, %v2268
        %v2270 = vpop.f32.mrf.mxu0
        %v2271 = vpop.f32.mrf.mxu0
        %v2272 = vadd.f32 0.0, %v2271
        %v2273 = vpop.f32.mrf.mxu0
        %2274 = vmatprep.mubr.bf16.mxu0 0
        %2275 = vmatmul.mubr.bf16.gmra.mxu0 %v2056
        %v2276 = vpop.f32.mrf.mxu0
        %v2277 = vadd.f32 0.0, %v2276
        %v2278 = vpop.f32.mrf.mxu0
        %v2279 = vpop.f32.mrf.mxu0
        %v2280 = vadd.f32 0.0, %v2279
        %v2281 = vpop.f32.mrf.mxu0
        %2282 = vdwg.mxu0
        %v2283 = vadd.f32 %v1881, %v2157
        %v2284 = vadd.f32 %v1882, %v2160
        %v2285 = vadd.f32 %v1883, %v2165
        %v2286 = vadd.f32 %v1884, %v2168
        %v2287 = vadd.f32 %v1885, %v2173
        %v2288 = vadd.f32 %v1886, %v2176
        %v2289 = vadd.f32 %v1887, %v2181
        %v2290 = vadd.f32 %v1888, %v2184
        %v2291 = vadd.f32 %v1889, %v2189
        %v2292 = vadd.f32 %v1890, %v2192
        %v2293 = vadd.f32 %v1891, %v2197
        %v2294 = vadd.f32 %v1892, %v2200
        %v2295 = vadd.f32 %v1893, %v2205
        %v2296 = vadd.f32 %v1894, %v2208
        %v2297 = vadd.f32 %v1895, %v2213
        %v2298 = vadd.f32 %v1896, %v2216
        %v2299 = vadd.f32 %v1897, %v2221
        %v2300 = vadd.f32 %v1898, %v2224
        %v2301 = vadd.f32 %v1899, %v2229
        %v2302 = vadd.f32 %v1900, %v2232
        %v2303 = vadd.f32 %v1901, %v2237
        %v2304 = vadd.f32 %v1902, %v2240
        %v2305 = vadd.f32 %v1903, %v2245
        %v2306 = vadd.f32 %v1904, %v2248
        %v2307 = vadd.f32 %v1905, %v2253
        %v2308 = vadd.f32 %v1906, %v2256
        %v2309 = vadd.f32 %v1907, %v2261
        %v2310 = vadd.f32 %v1908, %v2264
        %v2311 = vadd.f32 %v1909, %v2269
        %v2312 = vadd.f32 %v1910, %v2272
        %v2313 = vadd.f32 %v1911, %v2277
        %v2314 = vadd.f32 %v1912, %v2280
        %v2315 = vld [vmem:[%s337 + $0x2] sm:$0xff]
        %v2316 = vld [vmem:[%s337 + $0xa] sm:$0xff]
        %v2317 = vld [vmem:[%s337 + $0x1a] sm:$0xff]
        %v2318 = vld [vmem:[%s337 + $0x22] sm:$0xff]
        %v2319 = vld [vmem:[%s337 + $0x32] sm:$0xff]
        %v2320 = vld [vmem:[%s337 + $0x3a] sm:$0xff]
        %v2321 = vld [vmem:[%s337 + $0x4a] sm:$0xff]
        %v2322 = vld [vmem:[%s337 + $0x52] sm:$0xff]
        %v2323 = vld [vmem:[%s337 + $0x62] sm:$0xff]
        %v2324 = vld [vmem:[%s337 + $0x6a] sm:$0xff]
        %v2325 = vld [vmem:[%s337 + $0x7a] sm:$0xff]
        %v2326 = vld [vmem:[%s337 + $0x82] sm:$0xff]
        %v2327 = vld [vmem:[%s337 + $0x92] sm:$0xff]
        %v2328 = vld [vmem:[%s337 + $0x9a] sm:$0xff]
        %v2329 = vld [vmem:[%s337 + $0xaa] sm:$0xff]
        %v2330 = vld [vmem:[%s337 + $0xb2] sm:$0xff]
        %v2331 = vld [vmem:[%s337 + $0xc2] sm:$0xff]
        %v2332 = vld [vmem:[%s337 + $0xca] sm:$0xff]
        %v2333 = vld [vmem:[%s337 + $0xda] sm:$0xff]
        %v2334 = vld [vmem:[%s337 + $0xe2] sm:$0xff]
        %v2335 = vld [vmem:[%s337 + $0xf2] sm:$0xff]
        %v2336 = vld [vmem:[%s337 + $0xfa] sm:$0xff]
        %v2337 = vld [vmem:[%s337 + $0x10a] sm:$0xff]
        %v2338 = vld [vmem:[%s337 + $0x112] sm:$0xff]
        %v2339 = vld [vmem:[%s337 + $0x122] sm:$0xff]
        %v2340 = vld [vmem:[%s337 + $0x12a] sm:$0xff]
        %v2341 = vld [vmem:[%s337 + $0x13a] sm:$0xff]
        %v2342 = vld [vmem:[%s337 + $0x142] sm:$0xff]
        %v2343 = vld [vmem:[%s337 + $0x152] sm:$0xff]
        %v2344 = vld [vmem:[%s337 + $0x15a] sm:$0xff]
        %v2345 = vld [vmem:[%s337 + $0x16a] sm:$0xff]
        %v2346 = vld [vmem:[%s337 + $0x172] sm:$0xff]
        %vm2347 = vcmp.ge.f32.partialorder %v2315, 0.0
        %vm2348 = vcmp.ge.f32.partialorder %v2316, 0.0
        %vm2349 = vcmp.ge.f32.partialorder %v2317, 0.0
        %vm2350 = vcmp.ge.f32.partialorder %v2318, 0.0
        %vm2351 = vcmp.ge.f32.partialorder %v2319, 0.0
        %vm2352 = vcmp.ge.f32.partialorder %v2320, 0.0
        %vm2353 = vcmp.ge.f32.partialorder %v2321, 0.0
        %vm2354 = vcmp.ge.f32.partialorder %v2322, 0.0
        %vm2355 = vcmp.ge.f32.partialorder %v2323, 0.0
        %vm2356 = vcmp.ge.f32.partialorder %v2324, 0.0
        %vm2357 = vcmp.ge.f32.partialorder %v2325, 0.0
        %vm2358 = vcmp.ge.f32.partialorder %v2326, 0.0
        %vm2359 = vcmp.ge.f32.partialorder %v2327, 0.0
        %vm2360 = vcmp.ge.f32.partialorder %v2328, 0.0
        %vm2361 = vcmp.ge.f32.partialorder %v2329, 0.0
        %vm2362 = vcmp.ge.f32.partialorder %v2330, 0.0
        %vm2363 = vcmp.ge.f32.partialorder %v2331, 0.0
        %vm2364 = vcmp.ge.f32.partialorder %v2332, 0.0
        %vm2365 = vcmp.ge.f32.partialorder %v2333, 0.0
        %vm2366 = vcmp.ge.f32.partialorder %v2334, 0.0
        %vm2367 = vcmp.ge.f32.partialorder %v2335, 0.0
        %vm2368 = vcmp.ge.f32.partialorder %v2336, 0.0
        %vm2369 = vcmp.ge.f32.partialorder %v2337, 0.0
        %vm2370 = vcmp.ge.f32.partialorder %v2338, 0.0
        %vm2371 = vcmp.ge.f32.partialorder %v2339, 0.0
        %vm2372 = vcmp.ge.f32.partialorder %v2340, 0.0
        %vm2373 = vcmp.ge.f32.partialorder %v2341, 0.0
        %vm2374 = vcmp.ge.f32.partialorder %v2342, 0.0
        %vm2375 = vcmp.ge.f32.partialorder %v2343, 0.0
        %vm2376 = vcmp.ge.f32.partialorder %v2344, 0.0
        %vm2377 = vcmp.ge.f32.partialorder %v2345, 0.0
        %vm2378 = vcmp.ge.f32.partialorder %v2346, 0.0
        %v2379 = vmul.f32 %v2315, 0.2
        %v2380 = vmul.f32 %v2316, 0.2
        %v2381 = vmul.f32 %v2317, 0.2
        %v2382 = vmul.f32 %v2318, 0.2
        %v2383 = vmul.f32 %v2319, 0.2
        %v2384 = vmul.f32 %v2320, 0.2
        %v2385 = vmul.f32 %v2321, 0.2
        %v2386 = vmul.f32 %v2322, 0.2
        %v2387 = vmul.f32 %v2323, 0.2
        %v2388 = vmul.f32 %v2324, 0.2
        %v2389 = vmul.f32 %v2325, 0.2
        %v2390 = vmul.f32 %v2326, 0.2
        %v2391 = vmul.f32 %v2327, 0.2
        %v2392 = vmul.f32 %v2328, 0.2
        %v2393 = vmul.f32 %v2329, 0.2
        %v2394 = vmul.f32 %v2330, 0.2
        %v2395 = vmul.f32 %v2331, 0.2
        %v2396 = vmul.f32 %v2332, 0.2
        %v2397 = vmul.f32 %v2333, 0.2
        %v2398 = vmul.f32 %v2334, 0.2
        %v2399 = vmul.f32 %v2335, 0.2
        %v2400 = vmul.f32 %v2336, 0.2
        %v2401 = vmul.f32 %v2337, 0.2
        %v2402 = vmul.f32 %v2338, 0.2
        %v2403 = vmul.f32 %v2339, 0.2
        %v2404 = vmul.f32 %v2340, 0.2
        %v2405 = vmul.f32 %v2341, 0.2
        %v2406 = vmul.f32 %v2342, 0.2
        %v2407 = vmul.f32 %v2343, 0.2
        %v2408 = vmul.f32 %v2344, 0.2
        %v2409 = vmul.f32 %v2345, 0.2
        %v2410 = vmul.f32 %v2346, 0.2
        %v2411 = vsel %vm2347, %v2315, %v2379
        %v2412 = vsel %vm2348, %v2316, %v2380
        %v2413 = vsel %vm2349, %v2317, %v2381
        %v2414 = vsel %vm2350, %v2318, %v2382
        %v2415 = vsel %vm2351, %v2319, %v2383
        %v2416 = vsel %vm2352, %v2320, %v2384
        %v2417 = vsel %vm2353, %v2321, %v2385
        %v2418 = vsel %vm2354, %v2322, %v2386
        %v2419 = vsel %vm2355, %v2323, %v2387
        %v2420 = vsel %vm2356, %v2324, %v2388
        %v2421 = vsel %vm2357, %v2325, %v2389
        %v2422 = vsel %vm2358, %v2326, %v2390
        %v2423 = vsel %vm2359, %v2327, %v2391
        %v2424 = vsel %vm2360, %v2328, %v2392
        %v2425 = vsel %vm2361, %v2329, %v2393
        %v2426 = vsel %vm2362, %v2330, %v2394
        %v2427 = vsel %vm2363, %v2331, %v2395
        %v2428 = vsel %vm2364, %v2332, %v2396
        %v2429 = vsel %vm2365, %v2333, %v2397
        %v2430 = vsel %vm2366, %v2334, %v2398
        %v2431 = vsel %vm2367, %v2335, %v2399
        %v2432 = vsel %vm2368, %v2336, %v2400
        %v2433 = vsel %vm2369, %v2337, %v2401
        %v2434 = vsel %vm2370, %v2338, %v2402
        %v2435 = vsel %vm2371, %v2339, %v2403
        %v2436 = vsel %vm2372, %v2340, %v2404
        %v2437 = vsel %vm2373, %v2341, %v2405
        %v2438 = vsel %vm2374, %v2342, %v2406
        %v2439 = vsel %vm2375, %v2343, %v2407
        %v2440 = vsel %vm2376, %v2344, %v2408
        %v2441 = vsel %vm2377, %v2345, %v2409
        %v2442 = vsel %vm2378, %v2346, %v2410
        %v2443 = vpack.c.bf16 %v2412, %v2411
        %v2444 = vpack.c.bf16 %v2414, %v2413
        %v2445 = vpack.c.bf16 %v2416, %v2415
        %v2446 = vpack.c.bf16 %v2418, %v2417
        %v2447 = vpack.c.bf16 %v2420, %v2419
        %v2448 = vpack.c.bf16 %v2422, %v2421
        %v2449 = vpack.c.bf16 %v2424, %v2423
        %v2450 = vpack.c.bf16 %v2426, %v2425
        %v2451 = vpack.c.bf16 %v2428, %v2427
        %v2452 = vpack.c.bf16 %v2430, %v2429
        %v2453 = vpack.c.bf16 %v2432, %v2431
        %v2454 = vpack.c.bf16 %v2434, %v2433
        %v2455 = vpack.c.bf16 %v2436, %v2435
        %v2456 = vpack.c.bf16 %v2438, %v2437
        %v2457 = vpack.c.bf16 %v2440, %v2439
        %v2458 = vpack.c.bf16 %v2442, %v2441
        %s2459 = scalar_lea.vmem %s1, 320
        %v2460 = vld [vmem:[%s2459] sm:$0xf]
        %v2461 = vld [vmem:[%s2459 + $0x4] sm:$0xf]
        %v2462 = vld [vmem:[%s2459 + $0x8] sm:$0xf]
        %v2463 = vld [vmem:[%s2459 + $0xc] sm:$0xf]
        %v2464 = vld [vmem:[%s2459 + $0x10] sm:$0xf]
        %v2465 = vld [vmem:[%s2459 + $0x14] sm:$0xf]
        %v2466 = vld [vmem:[%s2459 + $0x18] sm:$0xf]
        %v2467 = vld [vmem:[%s2459 + $0x1c] sm:$0xf]
        %v2468 = vld [vmem:[%s2459 + $0x20] sm:$0xf]
        %v2469 = vld [vmem:[%s2459 + $0x24] sm:$0xf]
        %v2470 = vld [vmem:[%s2459 + $0x28] sm:$0xf]
        %v2471 = vld [vmem:[%s2459 + $0x2c] sm:$0xf]
        %v2472 = vld [vmem:[%s2459 + $0x30] sm:$0xf]
        %v2473 = vld [vmem:[%s2459 + $0x34] sm:$0xf]
        %v2474 = vld [vmem:[%s2459 + $0x38] sm:$0xf]
        %v2475 = vld [vmem:[%s2459 + $0x3c] sm:$0xf]
        %v2492 = vunpack.c.l.b16 %v2460
        %v2493 = vunpack.c.l.b16 %v2461
        %v2494 = vunpack.c.l.b16 %v2462
        %v2495 = vunpack.c.l.b16 %v2463
        %v2496 = vunpack.c.l.b16 %v2464
        %v2497 = vunpack.c.l.b16 %v2465
        %v2498 = vunpack.c.l.b16 %v2466
        %v2499 = vunpack.c.l.b16 %v2467
        %v2500 = vunpack.c.l.b16 %v2468
        %v2501 = vunpack.c.l.b16 %v2469
        %v2502 = vunpack.c.l.b16 %v2470
        %v2503 = vunpack.c.l.b16 %v2471
        %v2504 = vunpack.c.l.b16 %v2472
        %v2505 = vunpack.c.l.b16 %v2473
        %v2506 = vunpack.c.l.b16 %v2474
        %v2507 = vunpack.c.l.b16 %v2475
        %v2508 = vpack.c.b16 %v2493, %v2492
        %v2509 = vpack.c.b16 %v2495, %v2494
        %v2510 = vpack.c.b16 %v2497, %v2496
        %v2511 = vpack.c.b16 %v2499, %v2498
        %v2512 = vpack.c.b16 %v2501, %v2500
        %v2513 = vpack.c.b16 %v2503, %v2502
        %v2514 = vpack.c.b16 %v2505, %v2504
        %v2515 = vpack.c.b16 %v2507, %v2506
        %2524 = vmatprep.subr.bf16.mxu0 0
        %2525 = vmatpush1.bf16.msra.mxu0 %v2515
        %2526 = vmatprep.subr.bf16.mxu0 0
        %2527 = vmatpush1.bf16.msra.mxu0 %v2514
        %2528 = vmatprep.subr.bf16.mxu0 0
        %2529 = vmatpush1.bf16.msra.mxu0 %v2513
        %2530 = vmatprep.subr.bf16.mxu0 0
        %2531 = vmatpush1.bf16.msra.mxu0 %v2512
        %2532 = vmatprep.subr.bf16.mxu0 0
        %2533 = vmatpush1.bf16.msra.mxu0 %v2511
        %2534 = vmatprep.subr.bf16.mxu0 0
        %2535 = vmatpush1.bf16.msra.mxu0 %v2510
        %2536 = vmatprep.subr.bf16.mxu0 0
        %2537 = vmatpush1.bf16.msra.mxu0 %v2509
        %2538 = vmatprep.subr.bf16.mxu0 0
        %2539 = vmatpush1.bf16.msra.mxu0 %v2508
        %2540 = vmatprep.subr.bf16.mxu0 0
        %2541 = vmatpush2.bf16.msra.mxu0 0
        %2542 = vmatprep.subr.bf16.mxu0 0
        %2543 = vmatpush2.bf16.msra.mxu0 0
        %2544 = vmatprep.subr.bf16.mxu0 0
        %2545 = vmatpush2.bf16.msra.mxu0 0
        %2546 = vmatprep.subr.bf16.mxu0 0
        %2547 = vmatpush2.bf16.msra.mxu0 0
        %2548 = vmatprep.subr.bf16.mxu0 0
        %2549 = vmatpush2.bf16.msra.mxu0 0
        %2550 = vmatprep.subr.bf16.mxu0 0
        %2551 = vmatpush2.bf16.msra.mxu0 0
        %2552 = vmatprep.subr.bf16.mxu0 0
        %2553 = vmatpush2.bf16.msra.mxu0 0
        %2554 = vmatprep.subr.bf16.mxu0 0
        %2555 = vmatpush2.bf16.msra.mxu0 0
        %2556 = vmatprep.mubr.bf16.mxu0 0
        %2557 = vmatmul.mubr.bf16.gmra.mxu0 %v2443
        %v2558 = vpop.f32.mrf.mxu0
        %v2559 = vadd.f32 0.0, %v2558
        %v2560 = vpop.f32.mrf.mxu0
        %v2561 = vpop.f32.mrf.mxu0
        %v2562 = vadd.f32 0.0, %v2561
        %v2563 = vpop.f32.mrf.mxu0
        %2564 = vmatprep.mubr.bf16.mxu0 0
        %2565 = vmatmul.mubr.bf16.gmra.mxu0 %v2444
        %v2566 = vpop.f32.mrf.mxu0
        %v2567 = vadd.f32 0.0, %v2566
        %v2568 = vpop.f32.mrf.mxu0
        %v2569 = vpop.f32.mrf.mxu0
        %v2570 = vadd.f32 0.0, %v2569
        %v2571 = vpop.f32.mrf.mxu0
        %2572 = vmatprep.mubr.bf16.mxu0 0
        %2573 = vmatmul.mubr.bf16.gmra.mxu0 %v2445
        %v2574 = vpop.f32.mrf.mxu0
        %v2575 = vadd.f32 0.0, %v2574
        %v2576 = vpop.f32.mrf.mxu0
        %v2577 = vpop.f32.mrf.mxu0
        %v2578 = vadd.f32 0.0, %v2577
        %v2579 = vpop.f32.mrf.mxu0
        %2580 = vmatprep.mubr.bf16.mxu0 0
        %2581 = vmatmul.mubr.bf16.gmra.mxu0 %v2446
        %v2582 = vpop.f32.mrf.mxu0
        %v2583 = vadd.f32 0.0, %v2582
        %v2584 = vpop.f32.mrf.mxu0
        %v2585 = vpop.f32.mrf.mxu0
        %v2586 = vadd.f32 0.0, %v2585
        %v2587 = vpop.f32.mrf.mxu0
        %2588 = vmatprep.mubr.bf16.mxu0 0
        %2589 = vmatmul.mubr.bf16.gmra.mxu0 %v2447
        %v2590 = vpop.f32.mrf.mxu0
        %v2591 = vadd.f32 0.0, %v2590
        %v2592 = vpop.f32.mrf.mxu0
        %v2593 = vpop.f32.mrf.mxu0
        %v2594 = vadd.f32 0.0, %v2593
        %v2595 = vpop.f32.mrf.mxu0
        %2596 = vmatprep.mubr.bf16.mxu0 0
        %2597 = vmatmul.mubr.bf16.gmra.mxu0 %v2448
        %v2598 = vpop.f32.mrf.mxu0
        %v2599 = vadd.f32 0.0, %v2598
        %v2600 = vpop.f32.mrf.mxu0
        %v2601 = vpop.f32.mrf.mxu0
        %v2602 = vadd.f32 0.0, %v2601
        %v2603 = vpop.f32.mrf.mxu0
        %2604 = vmatprep.mubr.bf16.mxu0 0
        %2605 = vmatmul.mubr.bf16.gmra.mxu0 %v2449
        %v2606 = vpop.f32.mrf.mxu0
        %v2607 = vadd.f32 0.0, %v2606
        %v2608 = vpop.f32.mrf.mxu0
        %v2609 = vpop.f32.mrf.mxu0
        %v2610 = vadd.f32 0.0, %v2609
        %v2611 = vpop.f32.mrf.mxu0
        %2612 = vmatprep.mubr.bf16.mxu0 0
        %2613 = vmatmul.mubr.bf16.gmra.mxu0 %v2450
        %v2614 = vpop.f32.mrf.mxu0
        %v2615 = vadd.f32 0.0, %v2614
        %v2616 = vpop.f32.mrf.mxu0
        %v2617 = vpop.f32.mrf.mxu0
        %v2618 = vadd.f32 0.0, %v2617
        %v2619 = vpop.f32.mrf.mxu0
        %2620 = vmatprep.mubr.bf16.mxu0 0
        %2621 = vmatmul.mubr.bf16.gmra.mxu0 %v2451
        %v2622 = vpop.f32.mrf.mxu0
        %v2623 = vadd.f32 0.0, %v2622
        %v2624 = vpop.f32.mrf.mxu0
        %v2625 = vpop.f32.mrf.mxu0
        %v2626 = vadd.f32 0.0, %v2625
        %v2627 = vpop.f32.mrf.mxu0
        %2628 = vmatprep.mubr.bf16.mxu0 0
        %2629 = vmatmul.mubr.bf16.gmra.mxu0 %v2452
        %v2630 = vpop.f32.mrf.mxu0
        %v2631 = vadd.f32 0.0, %v2630
        %v2632 = vpop.f32.mrf.mxu0
        %v2633 = vpop.f32.mrf.mxu0
        %v2634 = vadd.f32 0.0, %v2633
        %v2635 = vpop.f32.mrf.mxu0
        %2636 = vmatprep.mubr.bf16.mxu0 0
        %2637 = vmatmul.mubr.bf16.gmra.mxu0 %v2453
        %v2638 = vpop.f32.mrf.mxu0
        %v2639 = vadd.f32 0.0, %v2638
        %v2640 = vpop.f32.mrf.mxu0
        %v2641 = vpop.f32.mrf.mxu0
        %v2642 = vadd.f32 0.0, %v2641
        %v2643 = vpop.f32.mrf.mxu0
        %2644 = vmatprep.mubr.bf16.mxu0 0
        %2645 = vmatmul.mubr.bf16.gmra.mxu0 %v2454
        %v2646 = vpop.f32.mrf.mxu0
        %v2647 = vadd.f32 0.0, %v2646
        %v2648 = vpop.f32.mrf.mxu0
        %v2649 = vpop.f32.mrf.mxu0
        %v2650 = vadd.f32 0.0, %v2649
        %v2651 = vpop.f32.mrf.mxu0
        %2652 = vmatprep.mubr.bf16.mxu0 0
        %2653 = vmatmul.mubr.bf16.gmra.mxu0 %v2455
        %v2654 = vpop.f32.mrf.mxu0
        %v2655 = vadd.f32 0.0, %v2654
        %v2656 = vpop.f32.mrf.mxu0
        %v2657 = vpop.f32.mrf.mxu0
        %v2658 = vadd.f32 0.0, %v2657
        %v2659 = vpop.f32.mrf.mxu0
        %2660 = vmatprep.mubr.bf16.mxu0 0
        %2661 = vmatmul.mubr.bf16.gmra.mxu0 %v2456
        %v2662 = vpop.f32.mrf.mxu0
        %v2663 = vadd.f32 0.0, %v2662
        %v2664 = vpop.f32.mrf.mxu0
        %v2665 = vpop.f32.mrf.mxu0
        %v2666 = vadd.f32 0.0, %v2665
        %v2667 = vpop.f32.mrf.mxu0
        %2668 = vmatprep.mubr.bf16.mxu0 0
        %2669 = vmatmul.mubr.bf16.gmra.mxu0 %v2457
        %v2670 = vpop.f32.mrf.mxu0
        %v2671 = vadd.f32 0.0, %v2670
        %v2672 = vpop.f32.mrf.mxu0
        %v2673 = vpop.f32.mrf.mxu0
        %v2674 = vadd.f32 0.0, %v2673
        %v2675 = vpop.f32.mrf.mxu0
        %2676 = vmatprep.mubr.bf16.mxu0 0
        %2677 = vmatmul.mubr.bf16.gmra.mxu0 %v2458
        %v2678 = vpop.f32.mrf.mxu0
        %v2679 = vadd.f32 0.0, %v2678
        %v2680 = vpop.f32.mrf.mxu0
        %v2681 = vpop.f32.mrf.mxu0
        %v2682 = vadd.f32 0.0, %v2681
        %v2683 = vpop.f32.mrf.mxu0
        %2684 = vdwg.mxu0
        %v2685 = vadd.f32 %v2283, %v2559
        %v2686 = vadd.f32 %v2284, %v2562
        %v2687 = vadd.f32 %v2285, %v2567
        %v2688 = vadd.f32 %v2286, %v2570
        %v2689 = vadd.f32 %v2287, %v2575
        %v2690 = vadd.f32 %v2288, %v2578
        %v2691 = vadd.f32 %v2289, %v2583
        %v2692 = vadd.f32 %v2290, %v2586
        %v2693 = vadd.f32 %v2291, %v2591
        %v2694 = vadd.f32 %v2292, %v2594
        %v2695 = vadd.f32 %v2293, %v2599
        %v2696 = vadd.f32 %v2294, %v2602
        %v2697 = vadd.f32 %v2295, %v2607
        %v2698 = vadd.f32 %v2296, %v2610
        %v2699 = vadd.f32 %v2297, %v2615
        %v2700 = vadd.f32 %v2298, %v2618
        %v2701 = vadd.f32 %v2299, %v2623
        %v2702 = vadd.f32 %v2300, %v2626
        %v2703 = vadd.f32 %v2301, %v2631
        %v2704 = vadd.f32 %v2302, %v2634
        %v2705 = vadd.f32 %v2303, %v2639
        %v2706 = vadd.f32 %v2304, %v2642
        %v2707 = vadd.f32 %v2305, %v2647
        %v2708 = vadd.f32 %v2306, %v2650
        %v2709 = vadd.f32 %v2307, %v2655
        %v2710 = vadd.f32 %v2308, %v2658
        %v2711 = vadd.f32 %v2309, %v2663
        %v2712 = vadd.f32 %v2310, %v2666
        %v2713 = vadd.f32 %v2311, %v2671
        %v2714 = vadd.f32 %v2312, %v2674
        %v2715 = vadd.f32 %v2313, %v2679
        %v2716 = vadd.f32 %v2314, %v2682
        %s2717 = scalar_lea.vmem [#allocation2], 48
        %v2718 = vld [vmem:[%s2717] sm:$0xff]
        %v2719 = vld [vmem:[%s2717 + $0x8] sm:$0xff]
        %v2720 = vld [vmem:[%s2717 + $0x18] sm:$0xff]
        %v2721 = vld [vmem:[%s2717 + $0x20] sm:$0xff]
        %v2722 = vld [vmem:[%s2717 + $0x30] sm:$0xff]
        %v2723 = vld [vmem:[%s2717 + $0x38] sm:$0xff]
        %v2724 = vld [vmem:[%s2717 + $0x48] sm:$0xff]
        %v2725 = vld [vmem:[%s2717 + $0x50] sm:$0xff]
        %v2726 = vld [vmem:[%s2717 + $0x60] sm:$0xff]
        %v2727 = vld [vmem:[%s2717 + $0x68] sm:$0xff]
        %v2728 = vld [vmem:[%s2717 + $0x78] sm:$0xff]
        %v2729 = vld [vmem:[%s2717 + $0x80] sm:$0xff]
        %v2730 = vld [vmem:[%s2717 + $0x90] sm:$0xff]
        %v2731 = vld [vmem:[%s2717 + $0x98] sm:$0xff]
        %v2732 = vld [vmem:[%s2717 + $0xa8] sm:$0xff]
        %v2733 = vld [vmem:[%s2717 + $0xb0] sm:$0xff]
        %v2734 = vld [vmem:[%s2717 + $0xc0] sm:$0xff]
        %v2735 = vld [vmem:[%s2717 + $0xc8] sm:$0xff]
        %v2736 = vld [vmem:[%s2717 + $0xd8] sm:$0xff]
        %v2737 = vld [vmem:[%s2717 + $0xe0] sm:$0xff]
        %v2738 = vld [vmem:[%s2717 + $0xf0] sm:$0xff]
        %v2739 = vld [vmem:[%s2717 + $0xf8] sm:$0xff]
        %v2740 = vld [vmem:[%s2717 + $0x108] sm:$0xff]
        %v2741 = vld [vmem:[%s2717 + $0x110] sm:$0xff]
        %v2742 = vld [vmem:[%s2717 + $0x120] sm:$0xff]
        %v2743 = vld [vmem:[%s2717 + $0x128] sm:$0xff]
        %v2744 = vld [vmem:[%s2717 + $0x138] sm:$0xff]
        %v2745 = vld [vmem:[%s2717 + $0x140] sm:$0xff]
        %v2746 = vld [vmem:[%s2717 + $0x150] sm:$0xff]
        %v2747 = vld [vmem:[%s2717 + $0x158] sm:$0xff]
        %v2748 = vld [vmem:[%s2717 + $0x168] sm:$0xff]
        %v2749 = vld [vmem:[%s2717 + $0x170] sm:$0xff]
        %vm2750 = vcmp.ge.f32.partialorder %v2718, 0.0
        %vm2751 = vcmp.ge.f32.partialorder %v2719, 0.0
        %vm2752 = vcmp.ge.f32.partialorder %v2720, 0.0
        %vm2753 = vcmp.ge.f32.partialorder %v2721, 0.0
        %vm2754 = vcmp.ge.f32.partialorder %v2722, 0.0
        %vm2755 = vcmp.ge.f32.partialorder %v2723, 0.0
        %vm2756 = vcmp.ge.f32.partialorder %v2724, 0.0
        %vm2757 = vcmp.ge.f32.partialorder %v2725, 0.0
        %vm2758 = vcmp.ge.f32.partialorder %v2726, 0.0
        %vm2759 = vcmp.ge.f32.partialorder %v2727, 0.0
        %vm2760 = vcmp.ge.f32.partialorder %v2728, 0.0
        %vm2761 = vcmp.ge.f32.partialorder %v2729, 0.0
        %vm2762 = vcmp.ge.f32.partialorder %v2730, 0.0
        %vm2763 = vcmp.ge.f32.partialorder %v2731, 0.0
        %vm2764 = vcmp.ge.f32.partialorder %v2732, 0.0
        %vm2765 = vcmp.ge.f32.partialorder %v2733, 0.0
        %vm2766 = vcmp.ge.f32.partialorder %v2734, 0.0
        %vm2767 = vcmp.ge.f32.partialorder %v2735, 0.0
        %vm2768 = vcmp.ge.f32.partialorder %v2736, 0.0
        %vm2769 = vcmp.ge.f32.partialorder %v2737, 0.0
        %vm2770 = vcmp.ge.f32.partialorder %v2738, 0.0
        %vm2771 = vcmp.ge.f32.partialorder %v2739, 0.0
        %vm2772 = vcmp.ge.f32.partialorder %v2740, 0.0
        %vm2773 = vcmp.ge.f32.partialorder %v2741, 0.0
        %vm2774 = vcmp.ge.f32.partialorder %v2742, 0.0
        %vm2775 = vcmp.ge.f32.partialorder %v2743, 0.0
        %vm2776 = vcmp.ge.f32.partialorder %v2744, 0.0
        %vm2777 = vcmp.ge.f32.partialorder %v2745, 0.0
        %vm2778 = vcmp.ge.f32.partialorder %v2746, 0.0
        %vm2779 = vcmp.ge.f32.partialorder %v2747, 0.0
        %vm2780 = vcmp.ge.f32.partialorder %v2748, 0.0
        %vm2781 = vcmp.ge.f32.partialorder %v2749, 0.0
        %v2782 = vmul.f32 %v2718, 0.2
        %v2783 = vmul.f32 %v2719, 0.2
        %v2784 = vmul.f32 %v2720, 0.2
        %v2785 = vmul.f32 %v2721, 0.2
        %v2786 = vmul.f32 %v2722, 0.2
        %v2787 = vmul.f32 %v2723, 0.2
        %v2788 = vmul.f32 %v2724, 0.2
        %v2789 = vmul.f32 %v2725, 0.2
        %v2790 = vmul.f32 %v2726, 0.2
        %v2791 = vmul.f32 %v2727, 0.2
        %v2792 = vmul.f32 %v2728, 0.2
        %v2793 = vmul.f32 %v2729, 0.2
        %v2794 = vmul.f32 %v2730, 0.2
        %v2795 = vmul.f32 %v2731, 0.2
        %v2796 = vmul.f32 %v2732, 0.2
        %v2797 = vmul.f32 %v2733, 0.2
        %v2798 = vmul.f32 %v2734, 0.2
        %v2799 = vmul.f32 %v2735, 0.2
        %v2800 = vmul.f32 %v2736, 0.2
        %v2801 = vmul.f32 %v2737, 0.2
        %v2802 = vmul.f32 %v2738, 0.2
        %v2803 = vmul.f32 %v2739, 0.2
        %v2804 = vmul.f32 %v2740, 0.2
        %v2805 = vmul.f32 %v2741, 0.2
        %v2806 = vmul.f32 %v2742, 0.2
        %v2807 = vmul.f32 %v2743, 0.2
        %v2808 = vmul.f32 %v2744, 0.2
        %v2809 = vmul.f32 %v2745, 0.2
        %v2810 = vmul.f32 %v2746, 0.2
        %v2811 = vmul.f32 %v2747, 0.2
        %v2812 = vmul.f32 %v2748, 0.2
        %v2813 = vmul.f32 %v2749, 0.2
        %v2814 = vsel %vm2750, %v2718, %v2782
        %v2815 = vsel %vm2751, %v2719, %v2783
        %v2816 = vsel %vm2752, %v2720, %v2784
        %v2817 = vsel %vm2753, %v2721, %v2785
        %v2818 = vsel %vm2754, %v2722, %v2786
        %v2819 = vsel %vm2755, %v2723, %v2787
        %v2820 = vsel %vm2756, %v2724, %v2788
        %v2821 = vsel %vm2757, %v2725, %v2789
        %v2822 = vsel %vm2758, %v2726, %v2790
        %v2823 = vsel %vm2759, %v2727, %v2791
        %v2824 = vsel %vm2760, %v2728, %v2792
        %v2825 = vsel %vm2761, %v2729, %v2793
        %v2826 = vsel %vm2762, %v2730, %v2794
        %v2827 = vsel %vm2763, %v2731, %v2795
        %v2828 = vsel %vm2764, %v2732, %v2796
        %v2829 = vsel %vm2765, %v2733, %v2797
        %v2830 = vsel %vm2766, %v2734, %v2798
        %v2831 = vsel %vm2767, %v2735, %v2799
        %v2832 = vsel %vm2768, %v2736, %v2800
        %v2833 = vsel %vm2769, %v2737, %v2801
        %v2834 = vsel %vm2770, %v2738, %v2802
        %v2835 = vsel %vm2771, %v2739, %v2803
        %v2836 = vsel %vm2772, %v2740, %v2804
        %v2837 = vsel %vm2773, %v2741, %v2805
        %v2838 = vsel %vm2774, %v2742, %v2806
        %v2839 = vsel %vm2775, %v2743, %v2807
        %v2840 = vsel %vm2776, %v2744, %v2808
        %v2841 = vsel %vm2777, %v2745, %v2809
        %v2842 = vsel %vm2778, %v2746, %v2810
        %v2843 = vsel %vm2779, %v2747, %v2811
        %v2844 = vsel %vm2780, %v2748, %v2812
        %v2845 = vsel %vm2781, %v2749, %v2813
        %v2846 = vpack.c.bf16 %v2815, %v2814
        %v2847 = vpack.c.bf16 %v2817, %v2816
        %v2848 = vpack.c.bf16 %v2819, %v2818
        %v2849 = vpack.c.bf16 %v2821, %v2820
        %v2850 = vpack.c.bf16 %v2823, %v2822
        %v2851 = vpack.c.bf16 %v2825, %v2824
        %v2852 = vpack.c.bf16 %v2827, %v2826
        %v2853 = vpack.c.bf16 %v2829, %v2828
        %v2854 = vpack.c.bf16 %v2831, %v2830
        %v2855 = vpack.c.bf16 %v2833, %v2832
        %v2856 = vpack.c.bf16 %v2835, %v2834
        %v2857 = vpack.c.bf16 %v2837, %v2836
        %v2858 = vpack.c.bf16 %v2839, %v2838
        %v2859 = vpack.c.bf16 %v2841, %v2840
        %v2860 = vpack.c.bf16 %v2843, %v2842
        %v2861 = vpack.c.bf16 %v2845, %v2844
        %s2862 = scalar_lea.vmem %s1, 384
        %v2863 = vld [vmem:[%s2862] sm:$0xf]
        %v2864 = vld [vmem:[%s2862 + $0x4] sm:$0xf]
        %v2865 = vld [vmem:[%s2862 + $0x8] sm:$0xf]
        %v2866 = vld [vmem:[%s2862 + $0xc] sm:$0xf]
        %v2867 = vld [vmem:[%s2862 + $0x10] sm:$0xf]
        %v2868 = vld [vmem:[%s2862 + $0x14] sm:$0xf]
        %v2869 = vld [vmem:[%s2862 + $0x18] sm:$0xf]
        %v2870 = vld [vmem:[%s2862 + $0x1c] sm:$0xf]
        %v2871 = vld [vmem:[%s2862 + $0x20] sm:$0xf]
        %v2872 = vld [vmem:[%s2862 + $0x24] sm:$0xf]
        %v2873 = vld [vmem:[%s2862 + $0x28] sm:$0xf]
        %v2874 = vld [vmem:[%s2862 + $0x2c] sm:$0xf]
        %v2875 = vld [vmem:[%s2862 + $0x30] sm:$0xf]
        %v2876 = vld [vmem:[%s2862 + $0x34] sm:$0xf]
        %v2877 = vld [vmem:[%s2862 + $0x38] sm:$0xf]
        %v2878 = vld [vmem:[%s2862 + $0x3c] sm:$0xf]
        %v2895 = vunpack.c.l.b16 %v2863
        %v2896 = vunpack.c.l.b16 %v2864
        %v2897 = vunpack.c.l.b16 %v2865
        %v2898 = vunpack.c.l.b16 %v2866
        %v2899 = vunpack.c.l.b16 %v2867
        %v2900 = vunpack.c.l.b16 %v2868
        %v2901 = vunpack.c.l.b16 %v2869
        %v2902 = vunpack.c.l.b16 %v2870
        %v2903 = vunpack.c.l.b16 %v2871
        %v2904 = vunpack.c.l.b16 %v2872
        %v2905 = vunpack.c.l.b16 %v2873
        %v2906 = vunpack.c.l.b16 %v2874
        %v2907 = vunpack.c.l.b16 %v2875
        %v2908 = vunpack.c.l.b16 %v2876
        %v2909 = vunpack.c.l.b16 %v2877
        %v2910 = vunpack.c.l.b16 %v2878
        %v2911 = vpack.c.b16 %v2896, %v2895
        %v2912 = vpack.c.b16 %v2898, %v2897
        %v2913 = vpack.c.b16 %v2900, %v2899
        %v2914 = vpack.c.b16 %v2902, %v2901
        %v2915 = vpack.c.b16 %v2904, %v2903
        %v2916 = vpack.c.b16 %v2906, %v2905
        %v2917 = vpack.c.b16 %v2908, %v2907
        %v2918 = vpack.c.b16 %v2910, %v2909
        %2927 = vmatprep.subr.bf16.mxu0 0
        %2928 = vmatpush1.bf16.msra.mxu0 %v2918
        %2929 = vmatprep.subr.bf16.mxu0 0
        %2930 = vmatpush1.bf16.msra.mxu0 %v2917
        %2931 = vmatprep.subr.bf16.mxu0 0
        %2932 = vmatpush1.bf16.msra.mxu0 %v2916
        %2933 = vmatprep.subr.bf16.mxu0 0
        %2934 = vmatpush1.bf16.msra.mxu0 %v2915
        %2935 = vmatprep.subr.bf16.mxu0 0
        %2936 = vmatpush1.bf16.msra.mxu0 %v2914
        %2937 = vmatprep.subr.bf16.mxu0 0
        %2938 = vmatpush1.bf16.msra.mxu0 %v2913
        %2939 = vmatprep.subr.bf16.mxu0 0
        %2940 = vmatpush1.bf16.msra.mxu0 %v2912
        %2941 = vmatprep.subr.bf16.mxu0 0
        %2942 = vmatpush1.bf16.msra.mxu0 %v2911
        %2943 = vmatprep.subr.bf16.mxu0 0
        %2944 = vmatpush2.bf16.msra.mxu0 0
        %2945 = vmatprep.subr.bf16.mxu0 0
        %2946 = vmatpush2.bf16.msra.mxu0 0
        %2947 = vmatprep.subr.bf16.mxu0 0
        %2948 = vmatpush2.bf16.msra.mxu0 0
        %2949 = vmatprep.subr.bf16.mxu0 0
        %2950 = vmatpush2.bf16.msra.mxu0 0
        %2951 = vmatprep.subr.bf16.mxu0 0
        %2952 = vmatpush2.bf16.msra.mxu0 0
        %2953 = vmatprep.subr.bf16.mxu0 0
        %2954 = vmatpush2.bf16.msra.mxu0 0
        %2955 = vmatprep.subr.bf16.mxu0 0
        %2956 = vmatpush2.bf16.msra.mxu0 0
        %2957 = vmatprep.subr.bf16.mxu0 0
        %2958 = vmatpush2.bf16.msra.mxu0 0
        %2959 = vmatprep.mubr.bf16.mxu0 0
        %2960 = vmatmul.mubr.bf16.gmra.mxu0 %v2846
        %v2961 = vpop.f32.mrf.mxu0
        %v2962 = vadd.f32 0.0, %v2961
        %v2963 = vpop.f32.mrf.mxu0
        %v2964 = vpop.f32.mrf.mxu0
        %v2965 = vadd.f32 0.0, %v2964
        %v2966 = vpop.f32.mrf.mxu0
        %2967 = vmatprep.mubr.bf16.mxu0 0
        %2968 = vmatmul.mubr.bf16.gmra.mxu0 %v2847
        %v2969 = vpop.f32.mrf.mxu0
        %v2970 = vadd.f32 0.0, %v2969
        %v2971 = vpop.f32.mrf.mxu0
        %v2972 = vpop.f32.mrf.mxu0
        %v2973 = vadd.f32 0.0, %v2972
        %v2974 = vpop.f32.mrf.mxu0
        %2975 = vmatprep.mubr.bf16.mxu0 0
        %2976 = vmatmul.mubr.bf16.gmra.mxu0 %v2848
        %v2977 = vpop.f32.mrf.mxu0
        %v2978 = vadd.f32 0.0, %v2977
        %v2979 = vpop.f32.mrf.mxu0
        %v2980 = vpop.f32.mrf.mxu0
        %v2981 = vadd.f32 0.0, %v2980
        %v2982 = vpop.f32.mrf.mxu0
        %2983 = vmatprep.mubr.bf16.mxu0 0
        %2984 = vmatmul.mubr.bf16.gmra.mxu0 %v2849
        %v2985 = vpop.f32.mrf.mxu0
        %v2986 = vadd.f32 0.0, %v2985
        %v2987 = vpop.f32.mrf.mxu0
        %v2988 = vpop.f32.mrf.mxu0
        %v2989 = vadd.f32 0.0, %v2988
        %v2990 = vpop.f32.mrf.mxu0
        %2991 = vmatprep.mubr.bf16.mxu0 0
        %2992 = vmatmul.mubr.bf16.gmra.mxu0 %v2850
        %v2993 = vpop.f32.mrf.mxu0
        %v2994 = vadd.f32 0.0, %v2993
        %v2995 = vpop.f32.mrf.mxu0
        %v2996 = vpop.f32.mrf.mxu0
        %v2997 = vadd.f32 0.0, %v2996
        %v2998 = vpop.f32.mrf.mxu0
        %2999 = vmatprep.mubr.bf16.mxu0 0
        %3000 = vmatmul.mubr.bf16.gmra.mxu0 %v2851
        %v3001 = vpop.f32.mrf.mxu0
        %v3002 = vadd.f32 0.0, %v3001
        %v3003 = vpop.f32.mrf.mxu0
        %v3004 = vpop.f32.mrf.mxu0
        %v3005 = vadd.f32 0.0, %v3004
        %v3006 = vpop.f32.mrf.mxu0
        %3007 = vmatprep.mubr.bf16.mxu0 0
        %3008 = vmatmul.mubr.bf16.gmra.mxu0 %v2852
        %v3009 = vpop.f32.mrf.mxu0
        %v3010 = vadd.f32 0.0, %v3009
        %v3011 = vpop.f32.mrf.mxu0
        %v3012 = vpop.f32.mrf.mxu0
        %v3013 = vadd.f32 0.0, %v3012
        %v3014 = vpop.f32.mrf.mxu0
        %3015 = vmatprep.mubr.bf16.mxu0 0
        %3016 = vmatmul.mubr.bf16.gmra.mxu0 %v2853
        %v3017 = vpop.f32.mrf.mxu0
        %v3018 = vadd.f32 0.0, %v3017
        %v3019 = vpop.f32.mrf.mxu0
        %v3020 = vpop.f32.mrf.mxu0
        %v3021 = vadd.f32 0.0, %v3020
        %v3022 = vpop.f32.mrf.mxu0
        %3023 = vmatprep.mubr.bf16.mxu0 0
        %3024 = vmatmul.mubr.bf16.gmra.mxu0 %v2854
        %v3025 = vpop.f32.mrf.mxu0
        %v3026 = vadd.f32 0.0, %v3025
        %v3027 = vpop.f32.mrf.mxu0
        %v3028 = vpop.f32.mrf.mxu0
        %v3029 = vadd.f32 0.0, %v3028
        %v3030 = vpop.f32.mrf.mxu0
        %3031 = vmatprep.mubr.bf16.mxu0 0
        %3032 = vmatmul.mubr.bf16.gmra.mxu0 %v2855
        %v3033 = vpop.f32.mrf.mxu0
        %v3034 = vadd.f32 0.0, %v3033
        %v3035 = vpop.f32.mrf.mxu0
        %v3036 = vpop.f32.mrf.mxu0
        %v3037 = vadd.f32 0.0, %v3036
        %v3038 = vpop.f32.mrf.mxu0
        %3039 = vmatprep.mubr.bf16.mxu0 0
        %3040 = vmatmul.mubr.bf16.gmra.mxu0 %v2856
        %v3041 = vpop.f32.mrf.mxu0
        %v3042 = vadd.f32 0.0, %v3041
        %v3043 = vpop.f32.mrf.mxu0
        %v3044 = vpop.f32.mrf.mxu0
        %v3045 = vadd.f32 0.0, %v3044
        %v3046 = vpop.f32.mrf.mxu0
        %3047 = vmatprep.mubr.bf16.mxu0 0
        %3048 = vmatmul.mubr.bf16.gmra.mxu0 %v2857
        %v3049 = vpop.f32.mrf.mxu0
        %v3050 = vadd.f32 0.0, %v3049
        %v3051 = vpop.f32.mrf.mxu0
        %v3052 = vpop.f32.mrf.mxu0
        %v3053 = vadd.f32 0.0, %v3052
        %v3054 = vpop.f32.mrf.mxu0
        %3055 = vmatprep.mubr.bf16.mxu0 0
        %3056 = vmatmul.mubr.bf16.gmra.mxu0 %v2858
        %v3057 = vpop.f32.mrf.mxu0
        %v3058 = vadd.f32 0.0, %v3057
        %v3059 = vpop.f32.mrf.mxu0
        %v3060 = vpop.f32.mrf.mxu0
        %v3061 = vadd.f32 0.0, %v3060
        %v3062 = vpop.f32.mrf.mxu0
        %3063 = vmatprep.mubr.bf16.mxu0 0
        %3064 = vmatmul.mubr.bf16.gmra.mxu0 %v2859
        %v3065 = vpop.f32.mrf.mxu0
        %v3066 = vadd.f32 0.0, %v3065
        %v3067 = vpop.f32.mrf.mxu0
        %v3068 = vpop.f32.mrf.mxu0
        %v3069 = vadd.f32 0.0, %v3068
        %v3070 = vpop.f32.mrf.mxu0
        %3071 = vmatprep.mubr.bf16.mxu0 0
        %3072 = vmatmul.mubr.bf16.gmra.mxu0 %v2860
        %v3073 = vpop.f32.mrf.mxu0
        %v3074 = vadd.f32 0.0, %v3073
        %v3075 = vpop.f32.mrf.mxu0
        %v3076 = vpop.f32.mrf.mxu0
        %v3077 = vadd.f32 0.0, %v3076
        %v3078 = vpop.f32.mrf.mxu0
        %3079 = vmatprep.mubr.bf16.mxu0 0
        %3080 = vmatmul.mubr.bf16.gmra.mxu0 %v2861
        %v3081 = vpop.f32.mrf.mxu0
        %v3082 = vadd.f32 0.0, %v3081
        %v3083 = vpop.f32.mrf.mxu0
        %v3084 = vpop.f32.mrf.mxu0
        %v3085 = vadd.f32 0.0, %v3084
        %v3086 = vpop.f32.mrf.mxu0
        %3087 = vdwg.mxu0
        %v3088 = vadd.f32 %v2685, %v2962
        %v3089 = vadd.f32 %v2686, %v2965
        %v3090 = vadd.f32 %v2687, %v2970
        %v3091 = vadd.f32 %v2688, %v2973
        %v3092 = vadd.f32 %v2689, %v2978
        %v3093 = vadd.f32 %v2690, %v2981
        %v3094 = vadd.f32 %v2691, %v2986
        %v3095 = vadd.f32 %v2692, %v2989
        %v3096 = vadd.f32 %v2693, %v2994
        %v3097 = vadd.f32 %v2694, %v2997
        %v3098 = vadd.f32 %v2695, %v3002
        %v3099 = vadd.f32 %v2696, %v3005
        %v3100 = vadd.f32 %v2697, %v3010
        %v3101 = vadd.f32 %v2698, %v3013
        %v3102 = vadd.f32 %v2699, %v3018
        %v3103 = vadd.f32 %v2700, %v3021
        %v3104 = vadd.f32 %v2701, %v3026
        %v3105 = vadd.f32 %v2702, %v3029
        %v3106 = vadd.f32 %v2703, %v3034
        %v3107 = vadd.f32 %v2704, %v3037
        %v3108 = vadd.f32 %v2705, %v3042
        %v3109 = vadd.f32 %v2706, %v3045
        %v3110 = vadd.f32 %v2707, %v3050
        %v3111 = vadd.f32 %v2708, %v3053
        %v3112 = vadd.f32 %v2709, %v3058
        %v3113 = vadd.f32 %v2710, %v3061
        %v3114 = vadd.f32 %v2711, %v3066
        %v3115 = vadd.f32 %v2712, %v3069
        %v3116 = vadd.f32 %v2713, %v3074
        %v3117 = vadd.f32 %v2714, %v3077
        %v3118 = vadd.f32 %v2715, %v3082
        %v3119 = vadd.f32 %v2716, %v3085
        %v3120 = vld [vmem:[%s2717 + $0x1] sm:$0xff]
        %v3121 = vld [vmem:[%s2717 + $0x9] sm:$0xff]
        %v3122 = vld [vmem:[%s2717 + $0x19] sm:$0xff]
        %v3123 = vld [vmem:[%s2717 + $0x21] sm:$0xff]
        %v3124 = vld [vmem:[%s2717 + $0x31] sm:$0xff]
        %v3125 = vld [vmem:[%s2717 + $0x39] sm:$0xff]
        %v3126 = vld [vmem:[%s2717 + $0x49] sm:$0xff]
        %v3127 = vld [vmem:[%s2717 + $0x51] sm:$0xff]
        %v3128 = vld [vmem:[%s2717 + $0x61] sm:$0xff]
        %v3129 = vld [vmem:[%s2717 + $0x69] sm:$0xff]
        %v3130 = vld [vmem:[%s2717 + $0x79] sm:$0xff]
        %v3131 = vld [vmem:[%s2717 + $0x81] sm:$0xff]
        %v3132 = vld [vmem:[%s2717 + $0x91] sm:$0xff]
        %v3133 = vld [vmem:[%s2717 + $0x99] sm:$0xff]
        %v3134 = vld [vmem:[%s2717 + $0xa9] sm:$0xff]
        %v3135 = vld [vmem:[%s2717 + $0xb1] sm:$0xff]
        %v3136 = vld [vmem:[%s2717 + $0xc1] sm:$0xff]
        %v3137 = vld [vmem:[%s2717 + $0xc9] sm:$0xff]
        %v3138 = vld [vmem:[%s2717 + $0xd9] sm:$0xff]
        %v3139 = vld [vmem:[%s2717 + $0xe1] sm:$0xff]
        %v3140 = vld [vmem:[%s2717 + $0xf1] sm:$0xff]
        %v3141 = vld [vmem:[%s2717 + $0xf9] sm:$0xff]
        %v3142 = vld [vmem:[%s2717 + $0x109] sm:$0xff]
        %v3143 = vld [vmem:[%s2717 + $0x111] sm:$0xff]
        %v3144 = vld [vmem:[%s2717 + $0x121] sm:$0xff]
        %v3145 = vld [vmem:[%s2717 + $0x129] sm:$0xff]
        %v3146 = vld [vmem:[%s2717 + $0x139] sm:$0xff]
        %v3147 = vld [vmem:[%s2717 + $0x141] sm:$0xff]
        %v3148 = vld [vmem:[%s2717 + $0x151] sm:$0xff]
        %v3149 = vld [vmem:[%s2717 + $0x159] sm:$0xff]
        %v3150 = vld [vmem:[%s2717 + $0x169] sm:$0xff]
        %v3151 = vld [vmem:[%s2717 + $0x171] sm:$0xff]
        %vm3152 = vcmp.ge.f32.partialorder %v3120, 0.0
        %vm3153 = vcmp.ge.f32.partialorder %v3121, 0.0
        %vm3154 = vcmp.ge.f32.partialorder %v3122, 0.0
        %vm3155 = vcmp.ge.f32.partialorder %v3123, 0.0
        %vm3156 = vcmp.ge.f32.partialorder %v3124, 0.0
        %vm3157 = vcmp.ge.f32.partialorder %v3125, 0.0
        %vm3158 = vcmp.ge.f32.partialorder %v3126, 0.0
        %vm3159 = vcmp.ge.f32.partialorder %v3127, 0.0
        %vm3160 = vcmp.ge.f32.partialorder %v3128, 0.0
        %vm3161 = vcmp.ge.f32.partialorder %v3129, 0.0
        %vm3162 = vcmp.ge.f32.partialorder %v3130, 0.0
        %vm3163 = vcmp.ge.f32.partialorder %v3131, 0.0
        %vm3164 = vcmp.ge.f32.partialorder %v3132, 0.0
        %vm3165 = vcmp.ge.f32.partialorder %v3133, 0.0
        %vm3166 = vcmp.ge.f32.partialorder %v3134, 0.0
        %vm3167 = vcmp.ge.f32.partialorder %v3135, 0.0
        %vm3168 = vcmp.ge.f32.partialorder %v3136, 0.0
        %vm3169 = vcmp.ge.f32.partialorder %v3137, 0.0
        %vm3170 = vcmp.ge.f32.partialorder %v3138, 0.0
        %vm3171 = vcmp.ge.f32.partialorder %v3139, 0.0
        %vm3172 = vcmp.ge.f32.partialorder %v3140, 0.0
        %vm3173 = vcmp.ge.f32.partialorder %v3141, 0.0
        %vm3174 = vcmp.ge.f32.partialorder %v3142, 0.0
        %vm3175 = vcmp.ge.f32.partialorder %v3143, 0.0
        %vm3176 = vcmp.ge.f32.partialorder %v3144, 0.0
        %vm3177 = vcmp.ge.f32.partialorder %v3145, 0.0
        %vm3178 = vcmp.ge.f32.partialorder %v3146, 0.0
        %vm3179 = vcmp.ge.f32.partialorder %v3147, 0.0
        %vm3180 = vcmp.ge.f32.partialorder %v3148, 0.0
        %vm3181 = vcmp.ge.f32.partialorder %v3149, 0.0
        %vm3182 = vcmp.ge.f32.partialorder %v3150, 0.0
        %vm3183 = vcmp.ge.f32.partialorder %v3151, 0.0
        %v3184 = vmul.f32 %v3120, 0.2
        %v3185 = vmul.f32 %v3121, 0.2
        %v3186 = vmul.f32 %v3122, 0.2
        %v3187 = vmul.f32 %v3123, 0.2
        %v3188 = vmul.f32 %v3124, 0.2
        %v3189 = vmul.f32 %v3125, 0.2
        %v3190 = vmul.f32 %v3126, 0.2
        %v3191 = vmul.f32 %v3127, 0.2
        %v3192 = vmul.f32 %v3128, 0.2
        %v3193 = vmul.f32 %v3129, 0.2
        %v3194 = vmul.f32 %v3130, 0.2
        %v3195 = vmul.f32 %v3131, 0.2
        %v3196 = vmul.f32 %v3132, 0.2
        %v3197 = vmul.f32 %v3133, 0.2
        %v3198 = vmul.f32 %v3134, 0.2
        %v3199 = vmul.f32 %v3135, 0.2
        %v3200 = vmul.f32 %v3136, 0.2
        %v3201 = vmul.f32 %v3137, 0.2
        %v3202 = vmul.f32 %v3138, 0.2
        %v3203 = vmul.f32 %v3139, 0.2
        %v3204 = vmul.f32 %v3140, 0.2
        %v3205 = vmul.f32 %v3141, 0.2
        %v3206 = vmul.f32 %v3142, 0.2
        %v3207 = vmul.f32 %v3143, 0.2
        %v3208 = vmul.f32 %v3144, 0.2
        %v3209 = vmul.f32 %v3145, 0.2
        %v3210 = vmul.f32 %v3146, 0.2
        %v3211 = vmul.f32 %v3147, 0.2
        %v3212 = vmul.f32 %v3148, 0.2
        %v3213 = vmul.f32 %v3149, 0.2
        %v3214 = vmul.f32 %v3150, 0.2
        %v3215 = vmul.f32 %v3151, 0.2
        %v3216 = vsel %vm3152, %v3120, %v3184
        %v3217 = vsel %vm3153, %v3121, %v3185
        %v3218 = vsel %vm3154, %v3122, %v3186
        %v3219 = vsel %vm3155, %v3123, %v3187
        %v3220 = vsel %vm3156, %v3124, %v3188
        %v3221 = vsel %vm3157, %v3125, %v3189
        %v3222 = vsel %vm3158, %v3126, %v3190
        %v3223 = vsel %vm3159, %v3127, %v3191
        %v3224 = vsel %vm3160, %v3128, %v3192
        %v3225 = vsel %vm3161, %v3129, %v3193
        %v3226 = vsel %vm3162, %v3130, %v3194
        %v3227 = vsel %vm3163, %v3131, %v3195
        %v3228 = vsel %vm3164, %v3132, %v3196
        %v3229 = vsel %vm3165, %v3133, %v3197
        %v3230 = vsel %vm3166, %v3134, %v3198
        %v3231 = vsel %vm3167, %v3135, %v3199
        %v3232 = vsel %vm3168, %v3136, %v3200
        %v3233 = vsel %vm3169, %v3137, %v3201
        %v3234 = vsel %vm3170, %v3138, %v3202
        %v3235 = vsel %vm3171, %v3139, %v3203
        %v3236 = vsel %vm3172, %v3140, %v3204
        %v3237 = vsel %vm3173, %v3141, %v3205
        %v3238 = vsel %vm3174, %v3142, %v3206
        %v3239 = vsel %vm3175, %v3143, %v3207
        %v3240 = vsel %vm3176, %v3144, %v3208
        %v3241 = vsel %vm3177, %v3145, %v3209
        %v3242 = vsel %vm3178, %v3146, %v3210
        %v3243 = vsel %vm3179, %v3147, %v3211
        %v3244 = vsel %vm3180, %v3148, %v3212
        %v3245 = vsel %vm3181, %v3149, %v3213
        %v3246 = vsel %vm3182, %v3150, %v3214
        %v3247 = vsel %vm3183, %v3151, %v3215
        %v3248 = vpack.c.bf16 %v3217, %v3216
        %v3249 = vpack.c.bf16 %v3219, %v3218
        %v3250 = vpack.c.bf16 %v3221, %v3220
        %v3251 = vpack.c.bf16 %v3223, %v3222
        %v3252 = vpack.c.bf16 %v3225, %v3224
        %v3253 = vpack.c.bf16 %v3227, %v3226
        %v3254 = vpack.c.bf16 %v3229, %v3228
        %v3255 = vpack.c.bf16 %v3231, %v3230
        %v3256 = vpack.c.bf16 %v3233, %v3232
        %v3257 = vpack.c.bf16 %v3235, %v3234
        %v3258 = vpack.c.bf16 %v3237, %v3236
        %v3259 = vpack.c.bf16 %v3239, %v3238
        %v3260 = vpack.c.bf16 %v3241, %v3240
        %v3261 = vpack.c.bf16 %v3243, %v3242
        %v3262 = vpack.c.bf16 %v3245, %v3244
        %v3263 = vpack.c.bf16 %v3247, %v3246
        %s3264 = scalar_lea.vmem %s1, 448
        %v3265 = vld [vmem:[%s3264] sm:$0xf]
        %v3266 = vld [vmem:[%s3264 + $0x4] sm:$0xf]
        %v3267 = vld [vmem:[%s3264 + $0x8] sm:$0xf]
        %v3268 = vld [vmem:[%s3264 + $0xc] sm:$0xf]
        %v3269 = vld [vmem:[%s3264 + $0x10] sm:$0xf]
        %v3270 = vld [vmem:[%s3264 + $0x14] sm:$0xf]
        %v3271 = vld [vmem:[%s3264 + $0x18] sm:$0xf]
        %v3272 = vld [vmem:[%s3264 + $0x1c] sm:$0xf]
        %v3273 = vld [vmem:[%s3264 + $0x20] sm:$0xf]
        %v3274 = vld [vmem:[%s3264 + $0x24] sm:$0xf]
        %v3275 = vld [vmem:[%s3264 + $0x28] sm:$0xf]
        %v3276 = vld [vmem:[%s3264 + $0x2c] sm:$0xf]
        %v3277 = vld [vmem:[%s3264 + $0x30] sm:$0xf]
        %v3278 = vld [vmem:[%s3264 + $0x34] sm:$0xf]
        %v3279 = vld [vmem:[%s3264 + $0x38] sm:$0xf]
        %v3280 = vld [vmem:[%s3264 + $0x3c] sm:$0xf]
        %v3297 = vunpack.c.l.b16 %v3265
        %v3298 = vunpack.c.l.b16 %v3266
        %v3299 = vunpack.c.l.b16 %v3267
        %v3300 = vunpack.c.l.b16 %v3268
        %v3301 = vunpack.c.l.b16 %v3269
        %v3302 = vunpack.c.l.b16 %v3270
        %v3303 = vunpack.c.l.b16 %v3271
        %v3304 = vunpack.c.l.b16 %v3272
        %v3305 = vunpack.c.l.b16 %v3273
        %v3306 = vunpack.c.l.b16 %v3274
        %v3307 = vunpack.c.l.b16 %v3275
        %v3308 = vunpack.c.l.b16 %v3276
        %v3309 = vunpack.c.l.b16 %v3277
        %v3310 = vunpack.c.l.b16 %v3278
        %v3311 = vunpack.c.l.b16 %v3279
        %v3312 = vunpack.c.l.b16 %v3280
        %v3313 = vpack.c.b16 %v3298, %v3297
        %v3314 = vpack.c.b16 %v3300, %v3299
        %v3315 = vpack.c.b16 %v3302, %v3301
        %v3316 = vpack.c.b16 %v3304, %v3303
        %v3317 = vpack.c.b16 %v3306, %v3305
        %v3318 = vpack.c.b16 %v3308, %v3307
        %v3319 = vpack.c.b16 %v3310, %v3309
        %v3320 = vpack.c.b16 %v3312, %v3311
        %3329 = vmatprep.subr.bf16.mxu0 0
        %3330 = vmatpush1.bf16.msra.mxu0 %v3320
        %3331 = vmatprep.subr.bf16.mxu0 0
        %3332 = vmatpush1.bf16.msra.mxu0 %v3319
        %3333 = vmatprep.subr.bf16.mxu0 0
        %3334 = vmatpush1.bf16.msra.mxu0 %v3318
        %3335 = vmatprep.subr.bf16.mxu0 0
        %3336 = vmatpush1.bf16.msra.mxu0 %v3317
        %3337 = vmatprep.subr.bf16.mxu0 0
        %3338 = vmatpush1.bf16.msra.mxu0 %v3316
        %3339 = vmatprep.subr.bf16.mxu0 0
        %3340 = vmatpush1.bf16.msra.mxu0 %v3315
        %3341 = vmatprep.subr.bf16.mxu0 0
        %3342 = vmatpush1.bf16.msra.mxu0 %v3314
        %3343 = vmatprep.subr.bf16.mxu0 0
        %3344 = vmatpush1.bf16.msra.mxu0 %v3313
        %3345 = vmatprep.subr.bf16.mxu0 0
        %3346 = vmatpush2.bf16.msra.mxu0 0
        %3347 = vmatprep.subr.bf16.mxu0 0
        %3348 = vmatpush2.bf16.msra.mxu0 0
        %3349 = vmatprep.subr.bf16.mxu0 0
        %3350 = vmatpush2.bf16.msra.mxu0 0
        %3351 = vmatprep.subr.bf16.mxu0 0
        %3352 = vmatpush2.bf16.msra.mxu0 0
        %3353 = vmatprep.subr.bf16.mxu0 0
        %3354 = vmatpush2.bf16.msra.mxu0 0
        %3355 = vmatprep.subr.bf16.mxu0 0
        %3356 = vmatpush2.bf16.msra.mxu0 0
        %3357 = vmatprep.subr.bf16.mxu0 0
        %3358 = vmatpush2.bf16.msra.mxu0 0
        %3359 = vmatprep.subr.bf16.mxu0 0
        %3360 = vmatpush2.bf16.msra.mxu0 0
        %3361 = vmatprep.mubr.bf16.mxu0 0
        %3362 = vmatmul.mubr.bf16.gmra.mxu0 %v3248
        %v3363 = vpop.f32.mrf.mxu0
        %v3364 = vadd.f32 0.0, %v3363
        %v3365 = vpop.f32.mrf.mxu0
        %v3366 = vpop.f32.mrf.mxu0
        %v3367 = vadd.f32 0.0, %v3366
        %v3368 = vpop.f32.mrf.mxu0
        %3369 = vmatprep.mubr.bf16.mxu0 0
        %3370 = vmatmul.mubr.bf16.gmra.mxu0 %v3249
        %v3371 = vpop.f32.mrf.mxu0
        %v3372 = vadd.f32 0.0, %v3371
        %v3373 = vpop.f32.mrf.mxu0
        %v3374 = vpop.f32.mrf.mxu0
        %v3375 = vadd.f32 0.0, %v3374
        %v3376 = vpop.f32.mrf.mxu0
        %3377 = vmatprep.mubr.bf16.mxu0 0
        %3378 = vmatmul.mubr.bf16.gmra.mxu0 %v3250
        %v3379 = vpop.f32.mrf.mxu0
        %v3380 = vadd.f32 0.0, %v3379
        %v3381 = vpop.f32.mrf.mxu0
        %v3382 = vpop.f32.mrf.mxu0
        %v3383 = vadd.f32 0.0, %v3382
        %v3384 = vpop.f32.mrf.mxu0
        %3385 = vmatprep.mubr.bf16.mxu0 0
        %3386 = vmatmul.mubr.bf16.gmra.mxu0 %v3251
        %v3387 = vpop.f32.mrf.mxu0
        %v3388 = vadd.f32 0.0, %v3387
        %v3389 = vpop.f32.mrf.mxu0
        %v3390 = vpop.f32.mrf.mxu0
        %v3391 = vadd.f32 0.0, %v3390
        %v3392 = vpop.f32.mrf.mxu0
        %3393 = vmatprep.mubr.bf16.mxu0 0
        %3394 = vmatmul.mubr.bf16.gmra.mxu0 %v3252
        %v3395 = vpop.f32.mrf.mxu0
        %v3396 = vadd.f32 0.0, %v3395
        %v3397 = vpop.f32.mrf.mxu0
        %v3398 = vpop.f32.mrf.mxu0
        %v3399 = vadd.f32 0.0, %v3398
        %v3400 = vpop.f32.mrf.mxu0
        %3401 = vmatprep.mubr.bf16.mxu0 0
        %3402 = vmatmul.mubr.bf16.gmra.mxu0 %v3253
        %v3403 = vpop.f32.mrf.mxu0
        %v3404 = vadd.f32 0.0, %v3403
        %v3405 = vpop.f32.mrf.mxu0
        %v3406 = vpop.f32.mrf.mxu0
        %v3407 = vadd.f32 0.0, %v3406
        %v3408 = vpop.f32.mrf.mxu0
        %3409 = vmatprep.mubr.bf16.mxu0 0
        %3410 = vmatmul.mubr.bf16.gmra.mxu0 %v3254
        %v3411 = vpop.f32.mrf.mxu0
        %v3412 = vadd.f32 0.0, %v3411
        %v3413 = vpop.f32.mrf.mxu0
        %v3414 = vpop.f32.mrf.mxu0
        %v3415 = vadd.f32 0.0, %v3414
        %v3416 = vpop.f32.mrf.mxu0
        %3417 = vmatprep.mubr.bf16.mxu0 0
        %3418 = vmatmul.mubr.bf16.gmra.mxu0 %v3255
        %v3419 = vpop.f32.mrf.mxu0
        %v3420 = vadd.f32 0.0, %v3419
        %v3421 = vpop.f32.mrf.mxu0
        %v3422 = vpop.f32.mrf.mxu0
        %v3423 = vadd.f32 0.0, %v3422
        %v3424 = vpop.f32.mrf.mxu0
        %3425 = vmatprep.mubr.bf16.mxu0 0
        %3426 = vmatmul.mubr.bf16.gmra.mxu0 %v3256
        %v3427 = vpop.f32.mrf.mxu0
        %v3428 = vadd.f32 0.0, %v3427
        %v3429 = vpop.f32.mrf.mxu0
        %v3430 = vpop.f32.mrf.mxu0
        %v3431 = vadd.f32 0.0, %v3430
        %v3432 = vpop.f32.mrf.mxu0
        %3433 = vmatprep.mubr.bf16.mxu0 0
        %3434 = vmatmul.mubr.bf16.gmra.mxu0 %v3257
        %v3435 = vpop.f32.mrf.mxu0
        %v3436 = vadd.f32 0.0, %v3435
        %v3437 = vpop.f32.mrf.mxu0
        %v3438 = vpop.f32.mrf.mxu0
        %v3439 = vadd.f32 0.0, %v3438
        %v3440 = vpop.f32.mrf.mxu0
        %3441 = vmatprep.mubr.bf16.mxu0 0
        %3442 = vmatmul.mubr.bf16.gmra.mxu0 %v3258
        %v3443 = vpop.f32.mrf.mxu0
        %v3444 = vadd.f32 0.0, %v3443
        %v3445 = vpop.f32.mrf.mxu0
        %v3446 = vpop.f32.mrf.mxu0
        %v3447 = vadd.f32 0.0, %v3446
        %v3448 = vpop.f32.mrf.mxu0
        %3449 = vmatprep.mubr.bf16.mxu0 0
        %3450 = vmatmul.mubr.bf16.gmra.mxu0 %v3259
        %v3451 = vpop.f32.mrf.mxu0
        %v3452 = vadd.f32 0.0, %v3451
        %v3453 = vpop.f32.mrf.mxu0
        %v3454 = vpop.f32.mrf.mxu0
        %v3455 = vadd.f32 0.0, %v3454
        %v3456 = vpop.f32.mrf.mxu0
        %3457 = vmatprep.mubr.bf16.mxu0 0
        %3458 = vmatmul.mubr.bf16.gmra.mxu0 %v3260
        %v3459 = vpop.f32.mrf.mxu0
        %v3460 = vadd.f32 0.0, %v3459
        %v3461 = vpop.f32.mrf.mxu0
        %v3462 = vpop.f32.mrf.mxu0
        %v3463 = vadd.f32 0.0, %v3462
        %v3464 = vpop.f32.mrf.mxu0
        %3465 = vmatprep.mubr.bf16.mxu0 0
        %3466 = vmatmul.mubr.bf16.gmra.mxu0 %v3261
        %v3467 = vpop.f32.mrf.mxu0
        %v3468 = vadd.f32 0.0, %v3467
        %v3469 = vpop.f32.mrf.mxu0
        %v3470 = vpop.f32.mrf.mxu0
        %v3471 = vadd.f32 0.0, %v3470
        %v3472 = vpop.f32.mrf.mxu0
        %3473 = vmatprep.mubr.bf16.mxu0 0
        %3474 = vmatmul.mubr.bf16.gmra.mxu0 %v3262
        %v3475 = vpop.f32.mrf.mxu0
        %v3476 = vadd.f32 0.0, %v3475
        %v3477 = vpop.f32.mrf.mxu0
        %v3478 = vpop.f32.mrf.mxu0
        %v3479 = vadd.f32 0.0, %v3478
        %v3480 = vpop.f32.mrf.mxu0
        %3481 = vmatprep.mubr.bf16.mxu0 0
        %3482 = vmatmul.mubr.bf16.gmra.mxu0 %v3263
        %v3483 = vpop.f32.mrf.mxu0
        %v3484 = vadd.f32 0.0, %v3483
        %v3485 = vpop.f32.mrf.mxu0
        %v3486 = vpop.f32.mrf.mxu0
        %v3487 = vadd.f32 0.0, %v3486
        %v3488 = vpop.f32.mrf.mxu0
        %3489 = vdwg.mxu0
        %v3490 = vadd.f32 %v3088, %v3364
        %v3491 = vadd.f32 %v3089, %v3367
        %v3492 = vadd.f32 %v3090, %v3372
        %v3493 = vadd.f32 %v3091, %v3375
        %v3494 = vadd.f32 %v3092, %v3380
        %v3495 = vadd.f32 %v3093, %v3383
        %v3496 = vadd.f32 %v3094, %v3388
        %v3497 = vadd.f32 %v3095, %v3391
        %v3498 = vadd.f32 %v3096, %v3396
        %v3499 = vadd.f32 %v3097, %v3399
        %v3500 = vadd.f32 %v3098, %v3404
        %v3501 = vadd.f32 %v3099, %v3407
        %v3502 = vadd.f32 %v3100, %v3412
        %v3503 = vadd.f32 %v3101, %v3415
        %v3504 = vadd.f32 %v3102, %v3420
        %v3505 = vadd.f32 %v3103, %v3423
        %v3506 = vadd.f32 %v3104, %v3428
        %v3507 = vadd.f32 %v3105, %v3431
        %v3508 = vadd.f32 %v3106, %v3436
        %v3509 = vadd.f32 %v3107, %v3439
        %v3510 = vadd.f32 %v3108, %v3444
        %v3511 = vadd.f32 %v3109, %v3447
        %v3512 = vadd.f32 %v3110, %v3452
        %v3513 = vadd.f32 %v3111, %v3455
        %v3514 = vadd.f32 %v3112, %v3460
        %v3515 = vadd.f32 %v3113, %v3463
        %v3516 = vadd.f32 %v3114, %v3468
        %v3517 = vadd.f32 %v3115, %v3471
        %v3518 = vadd.f32 %v3116, %v3476
        %v3519 = vadd.f32 %v3117, %v3479
        %v3520 = vadd.f32 %v3118, %v3484
        %v3521 = vadd.f32 %v3119, %v3487
        %v3522 = vld [vmem:[%s2717 + $0x2] sm:$0xff]
        %v3523 = vld [vmem:[%s2717 + $0xa] sm:$0xff]
        %v3524 = vld [vmem:[%s2717 + $0x1a] sm:$0xff]
        %v3525 = vld [vmem:[%s2717 + $0x22] sm:$0xff]
        %v3526 = vld [vmem:[%s2717 + $0x32] sm:$0xff]
        %v3527 = vld [vmem:[%s2717 + $0x3a] sm:$0xff]
        %v3528 = vld [vmem:[%s2717 + $0x4a] sm:$0xff]
        %v3529 = vld [vmem:[%s2717 + $0x52] sm:$0xff]
        %v3530 = vld [vmem:[%s2717 + $0x62] sm:$0xff]
        %v3531 = vld [vmem:[%s2717 + $0x6a] sm:$0xff]
        %v3532 = vld [vmem:[%s2717 + $0x7a] sm:$0xff]
        %v3533 = vld [vmem:[%s2717 + $0x82] sm:$0xff]
        %v3534 = vld [vmem:[%s2717 + $0x92] sm:$0xff]
        %v3535 = vld [vmem:[%s2717 + $0x9a] sm:$0xff]
        %v3536 = vld [vmem:[%s2717 + $0xaa] sm:$0xff]
        %v3537 = vld [vmem:[%s2717 + $0xb2] sm:$0xff]
        %v3538 = vld [vmem:[%s2717 + $0xc2] sm:$0xff]
        %v3539 = vld [vmem:[%s2717 + $0xca] sm:$0xff]
        %v3540 = vld [vmem:[%s2717 + $0xda] sm:$0xff]
        %v3541 = vld [vmem:[%s2717 + $0xe2] sm:$0xff]
        %v3542 = vld [vmem:[%s2717 + $0xf2] sm:$0xff]
        %v3543 = vld [vmem:[%s2717 + $0xfa] sm:$0xff]
        %v3544 = vld [vmem:[%s2717 + $0x10a] sm:$0xff]
        %v3545 = vld [vmem:[%s2717 + $0x112] sm:$0xff]
        %v3546 = vld [vmem:[%s2717 + $0x122] sm:$0xff]
        %v3547 = vld [vmem:[%s2717 + $0x12a] sm:$0xff]
        %v3548 = vld [vmem:[%s2717 + $0x13a] sm:$0xff]
        %v3549 = vld [vmem:[%s2717 + $0x142] sm:$0xff]
        %v3550 = vld [vmem:[%s2717 + $0x152] sm:$0xff]
        %v3551 = vld [vmem:[%s2717 + $0x15a] sm:$0xff]
        %v3552 = vld [vmem:[%s2717 + $0x16a] sm:$0xff]
        %v3553 = vld [vmem:[%s2717 + $0x172] sm:$0xff]
        %vm3554 = vcmp.ge.f32.partialorder %v3522, 0.0
        %vm3555 = vcmp.ge.f32.partialorder %v3523, 0.0
        %vm3556 = vcmp.ge.f32.partialorder %v3524, 0.0
        %vm3557 = vcmp.ge.f32.partialorder %v3525, 0.0
        %vm3558 = vcmp.ge.f32.partialorder %v3526, 0.0
        %vm3559 = vcmp.ge.f32.partialorder %v3527, 0.0
        %vm3560 = vcmp.ge.f32.partialorder %v3528, 0.0
        %vm3561 = vcmp.ge.f32.partialorder %v3529, 0.0
        %vm3562 = vcmp.ge.f32.partialorder %v3530, 0.0
        %vm3563 = vcmp.ge.f32.partialorder %v3531, 0.0
        %vm3564 = vcmp.ge.f32.partialorder %v3532, 0.0
        %vm3565 = vcmp.ge.f32.partialorder %v3533, 0.0
        %vm3566 = vcmp.ge.f32.partialorder %v3534, 0.0
        %vm3567 = vcmp.ge.f32.partialorder %v3535, 0.0
        %vm3568 = vcmp.ge.f32.partialorder %v3536, 0.0
        %vm3569 = vcmp.ge.f32.partialorder %v3537, 0.0
        %vm3570 = vcmp.ge.f32.partialorder %v3538, 0.0
        %vm3571 = vcmp.ge.f32.partialorder %v3539, 0.0
        %vm3572 = vcmp.ge.f32.partialorder %v3540, 0.0
        %vm3573 = vcmp.ge.f32.partialorder %v3541, 0.0
        %vm3574 = vcmp.ge.f32.partialorder %v3542, 0.0
        %vm3575 = vcmp.ge.f32.partialorder %v3543, 0.0
        %vm3576 = vcmp.ge.f32.partialorder %v3544, 0.0
        %vm3577 = vcmp.ge.f32.partialorder %v3545, 0.0
        %vm3578 = vcmp.ge.f32.partialorder %v3546, 0.0
        %vm3579 = vcmp.ge.f32.partialorder %v3547, 0.0
        %vm3580 = vcmp.ge.f32.partialorder %v3548, 0.0
        %vm3581 = vcmp.ge.f32.partialorder %v3549, 0.0
        %vm3582 = vcmp.ge.f32.partialorder %v3550, 0.0
        %vm3583 = vcmp.ge.f32.partialorder %v3551, 0.0
        %vm3584 = vcmp.ge.f32.partialorder %v3552, 0.0
        %vm3585 = vcmp.ge.f32.partialorder %v3553, 0.0
        %v3586 = vmul.f32 %v3522, 0.2
        %v3587 = vmul.f32 %v3523, 0.2
        %v3588 = vmul.f32 %v3524, 0.2
        %v3589 = vmul.f32 %v3525, 0.2
        %v3590 = vmul.f32 %v3526, 0.2
        %v3591 = vmul.f32 %v3527, 0.2
        %v3592 = vmul.f32 %v3528, 0.2
        %v3593 = vmul.f32 %v3529, 0.2
        %v3594 = vmul.f32 %v3530, 0.2
        %v3595 = vmul.f32 %v3531, 0.2
        %v3596 = vmul.f32 %v3532, 0.2
        %v3597 = vmul.f32 %v3533, 0.2
        %v3598 = vmul.f32 %v3534, 0.2
        %v3599 = vmul.f32 %v3535, 0.2
        %v3600 = vmul.f32 %v3536, 0.2
        %v3601 = vmul.f32 %v3537, 0.2
        %v3602 = vmul.f32 %v3538, 0.2
        %v3603 = vmul.f32 %v3539, 0.2
        %v3604 = vmul.f32 %v3540, 0.2
        %v3605 = vmul.f32 %v3541, 0.2
        %v3606 = vmul.f32 %v3542, 0.2
        %v3607 = vmul.f32 %v3543, 0.2
        %v3608 = vmul.f32 %v3544, 0.2
        %v3609 = vmul.f32 %v3545, 0.2
        %v3610 = vmul.f32 %v3546, 0.2
        %v3611 = vmul.f32 %v3547, 0.2
        %v3612 = vmul.f32 %v3548, 0.2
        %v3613 = vmul.f32 %v3549, 0.2
        %v3614 = vmul.f32 %v3550, 0.2
        %v3615 = vmul.f32 %v3551, 0.2
        %v3616 = vmul.f32 %v3552, 0.2
        %v3617 = vmul.f32 %v3553, 0.2
        %v3618 = vsel %vm3554, %v3522, %v3586
        %v3619 = vsel %vm3555, %v3523, %v3587
        %v3620 = vsel %vm3556, %v3524, %v3588
        %v3621 = vsel %vm3557, %v3525, %v3589
        %v3622 = vsel %vm3558, %v3526, %v3590
        %v3623 = vsel %vm3559, %v3527, %v3591
        %v3624 = vsel %vm3560, %v3528, %v3592
        %v3625 = vsel %vm3561, %v3529, %v3593
        %v3626 = vsel %vm3562, %v3530, %v3594
        %v3627 = vsel %vm3563, %v3531, %v3595
        %v3628 = vsel %vm3564, %v3532, %v3596
        %v3629 = vsel %vm3565, %v3533, %v3597
        %v3630 = vsel %vm3566, %v3534, %v3598
        %v3631 = vsel %vm3567, %v3535, %v3599
        %v3632 = vsel %vm3568, %v3536, %v3600
        %v3633 = vsel %vm3569, %v3537, %v3601
        %v3634 = vsel %vm3570, %v3538, %v3602
        %v3635 = vsel %vm3571, %v3539, %v3603
        %v3636 = vsel %vm3572, %v3540, %v3604
        %v3637 = vsel %vm3573, %v3541, %v3605
        %v3638 = vsel %vm3574, %v3542, %v3606
        %v3639 = vsel %vm3575, %v3543, %v3607
        %v3640 = vsel %vm3576, %v3544, %v3608
        %v3641 = vsel %vm3577, %v3545, %v3609
        %v3642 = vsel %vm3578, %v3546, %v3610
        %v3643 = vsel %vm3579, %v3547, %v3611
        %v3644 = vsel %vm3580, %v3548, %v3612
        %v3645 = vsel %vm3581, %v3549, %v3613
        %v3646 = vsel %vm3582, %v3550, %v3614
        %v3647 = vsel %vm3583, %v3551, %v3615
        %v3648 = vsel %vm3584, %v3552, %v3616
        %v3649 = vsel %vm3585, %v3553, %v3617
        %v3650 = vpack.c.bf16 %v3619, %v3618
        %v3651 = vpack.c.bf16 %v3621, %v3620
        %v3652 = vpack.c.bf16 %v3623, %v3622
        %v3653 = vpack.c.bf16 %v3625, %v3624
        %v3654 = vpack.c.bf16 %v3627, %v3626
        %v3655 = vpack.c.bf16 %v3629, %v3628
        %v3656 = vpack.c.bf16 %v3631, %v3630
        %v3657 = vpack.c.bf16 %v3633, %v3632
        %v3658 = vpack.c.bf16 %v3635, %v3634
        %v3659 = vpack.c.bf16 %v3637, %v3636
        %v3660 = vpack.c.bf16 %v3639, %v3638
        %v3661 = vpack.c.bf16 %v3641, %v3640
        %v3662 = vpack.c.bf16 %v3643, %v3642
        %v3663 = vpack.c.bf16 %v3645, %v3644
        %v3664 = vpack.c.bf16 %v3647, %v3646
        %v3665 = vpack.c.bf16 %v3649, %v3648
        %s3666 = scalar_lea.vmem %s1, 512
        %v3667 = vld [vmem:[%s3666] sm:$0xf]
        %v3668 = vld [vmem:[%s3666 + $0x4] sm:$0xf]
        %v3669 = vld [vmem:[%s3666 + $0x8] sm:$0xf]
        %v3670 = vld [vmem:[%s3666 + $0xc] sm:$0xf]
        %v3671 = vld [vmem:[%s3666 + $0x10] sm:$0xf]
        %v3672 = vld [vmem:[%s3666 + $0x14] sm:$0xf]
        %v3673 = vld [vmem:[%s3666 + $0x18] sm:$0xf]
        %v3674 = vld [vmem:[%s3666 + $0x1c] sm:$0xf]
        %v3675 = vld [vmem:[%s3666 + $0x20] sm:$0xf]
        %v3676 = vld [vmem:[%s3666 + $0x24] sm:$0xf]
        %v3677 = vld [vmem:[%s3666 + $0x28] sm:$0xf]
        %v3678 = vld [vmem:[%s3666 + $0x2c] sm:$0xf]
        %v3679 = vld [vmem:[%s3666 + $0x30] sm:$0xf]
        %v3680 = vld [vmem:[%s3666 + $0x34] sm:$0xf]
        %v3681 = vld [vmem:[%s3666 + $0x38] sm:$0xf]
        %v3682 = vld [vmem:[%s3666 + $0x3c] sm:$0xf]
        %v3699 = vunpack.c.l.b16 %v3667
        %v3700 = vunpack.c.l.b16 %v3668
        %v3701 = vunpack.c.l.b16 %v3669
        %v3702 = vunpack.c.l.b16 %v3670
        %v3703 = vunpack.c.l.b16 %v3671
        %v3704 = vunpack.c.l.b16 %v3672
        %v3705 = vunpack.c.l.b16 %v3673
        %v3706 = vunpack.c.l.b16 %v3674
        %v3707 = vunpack.c.l.b16 %v3675
        %v3708 = vunpack.c.l.b16 %v3676
        %v3709 = vunpack.c.l.b16 %v3677
        %v3710 = vunpack.c.l.b16 %v3678
        %v3711 = vunpack.c.l.b16 %v3679
        %v3712 = vunpack.c.l.b16 %v3680
        %v3713 = vunpack.c.l.b16 %v3681
        %v3714 = vunpack.c.l.b16 %v3682
        %v3715 = vpack.c.b16 %v3700, %v3699
        %v3716 = vpack.c.b16 %v3702, %v3701
        %v3717 = vpack.c.b16 %v3704, %v3703
        %v3718 = vpack.c.b16 %v3706, %v3705
        %v3719 = vpack.c.b16 %v3708, %v3707
        %v3720 = vpack.c.b16 %v3710, %v3709
        %v3721 = vpack.c.b16 %v3712, %v3711
        %v3722 = vpack.c.b16 %v3714, %v3713
        %3731 = vmatprep.subr.bf16.mxu0 0
        %3732 = vmatpush1.bf16.msra.mxu0 %v3722
        %3733 = vmatprep.subr.bf16.mxu0 0
        %3734 = vmatpush1.bf16.msra.mxu0 %v3721
        %3735 = vmatprep.subr.bf16.mxu0 0
        %3736 = vmatpush1.bf16.msra.mxu0 %v3720
        %3737 = vmatprep.subr.bf16.mxu0 0
        %3738 = vmatpush1.bf16.msra.mxu0 %v3719
        %3739 = vmatprep.subr.bf16.mxu0 0
        %3740 = vmatpush1.bf16.msra.mxu0 %v3718
        %3741 = vmatprep.subr.bf16.mxu0 0
        %3742 = vmatpush1.bf16.msra.mxu0 %v3717
        %3743 = vmatprep.subr.bf16.mxu0 0
        %3744 = vmatpush1.bf16.msra.mxu0 %v3716
        %3745 = vmatprep.subr.bf16.mxu0 0
        %3746 = vmatpush1.bf16.msra.mxu0 %v3715
        %3747 = vmatprep.subr.bf16.mxu0 0
        %3748 = vmatpush2.bf16.msra.mxu0 0
        %3749 = vmatprep.subr.bf16.mxu0 0
        %3750 = vmatpush2.bf16.msra.mxu0 0
        %3751 = vmatprep.subr.bf16.mxu0 0
        %3752 = vmatpush2.bf16.msra.mxu0 0
        %3753 = vmatprep.subr.bf16.mxu0 0
        %3754 = vmatpush2.bf16.msra.mxu0 0
        %3755 = vmatprep.subr.bf16.mxu0 0
        %3756 = vmatpush2.bf16.msra.mxu0 0
        %3757 = vmatprep.subr.bf16.mxu0 0
        %3758 = vmatpush2.bf16.msra.mxu0 0
        %3759 = vmatprep.subr.bf16.mxu0 0
        %3760 = vmatpush2.bf16.msra.mxu0 0
        %3761 = vmatprep.subr.bf16.mxu0 0
        %3762 = vmatpush2.bf16.msra.mxu0 0
        %3763 = vmatprep.mubr.bf16.mxu0 0
        %3764 = vmatmul.mubr.bf16.gmra.mxu0 %v3650
        %v3765 = vpop.f32.mrf.mxu0
        %v3766 = vadd.f32 0.0, %v3765
        %v3767 = vpop.f32.mrf.mxu0
        %v3768 = vpop.f32.mrf.mxu0
        %v3769 = vadd.f32 0.0, %v3768
        %v3770 = vpop.f32.mrf.mxu0
        %3771 = vmatprep.mubr.bf16.mxu0 0
        %3772 = vmatmul.mubr.bf16.gmra.mxu0 %v3651
        %v3773 = vpop.f32.mrf.mxu0
        %v3774 = vadd.f32 0.0, %v3773
        %v3775 = vpop.f32.mrf.mxu0
        %v3776 = vpop.f32.mrf.mxu0
        %v3777 = vadd.f32 0.0, %v3776
        %v3778 = vpop.f32.mrf.mxu0
        %3779 = vmatprep.mubr.bf16.mxu0 0
        %3780 = vmatmul.mubr.bf16.gmra.mxu0 %v3652
        %v3781 = vpop.f32.mrf.mxu0
        %v3782 = vadd.f32 0.0, %v3781
        %v3783 = vpop.f32.mrf.mxu0
        %v3784 = vpop.f32.mrf.mxu0
        %v3785 = vadd.f32 0.0, %v3784
        %v3786 = vpop.f32.mrf.mxu0
        %3787 = vmatprep.mubr.bf16.mxu0 0
        %3788 = vmatmul.mubr.bf16.gmra.mxu0 %v3653
        %v3789 = vpop.f32.mrf.mxu0
        %v3790 = vadd.f32 0.0, %v3789
        %v3791 = vpop.f32.mrf.mxu0
        %v3792 = vpop.f32.mrf.mxu0
        %v3793 = vadd.f32 0.0, %v3792
        %v3794 = vpop.f32.mrf.mxu0
        %3795 = vmatprep.mubr.bf16.mxu0 0
        %3796 = vmatmul.mubr.bf16.gmra.mxu0 %v3654
        %v3797 = vpop.f32.mrf.mxu0
        %v3798 = vadd.f32 0.0, %v3797
        %v3799 = vpop.f32.mrf.mxu0
        %v3800 = vpop.f32.mrf.mxu0
        %v3801 = vadd.f32 0.0, %v3800
        %v3802 = vpop.f32.mrf.mxu0
        %3803 = vmatprep.mubr.bf16.mxu0 0
        %3804 = vmatmul.mubr.bf16.gmra.mxu0 %v3655
        %v3805 = vpop.f32.mrf.mxu0
        %v3806 = vadd.f32 0.0, %v3805
        %v3807 = vpop.f32.mrf.mxu0
        %v3808 = vpop.f32.mrf.mxu0
        %v3809 = vadd.f32 0.0, %v3808
        %v3810 = vpop.f32.mrf.mxu0
        %3811 = vmatprep.mubr.bf16.mxu0 0
        %3812 = vmatmul.mubr.bf16.gmra.mxu0 %v3656
        %v3813 = vpop.f32.mrf.mxu0
        %v3814 = vadd.f32 0.0, %v3813
        %v3815 = vpop.f32.mrf.mxu0
        %v3816 = vpop.f32.mrf.mxu0
        %v3817 = vadd.f32 0.0, %v3816
        %v3818 = vpop.f32.mrf.mxu0
        %3819 = vmatprep.mubr.bf16.mxu0 0
        %3820 = vmatmul.mubr.bf16.gmra.mxu0 %v3657
        %v3821 = vpop.f32.mrf.mxu0
        %v3822 = vadd.f32 0.0, %v3821
        %v3823 = vpop.f32.mrf.mxu0
        %v3824 = vpop.f32.mrf.mxu0
        %v3825 = vadd.f32 0.0, %v3824
        %v3826 = vpop.f32.mrf.mxu0
        %3827 = vmatprep.mubr.bf16.mxu0 0
        %3828 = vmatmul.mubr.bf16.gmra.mxu0 %v3658
        %v3829 = vpop.f32.mrf.mxu0
        %v3830 = vadd.f32 0.0, %v3829
        %v3831 = vpop.f32.mrf.mxu0
        %v3832 = vpop.f32.mrf.mxu0
        %v3833 = vadd.f32 0.0, %v3832
        %v3834 = vpop.f32.mrf.mxu0
        %3835 = vmatprep.mubr.bf16.mxu0 0
        %3836 = vmatmul.mubr.bf16.gmra.mxu0 %v3659
        %v3837 = vpop.f32.mrf.mxu0
        %v3838 = vadd.f32 0.0, %v3837
        %v3839 = vpop.f32.mrf.mxu0
        %v3840 = vpop.f32.mrf.mxu0
        %v3841 = vadd.f32 0.0, %v3840
        %v3842 = vpop.f32.mrf.mxu0
        %3843 = vmatprep.mubr.bf16.mxu0 0
        %3844 = vmatmul.mubr.bf16.gmra.mxu0 %v3660
        %v3845 = vpop.f32.mrf.mxu0
        %v3846 = vadd.f32 0.0, %v3845
        %v3847 = vpop.f32.mrf.mxu0
        %v3848 = vpop.f32.mrf.mxu0
        %v3849 = vadd.f32 0.0, %v3848
        %v3850 = vpop.f32.mrf.mxu0
        %3851 = vmatprep.mubr.bf16.mxu0 0
        %3852 = vmatmul.mubr.bf16.gmra.mxu0 %v3661
        %v3853 = vpop.f32.mrf.mxu0
        %v3854 = vadd.f32 0.0, %v3853
        %v3855 = vpop.f32.mrf.mxu0
        %v3856 = vpop.f32.mrf.mxu0
        %v3857 = vadd.f32 0.0, %v3856
        %v3858 = vpop.f32.mrf.mxu0
        %3859 = vmatprep.mubr.bf16.mxu0 0
        %3860 = vmatmul.mubr.bf16.gmra.mxu0 %v3662
        %v3861 = vpop.f32.mrf.mxu0
        %v3862 = vadd.f32 0.0, %v3861
        %v3863 = vpop.f32.mrf.mxu0
        %v3864 = vpop.f32.mrf.mxu0
        %v3865 = vadd.f32 0.0, %v3864
        %v3866 = vpop.f32.mrf.mxu0
        %3867 = vmatprep.mubr.bf16.mxu0 0
        %3868 = vmatmul.mubr.bf16.gmra.mxu0 %v3663
        %v3869 = vpop.f32.mrf.mxu0
        %v3870 = vadd.f32 0.0, %v3869
        %v3871 = vpop.f32.mrf.mxu0
        %v3872 = vpop.f32.mrf.mxu0
        %v3873 = vadd.f32 0.0, %v3872
        %v3874 = vpop.f32.mrf.mxu0
        %3875 = vmatprep.mubr.bf16.mxu0 0
        %3876 = vmatmul.mubr.bf16.gmra.mxu0 %v3664
        %v3877 = vpop.f32.mrf.mxu0
        %v3878 = vadd.f32 0.0, %v3877
        %v3879 = vpop.f32.mrf.mxu0
        %v3880 = vpop.f32.mrf.mxu0
        %v3881 = vadd.f32 0.0, %v3880
        %v3882 = vpop.f32.mrf.mxu0
        %3883 = vmatprep.mubr.bf16.mxu0 0
        %3884 = vmatmul.mubr.bf16.gmra.mxu0 %v3665
        %v3885 = vpop.f32.mrf.mxu0
        %v3886 = vadd.f32 0.0, %v3885
        %v3887 = vpop.f32.mrf.mxu0
        %v3888 = vpop.f32.mrf.mxu0
        %v3889 = vadd.f32 0.0, %v3888
        %v3890 = vpop.f32.mrf.mxu0
        %3891 = vdwg.mxu0
        %v3892 = vadd.f32 %v3490, %v3766
        %v3893 = vadd.f32 %v3491, %v3769
        %v3894 = vadd.f32 %v3492, %v3774
        %v3895 = vadd.f32 %v3493, %v3777
        %v3896 = vadd.f32 %v3494, %v3782
        %v3897 = vadd.f32 %v3495, %v3785
        %v3898 = vadd.f32 %v3496, %v3790
        %v3899 = vadd.f32 %v3497, %v3793
        %v3900 = vadd.f32 %v3498, %v3798
        %v3901 = vadd.f32 %v3499, %v3801
        %v3902 = vadd.f32 %v3500, %v3806
        %v3903 = vadd.f32 %v3501, %v3809
        %v3904 = vadd.f32 %v3502, %v3814
        %v3905 = vadd.f32 %v3503, %v3817
        %v3906 = vadd.f32 %v3504, %v3822
        %v3907 = vadd.f32 %v3505, %v3825
        %v3908 = vadd.f32 %v3506, %v3830
        %v3909 = vadd.f32 %v3507, %v3833
        %v3910 = vadd.f32 %v3508, %v3838
        %v3911 = vadd.f32 %v3509, %v3841
        %v3912 = vadd.f32 %v3510, %v3846
        %v3913 = vadd.f32 %v3511, %v3849
        %v3914 = vadd.f32 %v3512, %v3854
        %v3915 = vadd.f32 %v3513, %v3857
        %v3916 = vadd.f32 %v3514, %v3862
        %v3917 = vadd.f32 %v3515, %v3865
        %v3918 = vadd.f32 %v3516, %v3870
        %v3919 = vadd.f32 %v3517, %v3873
        %v3920 = vadd.f32 %v3518, %v3878
        %v3921 = vadd.f32 %v3519, %v3881
        %v3922 = vadd.f32 %v3520, %v3886
        %v3923 = vadd.f32 %v3521, %v3889
        %v3924 = vld [vmem:[%s2] sm:$0x1]
        %v3926 = vlaneseq
        %v3927 = vshrl.u32 %v3926, 7
        %v3928 = vsub.s32 0, %v3927
        %v3929 = vrot.slane %v3924, %v3928
        %v3931 = vadd.f32 %v3892, %v3929
        %v3932 = vadd.f32 %v3893, %v3929
        %v3933 = vadd.f32 %v3894, %v3929
        %v3934 = vadd.f32 %v3895, %v3929
        %v3935 = vadd.f32 %v3896, %v3929
        %v3936 = vadd.f32 %v3897, %v3929
        %v3937 = vadd.f32 %v3898, %v3929
        %v3938 = vadd.f32 %v3899, %v3929
        %v3939 = vadd.f32 %v3900, %v3929
        %v3940 = vadd.f32 %v3901, %v3929
        %v3941 = vadd.f32 %v3902, %v3929
        %v3942 = vadd.f32 %v3903, %v3929
        %v3943 = vadd.f32 %v3904, %v3929
        %v3944 = vadd.f32 %v3905, %v3929
        %v3945 = vadd.f32 %v3906, %v3929
        %v3946 = vadd.f32 %v3907, %v3929
        %v3947 = vadd.f32 %v3908, %v3929
        %v3948 = vadd.f32 %v3909, %v3929
        %v3949 = vadd.f32 %v3910, %v3929
        %v3950 = vadd.f32 %v3911, %v3929
        %v3951 = vadd.f32 %v3912, %v3929
        %v3952 = vadd.f32 %v3913, %v3929
        %v3953 = vadd.f32 %v3914, %v3929
        %v3954 = vadd.f32 %v3915, %v3929
        %v3955 = vadd.f32 %v3916, %v3929
        %v3956 = vadd.f32 %v3917, %v3929
        %v3957 = vadd.f32 %v3918, %v3929
        %v3958 = vadd.f32 %v3919, %v3929
        %v3959 = vadd.f32 %v3920, %v3929
        %v3960 = vadd.f32 %v3921, %v3929
        %v3961 = vadd.f32 %v3922, %v3929
        %v3962 = vadd.f32 %v3923, %v3929
        %3963 = vst [vmem:[#allocation3] sm:$0xff] 0.0
        %3964 = vst [vmem:[#allocation3 + $0x8] sm:$0x3] 0.0
        %3965 = vst [vmem:[#allocation3 + $0x10] sm:$0xff] 0.0
        %3966 = vst [vmem:[#allocation3 + $0x18] sm:$0x3] 0.0
        %3967 = vst [vmem:[#allocation3 + $0x20] sm:$0xff] 0.0
        %3968 = vst [vmem:[#allocation3 + $0x28] sm:$0x3] 0.0
        %3969 = vst [vmem:[#allocation3 + $0x30] sm:$0xff] 0.0
        %3970 = vst [vmem:[#allocation3 + $0x38] sm:$0x3] 0.0
        %3971 = vst [vmem:[#allocation3 + $0x40] sm:$0xff] 0.0
        %3972 = vst [vmem:[#allocation3 + $0x48] sm:$0x3] 0.0
        %3973 = vst [vmem:[#allocation3 + $0x50] sm:$0xff] 0.0
        %3974 = vst [vmem:[#allocation3 + $0x58] sm:$0x3] 0.0
        %3975 = vst [vmem:[#allocation3 + $0x60] sm:$0xff] 0.0
        %3976 = vst [vmem:[#allocation3 + $0x68] sm:$0x3] 0.0
        %3977 = vst [vmem:[#allocation3 + $0x70] sm:$0xff] 0.0
        %3978 = vst [vmem:[#allocation3 + $0x78] sm:$0x3] 0.0
        %3979 = vst [vmem:[#allocation3 + $0x80] sm:$0xff] 0.0
        %3980 = vst [vmem:[#allocation3 + $0x88] sm:$0x3] 0.0
        %3981 = vst [vmem:[#allocation3 + $0x90] sm:$0xff] 0.0
        %3982 = vst [vmem:[#allocation3 + $0x98] sm:$0x3] 0.0
        %v3983 = vadd.f32 %v3931, %v3933
        %v3984 = vadd.f32 %v3932, %v3934
        %v3985 = vadd.f32 %v3935, %v3937
        %v3986 = vadd.f32 %v3936, %v3938
        %v3987 = vadd.f32 %v3939, %v3941
        %v3988 = vadd.f32 %v3940, %v3942
        %v3989 = vadd.f32 %v3943, %v3945
        %v3990 = vadd.f32 %v3944, %v3946
        %v3991 = vadd.f32 %v3947, %v3949
        %v3992 = vadd.f32 %v3948, %v3950
        %v3993 = vadd.f32 %v3951, %v3953
        %v3994 = vadd.f32 %v3952, %v3954
        %v3995 = vadd.f32 %v3955, %v3957
        %v3996 = vadd.f32 %v3956, %v3958
        %v3997 = vadd.f32 %v3959, %v3961
        %v3998 = vadd.f32 %v3960, %v3962
        %3999 = vst [vmem:[#allocation4] sm:$0xff] %v3983
        %4000 = vst [vmem:[#allocation4 + $0x8] sm:$0xff] %v3984
        %4001 = vst [vmem:[#allocation4 + $0x10] sm:$0xff] %v3985
        %4002 = vst [vmem:[#allocation4 + $0x18] sm:$0xff] %v3986
        %4003 = vst [vmem:[#allocation4 + $0x20] sm:$0xff] %v3987
        %4004 = vst [vmem:[#allocation4 + $0x28] sm:$0xff] %v3988
        %4005 = vst [vmem:[#allocation4 + $0x30] sm:$0xff] %v3989
        %4006 = vst [vmem:[#allocation4 + $0x38] sm:$0xff] %v3990
        %4007 = vst [vmem:[#allocation4 + $0x40] sm:$0xff] %v3991
        %4008 = vst [vmem:[#allocation4 + $0x48] sm:$0xff] %v3992
        %4009 = vst [vmem:[#allocation4 + $0x50] sm:$0xff] %v3993
        %4010 = vst [vmem:[#allocation4 + $0x58] sm:$0xff] %v3994
        %4011 = vst [vmem:[#allocation4 + $0x60] sm:$0xff] %v3995
        %4012 = vst [vmem:[#allocation4 + $0x68] sm:$0xff] %v3996
        %4013 = vst [vmem:[#allocation4 + $0x70] sm:$0xff] %v3997
        %4014 = vst [vmem:[#allocation4 + $0x78] sm:$0xff] %v3998
        %v4015 = vld [vmem:[#allocation4] ss:$2 sm:$0xff]
        %s4016 = scalar_lea.vmem [#allocation4], 16
        %v4017 = vld [vmem:[%s4016] ss:$2 sm:$0xff]
        %s4018 = scalar_lea.vmem [#allocation4], 32
        %v4019 = vld [vmem:[%s4018] ss:$2 sm:$0xff]
        %s4020 = scalar_lea.vmem [#allocation4], 48
        %v4021 = vld [vmem:[%s4020] ss:$2 sm:$0xff]
        %s4022 = scalar_lea.vmem [#allocation4], 64
        %v4023 = vld [vmem:[%s4022] ss:$2 sm:$0xff]
        %s4024 = scalar_lea.vmem [#allocation4], 80
        %v4025 = vld [vmem:[%s4024] ss:$2 sm:$0xff]
        %s4026 = scalar_lea.vmem [#allocation4], 96
        %v4027 = vld [vmem:[%s4026] ss:$2 sm:$0xff]
        %s4028 = scalar_lea.vmem [#allocation4], 112
        %v4029 = vld [vmem:[%s4028] ss:$2 sm:$0xff]
        %s4030 = scalar_lea.vmem [#allocation4], 1
        %v4031 = vld [vmem:[%s4030] ss:$2 sm:$0xff]
        %s4032 = scalar_lea.vmem [#allocation4], 17
        %v4033 = vld [vmem:[%s4032] ss:$2 sm:$0xff]
        %s4034 = scalar_lea.vmem [#allocation4], 33
        %v4035 = vld [vmem:[%s4034] ss:$2 sm:$0xff]
        %s4036 = scalar_lea.vmem [#allocation4], 49
        %v4037 = vld [vmem:[%s4036] ss:$2 sm:$0xff]
        %s4038 = scalar_lea.vmem [#allocation4], 65
        %v4039 = vld [vmem:[%s4038] ss:$2 sm:$0xff]
        %s4040 = scalar_lea.vmem [#allocation4], 81
        %v4041 = vld [vmem:[%s4040] ss:$2 sm:$0xff]
        %s4042 = scalar_lea.vmem [#allocation4], 97
        %v4043 = vld [vmem:[%s4042] ss:$2 sm:$0xff]
        %s4044 = scalar_lea.vmem [#allocation4], 113
        %v4045 = vld [vmem:[%s4044] ss:$2 sm:$0xff]
        %v4046 = vadd.f32 %v4015, %v4031
        %v4047 = vadd.f32 %v4017, %v4033
        %v4048 = vadd.f32 %v4019, %v4035
        %v4049 = vadd.f32 %v4021, %v4037
        %v4050 = vadd.f32 %v4023, %v4039
        %v4051 = vadd.f32 %v4025, %v4041
        %v4052 = vadd.f32 %v4027, %v4043
        %v4053 = vadd.f32 %v4029, %v4045
        %v4054 = vmul.f32 %v4046, 0.25
        %v4055 = vmul.f32 %v4047, 0.25
        %v4056 = vmul.f32 %v4048, 0.25
        %v4057 = vmul.f32 %v4049, 0.25
        %v4058 = vmul.f32 %v4050, 0.25
        %v4059 = vmul.f32 %v4051, 0.25
        %v4060 = vmul.f32 %v4052, 0.25
        %v4061 = vmul.f32 %v4053, 0.25
        %s4062 = scalar_lea.vmem [#allocation3], 16
        %4063 = vst [vmem:[%s4062 + $0x1] sm:$0xff] %v4054
        %4064 = vst [vmem:[%s4062 + $0x11] sm:$0xff] %v4055
        %4065 = vst [vmem:[%s4062 + $0x21] sm:$0xff] %v4056
        %4066 = vst [vmem:[%s4062 + $0x31] sm:$0xff] %v4057
        %4067 = vst [vmem:[%s4062 + $0x41] sm:$0xff] %v4058
        %4068 = vst [vmem:[%s4062 + $0x51] sm:$0xff] %v4059
        %4069 = vst [vmem:[%s4062 + $0x61] sm:$0xff] %v4060
        %4070 = vst [vmem:[%s4062 + $0x71] sm:$0xff] %v4061
        %v4071 = vld [vmem:[#allocation3] sm:$0xff]
        %v4072 = vld [vmem:[#allocation3 + $0x10] sm:$0xff]
        %v4073 = vld [vmem:[#allocation3 + $0x20] sm:$0xff]
        %v4074 = vld [vmem:[#allocation3 + $0x30] sm:$0xff]
        %v4075 = vld [vmem:[#allocation3 + $0x40] sm:$0xff]
        %v4076 = vld [vmem:[#allocation3 + $0x50] sm:$0xff]
        %v4077 = vld [vmem:[#allocation3 + $0x60] sm:$0xff]
        %v4078 = vld [vmem:[#allocation3 + $0x70] sm:$0xff]
        %vm4079 = vcmp.ge.f32.partialorder %v4071, 0.0
        %vm4080 = vcmp.ge.f32.partialorder %v4072, 0.0
        %vm4081 = vcmp.ge.f32.partialorder %v4073, 0.0
        %vm4082 = vcmp.ge.f32.partialorder %v4074, 0.0
        %vm4083 = vcmp.ge.f32.partialorder %v4075, 0.0
        %vm4084 = vcmp.ge.f32.partialorder %v4076, 0.0
        %vm4085 = vcmp.ge.f32.partialorder %v4077, 0.0
        %vm4086 = vcmp.ge.f32.partialorder %v4078, 0.0
        %v4087 = vmul.f32 %v4071, 0.2
        %v4088 = vmul.f32 %v4072, 0.2
        %v4089 = vmul.f32 %v4073, 0.2
        %v4090 = vmul.f32 %v4074, 0.2
        %v4091 = vmul.f32 %v4075, 0.2
        %v4092 = vmul.f32 %v4076, 0.2
        %v4093 = vmul.f32 %v4077, 0.2
        %v4094 = vmul.f32 %v4078, 0.2
        %v4095 = vsel %vm4079, %v4071, %v4087
        %v4096 = vsel %vm4080, %v4072, %v4088
        %v4097 = vsel %vm4081, %v4073, %v4089
        %v4098 = vsel %vm4082, %v4074, %v4090
        %v4099 = vsel %vm4083, %v4075, %v4091
        %v4100 = vsel %vm4084, %v4076, %v4092
        %v4101 = vsel %vm4085, %v4077, %v4093
        %v4102 = vsel %vm4086, %v4078, %v4094
        %v4103 = vpack.c.bf16 %v4096, %v4095
        %v4104 = vpack.c.bf16 %v4098, %v4097
        %v4105 = vpack.c.bf16 %v4100, %v4099
        %v4106 = vpack.c.bf16 %v4102, %v4101
        %v4107 = vld [vmem:[%s3] sm:$0xff]
        %v4108 = vld [vmem:[%s3 + $0x8] sm:$0xff]
        %v4109 = vld [vmem:[%s3 + $0x10] sm:$0xff]
        %v4110 = vld [vmem:[%s3 + $0x18] sm:$0xff]
        %v4111 = vld [vmem:[%s3 + $0x20] sm:$0xff]
        %v4112 = vld [vmem:[%s3 + $0x28] sm:$0xff]
        %v4113 = vld [vmem:[%s3 + $0x30] sm:$0xff]
        %v4114 = vld [vmem:[%s3 + $0x38] sm:$0xff]
        %v4115 = vld [vmem:[%s3 + $0x40] sm:$0xff]
        %v4116 = vld [vmem:[%s3 + $0x48] sm:$0xff]
        %v4117 = vld [vmem:[%s3 + $0x50] sm:$0xff]
        %v4118 = vld [vmem:[%s3 + $0x58] sm:$0xff]
        %v4119 = vld [vmem:[%s3 + $0x60] sm:$0xff]
        %v4120 = vld [vmem:[%s3 + $0x68] sm:$0xff]
        %v4121 = vld [vmem:[%s3 + $0x70] sm:$0xff]
        %v4122 = vld [vmem:[%s3 + $0x78] sm:$0xff]
        %v4123 = vld [vmem:[#allocation3 + $0x1] sm:$0xff]
        %v4124 = vld [vmem:[#allocation3 + $0x11] sm:$0xff]
        %v4125 = vld [vmem:[#allocation3 + $0x21] sm:$0xff]
        %v4126 = vld [vmem:[#allocation3 + $0x31] sm:$0xff]
        %v4127 = vld [vmem:[#allocation3 + $0x41] sm:$0xff]
        %v4128 = vld [vmem:[#allocation3 + $0x51] sm:$0xff]
        %v4129 = vld [vmem:[#allocation3 + $0x61] sm:$0xff]
        %v4130 = vld [vmem:[#allocation3 + $0x71] sm:$0xff]
        %vm4131 = vcmp.ge.f32.partialorder %v4123, 0.0
        %vm4132 = vcmp.ge.f32.partialorder %v4124, 0.0
        %vm4133 = vcmp.ge.f32.partialorder %v4125, 0.0
        %vm4134 = vcmp.ge.f32.partialorder %v4126, 0.0
        %vm4135 = vcmp.ge.f32.partialorder %v4127, 0.0
        %vm4136 = vcmp.ge.f32.partialorder %v4128, 0.0
        %vm4137 = vcmp.ge.f32.partialorder %v4129, 0.0
        %vm4138 = vcmp.ge.f32.partialorder %v4130, 0.0
        %v4139 = vmul.f32 %v4123, 0.2
        %v4140 = vmul.f32 %v4124, 0.2
        %v4141 = vmul.f32 %v4125, 0.2
        %v4142 = vmul.f32 %v4126, 0.2
        %v4143 = vmul.f32 %v4127, 0.2
        %v4144 = vmul.f32 %v4128, 0.2
        %v4145 = vmul.f32 %v4129, 0.2
        %v4146 = vmul.f32 %v4130, 0.2
        %v4147 = vsel %vm4131, %v4123, %v4139
        %v4148 = vsel %vm4132, %v4124, %v4140
        %v4149 = vsel %vm4133, %v4125, %v4141
        %v4150 = vsel %vm4134, %v4126, %v4142
        %v4151 = vsel %vm4135, %v4127, %v4143
        %v4152 = vsel %vm4136, %v4128, %v4144
        %v4153 = vsel %vm4137, %v4129, %v4145
        %v4154 = vsel %vm4138, %v4130, %v4146
        %v4155 = vpack.c.bf16 %v4148, %v4147
        %v4156 = vpack.c.bf16 %v4150, %v4149
        %v4157 = vpack.c.bf16 %v4152, %v4151
        %v4158 = vpack.c.bf16 %v4154, %v4153
        %s4159 = scalar_lea.vmem %s3, 128
        %v4160 = vld [vmem:[%s4159] sm:$0xff]
        %v4161 = vld [vmem:[%s4159 + $0x8] sm:$0xff]
        %v4162 = vld [vmem:[%s4159 + $0x10] sm:$0xff]
        %v4163 = vld [vmem:[%s4159 + $0x18] sm:$0xff]
        %v4164 = vld [vmem:[%s4159 + $0x20] sm:$0xff]
        %v4165 = vld [vmem:[%s4159 + $0x28] sm:$0xff]
        %v4166 = vld [vmem:[%s4159 + $0x30] sm:$0xff]
        %v4167 = vld [vmem:[%s4159 + $0x38] sm:$0xff]
        %v4168 = vld [vmem:[%s4159 + $0x40] sm:$0xff]
        %v4169 = vld [vmem:[%s4159 + $0x48] sm:$0xff]
        %v4170 = vld [vmem:[%s4159 + $0x50] sm:$0xff]
        %v4171 = vld [vmem:[%s4159 + $0x58] sm:$0xff]
        %v4172 = vld [vmem:[%s4159 + $0x60] sm:$0xff]
        %v4173 = vld [vmem:[%s4159 + $0x68] sm:$0xff]
        %v4174 = vld [vmem:[%s4159 + $0x70] sm:$0xff]
        %v4175 = vld [vmem:[%s4159 + $0x78] sm:$0xff]
        %v4192 = vunpack.c.l.b16 %v4160
        %v4193 = vunpack.c.h.b16 %v4160
        %v4194 = vunpack.c.l.b16 %v4161
        %v4195 = vunpack.c.h.b16 %v4161
        %v4196 = vunpack.c.l.b16 %v4162
        %v4197 = vunpack.c.h.b16 %v4162
        %v4198 = vunpack.c.l.b16 %v4163
        %v4199 = vunpack.c.h.b16 %v4163
        %v4200 = vunpack.c.l.b16 %v4164
        %v4201 = vunpack.c.h.b16 %v4164
        %v4202 = vunpack.c.l.b16 %v4165
        %v4203 = vunpack.c.h.b16 %v4165
        %v4204 = vunpack.c.l.b16 %v4166
        %v4205 = vunpack.c.h.b16 %v4166
        %v4206 = vunpack.c.l.b16 %v4167
        %v4207 = vunpack.c.h.b16 %v4167
        %v4208 = vunpack.c.l.b16 %v4168
        %v4209 = vunpack.c.h.b16 %v4168
        %v4210 = vunpack.c.l.b16 %v4169
        %v4211 = vunpack.c.h.b16 %v4169
        %v4212 = vunpack.c.l.b16 %v4170
        %v4213 = vunpack.c.h.b16 %v4170
        %v4214 = vunpack.c.l.b16 %v4171
        %v4215 = vunpack.c.h.b16 %v4171
        %v4216 = vunpack.c.l.b16 %v4172
        %v4217 = vunpack.c.h.b16 %v4172
        %v4218 = vunpack.c.l.b16 %v4173
        %v4219 = vunpack.c.h.b16 %v4173
        %v4220 = vunpack.c.l.b16 %v4174
        %v4221 = vunpack.c.h.b16 %v4174
        %v4222 = vunpack.c.l.b16 %v4175
        %v4223 = vunpack.c.h.b16 %v4175
        %v4224 = vpack.c.b16 %v4194, %v4192
        %v4225 = vpack.c.b16 %v4195, %v4193
        %v4226 = vpack.c.b16 %v4198, %v4196
        %v4227 = vpack.c.b16 %v4199, %v4197
        %v4228 = vpack.c.b16 %v4202, %v4200
        %v4229 = vpack.c.b16 %v4203, %v4201
        %v4230 = vpack.c.b16 %v4206, %v4204
        %v4231 = vpack.c.b16 %v4207, %v4205
        %v4232 = vpack.c.b16 %v4210, %v4208
        %v4233 = vpack.c.b16 %v4211, %v4209
        %v4234 = vpack.c.b16 %v4214, %v4212
        %v4235 = vpack.c.b16 %v4215, %v4213
        %v4236 = vpack.c.b16 %v4218, %v4216
        %v4237 = vpack.c.b16 %v4219, %v4217
        %v4238 = vpack.c.b16 %v4222, %v4220
        %v4239 = vpack.c.b16 %v4223, %v4221
        %4256 = vmatprep.subr.bf16.mxu0 %v4239
        %4257 = vmatpush1.bf16.msra.mxu0 %v4238
        %4258 = vmatprep.subr.bf16.mxu0 %v4237
        %4259 = vmatpush1.bf16.msra.mxu0 %v4236
        %4260 = vmatprep.subr.bf16.mxu0 %v4235
        %4261 = vmatpush1.bf16.msra.mxu0 %v4234
        %4262 = vmatprep.subr.bf16.mxu0 %v4233
        %4263 = vmatpush1.bf16.msra.mxu0 %v4232
        %4264 = vmatprep.subr.bf16.mxu0 %v4231
        %4265 = vmatpush1.bf16.msra.mxu0 %v4230
        %4266 = vmatprep.subr.bf16.mxu0 %v4229
        %4267 = vmatpush1.bf16.msra.mxu0 %v4228
        %4268 = vmatprep.subr.bf16.mxu0 %v4227
        %4269 = vmatpush1.bf16.msra.mxu0 %v4226
        %4270 = vmatprep.subr.bf16.mxu0 %v4225
        %4271 = vmatpush1.bf16.msra.mxu0 %v4224
        %4272 = vmatprep.subr.bf16.mxu0 0
        %4273 = vmatpush2.bf16.msra.mxu0 0
        %4274 = vmatprep.subr.bf16.mxu0 0
        %4275 = vmatpush2.bf16.msra.mxu0 0
        %4276 = vmatprep.subr.bf16.mxu0 0
        %4277 = vmatpush2.bf16.msra.mxu0 0
        %4278 = vmatprep.subr.bf16.mxu0 0
        %4279 = vmatpush2.bf16.msra.mxu0 0
        %4280 = vmatprep.subr.bf16.mxu0 0
        %4281 = vmatpush2.bf16.msra.mxu0 0
        %4282 = vmatprep.subr.bf16.mxu0 0
        %4283 = vmatpush2.bf16.msra.mxu0 0
        %4284 = vmatprep.subr.bf16.mxu0 0
        %4285 = vmatpush2.bf16.msra.mxu0 0
        %4286 = vmatprep.subr.bf16.mxu0 0
        %4287 = vmatpush2.bf16.msra.mxu0 0
        %4288 = vmatprep.mubr.bf16.mxu0 0
        %4289 = vmatmul.mubr.bf16.gmra.mxu0 %v4155
        %v4290 = vpop.f32.mrf.mxu0
        %v4291 = vadd.f32 0.0, %v4290
        %v4292 = vpop.f32.mrf.mxu0
        %v4293 = vadd.f32 0.0, %v4292
        %v4294 = vpop.f32.mrf.mxu0
        %v4295 = vadd.f32 0.0, %v4294
        %v4296 = vpop.f32.mrf.mxu0
        %v4297 = vadd.f32 0.0, %v4296
        %4298 = vmatprep.mubr.bf16.mxu0 0
        %4299 = vmatmul.mubr.bf16.gmra.mxu0 %v4156
        %v4300 = vpop.f32.mrf.mxu0
        %v4301 = vadd.f32 0.0, %v4300
        %v4302 = vpop.f32.mrf.mxu0
        %v4303 = vadd.f32 0.0, %v4302
        %v4304 = vpop.f32.mrf.mxu0
        %v4305 = vadd.f32 0.0, %v4304
        %v4306 = vpop.f32.mrf.mxu0
        %v4307 = vadd.f32 0.0, %v4306
        %4308 = vmatprep.mubr.bf16.mxu0 0
        %4309 = vmatmul.mubr.bf16.gmra.mxu0 %v4157
        %v4310 = vpop.f32.mrf.mxu0
        %v4311 = vadd.f32 0.0, %v4310
        %v4312 = vpop.f32.mrf.mxu0
        %v4313 = vadd.f32 0.0, %v4312
        %v4314 = vpop.f32.mrf.mxu0
        %v4315 = vadd.f32 0.0, %v4314
        %v4316 = vpop.f32.mrf.mxu0
        %v4317 = vadd.f32 0.0, %v4316
        %4318 = vmatprep.mubr.bf16.mxu0 0
        %4319 = vmatmul.mubr.bf16.gmra.mxu0 %v4158
        %v4320 = vpop.f32.mrf.mxu0
        %v4321 = vadd.f32 0.0, %v4320
        %v4322 = vpop.f32.mrf.mxu0
        %v4323 = vadd.f32 0.0, %v4322
        %v4324 = vpop.f32.mrf.mxu0
        %v4325 = vadd.f32 0.0, %v4324
        %v4326 = vpop.f32.mrf.mxu0
        %v4327 = vadd.f32 0.0, %v4326
        %4328 = vdwg.mxu0
        %v4345 = vunpack.c.l.b16 %v4107
        %v4346 = vunpack.c.h.b16 %v4107
        %v4347 = vunpack.c.l.b16 %v4108
        %v4348 = vunpack.c.h.b16 %v4108
        %v4349 = vunpack.c.l.b16 %v4109
        %v4350 = vunpack.c.h.b16 %v4109
        %v4351 = vunpack.c.l.b16 %v4110
        %v4352 = vunpack.c.h.b16 %v4110
        %v4353 = vunpack.c.l.b16 %v4111
        %v4354 = vunpack.c.h.b16 %v4111
        %v4355 = vunpack.c.l.b16 %v4112
        %v4356 = vunpack.c.h.b16 %v4112
        %v4357 = vunpack.c.l.b16 %v4113
        %v4358 = vunpack.c.h.b16 %v4113
        %v4359 = vunpack.c.l.b16 %v4114
        %v4360 = vunpack.c.h.b16 %v4114
        %v4361 = vunpack.c.l.b16 %v4115
        %v4362 = vunpack.c.h.b16 %v4115
        %v4363 = vunpack.c.l.b16 %v4116
        %v4364 = vunpack.c.h.b16 %v4116
        %v4365 = vunpack.c.l.b16 %v4117
        %v4366 = vunpack.c.h.b16 %v4117
        %v4367 = vunpack.c.l.b16 %v4118
        %v4368 = vunpack.c.h.b16 %v4118
        %v4369 = vunpack.c.l.b16 %v4119
        %v4370 = vunpack.c.h.b16 %v4119
        %v4371 = vunpack.c.l.b16 %v4120
        %v4372 = vunpack.c.h.b16 %v4120
        %v4373 = vunpack.c.l.b16 %v4121
        %v4374 = vunpack.c.h.b16 %v4121
        %v4375 = vunpack.c.l.b16 %v4122
        %v4376 = vunpack.c.h.b16 %v4122
        %v4377 = vpack.c.b16 %v4347, %v4345
        %v4378 = vpack.c.b16 %v4348, %v4346
        %v4379 = vpack.c.b16 %v4351, %v4349
        %v4380 = vpack.c.b16 %v4352, %v4350
        %v4381 = vpack.c.b16 %v4355, %v4353
        %v4382 = vpack.c.b16 %v4356, %v4354
        %v4383 = vpack.c.b16 %v4359, %v4357
        %v4384 = vpack.c.b16 %v4360, %v4358
        %v4385 = vpack.c.b16 %v4363, %v4361
        %v4386 = vpack.c.b16 %v4364, %v4362
        %v4387 = vpack.c.b16 %v4367, %v4365
        %v4388 = vpack.c.b16 %v4368, %v4366
        %v4389 = vpack.c.b16 %v4371, %v4369
        %v4390 = vpack.c.b16 %v4372, %v4370
        %v4391 = vpack.c.b16 %v4375, %v4373
        %v4392 = vpack.c.b16 %v4376, %v4374
        %4409 = vmatprep.subr.bf16.mxu0 %v4392
        %4410 = vmatpush1.bf16.msra.mxu0 %v4391
        %4411 = vmatprep.subr.bf16.mxu0 %v4390
        %4412 = vmatpush1.bf16.msra.mxu0 %v4389
        %4413 = vmatprep.subr.bf16.mxu0 %v4388
        %4414 = vmatpush1.bf16.msra.mxu0 %v4387
        %4415 = vmatprep.subr.bf16.mxu0 %v4386
        %4416 = vmatpush1.bf16.msra.mxu0 %v4385
        %4417 = vmatprep.subr.bf16.mxu0 %v4384
        %4418 = vmatpush1.bf16.msra.mxu0 %v4383
        %4419 = vmatprep.subr.bf16.mxu0 %v4382
        %4420 = vmatpush1.bf16.msra.mxu0 %v4381
        %4421 = vmatprep.subr.bf16.mxu0 %v4380
        %4422 = vmatpush1.bf16.msra.mxu0 %v4379
        %4423 = vmatprep.subr.bf16.mxu0 %v4378
        %4424 = vmatpush1.bf16.msra.mxu0 %v4377
        %4425 = vmatprep.subr.bf16.mxu0 0
        %4426 = vmatpush2.bf16.msra.mxu0 0
        %4427 = vmatprep.subr.bf16.mxu0 0
        %4428 = vmatpush2.bf16.msra.mxu0 0
        %4429 = vmatprep.subr.bf16.mxu0 0
        %4430 = vmatpush2.bf16.msra.mxu0 0
        %4431 = vmatprep.subr.bf16.mxu0 0
        %4432 = vmatpush2.bf16.msra.mxu0 0
        %4433 = vmatprep.subr.bf16.mxu0 0
        %4434 = vmatpush2.bf16.msra.mxu0 0
        %4435 = vmatprep.subr.bf16.mxu0 0
        %4436 = vmatpush2.bf16.msra.mxu0 0
        %4437 = vmatprep.subr.bf16.mxu0 0
        %4438 = vmatpush2.bf16.msra.mxu0 0
        %4439 = vmatprep.subr.bf16.mxu0 0
        %4440 = vmatpush2.bf16.msra.mxu0 0
        %4441 = vmatprep.mubr.bf16.mxu0 0
        %4442 = vmatmul.mubr.bf16.gmra.mxu0 %v4103
        %v4443 = vpop.f32.mrf.mxu0
        %v4444 = vadd.f32 %v4291, %v4443
        %v4445 = vpop.f32.mrf.mxu0
        %v4446 = vadd.f32 %v4293, %v4445
        %v4447 = vpop.f32.mrf.mxu0
        %v4448 = vadd.f32 %v4295, %v4447
        %v4449 = vpop.f32.mrf.mxu0
        %v4450 = vadd.f32 %v4297, %v4449
        %4451 = vmatprep.mubr.bf16.mxu0 0
        %4452 = vmatmul.mubr.bf16.gmra.mxu0 %v4104
        %v4453 = vpop.f32.mrf.mxu0
        %v4454 = vadd.f32 %v4301, %v4453
        %v4455 = vpop.f32.mrf.mxu0
        %v4456 = vadd.f32 %v4303, %v4455
        %v4457 = vpop.f32.mrf.mxu0
        %v4458 = vadd.f32 %v4305, %v4457
        %v4459 = vpop.f32.mrf.mxu0
        %v4460 = vadd.f32 %v4307, %v4459
        %4461 = vmatprep.mubr.bf16.mxu0 0
        %4462 = vmatmul.mubr.bf16.gmra.mxu0 %v4105
        %v4463 = vpop.f32.mrf.mxu0
        %v4464 = vadd.f32 %v4311, %v4463
        %v4465 = vpop.f32.mrf.mxu0
        %v4466 = vadd.f32 %v4313, %v4465
        %v4467 = vpop.f32.mrf.mxu0
        %v4468 = vadd.f32 %v4315, %v4467
        %v4469 = vpop.f32.mrf.mxu0
        %v4470 = vadd.f32 %v4317, %v4469
        %4471 = vmatprep.mubr.bf16.mxu0 0
        %4472 = vmatmul.mubr.bf16.gmra.mxu0 %v4106
        %v4473 = vpop.f32.mrf.mxu0
        %v4474 = vadd.f32 %v4321, %v4473
        %v4475 = vpop.f32.mrf.mxu0
        %v4476 = vadd.f32 %v4323, %v4475
        %v4477 = vpop.f32.mrf.mxu0
        %v4478 = vadd.f32 %v4325, %v4477
        %v4479 = vpop.f32.mrf.mxu0
        %v4480 = vadd.f32 %v4327, %v4479
        %4481 = vdwg.mxu0
        %v4482 = vld [vmem:[#allocation3 + $0x2] sm:$0xff]
        %v4483 = vld [vmem:[#allocation3 + $0x12] sm:$0xff]
        %v4484 = vld [vmem:[#allocation3 + $0x22] sm:$0xff]
        %v4485 = vld [vmem:[#allocation3 + $0x32] sm:$0xff]
        %v4486 = vld [vmem:[#allocation3 + $0x42] sm:$0xff]
        %v4487 = vld [vmem:[#allocation3 + $0x52] sm:$0xff]
        %v4488 = vld [vmem:[#allocation3 + $0x62] sm:$0xff]
        %v4489 = vld [vmem:[#allocation3 + $0x72] sm:$0xff]
        %vm4490 = vcmp.ge.f32.partialorder %v4482, 0.0
        %vm4491 = vcmp.ge.f32.partialorder %v4483, 0.0
        %vm4492 = vcmp.ge.f32.partialorder %v4484, 0.0
        %vm4493 = vcmp.ge.f32.partialorder %v4485, 0.0
        %vm4494 = vcmp.ge.f32.partialorder %v4486, 0.0
        %vm4495 = vcmp.ge.f32.partialorder %v4487, 0.0
        %vm4496 = vcmp.ge.f32.partialorder %v4488, 0.0
        %vm4497 = vcmp.ge.f32.partialorder %v4489, 0.0
        %v4498 = vmul.f32 %v4482, 0.2
        %v4499 = vmul.f32 %v4483, 0.2
        %v4500 = vmul.f32 %v4484, 0.2
        %v4501 = vmul.f32 %v4485, 0.2
        %v4502 = vmul.f32 %v4486, 0.2
        %v4503 = vmul.f32 %v4487, 0.2
        %v4504 = vmul.f32 %v4488, 0.2
        %v4505 = vmul.f32 %v4489, 0.2
        %v4506 = vsel %vm4490, %v4482, %v4498
        %v4507 = vsel %vm4491, %v4483, %v4499
        %v4508 = vsel %vm4492, %v4484, %v4500
        %v4509 = vsel %vm4493, %v4485, %v4501
        %v4510 = vsel %vm4494, %v4486, %v4502
        %v4511 = vsel %vm4495, %v4487, %v4503
        %v4512 = vsel %vm4496, %v4488, %v4504
        %v4513 = vsel %vm4497, %v4489, %v4505
        %v4514 = vpack.c.bf16 %v4507, %v4506
        %v4515 = vpack.c.bf16 %v4509, %v4508
        %v4516 = vpack.c.bf16 %v4511, %v4510
        %v4517 = vpack.c.bf16 %v4513, %v4512
        %s4518 = scalar_lea.vmem %s3, 256
        %v4519 = vld [vmem:[%s4518] sm:$0xff]
        %v4520 = vld [vmem:[%s4518 + $0x8] sm:$0xff]
        %v4521 = vld [vmem:[%s4518 + $0x10] sm:$0xff]
        %v4522 = vld [vmem:[%s4518 + $0x18] sm:$0xff]
        %v4523 = vld [vmem:[%s4518 + $0x20] sm:$0xff]
        %v4524 = vld [vmem:[%s4518 + $0x28] sm:$0xff]
        %v4525 = vld [vmem:[%s4518 + $0x30] sm:$0xff]
        %v4526 = vld [vmem:[%s4518 + $0x38] sm:$0xff]
        %v4527 = vld [vmem:[%s4518 + $0x40] sm:$0xff]
        %v4528 = vld [vmem:[%s4518 + $0x48] sm:$0xff]
        %v4529 = vld [vmem:[%s4518 + $0x50] sm:$0xff]
        %v4530 = vld [vmem:[%s4518 + $0x58] sm:$0xff]
        %v4531 = vld [vmem:[%s4518 + $0x60] sm:$0xff]
        %v4532 = vld [vmem:[%s4518 + $0x68] sm:$0xff]
        %v4533 = vld [vmem:[%s4518 + $0x70] sm:$0xff]
        %v4534 = vld [vmem:[%s4518 + $0x78] sm:$0xff]
        %v4551 = vunpack.c.l.b16 %v4519
        %v4552 = vunpack.c.h.b16 %v4519
        %v4553 = vunpack.c.l.b16 %v4520
        %v4554 = vunpack.c.h.b16 %v4520
        %v4555 = vunpack.c.l.b16 %v4521
        %v4556 = vunpack.c.h.b16 %v4521
        %v4557 = vunpack.c.l.b16 %v4522
        %v4558 = vunpack.c.h.b16 %v4522
        %v4559 = vunpack.c.l.b16 %v4523
        %v4560 = vunpack.c.h.b16 %v4523
        %v4561 = vunpack.c.l.b16 %v4524
        %v4562 = vunpack.c.h.b16 %v4524
        %v4563 = vunpack.c.l.b16 %v4525
        %v4564 = vunpack.c.h.b16 %v4525
        %v4565 = vunpack.c.l.b16 %v4526
        %v4566 = vunpack.c.h.b16 %v4526
        %v4567 = vunpack.c.l.b16 %v4527
        %v4568 = vunpack.c.h.b16 %v4527
        %v4569 = vunpack.c.l.b16 %v4528
        %v4570 = vunpack.c.h.b16 %v4528
        %v4571 = vunpack.c.l.b16 %v4529
        %v4572 = vunpack.c.h.b16 %v4529
        %v4573 = vunpack.c.l.b16 %v4530
        %v4574 = vunpack.c.h.b16 %v4530
        %v4575 = vunpack.c.l.b16 %v4531
        %v4576 = vunpack.c.h.b16 %v4531
        %v4577 = vunpack.c.l.b16 %v4532
        %v4578 = vunpack.c.h.b16 %v4532
        %v4579 = vunpack.c.l.b16 %v4533
        %v4580 = vunpack.c.h.b16 %v4533
        %v4581 = vunpack.c.l.b16 %v4534
        %v4582 = vunpack.c.h.b16 %v4534
        %v4583 = vpack.c.b16 %v4553, %v4551
        %v4584 = vpack.c.b16 %v4554, %v4552
        %v4585 = vpack.c.b16 %v4557, %v4555
        %v4586 = vpack.c.b16 %v4558, %v4556
        %v4587 = vpack.c.b16 %v4561, %v4559
        %v4588 = vpack.c.b16 %v4562, %v4560
        %v4589 = vpack.c.b16 %v4565, %v4563
        %v4590 = vpack.c.b16 %v4566, %v4564
        %v4591 = vpack.c.b16 %v4569, %v4567
        %v4592 = vpack.c.b16 %v4570, %v4568
        %v4593 = vpack.c.b16 %v4573, %v4571
        %v4594 = vpack.c.b16 %v4574, %v4572
        %v4595 = vpack.c.b16 %v4577, %v4575
        %v4596 = vpack.c.b16 %v4578, %v4576
        %v4597 = vpack.c.b16 %v4581, %v4579
        %v4598 = vpack.c.b16 %v4582, %v4580
        %4615 = vmatprep.subr.bf16.mxu0 %v4598
        %4616 = vmatpush1.bf16.msra.mxu0 %v4597
        %4617 = vmatprep.subr.bf16.mxu0 %v4596
        %4618 = vmatpush1.bf16.msra.mxu0 %v4595
        %4619 = vmatprep.subr.bf16.mxu0 %v4594
        %4620 = vmatpush1.bf16.msra.mxu0 %v4593
        %4621 = vmatprep.subr.bf16.mxu0 %v4592
        %4622 = vmatpush1.bf16.msra.mxu0 %v4591
        %4623 = vmatprep.subr.bf16.mxu0 %v4590
        %4624 = vmatpush1.bf16.msra.mxu0 %v4589
        %4625 = vmatprep.subr.bf16.mxu0 %v4588
        %4626 = vmatpush1.bf16.msra.mxu0 %v4587
        %4627 = vmatprep.subr.bf16.mxu0 %v4586
        %4628 = vmatpush1.bf16.msra.mxu0 %v4585
        %4629 = vmatprep.subr.bf16.mxu0 %v4584
        %4630 = vmatpush1.bf16.msra.mxu0 %v4583
        %4631 = vmatprep.subr.bf16.mxu0 0
        %4632 = vmatpush2.bf16.msra.mxu0 0
        %4633 = vmatprep.subr.bf16.mxu0 0
        %4634 = vmatpush2.bf16.msra.mxu0 0
        %4635 = vmatprep.subr.bf16.mxu0 0
        %4636 = vmatpush2.bf16.msra.mxu0 0
        %4637 = vmatprep.subr.bf16.mxu0 0
        %4638 = vmatpush2.bf16.msra.mxu0 0
        %4639 = vmatprep.subr.bf16.mxu0 0
        %4640 = vmatpush2.bf16.msra.mxu0 0
        %4641 = vmatprep.subr.bf16.mxu0 0
        %4642 = vmatpush2.bf16.msra.mxu0 0
        %4643 = vmatprep.subr.bf16.mxu0 0
        %4644 = vmatpush2.bf16.msra.mxu0 0
        %4645 = vmatprep.subr.bf16.mxu0 0
        %4646 = vmatpush2.bf16.msra.mxu0 0
        %4647 = vmatprep.mubr.bf16.mxu0 0
        %4648 = vmatmul.mubr.bf16.gmra.mxu0 %v4514
        %v4649 = vpop.f32.mrf.mxu0
        %v4650 = vadd.f32 0.0, %v4649
        %v4651 = vpop.f32.mrf.mxu0
        %v4652 = vadd.f32 0.0, %v4651
        %v4653 = vpop.f32.mrf.mxu0
        %v4654 = vadd.f32 0.0, %v4653
        %v4655 = vpop.f32.mrf.mxu0
        %v4656 = vadd.f32 0.0, %v4655
        %4657 = vmatprep.mubr.bf16.mxu0 0
        %4658 = vmatmul.mubr.bf16.gmra.mxu0 %v4515
        %v4659 = vpop.f32.mrf.mxu0
        %v4660 = vadd.f32 0.0, %v4659
        %v4661 = vpop.f32.mrf.mxu0
        %v4662 = vadd.f32 0.0, %v4661
        %v4663 = vpop.f32.mrf.mxu0
        %v4664 = vadd.f32 0.0, %v4663
        %v4665 = vpop.f32.mrf.mxu0
        %v4666 = vadd.f32 0.0, %v4665
        %4667 = vmatprep.mubr.bf16.mxu0 0
        %4668 = vmatmul.mubr.bf16.gmra.mxu0 %v4516
        %v4669 = vpop.f32.mrf.mxu0
        %v4670 = vadd.f32 0.0, %v4669
        %v4671 = vpop.f32.mrf.mxu0
        %v4672 = vadd.f32 0.0, %v4671
        %v4673 = vpop.f32.mrf.mxu0
        %v4674 = vadd.f32 0.0, %v4673
        %v4675 = vpop.f32.mrf.mxu0
        %v4676 = vadd.f32 0.0, %v4675
        %4677 = vmatprep.mubr.bf16.mxu0 0
        %4678 = vmatmul.mubr.bf16.gmra.mxu0 %v4517
        %v4679 = vpop.f32.mrf.mxu0
        %v4680 = vadd.f32 0.0, %v4679
        %v4681 = vpop.f32.mrf.mxu0
        %v4682 = vadd.f32 0.0, %v4681
        %v4683 = vpop.f32.mrf.mxu0
        %v4684 = vadd.f32 0.0, %v4683
        %v4685 = vpop.f32.mrf.mxu0
        %v4686 = vadd.f32 0.0, %v4685
        %4687 = vdwg.mxu0
        %v4688 = vadd.f32 %v4444, %v4650
        %v4689 = vadd.f32 %v4446, %v4652
        %v4690 = vadd.f32 %v4448, %v4654
        %v4691 = vadd.f32 %v4450, %v4656
        %v4692 = vadd.f32 %v4454, %v4660
        %v4693 = vadd.f32 %v4456, %v4662
        %v4694 = vadd.f32 %v4458, %v4664
        %v4695 = vadd.f32 %v4460, %v4666
        %v4696 = vadd.f32 %v4464, %v4670
        %v4697 = vadd.f32 %v4466, %v4672
        %v4698 = vadd.f32 %v4468, %v4674
        %v4699 = vadd.f32 %v4470, %v4676
        %v4700 = vadd.f32 %v4474, %v4680
        %v4701 = vadd.f32 %v4476, %v4682
        %v4702 = vadd.f32 %v4478, %v4684
        %v4703 = vadd.f32 %v4480, %v4686
        %v4704 = vld [vmem:[%s4062] sm:$0xff]
        %v4705 = vld [vmem:[%s4062 + $0x10] sm:$0xff]
        %v4706 = vld [vmem:[%s4062 + $0x20] sm:$0xff]
        %v4707 = vld [vmem:[%s4062 + $0x30] sm:$0xff]
        %v4708 = vld [vmem:[%s4062 + $0x40] sm:$0xff]
        %v4709 = vld [vmem:[%s4062 + $0x50] sm:$0xff]
        %v4710 = vld [vmem:[%s4062 + $0x60] sm:$0xff]
        %v4711 = vld [vmem:[%s4062 + $0x70] sm:$0xff]
        %vm4712 = vcmp.ge.f32.partialorder %v4704, 0.0
        %vm4713 = vcmp.ge.f32.partialorder %v4705, 0.0
        %vm4714 = vcmp.ge.f32.partialorder %v4706, 0.0
        %vm4715 = vcmp.ge.f32.partialorder %v4707, 0.0
        %vm4716 = vcmp.ge.f32.partialorder %v4708, 0.0
        %vm4717 = vcmp.ge.f32.partialorder %v4709, 0.0
        %vm4718 = vcmp.ge.f32.partialorder %v4710, 0.0
        %vm4719 = vcmp.ge.f32.partialorder %v4711, 0.0
        %v4720 = vmul.f32 %v4704, 0.2
        %v4721 = vmul.f32 %v4705, 0.2
        %v4722 = vmul.f32 %v4706, 0.2
        %v4723 = vmul.f32 %v4707, 0.2
        %v4724 = vmul.f32 %v4708, 0.2
        %v4725 = vmul.f32 %v4709, 0.2
        %v4726 = vmul.f32 %v4710, 0.2
        %v4727 = vmul.f32 %v4711, 0.2
        %v4728 = vsel %vm4712, %v4704, %v4720
        %v4729 = vsel %vm4713, %v4705, %v4721
        %v4730 = vsel %vm4714, %v4706, %v4722
        %v4731 = vsel %vm4715, %v4707, %v4723
        %v4732 = vsel %vm4716, %v4708, %v4724
        %v4733 = vsel %vm4717, %v4709, %v4725
        %v4734 = vsel %vm4718, %v4710, %v4726
        %v4735 = vsel %vm4719, %v4711, %v4727
        %v4736 = vpack.c.bf16 %v4729, %v4728
        %v4737 = vpack.c.bf16 %v4731, %v4730
        %v4738 = vpack.c.bf16 %v4733, %v4732
        %v4739 = vpack.c.bf16 %v4735, %v4734
        %s4740 = scalar_lea.vmem %s3, 384
        %v4741 = vld [vmem:[%s4740] sm:$0xff]
        %v4742 = vld [vmem:[%s4740 + $0x8] sm:$0xff]
        %v4743 = vld [vmem:[%s4740 + $0x10] sm:$0xff]
        %v4744 = vld [vmem:[%s4740 + $0x18] sm:$0xff]
        %v4745 = vld [vmem:[%s4740 + $0x20] sm:$0xff]
        %v4746 = vld [vmem:[%s4740 + $0x28] sm:$0xff]
        %v4747 = vld [vmem:[%s4740 + $0x30] sm:$0xff]
        %v4748 = vld [vmem:[%s4740 + $0x38] sm:$0xff]
        %v4749 = vld [vmem:[%s4740 + $0x40] sm:$0xff]
        %v4750 = vld [vmem:[%s4740 + $0x48] sm:$0xff]
        %v4751 = vld [vmem:[%s4740 + $0x50] sm:$0xff]
        %v4752 = vld [vmem:[%s4740 + $0x58] sm:$0xff]
        %v4753 = vld [vmem:[%s4740 + $0x60] sm:$0xff]
        %v4754 = vld [vmem:[%s4740 + $0x68] sm:$0xff]
        %v4755 = vld [vmem:[%s4740 + $0x70] sm:$0xff]
        %v4756 = vld [vmem:[%s4740 + $0x78] sm:$0xff]
        %v4773 = vunpack.c.l.b16 %v4741
        %v4774 = vunpack.c.h.b16 %v4741
        %v4775 = vunpack.c.l.b16 %v4742
        %v4776 = vunpack.c.h.b16 %v4742
        %v4777 = vunpack.c.l.b16 %v4743
        %v4778 = vunpack.c.h.b16 %v4743
        %v4779 = vunpack.c.l.b16 %v4744
        %v4780 = vunpack.c.h.b16 %v4744
        %v4781 = vunpack.c.l.b16 %v4745
        %v4782 = vunpack.c.h.b16 %v4745
        %v4783 = vunpack.c.l.b16 %v4746
        %v4784 = vunpack.c.h.b16 %v4746
        %v4785 = vunpack.c.l.b16 %v4747
        %v4786 = vunpack.c.h.b16 %v4747
        %v4787 = vunpack.c.l.b16 %v4748
        %v4788 = vunpack.c.h.b16 %v4748
        %v4789 = vunpack.c.l.b16 %v4749
        %v4790 = vunpack.c.h.b16 %v4749
        %v4791 = vunpack.c.l.b16 %v4750
        %v4792 = vunpack.c.h.b16 %v4750
        %v4793 = vunpack.c.l.b16 %v4751
        %v4794 = vunpack.c.h.b16 %v4751
        %v4795 = vunpack.c.l.b16 %v4752
        %v4796 = vunpack.c.h.b16 %v4752
        %v4797 = vunpack.c.l.b16 %v4753
        %v4798 = vunpack.c.h.b16 %v4753
        %v4799 = vunpack.c.l.b16 %v4754
        %v4800 = vunpack.c.h.b16 %v4754
        %v4801 = vunpack.c.l.b16 %v4755
        %v4802 = vunpack.c.h.b16 %v4755
        %v4803 = vunpack.c.l.b16 %v4756
        %v4804 = vunpack.c.h.b16 %v4756
        %v4805 = vpack.c.b16 %v4775, %v4773
        %v4806 = vpack.c.b16 %v4776, %v4774
        %v4807 = vpack.c.b16 %v4779, %v4777
        %v4808 = vpack.c.b16 %v4780, %v4778
        %v4809 = vpack.c.b16 %v4783, %v4781
        %v4810 = vpack.c.b16 %v4784, %v4782
        %v4811 = vpack.c.b16 %v4787, %v4785
        %v4812 = vpack.c.b16 %v4788, %v4786
        %v4813 = vpack.c.b16 %v4791, %v4789
        %v4814 = vpack.c.b16 %v4792, %v4790
        %v4815 = vpack.c.b16 %v4795, %v4793
        %v4816 = vpack.c.b16 %v4796, %v4794
        %v4817 = vpack.c.b16 %v4799, %v4797
        %v4818 = vpack.c.b16 %v4800, %v4798
        %v4819 = vpack.c.b16 %v4803, %v4801
        %v4820 = vpack.c.b16 %v4804, %v4802
        %4837 = vmatprep.subr.bf16.mxu0 %v4820
        %4838 = vmatpush1.bf16.msra.mxu0 %v4819
        %4839 = vmatprep.subr.bf16.mxu0 %v4818
        %4840 = vmatpush1.bf16.msra.mxu0 %v4817
        %4841 = vmatprep.subr.bf16.mxu0 %v4816
        %4842 = vmatpush1.bf16.msra.mxu0 %v4815
        %4843 = vmatprep.subr.bf16.mxu0 %v4814
        %4844 = vmatpush1.bf16.msra.mxu0 %v4813
        %4845 = vmatprep.subr.bf16.mxu0 %v4812
        %4846 = vmatpush1.bf16.msra.mxu0 %v4811
        %4847 = vmatprep.subr.bf16.mxu0 %v4810
        %4848 = vmatpush1.bf16.msra.mxu0 %v4809
        %4849 = vmatprep.subr.bf16.mxu0 %v4808
        %4850 = vmatpush1.bf16.msra.mxu0 %v4807
        %4851 = vmatprep.subr.bf16.mxu0 %v4806
        %4852 = vmatpush1.bf16.msra.mxu0 %v4805
        %4853 = vmatprep.subr.bf16.mxu0 0
        %4854 = vmatpush2.bf16.msra.mxu0 0
        %4855 = vmatprep.subr.bf16.mxu0 0
        %4856 = vmatpush2.bf16.msra.mxu0 0
        %4857 = vmatprep.subr.bf16.mxu0 0
        %4858 = vmatpush2.bf16.msra.mxu0 0
        %4859 = vmatprep.subr.bf16.mxu0 0
        %4860 = vmatpush2.bf16.msra.mxu0 0
        %4861 = vmatprep.subr.bf16.mxu0 0
        %4862 = vmatpush2.bf16.msra.mxu0 0
        %4863 = vmatprep.subr.bf16.mxu0 0
        %4864 = vmatpush2.bf16.msra.mxu0 0
        %4865 = vmatprep.subr.bf16.mxu0 0
        %4866 = vmatpush2.bf16.msra.mxu0 0
        %4867 = vmatprep.subr.bf16.mxu0 0
        %4868 = vmatpush2.bf16.msra.mxu0 0
        %4869 = vmatprep.mubr.bf16.mxu0 0
        %4870 = vmatmul.mubr.bf16.gmra.mxu0 %v4736
        %v4871 = vpop.f32.mrf.mxu0
        %v4872 = vadd.f32 0.0, %v4871
        %v4873 = vpop.f32.mrf.mxu0
        %v4874 = vadd.f32 0.0, %v4873
        %v4875 = vpop.f32.mrf.mxu0
        %v4876 = vadd.f32 0.0, %v4875
        %v4877 = vpop.f32.mrf.mxu0
        %v4878 = vadd.f32 0.0, %v4877
        %4879 = vmatprep.mubr.bf16.mxu0 0
        %4880 = vmatmul.mubr.bf16.gmra.mxu0 %v4737
        %v4881 = vpop.f32.mrf.mxu0
        %v4882 = vadd.f32 0.0, %v4881
        %v4883 = vpop.f32.mrf.mxu0
        %v4884 = vadd.f32 0.0, %v4883
        %v4885 = vpop.f32.mrf.mxu0
        %v4886 = vadd.f32 0.0, %v4885
        %v4887 = vpop.f32.mrf.mxu0
        %v4888 = vadd.f32 0.0, %v4887
        %4889 = vmatprep.mubr.bf16.mxu0 0
        %4890 = vmatmul.mubr.bf16.gmra.mxu0 %v4738
        %v4891 = vpop.f32.mrf.mxu0
        %v4892 = vadd.f32 0.0, %v4891
        %v4893 = vpop.f32.mrf.mxu0
        %v4894 = vadd.f32 0.0, %v4893
        %v4895 = vpop.f32.mrf.mxu0
        %v4896 = vadd.f32 0.0, %v4895
        %v4897 = vpop.f32.mrf.mxu0
        %v4898 = vadd.f32 0.0, %v4897
        %4899 = vmatprep.mubr.bf16.mxu0 0
        %4900 = vmatmul.mubr.bf16.gmra.mxu0 %v4739
        %v4901 = vpop.f32.mrf.mxu0
        %v4902 = vadd.f32 0.0, %v4901
        %v4903 = vpop.f32.mrf.mxu0
        %v4904 = vadd.f32 0.0, %v4903
        %v4905 = vpop.f32.mrf.mxu0
        %v4906 = vadd.f32 0.0, %v4905
        %v4907 = vpop.f32.mrf.mxu0
        %v4908 = vadd.f32 0.0, %v4907
        %4909 = vdwg.mxu0
        %v4910 = vadd.f32 %v4688, %v4872
        %v4911 = vadd.f32 %v4689, %v4874
        %v4912 = vadd.f32 %v4690, %v4876
        %v4913 = vadd.f32 %v4691, %v4878
        %v4914 = vadd.f32 %v4692, %v4882
        %v4915 = vadd.f32 %v4693, %v4884
        %v4916 = vadd.f32 %v4694, %v4886
        %v4917 = vadd.f32 %v4695, %v4888
        %v4918 = vadd.f32 %v4696, %v4892
        %v4919 = vadd.f32 %v4697, %v4894
        %v4920 = vadd.f32 %v4698, %v4896
        %v4921 = vadd.f32 %v4699, %v4898
        %v4922 = vadd.f32 %v4700, %v4902
        %v4923 = vadd.f32 %v4701, %v4904
        %v4924 = vadd.f32 %v4702, %v4906
        %v4925 = vadd.f32 %v4703, %v4908
        %v4926 = vld [vmem:[%s4062 + $0x1] sm:$0xff]
        %v4927 = vld [vmem:[%s4062 + $0x11] sm:$0xff]
        %v4928 = vld [vmem:[%s4062 + $0x21] sm:$0xff]
        %v4929 = vld [vmem:[%s4062 + $0x31] sm:$0xff]
        %v4930 = vld [vmem:[%s4062 + $0x41] sm:$0xff]
        %v4931 = vld [vmem:[%s4062 + $0x51] sm:$0xff]
        %v4932 = vld [vmem:[%s4062 + $0x61] sm:$0xff]
        %v4933 = vld [vmem:[%s4062 + $0x71] sm:$0xff]
        %vm4934 = vcmp.ge.f32.partialorder %v4926, 0.0
        %vm4935 = vcmp.ge.f32.partialorder %v4927, 0.0
        %vm4936 = vcmp.ge.f32.partialorder %v4928, 0.0
        %vm4937 = vcmp.ge.f32.partialorder %v4929, 0.0
        %vm4938 = vcmp.ge.f32.partialorder %v4930, 0.0
        %vm4939 = vcmp.ge.f32.partialorder %v4931, 0.0
        %vm4940 = vcmp.ge.f32.partialorder %v4932, 0.0
        %vm4941 = vcmp.ge.f32.partialorder %v4933, 0.0
        %v4942 = vmul.f32 %v4926, 0.2
        %v4943 = vmul.f32 %v4927, 0.2
        %v4944 = vmul.f32 %v4928, 0.2
        %v4945 = vmul.f32 %v4929, 0.2
        %v4946 = vmul.f32 %v4930, 0.2
        %v4947 = vmul.f32 %v4931, 0.2
        %v4948 = vmul.f32 %v4932, 0.2
        %v4949 = vmul.f32 %v4933, 0.2
        %v4950 = vsel %vm4934, %v4926, %v4942
        %v4951 = vsel %vm4935, %v4927, %v4943
        %v4952 = vsel %vm4936, %v4928, %v4944
        %v4953 = vsel %vm4937, %v4929, %v4945
        %v4954 = vsel %vm4938, %v4930, %v4946
        %v4955 = vsel %vm4939, %v4931, %v4947
        %v4956 = vsel %vm4940, %v4932, %v4948
        %v4957 = vsel %vm4941, %v4933, %v4949
        %v4958 = vpack.c.bf16 %v4951, %v4950
        %v4959 = vpack.c.bf16 %v4953, %v4952
        %v4960 = vpack.c.bf16 %v4955, %v4954
        %v4961 = vpack.c.bf16 %v4957, %v4956
        %s4962 = scalar_lea.vmem %s3, 512
        %v4963 = vld [vmem:[%s4962] sm:$0xff]
        %v4964 = vld [vmem:[%s4962 + $0x8] sm:$0xff]
        %v4965 = vld [vmem:[%s4962 + $0x10] sm:$0xff]
        %v4966 = vld [vmem:[%s4962 + $0x18] sm:$0xff]
        %v4967 = vld [vmem:[%s4962 + $0x20] sm:$0xff]
        %v4968 = vld [vmem:[%s4962 + $0x28] sm:$0xff]
        %v4969 = vld [vmem:[%s4962 + $0x30] sm:$0xff]
        %v4970 = vld [vmem:[%s4962 + $0x38] sm:$0xff]
        %v4971 = vld [vmem:[%s4962 + $0x40] sm:$0xff]
        %v4972 = vld [vmem:[%s4962 + $0x48] sm:$0xff]
        %v4973 = vld [vmem:[%s4962 + $0x50] sm:$0xff]
        %v4974 = vld [vmem:[%s4962 + $0x58] sm:$0xff]
        %v4975 = vld [vmem:[%s4962 + $0x60] sm:$0xff]
        %v4976 = vld [vmem:[%s4962 + $0x68] sm:$0xff]
        %v4977 = vld [vmem:[%s4962 + $0x70] sm:$0xff]
        %v4978 = vld [vmem:[%s4962 + $0x78] sm:$0xff]
        %v4995 = vunpack.c.l.b16 %v4963
        %v4996 = vunpack.c.h.b16 %v4963
        %v4997 = vunpack.c.l.b16 %v4964
        %v4998 = vunpack.c.h.b16 %v4964
        %v4999 = vunpack.c.l.b16 %v4965
        %v5000 = vunpack.c.h.b16 %v4965
        %v5001 = vunpack.c.l.b16 %v4966
        %v5002 = vunpack.c.h.b16 %v4966
        %v5003 = vunpack.c.l.b16 %v4967
        %v5004 = vunpack.c.h.b16 %v4967
        %v5005 = vunpack.c.l.b16 %v4968
        %v5006 = vunpack.c.h.b16 %v4968
        %v5007 = vunpack.c.l.b16 %v4969
        %v5008 = vunpack.c.h.b16 %v4969
        %v5009 = vunpack.c.l.b16 %v4970
        %v5010 = vunpack.c.h.b16 %v4970
        %v5011 = vunpack.c.l.b16 %v4971
        %v5012 = vunpack.c.h.b16 %v4971
        %v5013 = vunpack.c.l.b16 %v4972
        %v5014 = vunpack.c.h.b16 %v4972
        %v5015 = vunpack.c.l.b16 %v4973
        %v5016 = vunpack.c.h.b16 %v4973
        %v5017 = vunpack.c.l.b16 %v4974
        %v5018 = vunpack.c.h.b16 %v4974
        %v5019 = vunpack.c.l.b16 %v4975
        %v5020 = vunpack.c.h.b16 %v4975
        %v5021 = vunpack.c.l.b16 %v4976
        %v5022 = vunpack.c.h.b16 %v4976
        %v5023 = vunpack.c.l.b16 %v4977
        %v5024 = vunpack.c.h.b16 %v4977
        %v5025 = vunpack.c.l.b16 %v4978
        %v5026 = vunpack.c.h.b16 %v4978
        %v5027 = vpack.c.b16 %v4997, %v4995
        %v5028 = vpack.c.b16 %v4998, %v4996
        %v5029 = vpack.c.b16 %v5001, %v4999
        %v5030 = vpack.c.b16 %v5002, %v5000
        %v5031 = vpack.c.b16 %v5005, %v5003
        %v5032 = vpack.c.b16 %v5006, %v5004
        %v5033 = vpack.c.b16 %v5009, %v5007
        %v5034 = vpack.c.b16 %v5010, %v5008
        %v5035 = vpack.c.b16 %v5013, %v5011
        %v5036 = vpack.c.b16 %v5014, %v5012
        %v5037 = vpack.c.b16 %v5017, %v5015
        %v5038 = vpack.c.b16 %v5018, %v5016
        %v5039 = vpack.c.b16 %v5021, %v5019
        %v5040 = vpack.c.b16 %v5022, %v5020
        %v5041 = vpack.c.b16 %v5025, %v5023
        %v5042 = vpack.c.b16 %v5026, %v5024
        %5059 = vmatprep.subr.bf16.mxu0 %v5042
        %5060 = vmatpush1.bf16.msra.mxu0 %v5041
        %5061 = vmatprep.subr.bf16.mxu0 %v5040
        %5062 = vmatpush1.bf16.msra.mxu0 %v5039
        %5063 = vmatprep.subr.bf16.mxu0 %v5038
        %5064 = vmatpush1.bf16.msra.mxu0 %v5037
        %5065 = vmatprep.subr.bf16.mxu0 %v5036
        %5066 = vmatpush1.bf16.msra.mxu0 %v5035
        %5067 = vmatprep.subr.bf16.mxu0 %v5034
        %5068 = vmatpush1.bf16.msra.mxu0 %v5033
        %5069 = vmatprep.subr.bf16.mxu0 %v5032
        %5070 = vmatpush1.bf16.msra.mxu0 %v5031
        %5071 = vmatprep.subr.bf16.mxu0 %v5030
        %5072 = vmatpush1.bf16.msra.mxu0 %v5029
        %5073 = vmatprep.subr.bf16.mxu0 %v5028
        %5074 = vmatpush1.bf16.msra.mxu0 %v5027
        %5075 = vmatprep.subr.bf16.mxu0 0
        %5076 = vmatpush2.bf16.msra.mxu0 0
        %5077 = vmatprep.subr.bf16.mxu0 0
        %5078 = vmatpush2.bf16.msra.mxu0 0
        %5079 = vmatprep.subr.bf16.mxu0 0
        %5080 = vmatpush2.bf16.msra.mxu0 0
        %5081 = vmatprep.subr.bf16.mxu0 0
        %5082 = vmatpush2.bf16.msra.mxu0 0
        %5083 = vmatprep.subr.bf16.mxu0 0
        %5084 = vmatpush2.bf16.msra.mxu0 0
        %5085 = vmatprep.subr.bf16.mxu0 0
        %5086 = vmatpush2.bf16.msra.mxu0 0
        %5087 = vmatprep.subr.bf16.mxu0 0
        %5088 = vmatpush2.bf16.msra.mxu0 0
        %5089 = vmatprep.subr.bf16.mxu0 0
        %5090 = vmatpush2.bf16.msra.mxu0 0
        %5091 = vmatprep.mubr.bf16.mxu0 0
        %5092 = vmatmul.mubr.bf16.gmra.mxu0 %v4958
        %v5093 = vpop.f32.mrf.mxu0
        %v5094 = vadd.f32 0.0, %v5093
        %v5095 = vpop.f32.mrf.mxu0
        %v5096 = vadd.f32 0.0, %v5095
        %v5097 = vpop.f32.mrf.mxu0
        %v5098 = vadd.f32 0.0, %v5097
        %v5099 = vpop.f32.mrf.mxu0
        %v5100 = vadd.f32 0.0, %v5099
        %5101 = vmatprep.mubr.bf16.mxu0 0
        %5102 = vmatmul.mubr.bf16.gmra.mxu0 %v4959
        %v5103 = vpop.f32.mrf.mxu0
        %v5104 = vadd.f32 0.0, %v5103
        %v5105 = vpop.f32.mrf.mxu0
        %v5106 = vadd.f32 0.0, %v5105
        %v5107 = vpop.f32.mrf.mxu0
        %v5108 = vadd.f32 0.0, %v5107
        %v5109 = vpop.f32.mrf.mxu0
        %v5110 = vadd.f32 0.0, %v5109
        %5111 = vmatprep.mubr.bf16.mxu0 0
        %5112 = vmatmul.mubr.bf16.gmra.mxu0 %v4960
        %v5113 = vpop.f32.mrf.mxu0
        %v5114 = vadd.f32 0.0, %v5113
        %v5115 = vpop.f32.mrf.mxu0
        %v5116 = vadd.f32 0.0, %v5115
        %v5117 = vpop.f32.mrf.mxu0
        %v5118 = vadd.f32 0.0, %v5117
        %v5119 = vpop.f32.mrf.mxu0
        %v5120 = vadd.f32 0.0, %v5119
        %5121 = vmatprep.mubr.bf16.mxu0 0
        %5122 = vmatmul.mubr.bf16.gmra.mxu0 %v4961
        %v5123 = vpop.f32.mrf.mxu0
        %v5124 = vadd.f32 0.0, %v5123
        %v5125 = vpop.f32.mrf.mxu0
        %v5126 = vadd.f32 0.0, %v5125
        %v5127 = vpop.f32.mrf.mxu0
        %v5128 = vadd.f32 0.0, %v5127
        %v5129 = vpop.f32.mrf.mxu0
        %v5130 = vadd.f32 0.0, %v5129
        %5131 = vdwg.mxu0
        %v5132 = vadd.f32 %v4910, %v5094
        %v5133 = vadd.f32 %v4911, %v5096
        %v5134 = vadd.f32 %v4912, %v5098
        %v5135 = vadd.f32 %v4913, %v5100
        %v5136 = vadd.f32 %v4914, %v5104
        %v5137 = vadd.f32 %v4915, %v5106
        %v5138 = vadd.f32 %v4916, %v5108
        %v5139 = vadd.f32 %v4917, %v5110
        %v5140 = vadd.f32 %v4918, %v5114
        %v5141 = vadd.f32 %v4919, %v5116
        %v5142 = vadd.f32 %v4920, %v5118
        %v5143 = vadd.f32 %v4921, %v5120
        %v5144 = vadd.f32 %v4922, %v5124
        %v5145 = vadd.f32 %v4923, %v5126
        %v5146 = vadd.f32 %v4924, %v5128
        %v5147 = vadd.f32 %v4925, %v5130
        %v5148 = vld [vmem:[%s4062 + $0x2] sm:$0xff]
        %v5149 = vld [vmem:[%s4062 + $0x12] sm:$0xff]
        %v5150 = vld [vmem:[%s4062 + $0x22] sm:$0xff]
        %v5151 = vld [vmem:[%s4062 + $0x32] sm:$0xff]
        %v5152 = vld [vmem:[%s4062 + $0x42] sm:$0xff]
        %v5153 = vld [vmem:[%s4062 + $0x52] sm:$0xff]
        %v5154 = vld [vmem:[%s4062 + $0x62] sm:$0xff]
        %v5155 = vld [vmem:[%s4062 + $0x72] sm:$0xff]
        %vm5156 = vcmp.ge.f32.partialorder %v5148, 0.0
        %vm5157 = vcmp.ge.f32.partialorder %v5149, 0.0
        %vm5158 = vcmp.ge.f32.partialorder %v5150, 0.0
        %vm5159 = vcmp.ge.f32.partialorder %v5151, 0.0
        %vm5160 = vcmp.ge.f32.partialorder %v5152, 0.0
        %vm5161 = vcmp.ge.f32.partialorder %v5153, 0.0
        %vm5162 = vcmp.ge.f32.partialorder %v5154, 0.0
        %vm5163 = vcmp.ge.f32.partialorder %v5155, 0.0
        %v5164 = vmul.f32 %v5148, 0.2
        %v5165 = vmul.f32 %v5149, 0.2
        %v5166 = vmul.f32 %v5150, 0.2
        %v5167 = vmul.f32 %v5151, 0.2
        %v5168 = vmul.f32 %v5152, 0.2
        %v5169 = vmul.f32 %v5153, 0.2
        %v5170 = vmul.f32 %v5154, 0.2
        %v5171 = vmul.f32 %v5155, 0.2
        %v5172 = vsel %vm5156, %v5148, %v5164
        %v5173 = vsel %vm5157, %v5149, %v5165
        %v5174 = vsel %vm5158, %v5150, %v5166
        %v5175 = vsel %vm5159, %v5151, %v5167
        %v5176 = vsel %vm5160, %v5152, %v5168
        %v5177 = vsel %vm5161, %v5153, %v5169
        %v5178 = vsel %vm5162, %v5154, %v5170
        %v5179 = vsel %vm5163, %v5155, %v5171
        %v5180 = vpack.c.bf16 %v5173, %v5172
        %v5181 = vpack.c.bf16 %v5175, %v5174
        %v5182 = vpack.c.bf16 %v5177, %v5176
        %v5183 = vpack.c.bf16 %v5179, %v5178
        %s5184 = scalar_lea.vmem %s3, 640
        %v5185 = vld [vmem:[%s5184] sm:$0xff]
        %v5186 = vld [vmem:[%s5184 + $0x8] sm:$0xff]
        %v5187 = vld [vmem:[%s5184 + $0x10] sm:$0xff]
        %v5188 = vld [vmem:[%s5184 + $0x18] sm:$0xff]
        %v5189 = vld [vmem:[%s5184 + $0x20] sm:$0xff]
        %v5190 = vld [vmem:[%s5184 + $0x28] sm:$0xff]
        %v5191 = vld [vmem:[%s5184 + $0x30] sm:$0xff]
        %v5192 = vld [vmem:[%s5184 + $0x38] sm:$0xff]
        %v5193 = vld [vmem:[%s5184 + $0x40] sm:$0xff]
        %v5194 = vld [vmem:[%s5184 + $0x48] sm:$0xff]
        %v5195 = vld [vmem:[%s5184 + $0x50] sm:$0xff]
        %v5196 = vld [vmem:[%s5184 + $0x58] sm:$0xff]
        %v5197 = vld [vmem:[%s5184 + $0x60] sm:$0xff]
        %v5198 = vld [vmem:[%s5184 + $0x68] sm:$0xff]
        %v5199 = vld [vmem:[%s5184 + $0x70] sm:$0xff]
        %v5200 = vld [vmem:[%s5184 + $0x78] sm:$0xff]
        %v5217 = vunpack.c.l.b16 %v5185
        %v5218 = vunpack.c.h.b16 %v5185
        %v5219 = vunpack.c.l.b16 %v5186
        %v5220 = vunpack.c.h.b16 %v5186
        %v5221 = vunpack.c.l.b16 %v5187
        %v5222 = vunpack.c.h.b16 %v5187
        %v5223 = vunpack.c.l.b16 %v5188
        %v5224 = vunpack.c.h.b16 %v5188
        %v5225 = vunpack.c.l.b16 %v5189
        %v5226 = vunpack.c.h.b16 %v5189
        %v5227 = vunpack.c.l.b16 %v5190
        %v5228 = vunpack.c.h.b16 %v5190
        %v5229 = vunpack.c.l.b16 %v5191
        %v5230 = vunpack.c.h.b16 %v5191
        %v5231 = vunpack.c.l.b16 %v5192
        %v5232 = vunpack.c.h.b16 %v5192
        %v5233 = vunpack.c.l.b16 %v5193
        %v5234 = vunpack.c.h.b16 %v5193
        %v5235 = vunpack.c.l.b16 %v5194
        %v5236 = vunpack.c.h.b16 %v5194
        %v5237 = vunpack.c.l.b16 %v5195
        %v5238 = vunpack.c.h.b16 %v5195
        %v5239 = vunpack.c.l.b16 %v5196
        %v5240 = vunpack.c.h.b16 %v5196
        %v5241 = vunpack.c.l.b16 %v5197
        %v5242 = vunpack.c.h.b16 %v5197
        %v5243 = vunpack.c.l.b16 %v5198
        %v5244 = vunpack.c.h.b16 %v5198
        %v5245 = vunpack.c.l.b16 %v5199
        %v5246 = vunpack.c.h.b16 %v5199
        %v5247 = vunpack.c.l.b16 %v5200
        %v5248 = vunpack.c.h.b16 %v5200
        %v5249 = vpack.c.b16 %v5219, %v5217
        %v5250 = vpack.c.b16 %v5220, %v5218
        %v5251 = vpack.c.b16 %v5223, %v5221
        %v5252 = vpack.c.b16 %v5224, %v5222
        %v5253 = vpack.c.b16 %v5227, %v5225
        %v5254 = vpack.c.b16 %v5228, %v5226
        %v5255 = vpack.c.b16 %v5231, %v5229
        %v5256 = vpack.c.b16 %v5232, %v5230
        %v5257 = vpack.c.b16 %v5235, %v5233
        %v5258 = vpack.c.b16 %v5236, %v5234
        %v5259 = vpack.c.b16 %v5239, %v5237
        %v5260 = vpack.c.b16 %v5240, %v5238
        %v5261 = vpack.c.b16 %v5243, %v5241
        %v5262 = vpack.c.b16 %v5244, %v5242
        %v5263 = vpack.c.b16 %v5247, %v5245
        %v5264 = vpack.c.b16 %v5248, %v5246
        %5281 = vmatprep.subr.bf16.mxu0 %v5264
        %5282 = vmatpush1.bf16.msra.mxu0 %v5263
        %5283 = vmatprep.subr.bf16.mxu0 %v5262
        %5284 = vmatpush1.bf16.msra.mxu0 %v5261
        %5285 = vmatprep.subr.bf16.mxu0 %v5260
        %5286 = vmatpush1.bf16.msra.mxu0 %v5259
        %5287 = vmatprep.subr.bf16.mxu0 %v5258
        %5288 = vmatpush1.bf16.msra.mxu0 %v5257
        %5289 = vmatprep.subr.bf16.mxu0 %v5256
        %5290 = vmatpush1.bf16.msra.mxu0 %v5255
        %5291 = vmatprep.subr.bf16.mxu0 %v5254
        %5292 = vmatpush1.bf16.msra.mxu0 %v5253
        %5293 = vmatprep.subr.bf16.mxu0 %v5252
        %5294 = vmatpush1.bf16.msra.mxu0 %v5251
        %5295 = vmatprep.subr.bf16.mxu0 %v5250
        %5296 = vmatpush1.bf16.msra.mxu0 %v5249
        %5297 = vmatprep.subr.bf16.mxu0 0
        %5298 = vmatpush2.bf16.msra.mxu0 0
        %5299 = vmatprep.subr.bf16.mxu0 0
        %5300 = vmatpush2.bf16.msra.mxu0 0
        %5301 = vmatprep.subr.bf16.mxu0 0
        %5302 = vmatpush2.bf16.msra.mxu0 0
        %5303 = vmatprep.subr.bf16.mxu0 0
        %5304 = vmatpush2.bf16.msra.mxu0 0
        %5305 = vmatprep.subr.bf16.mxu0 0
        %5306 = vmatpush2.bf16.msra.mxu0 0
        %5307 = vmatprep.subr.bf16.mxu0 0
        %5308 = vmatpush2.bf16.msra.mxu0 0
        %5309 = vmatprep.subr.bf16.mxu0 0
        %5310 = vmatpush2.bf16.msra.mxu0 0
        %5311 = vmatprep.subr.bf16.mxu0 0
        %5312 = vmatpush2.bf16.msra.mxu0 0
        %5313 = vmatprep.mubr.bf16.mxu0 0
        %5314 = vmatmul.mubr.bf16.gmra.mxu0 %v5180
        %v5315 = vpop.f32.mrf.mxu0
        %v5316 = vadd.f32 0.0, %v5315
        %v5317 = vpop.f32.mrf.mxu0
        %v5318 = vadd.f32 0.0, %v5317
        %v5319 = vpop.f32.mrf.mxu0
        %v5320 = vadd.f32 0.0, %v5319
        %v5321 = vpop.f32.mrf.mxu0
        %v5322 = vadd.f32 0.0, %v5321
        %5323 = vmatprep.mubr.bf16.mxu0 0
        %5324 = vmatmul.mubr.bf16.gmra.mxu0 %v5181
        %v5325 = vpop.f32.mrf.mxu0
        %v5326 = vadd.f32 0.0, %v5325
        %v5327 = vpop.f32.mrf.mxu0
        %v5328 = vadd.f32 0.0, %v5327
        %v5329 = vpop.f32.mrf.mxu0
        %v5330 = vadd.f32 0.0, %v5329
        %v5331 = vpop.f32.mrf.mxu0
        %v5332 = vadd.f32 0.0, %v5331
        %5333 = vmatprep.mubr.bf16.mxu0 0
        %5334 = vmatmul.mubr.bf16.gmra.mxu0 %v5182
        %v5335 = vpop.f32.mrf.mxu0
        %v5336 = vadd.f32 0.0, %v5335
        %v5337 = vpop.f32.mrf.mxu0
        %v5338 = vadd.f32 0.0, %v5337
        %v5339 = vpop.f32.mrf.mxu0
        %v5340 = vadd.f32 0.0, %v5339
        %v5341 = vpop.f32.mrf.mxu0
        %v5342 = vadd.f32 0.0, %v5341
        %5343 = vmatprep.mubr.bf16.mxu0 0
        %5344 = vmatmul.mubr.bf16.gmra.mxu0 %v5183
        %v5345 = vpop.f32.mrf.mxu0
        %v5346 = vadd.f32 0.0, %v5345
        %v5347 = vpop.f32.mrf.mxu0
        %v5348 = vadd.f32 0.0, %v5347
        %v5349 = vpop.f32.mrf.mxu0
        %v5350 = vadd.f32 0.0, %v5349
        %v5351 = vpop.f32.mrf.mxu0
        %v5352 = vadd.f32 0.0, %v5351
        %5353 = vdwg.mxu0
        %v5354 = vadd.f32 %v5132, %v5316
        %v5355 = vadd.f32 %v5133, %v5318
        %v5356 = vadd.f32 %v5134, %v5320
        %v5357 = vadd.f32 %v5135, %v5322
        %v5358 = vadd.f32 %v5136, %v5326
        %v5359 = vadd.f32 %v5137, %v5328
        %v5360 = vadd.f32 %v5138, %v5330
        %v5361 = vadd.f32 %v5139, %v5332
        %v5362 = vadd.f32 %v5140, %v5336
        %v5363 = vadd.f32 %v5141, %v5338
        %v5364 = vadd.f32 %v5142, %v5340
        %v5365 = vadd.f32 %v5143, %v5342
        %v5366 = vadd.f32 %v5144, %v5346
        %v5367 = vadd.f32 %v5145, %v5348
        %v5368 = vadd.f32 %v5146, %v5350
        %v5369 = vadd.f32 %v5147, %v5352
        %s5370 = scalar_lea.vmem [#allocation3], 32
        %v5371 = vld [vmem:[%s5370] sm:$0xff]
        %v5372 = vld [vmem:[%s5370 + $0x10] sm:$0xff]
        %v5373 = vld [vmem:[%s5370 + $0x20] sm:$0xff]
        %v5374 = vld [vmem:[%s5370 + $0x30] sm:$0xff]
        %v5375 = vld [vmem:[%s5370 + $0x40] sm:$0xff]
        %v5376 = vld [vmem:[%s5370 + $0x50] sm:$0xff]
        %v5377 = vld [vmem:[%s5370 + $0x60] sm:$0xff]
        %v5378 = vld [vmem:[%s5370 + $0x70] sm:$0xff]
        %vm5379 = vcmp.ge.f32.partialorder %v5371, 0.0
        %vm5380 = vcmp.ge.f32.partialorder %v5372, 0.0
        %vm5381 = vcmp.ge.f32.partialorder %v5373, 0.0
        %vm5382 = vcmp.ge.f32.partialorder %v5374, 0.0
        %vm5383 = vcmp.ge.f32.partialorder %v5375, 0.0
        %vm5384 = vcmp.ge.f32.partialorder %v5376, 0.0
        %vm5385 = vcmp.ge.f32.partialorder %v5377, 0.0
        %vm5386 = vcmp.ge.f32.partialorder %v5378, 0.0
        %v5387 = vmul.f32 %v5371, 0.2
        %v5388 = vmul.f32 %v5372, 0.2
        %v5389 = vmul.f32 %v5373, 0.2
        %v5390 = vmul.f32 %v5374, 0.2
        %v5391 = vmul.f32 %v5375, 0.2
        %v5392 = vmul.f32 %v5376, 0.2
        %v5393 = vmul.f32 %v5377, 0.2
        %v5394 = vmul.f32 %v5378, 0.2
        %v5395 = vsel %vm5379, %v5371, %v5387
        %v5396 = vsel %vm5380, %v5372, %v5388
        %v5397 = vsel %vm5381, %v5373, %v5389
        %v5398 = vsel %vm5382, %v5374, %v5390
        %v5399 = vsel %vm5383, %v5375, %v5391
        %v5400 = vsel %vm5384, %v5376, %v5392
        %v5401 = vsel %vm5385, %v5377, %v5393
        %v5402 = vsel %vm5386, %v5378, %v5394
        %v5403 = vpack.c.bf16 %v5396, %v5395
        %v5404 = vpack.c.bf16 %v5398, %v5397
        %v5405 = vpack.c.bf16 %v5400, %v5399
        %v5406 = vpack.c.bf16 %v5402, %v5401
        %s5407 = scalar_lea.vmem %s3, 768
        %v5408 = vld [vmem:[%s5407] sm:$0xff]
        %v5409 = vld [vmem:[%s5407 + $0x8] sm:$0xff]
        %v5410 = vld [vmem:[%s5407 + $0x10] sm:$0xff]
        %v5411 = vld [vmem:[%s5407 + $0x18] sm:$0xff]
        %v5412 = vld [vmem:[%s5407 + $0x20] sm:$0xff]
        %v5413 = vld [vmem:[%s5407 + $0x28] sm:$0xff]
        %v5414 = vld [vmem:[%s5407 + $0x30] sm:$0xff]
        %v5415 = vld [vmem:[%s5407 + $0x38] sm:$0xff]
        %v5416 = vld [vmem:[%s5407 + $0x40] sm:$0xff]
        %v5417 = vld [vmem:[%s5407 + $0x48] sm:$0xff]
        %v5418 = vld [vmem:[%s5407 + $0x50] sm:$0xff]
        %v5419 = vld [vmem:[%s5407 + $0x58] sm:$0xff]
        %v5420 = vld [vmem:[%s5407 + $0x60] sm:$0xff]
        %v5421 = vld [vmem:[%s5407 + $0x68] sm:$0xff]
        %v5422 = vld [vmem:[%s5407 + $0x70] sm:$0xff]
        %v5423 = vld [vmem:[%s5407 + $0x78] sm:$0xff]
        %v5440 = vunpack.c.l.b16 %v5408
        %v5441 = vunpack.c.h.b16 %v5408
        %v5442 = vunpack.c.l.b16 %v5409
        %v5443 = vunpack.c.h.b16 %v5409
        %v5444 = vunpack.c.l.b16 %v5410
        %v5445 = vunpack.c.h.b16 %v5410
        %v5446 = vunpack.c.l.b16 %v5411
        %v5447 = vunpack.c.h.b16 %v5411
        %v5448 = vunpack.c.l.b16 %v5412
        %v5449 = vunpack.c.h.b16 %v5412
        %v5450 = vunpack.c.l.b16 %v5413
        %v5451 = vunpack.c.h.b16 %v5413
        %v5452 = vunpack.c.l.b16 %v5414
        %v5453 = vunpack.c.h.b16 %v5414
        %v5454 = vunpack.c.l.b16 %v5415
        %v5455 = vunpack.c.h.b16 %v5415
        %v5456 = vunpack.c.l.b16 %v5416
        %v5457 = vunpack.c.h.b16 %v5416
        %v5458 = vunpack.c.l.b16 %v5417
        %v5459 = vunpack.c.h.b16 %v5417
        %v5460 = vunpack.c.l.b16 %v5418
        %v5461 = vunpack.c.h.b16 %v5418
        %v5462 = vunpack.c.l.b16 %v5419
        %v5463 = vunpack.c.h.b16 %v5419
        %v5464 = vunpack.c.l.b16 %v5420
        %v5465 = vunpack.c.h.b16 %v5420
        %v5466 = vunpack.c.l.b16 %v5421
        %v5467 = vunpack.c.h.b16 %v5421
        %v5468 = vunpack.c.l.b16 %v5422
        %v5469 = vunpack.c.h.b16 %v5422
        %v5470 = vunpack.c.l.b16 %v5423
        %v5471 = vunpack.c.h.b16 %v5423
        %v5472 = vpack.c.b16 %v5442, %v5440
        %v5473 = vpack.c.b16 %v5443, %v5441
        %v5474 = vpack.c.b16 %v5446, %v5444
        %v5475 = vpack.c.b16 %v5447, %v5445
        %v5476 = vpack.c.b16 %v5450, %v5448
        %v5477 = vpack.c.b16 %v5451, %v5449
        %v5478 = vpack.c.b16 %v5454, %v5452
        %v5479 = vpack.c.b16 %v5455, %v5453
        %v5480 = vpack.c.b16 %v5458, %v5456
        %v5481 = vpack.c.b16 %v5459, %v5457
        %v5482 = vpack.c.b16 %v5462, %v5460
        %v5483 = vpack.c.b16 %v5463, %v5461
        %v5484 = vpack.c.b16 %v5466, %v5464
        %v5485 = vpack.c.b16 %v5467, %v5465
        %v5486 = vpack.c.b16 %v5470, %v5468
        %v5487 = vpack.c.b16 %v5471, %v5469
        %5504 = vmatprep.subr.bf16.mxu0 %v5487
        %5505 = vmatpush1.bf16.msra.mxu0 %v5486
        %5506 = vmatprep.subr.bf16.mxu0 %v5485
        %5507 = vmatpush1.bf16.msra.mxu0 %v5484
        %5508 = vmatprep.subr.bf16.mxu0 %v5483
        %5509 = vmatpush1.bf16.msra.mxu0 %v5482
        %5510 = vmatprep.subr.bf16.mxu0 %v5481
        %5511 = vmatpush1.bf16.msra.mxu0 %v5480
        %5512 = vmatprep.subr.bf16.mxu0 %v5479
        %5513 = vmatpush1.bf16.msra.mxu0 %v5478
        %5514 = vmatprep.subr.bf16.mxu0 %v5477
        %5515 = vmatpush1.bf16.msra.mxu0 %v5476
        %5516 = vmatprep.subr.bf16.mxu0 %v5475
        %5517 = vmatpush1.bf16.msra.mxu0 %v5474
        %5518 = vmatprep.subr.bf16.mxu0 %v5473
        %5519 = vmatpush1.bf16.msra.mxu0 %v5472
        %5520 = vmatprep.subr.bf16.mxu0 0
        %5521 = vmatpush2.bf16.msra.mxu0 0
        %5522 = vmatprep.subr.bf16.mxu0 0
        %5523 = vmatpush2.bf16.msra.mxu0 0
        %5524 = vmatprep.subr.bf16.mxu0 0
        %5525 = vmatpush2.bf16.msra.mxu0 0
        %5526 = vmatprep.subr.bf16.mxu0 0
        %5527 = vmatpush2.bf16.msra.mxu0 0
        %5528 = vmatprep.subr.bf16.mxu0 0
        %5529 = vmatpush2.bf16.msra.mxu0 0
        %5530 = vmatprep.subr.bf16.mxu0 0
        %5531 = vmatpush2.bf16.msra.mxu0 0
        %5532 = vmatprep.subr.bf16.mxu0 0
        %5533 = vmatpush2.bf16.msra.mxu0 0
        %5534 = vmatprep.subr.bf16.mxu0 0
        %5535 = vmatpush2.bf16.msra.mxu0 0
        %5536 = vmatprep.mubr.bf16.mxu0 0
        %5537 = vmatmul.mubr.bf16.gmra.mxu0 %v5403
        %v5538 = vpop.f32.mrf.mxu0
        %v5539 = vadd.f32 0.0, %v5538
        %v5540 = vpop.f32.mrf.mxu0
        %v5541 = vadd.f32 0.0, %v5540
        %v5542 = vpop.f32.mrf.mxu0
        %v5543 = vadd.f32 0.0, %v5542
        %v5544 = vpop.f32.mrf.mxu0
        %v5545 = vadd.f32 0.0, %v5544
        %5546 = vmatprep.mubr.bf16.mxu0 0
        %5547 = vmatmul.mubr.bf16.gmra.mxu0 %v5404
        %v5548 = vpop.f32.mrf.mxu0
        %v5549 = vadd.f32 0.0, %v5548
        %v5550 = vpop.f32.mrf.mxu0
        %v5551 = vadd.f32 0.0, %v5550
        %v5552 = vpop.f32.mrf.mxu0
        %v5553 = vadd.f32 0.0, %v5552
        %v5554 = vpop.f32.mrf.mxu0
        %v5555 = vadd.f32 0.0, %v5554
        %5556 = vmatprep.mubr.bf16.mxu0 0
        %5557 = vmatmul.mubr.bf16.gmra.mxu0 %v5405
        %v5558 = vpop.f32.mrf.mxu0
        %v5559 = vadd.f32 0.0, %v5558
        %v5560 = vpop.f32.mrf.mxu0
        %v5561 = vadd.f32 0.0, %v5560
        %v5562 = vpop.f32.mrf.mxu0
        %v5563 = vadd.f32 0.0, %v5562
        %v5564 = vpop.f32.mrf.mxu0
        %v5565 = vadd.f32 0.0, %v5564
        %5566 = vmatprep.mubr.bf16.mxu0 0
        %5567 = vmatmul.mubr.bf16.gmra.mxu0 %v5406
        %v5568 = vpop.f32.mrf.mxu0
        %v5569 = vadd.f32 0.0, %v5568
        %v5570 = vpop.f32.mrf.mxu0
        %v5571 = vadd.f32 0.0, %v5570
        %v5572 = vpop.f32.mrf.mxu0
        %v5573 = vadd.f32 0.0, %v5572
        %v5574 = vpop.f32.mrf.mxu0
        %v5575 = vadd.f32 0.0, %v5574
        %5576 = vdwg.mxu0
        %v5577 = vadd.f32 %v5354, %v5539
        %v5578 = vadd.f32 %v5355, %v5541
        %v5579 = vadd.f32 %v5356, %v5543
        %v5580 = vadd.f32 %v5357, %v5545
        %v5581 = vadd.f32 %v5358, %v5549
        %v5582 = vadd.f32 %v5359, %v5551
        %v5583 = vadd.f32 %v5360, %v5553
        %v5584 = vadd.f32 %v5361, %v5555
        %v5585 = vadd.f32 %v5362, %v5559
        %v5586 = vadd.f32 %v5363, %v5561
        %v5587 = vadd.f32 %v5364, %v5563
        %v5588 = vadd.f32 %v5365, %v5565
        %v5589 = vadd.f32 %v5366, %v5569
        %v5590 = vadd.f32 %v5367, %v5571
        %v5591 = vadd.f32 %v5368, %v5573
        %v5592 = vadd.f32 %v5369, %v5575
        %v5593 = vld [vmem:[%s5370 + $0x1] sm:$0xff]
        %v5594 = vld [vmem:[%s5370 + $0x11] sm:$0xff]
        %v5595 = vld [vmem:[%s5370 + $0x21] sm:$0xff]
        %v5596 = vld [vmem:[%s5370 + $0x31] sm:$0xff]
        %v5597 = vld [vmem:[%s5370 + $0x41] sm:$0xff]
        %v5598 = vld [vmem:[%s5370 + $0x51] sm:$0xff]
        %v5599 = vld [vmem:[%s5370 + $0x61] sm:$0xff]
        %v5600 = vld [vmem:[%s5370 + $0x71] sm:$0xff]
        %vm5601 = vcmp.ge.f32.partialorder %v5593, 0.0
        %vm5602 = vcmp.ge.f32.partialorder %v5594, 0.0
        %vm5603 = vcmp.ge.f32.partialorder %v5595, 0.0
        %vm5604 = vcmp.ge.f32.partialorder %v5596, 0.0
        %vm5605 = vcmp.ge.f32.partialorder %v5597, 0.0
        %vm5606 = vcmp.ge.f32.partialorder %v5598, 0.0
        %vm5607 = vcmp.ge.f32.partialorder %v5599, 0.0
        %vm5608 = vcmp.ge.f32.partialorder %v5600, 0.0
        %v5609 = vmul.f32 %v5593, 0.2
        %v5610 = vmul.f32 %v5594, 0.2
        %v5611 = vmul.f32 %v5595, 0.2
        %v5612 = vmul.f32 %v5596, 0.2
        %v5613 = vmul.f32 %v5597, 0.2
        %v5614 = vmul.f32 %v5598, 0.2
        %v5615 = vmul.f32 %v5599, 0.2
        %v5616 = vmul.f32 %v5600, 0.2
        %v5617 = vsel %vm5601, %v5593, %v5609
        %v5618 = vsel %vm5602, %v5594, %v5610
        %v5619 = vsel %vm5603, %v5595, %v5611
        %v5620 = vsel %vm5604, %v5596, %v5612
        %v5621 = vsel %vm5605, %v5597, %v5613
        %v5622 = vsel %vm5606, %v5598, %v5614
        %v5623 = vsel %vm5607, %v5599, %v5615
        %v5624 = vsel %vm5608, %v5600, %v5616
        %v5625 = vpack.c.bf16 %v5618, %v5617
        %v5626 = vpack.c.bf16 %v5620, %v5619
        %v5627 = vpack.c.bf16 %v5622, %v5621
        %v5628 = vpack.c.bf16 %v5624, %v5623
        %s5629 = scalar_lea.vmem %s3, 896
        %v5630 = vld [vmem:[%s5629] sm:$0xff]
        %v5631 = vld [vmem:[%s5629 + $0x8] sm:$0xff]
        %v5632 = vld [vmem:[%s5629 + $0x10] sm:$0xff]
        %v5633 = vld [vmem:[%s5629 + $0x18] sm:$0xff]
        %v5634 = vld [vmem:[%s5629 + $0x20] sm:$0xff]
        %v5635 = vld [vmem:[%s5629 + $0x28] sm:$0xff]
        %v5636 = vld [vmem:[%s5629 + $0x30] sm:$0xff]
        %v5637 = vld [vmem:[%s5629 + $0x38] sm:$0xff]
        %v5638 = vld [vmem:[%s5629 + $0x40] sm:$0xff]
        %v5639 = vld [vmem:[%s5629 + $0x48] sm:$0xff]
        %v5640 = vld [vmem:[%s5629 + $0x50] sm:$0xff]
        %v5641 = vld [vmem:[%s5629 + $0x58] sm:$0xff]
        %v5642 = vld [vmem:[%s5629 + $0x60] sm:$0xff]
        %v5643 = vld [vmem:[%s5629 + $0x68] sm:$0xff]
        %v5644 = vld [vmem:[%s5629 + $0x70] sm:$0xff]
        %v5645 = vld [vmem:[%s5629 + $0x78] sm:$0xff]
        %v5662 = vunpack.c.l.b16 %v5630
        %v5663 = vunpack.c.h.b16 %v5630
        %v5664 = vunpack.c.l.b16 %v5631
        %v5665 = vunpack.c.h.b16 %v5631
        %v5666 = vunpack.c.l.b16 %v5632
        %v5667 = vunpack.c.h.b16 %v5632
        %v5668 = vunpack.c.l.b16 %v5633
        %v5669 = vunpack.c.h.b16 %v5633
        %v5670 = vunpack.c.l.b16 %v5634
        %v5671 = vunpack.c.h.b16 %v5634
        %v5672 = vunpack.c.l.b16 %v5635
        %v5673 = vunpack.c.h.b16 %v5635
        %v5674 = vunpack.c.l.b16 %v5636
        %v5675 = vunpack.c.h.b16 %v5636
        %v5676 = vunpack.c.l.b16 %v5637
        %v5677 = vunpack.c.h.b16 %v5637
        %v5678 = vunpack.c.l.b16 %v5638
        %v5679 = vunpack.c.h.b16 %v5638
        %v5680 = vunpack.c.l.b16 %v5639
        %v5681 = vunpack.c.h.b16 %v5639
        %v5682 = vunpack.c.l.b16 %v5640
        %v5683 = vunpack.c.h.b16 %v5640
        %v5684 = vunpack.c.l.b16 %v5641
        %v5685 = vunpack.c.h.b16 %v5641
        %v5686 = vunpack.c.l.b16 %v5642
        %v5687 = vunpack.c.h.b16 %v5642
        %v5688 = vunpack.c.l.b16 %v5643
        %v5689 = vunpack.c.h.b16 %v5643
        %v5690 = vunpack.c.l.b16 %v5644
        %v5691 = vunpack.c.h.b16 %v5644
        %v5692 = vunpack.c.l.b16 %v5645
        %v5693 = vunpack.c.h.b16 %v5645
        %v5694 = vpack.c.b16 %v5664, %v5662
        %v5695 = vpack.c.b16 %v5665, %v5663
        %v5696 = vpack.c.b16 %v5668, %v5666
        %v5697 = vpack.c.b16 %v5669, %v5667
        %v5698 = vpack.c.b16 %v5672, %v5670
        %v5699 = vpack.c.b16 %v5673, %v5671
        %v5700 = vpack.c.b16 %v5676, %v5674
        %v5701 = vpack.c.b16 %v5677, %v5675
        %v5702 = vpack.c.b16 %v5680, %v5678
        %v5703 = vpack.c.b16 %v5681, %v5679
        %v5704 = vpack.c.b16 %v5684, %v5682
        %v5705 = vpack.c.b16 %v5685, %v5683
        %v5706 = vpack.c.b16 %v5688, %v5686
        %v5707 = vpack.c.b16 %v5689, %v5687
        %v5708 = vpack.c.b16 %v5692, %v5690
        %v5709 = vpack.c.b16 %v5693, %v5691
        %5726 = vmatprep.subr.bf16.mxu0 %v5709
        %5727 = vmatpush1.bf16.msra.mxu0 %v5708
        %5728 = vmatprep.subr.bf16.mxu0 %v5707
        %5729 = vmatpush1.bf16.msra.mxu0 %v5706
        %5730 = vmatprep.subr.bf16.mxu0 %v5705
        %5731 = vmatpush1.bf16.msra.mxu0 %v5704
        %5732 = vmatprep.subr.bf16.mxu0 %v5703
        %5733 = vmatpush1.bf16.msra.mxu0 %v5702
        %5734 = vmatprep.subr.bf16.mxu0 %v5701
        %5735 = vmatpush1.bf16.msra.mxu0 %v5700
        %5736 = vmatprep.subr.bf16.mxu0 %v5699
        %5737 = vmatpush1.bf16.msra.mxu0 %v5698
        %5738 = vmatprep.subr.bf16.mxu0 %v5697
        %5739 = vmatpush1.bf16.msra.mxu0 %v5696
        %5740 = vmatprep.subr.bf16.mxu0 %v5695
        %5741 = vmatpush1.bf16.msra.mxu0 %v5694
        %5742 = vmatprep.subr.bf16.mxu0 0
        %5743 = vmatpush2.bf16.msra.mxu0 0
        %5744 = vmatprep.subr.bf16.mxu0 0
        %5745 = vmatpush2.bf16.msra.mxu0 0
        %5746 = vmatprep.subr.bf16.mxu0 0
        %5747 = vmatpush2.bf16.msra.mxu0 0
        %5748 = vmatprep.subr.bf16.mxu0 0
        %5749 = vmatpush2.bf16.msra.mxu0 0
        %5750 = vmatprep.subr.bf16.mxu0 0
        %5751 = vmatpush2.bf16.msra.mxu0 0
        %5752 = vmatprep.subr.bf16.mxu0 0
        %5753 = vmatpush2.bf16.msra.mxu0 0
        %5754 = vmatprep.subr.bf16.mxu0 0
        %5755 = vmatpush2.bf16.msra.mxu0 0
        %5756 = vmatprep.subr.bf16.mxu0 0
        %5757 = vmatpush2.bf16.msra.mxu0 0
        %5758 = vmatprep.mubr.bf16.mxu0 0
        %5759 = vmatmul.mubr.bf16.gmra.mxu0 %v5625
        %v5760 = vpop.f32.mrf.mxu0
        %v5761 = vadd.f32 0.0, %v5760
        %v5762 = vpop.f32.mrf.mxu0
        %v5763 = vadd.f32 0.0, %v5762
        %v5764 = vpop.f32.mrf.mxu0
        %v5765 = vadd.f32 0.0, %v5764
        %v5766 = vpop.f32.mrf.mxu0
        %v5767 = vadd.f32 0.0, %v5766
        %5768 = vmatprep.mubr.bf16.mxu0 0
        %5769 = vmatmul.mubr.bf16.gmra.mxu0 %v5626
        %v5770 = vpop.f32.mrf.mxu0
        %v5771 = vadd.f32 0.0, %v5770
        %v5772 = vpop.f32.mrf.mxu0
        %v5773 = vadd.f32 0.0, %v5772
        %v5774 = vpop.f32.mrf.mxu0
        %v5775 = vadd.f32 0.0, %v5774
        %v5776 = vpop.f32.mrf.mxu0
        %v5777 = vadd.f32 0.0, %v5776
        %5778 = vmatprep.mubr.bf16.mxu0 0
        %5779 = vmatmul.mubr.bf16.gmra.mxu0 %v5627
        %v5780 = vpop.f32.mrf.mxu0
        %v5781 = vadd.f32 0.0, %v5780
        %v5782 = vpop.f32.mrf.mxu0
        %v5783 = vadd.f32 0.0, %v5782
        %v5784 = vpop.f32.mrf.mxu0
        %v5785 = vadd.f32 0.0, %v5784
        %v5786 = vpop.f32.mrf.mxu0
        %v5787 = vadd.f32 0.0, %v5786
        %5788 = vmatprep.mubr.bf16.mxu0 0
        %5789 = vmatmul.mubr.bf16.gmra.mxu0 %v5628
        %v5790 = vpop.f32.mrf.mxu0
        %v5791 = vadd.f32 0.0, %v5790
        %v5792 = vpop.f32.mrf.mxu0
        %v5793 = vadd.f32 0.0, %v5792
        %v5794 = vpop.f32.mrf.mxu0
        %v5795 = vadd.f32 0.0, %v5794
        %v5796 = vpop.f32.mrf.mxu0
        %v5797 = vadd.f32 0.0, %v5796
        %5798 = vdwg.mxu0
        %v5799 = vadd.f32 %v5577, %v5761
        %v5800 = vadd.f32 %v5578, %v5763
        %v5801 = vadd.f32 %v5579, %v5765
        %v5802 = vadd.f32 %v5580, %v5767
        %v5803 = vadd.f32 %v5581, %v5771
        %v5804 = vadd.f32 %v5582, %v5773
        %v5805 = vadd.f32 %v5583, %v5775
        %v5806 = vadd.f32 %v5584, %v5777
        %v5807 = vadd.f32 %v5585, %v5781
        %v5808 = vadd.f32 %v5586, %v5783
        %v5809 = vadd.f32 %v5587, %v5785
        %v5810 = vadd.f32 %v5588, %v5787
        %v5811 = vadd.f32 %v5589, %v5791
        %v5812 = vadd.f32 %v5590, %v5793
        %v5813 = vadd.f32 %v5591, %v5795
        %v5814 = vadd.f32 %v5592, %v5797
        %v5815 = vld [vmem:[%s5370 + $0x2] sm:$0xff]
        %v5816 = vld [vmem:[%s5370 + $0x12] sm:$0xff]
        %v5817 = vld [vmem:[%s5370 + $0x22] sm:$0xff]
        %v5818 = vld [vmem:[%s5370 + $0x32] sm:$0xff]
        %v5819 = vld [vmem:[%s5370 + $0x42] sm:$0xff]
        %v5820 = vld [vmem:[%s5370 + $0x52] sm:$0xff]
        %v5821 = vld [vmem:[%s5370 + $0x62] sm:$0xff]
        %v5822 = vld [vmem:[%s5370 + $0x72] sm:$0xff]
        %vm5823 = vcmp.ge.f32.partialorder %v5815, 0.0
        %vm5824 = vcmp.ge.f32.partialorder %v5816, 0.0
        %vm5825 = vcmp.ge.f32.partialorder %v5817, 0.0
        %vm5826 = vcmp.ge.f32.partialorder %v5818, 0.0
        %vm5827 = vcmp.ge.f32.partialorder %v5819, 0.0
        %vm5828 = vcmp.ge.f32.partialorder %v5820, 0.0
        %vm5829 = vcmp.ge.f32.partialorder %v5821, 0.0
        %vm5830 = vcmp.ge.f32.partialorder %v5822, 0.0
        %v5831 = vmul.f32 %v5815, 0.2
        %v5832 = vmul.f32 %v5816, 0.2
        %v5833 = vmul.f32 %v5817, 0.2
        %v5834 = vmul.f32 %v5818, 0.2
        %v5835 = vmul.f32 %v5819, 0.2
        %v5836 = vmul.f32 %v5820, 0.2
        %v5837 = vmul.f32 %v5821, 0.2
        %v5838 = vmul.f32 %v5822, 0.2
        %v5839 = vsel %vm5823, %v5815, %v5831
        %v5840 = vsel %vm5824, %v5816, %v5832
        %v5841 = vsel %vm5825, %v5817, %v5833
        %v5842 = vsel %vm5826, %v5818, %v5834
        %v5843 = vsel %vm5827, %v5819, %v5835
        %v5844 = vsel %vm5828, %v5820, %v5836
        %v5845 = vsel %vm5829, %v5821, %v5837
        %v5846 = vsel %vm5830, %v5822, %v5838
        %v5847 = vpack.c.bf16 %v5840, %v5839
        %v5848 = vpack.c.bf16 %v5842, %v5841
        %v5849 = vpack.c.bf16 %v5844, %v5843
        %v5850 = vpack.c.bf16 %v5846, %v5845
        %s5851 = scalar_lea.vmem %s3, 1024
        %v5852 = vld [vmem:[%s5851] sm:$0xff]
        %v5853 = vld [vmem:[%s5851 + $0x8] sm:$0xff]
        %v5854 = vld [vmem:[%s5851 + $0x10] sm:$0xff]
        %v5855 = vld [vmem:[%s5851 + $0x18] sm:$0xff]
        %v5856 = vld [vmem:[%s5851 + $0x20] sm:$0xff]
        %v5857 = vld [vmem:[%s5851 + $0x28] sm:$0xff]
        %v5858 = vld [vmem:[%s5851 + $0x30] sm:$0xff]
        %v5859 = vld [vmem:[%s5851 + $0x38] sm:$0xff]
        %v5860 = vld [vmem:[%s5851 + $0x40] sm:$0xff]
        %v5861 = vld [vmem:[%s5851 + $0x48] sm:$0xff]
        %v5862 = vld [vmem:[%s5851 + $0x50] sm:$0xff]
        %v5863 = vld [vmem:[%s5851 + $0x58] sm:$0xff]
        %v5864 = vld [vmem:[%s5851 + $0x60] sm:$0xff]
        %v5865 = vld [vmem:[%s5851 + $0x68] sm:$0xff]
        %v5866 = vld [vmem:[%s5851 + $0x70] sm:$0xff]
        %v5867 = vld [vmem:[%s5851 + $0x78] sm:$0xff]
        %v5884 = vunpack.c.l.b16 %v5852
        %v5885 = vunpack.c.h.b16 %v5852
        %v5886 = vunpack.c.l.b16 %v5853
        %v5887 = vunpack.c.h.b16 %v5853
        %v5888 = vunpack.c.l.b16 %v5854
        %v5889 = vunpack.c.h.b16 %v5854
        %v5890 = vunpack.c.l.b16 %v5855
        %v5891 = vunpack.c.h.b16 %v5855
        %v5892 = vunpack.c.l.b16 %v5856
        %v5893 = vunpack.c.h.b16 %v5856
        %v5894 = vunpack.c.l.b16 %v5857
        %v5895 = vunpack.c.h.b16 %v5857
        %v5896 = vunpack.c.l.b16 %v5858
        %v5897 = vunpack.c.h.b16 %v5858
        %v5898 = vunpack.c.l.b16 %v5859
        %v5899 = vunpack.c.h.b16 %v5859
        %v5900 = vunpack.c.l.b16 %v5860
        %v5901 = vunpack.c.h.b16 %v5860
        %v5902 = vunpack.c.l.b16 %v5861
        %v5903 = vunpack.c.h.b16 %v5861
        %v5904 = vunpack.c.l.b16 %v5862
        %v5905 = vunpack.c.h.b16 %v5862
        %v5906 = vunpack.c.l.b16 %v5863
        %v5907 = vunpack.c.h.b16 %v5863
        %v5908 = vunpack.c.l.b16 %v5864
        %v5909 = vunpack.c.h.b16 %v5864
        %v5910 = vunpack.c.l.b16 %v5865
        %v5911 = vunpack.c.h.b16 %v5865
        %v5912 = vunpack.c.l.b16 %v5866
        %v5913 = vunpack.c.h.b16 %v5866
        %v5914 = vunpack.c.l.b16 %v5867
        %v5915 = vunpack.c.h.b16 %v5867
        %v5916 = vpack.c.b16 %v5886, %v5884
        %v5917 = vpack.c.b16 %v5887, %v5885
        %v5918 = vpack.c.b16 %v5890, %v5888
        %v5919 = vpack.c.b16 %v5891, %v5889
        %v5920 = vpack.c.b16 %v5894, %v5892
        %v5921 = vpack.c.b16 %v5895, %v5893
        %v5922 = vpack.c.b16 %v5898, %v5896
        %v5923 = vpack.c.b16 %v5899, %v5897
        %v5924 = vpack.c.b16 %v5902, %v5900
        %v5925 = vpack.c.b16 %v5903, %v5901
        %v5926 = vpack.c.b16 %v5906, %v5904
        %v5927 = vpack.c.b16 %v5907, %v5905
        %v5928 = vpack.c.b16 %v5910, %v5908
        %v5929 = vpack.c.b16 %v5911, %v5909
        %v5930 = vpack.c.b16 %v5914, %v5912
        %v5931 = vpack.c.b16 %v5915, %v5913
        %5948 = vmatprep.subr.bf16.mxu0 %v5931
        %5949 = vmatpush1.bf16.msra.mxu0 %v5930
        %5950 = vmatprep.subr.bf16.mxu0 %v5929
        %5951 = vmatpush1.bf16.msra.mxu0 %v5928
        %5952 = vmatprep.subr.bf16.mxu0 %v5927
        %5953 = vmatpush1.bf16.msra.mxu0 %v5926
        %5954 = vmatprep.subr.bf16.mxu0 %v5925
        %5955 = vmatpush1.bf16.msra.mxu0 %v5924
        %5956 = vmatprep.subr.bf16.mxu0 %v5923
        %5957 = vmatpush1.bf16.msra.mxu0 %v5922
        %5958 = vmatprep.subr.bf16.mxu0 %v5921
        %5959 = vmatpush1.bf16.msra.mxu0 %v5920
        %5960 = vmatprep.subr.bf16.mxu0 %v5919
        %5961 = vmatpush1.bf16.msra.mxu0 %v5918
        %5962 = vmatprep.subr.bf16.mxu0 %v5917
        %5963 = vmatpush1.bf16.msra.mxu0 %v5916
        %5964 = vmatprep.subr.bf16.mxu0 0
        %5965 = vmatpush2.bf16.msra.mxu0 0
        %5966 = vmatprep.subr.bf16.mxu0 0
        %5967 = vmatpush2.bf16.msra.mxu0 0
        %5968 = vmatprep.subr.bf16.mxu0 0
        %5969 = vmatpush2.bf16.msra.mxu0 0
        %5970 = vmatprep.subr.bf16.mxu0 0
        %5971 = vmatpush2.bf16.msra.mxu0 0
        %5972 = vmatprep.subr.bf16.mxu0 0
        %5973 = vmatpush2.bf16.msra.mxu0 0
        %5974 = vmatprep.subr.bf16.mxu0 0
        %5975 = vmatpush2.bf16.msra.mxu0 0
        %5976 = vmatprep.subr.bf16.mxu0 0
        %5977 = vmatpush2.bf16.msra.mxu0 0
        %5978 = vmatprep.subr.bf16.mxu0 0
        %5979 = vmatpush2.bf16.msra.mxu0 0
        %5980 = vmatprep.mubr.bf16.mxu0 0
        %5981 = vmatmul.mubr.bf16.gmra.mxu0 %v5847
        %v5982 = vpop.f32.mrf.mxu0
        %v5983 = vadd.f32 0.0, %v5982
        %v5984 = vpop.f32.mrf.mxu0
        %v5985 = vadd.f32 0.0, %v5984
        %v5986 = vpop.f32.mrf.mxu0
        %v5987 = vadd.f32 0.0, %v5986
        %v5988 = vpop.f32.mrf.mxu0
        %v5989 = vadd.f32 0.0, %v5988
        %5990 = vmatprep.mubr.bf16.mxu0 0
        %5991 = vmatmul.mubr.bf16.gmra.mxu0 %v5848
        %v5992 = vpop.f32.mrf.mxu0
        %v5993 = vadd.f32 0.0, %v5992
        %v5994 = vpop.f32.mrf.mxu0
        %v5995 = vadd.f32 0.0, %v5994
        %v5996 = vpop.f32.mrf.mxu0
        %v5997 = vadd.f32 0.0, %v5996
        %v5998 = vpop.f32.mrf.mxu0
        %v5999 = vadd.f32 0.0, %v5998
        %6000 = vmatprep.mubr.bf16.mxu0 0
        %6001 = vmatmul.mubr.bf16.gmra.mxu0 %v5849
        %v6002 = vpop.f32.mrf.mxu0
        %v6003 = vadd.f32 0.0, %v6002
        %v6004 = vpop.f32.mrf.mxu0
        %v6005 = vadd.f32 0.0, %v6004
        %v6006 = vpop.f32.mrf.mxu0
        %v6007 = vadd.f32 0.0, %v6006
        %v6008 = vpop.f32.mrf.mxu0
        %v6009 = vadd.f32 0.0, %v6008
        %6010 = vmatprep.mubr.bf16.mxu0 0
        %6011 = vmatmul.mubr.bf16.gmra.mxu0 %v5850
        %v6012 = vpop.f32.mrf.mxu0
        %v6013 = vadd.f32 0.0, %v6012
        %v6014 = vpop.f32.mrf.mxu0
        %v6015 = vadd.f32 0.0, %v6014
        %v6016 = vpop.f32.mrf.mxu0
        %v6017 = vadd.f32 0.0, %v6016
        %v6018 = vpop.f32.mrf.mxu0
        %v6019 = vadd.f32 0.0, %v6018
        %6020 = vdwg.mxu0
        %v6021 = vadd.f32 %v5799, %v5983
        %v6022 = vadd.f32 %v5800, %v5985
        %v6023 = vadd.f32 %v5801, %v5987
        %v6024 = vadd.f32 %v5802, %v5989
        %v6025 = vadd.f32 %v5803, %v5993
        %v6026 = vadd.f32 %v5804, %v5995
        %v6027 = vadd.f32 %v5805, %v5997
        %v6028 = vadd.f32 %v5806, %v5999
        %v6029 = vadd.f32 %v5807, %v6003
        %v6030 = vadd.f32 %v5808, %v6005
        %v6031 = vadd.f32 %v5809, %v6007
        %v6032 = vadd.f32 %v5810, %v6009
        %v6033 = vadd.f32 %v5811, %v6013
        %v6034 = vadd.f32 %v5812, %v6015
        %v6035 = vadd.f32 %v5813, %v6017
        %v6036 = vadd.f32 %v5814, %v6019
        %v6037 = vld [vmem:[%s4] sm:$0x3]
        %v6039 = vlaneseq
        %v6040 = vshrl.u32 %v6039, 7
        %v6041 = vsub.s32 0, %v6040
        %v6042 = vrot.slane %v6037, %v6041
        %v6043 = vlaneseq
        %v6044 = vshrl.u32 %v6043, 7
        %v6045 = vsub.s32 1, %v6044
        %v6046 = vrot.slane %v6037, %v6045
        %v6049 = vadd.f32 %v6021, %v6042
        %v6050 = vadd.f32 %v6022, %v6046
        %v6051 = vadd.f32 %v6023, %v6042
        %v6052 = vadd.f32 %v6024, %v6046
        %v6053 = vadd.f32 %v6025, %v6042
        %v6054 = vadd.f32 %v6026, %v6046
        %v6055 = vadd.f32 %v6027, %v6042
        %v6056 = vadd.f32 %v6028, %v6046
        %v6057 = vadd.f32 %v6029, %v6042
        %v6058 = vadd.f32 %v6030, %v6046
        %v6059 = vadd.f32 %v6031, %v6042
        %v6060 = vadd.f32 %v6032, %v6046
        %v6061 = vadd.f32 %v6033, %v6042
        %v6062 = vadd.f32 %v6034, %v6046
        %v6063 = vadd.f32 %v6035, %v6042
        %v6064 = vadd.f32 %v6036, %v6046
        %v6065 = vld [vmem:[%s249] sm:$0xff]
        %v6066 = vld [vmem:[%s249 + $0x8] sm:$0xff]
        %v6067 = vld [vmem:[%s249 + $0x10] sm:$0xff]
        %v6068 = vld [vmem:[%s249 + $0x18] sm:$0xff]
        %v6069 = vld [vmem:[%s249 + $0x20] sm:$0xff]
        %v6070 = vld [vmem:[%s249 + $0x28] sm:$0xff]
        %v6071 = vld [vmem:[%s249 + $0x30] sm:$0xff]
        %v6072 = vld [vmem:[%s249 + $0x38] sm:$0xff]
        %v6073 = vld [vmem:[%s249 + $0x40] sm:$0xff]
        %v6074 = vld [vmem:[%s249 + $0x48] sm:$0xff]
        %v6075 = vld [vmem:[%s249 + $0x50] sm:$0xff]
        %v6076 = vld [vmem:[%s249 + $0x58] sm:$0xff]
        %v6077 = vld [vmem:[%s249 + $0x60] sm:$0xff]
        %v6078 = vld [vmem:[%s249 + $0x68] sm:$0xff]
        %v6079 = vld [vmem:[%s249 + $0x70] sm:$0xff]
        %v6080 = vld [vmem:[%s249 + $0x78] sm:$0xff]
        %v6081 = vld [vmem:[%s249 + $0x80] sm:$0xff]
        %v6082 = vld [vmem:[%s249 + $0x88] sm:$0xff]
        %v6083 = vld [vmem:[%s249 + $0x90] sm:$0xff]
        %v6084 = vld [vmem:[%s249 + $0x98] sm:$0xff]
        %v6085 = vld [vmem:[%s249 + $0xa0] sm:$0xff]
        %v6086 = vld [vmem:[%s249 + $0xa8] sm:$0xff]
        %v6087 = vld [vmem:[%s249 + $0xb0] sm:$0xff]
        %v6088 = vld [vmem:[%s249 + $0xb8] sm:$0xff]
        %v6089 = vld [vmem:[%s249 + $0xc0] sm:$0xff]
        %v6090 = vld [vmem:[%s249 + $0xc8] sm:$0xff]
        %v6091 = vld [vmem:[%s249 + $0xd0] sm:$0xff]
        %v6092 = vld [vmem:[%s249 + $0xd8] sm:$0xff]
        %v6093 = vld [vmem:[%s249 + $0xe0] sm:$0xff]
        %v6094 = vld [vmem:[%s249 + $0xe8] sm:$0xff]
        %v6095 = vld [vmem:[%s249 + $0xf0] sm:$0xff]
        %v6096 = vld [vmem:[%s249 + $0xf8] sm:$0xff]
        %v6097 = vadd.f32 %v6065, %v6067
        %v6098 = vadd.f32 %v6066, %v6068
        %v6099 = vadd.f32 %v6069, %v6071
        %v6100 = vadd.f32 %v6070, %v6072
        %v6101 = vadd.f32 %v6073, %v6075
        %v6102 = vadd.f32 %v6074, %v6076
        %v6103 = vadd.f32 %v6077, %v6079
        %v6104 = vadd.f32 %v6078, %v6080
        %v6105 = vadd.f32 %v6081, %v6083
        %v6106 = vadd.f32 %v6082, %v6084
        %v6107 = vadd.f32 %v6085, %v6087
        %v6108 = vadd.f32 %v6086, %v6088
        %v6109 = vadd.f32 %v6089, %v6091
        %v6110 = vadd.f32 %v6090, %v6092
        %v6111 = vadd.f32 %v6093, %v6095
        %v6112 = vadd.f32 %v6094, %v6096
        %6113 = vst [vmem:[#allocation4] sm:$0xff] %v6097
        %6114 = vst [vmem:[#allocation4 + $0x8] sm:$0xff] %v6098
        %6115 = vst [vmem:[#allocation4 + $0x10] sm:$0xff] %v6099
        %6116 = vst [vmem:[#allocation4 + $0x18] sm:$0xff] %v6100
        %6117 = vst [vmem:[#allocation4 + $0x20] sm:$0xff] %v6101
        %6118 = vst [vmem:[#allocation4 + $0x28] sm:$0xff] %v6102
        %6119 = vst [vmem:[#allocation4 + $0x30] sm:$0xff] %v6103
        %6120 = vst [vmem:[#allocation4 + $0x38] sm:$0xff] %v6104
        %6121 = vst [vmem:[#allocation4 + $0x40] sm:$0xff] %v6105
        %6122 = vst [vmem:[#allocation4 + $0x48] sm:$0xff] %v6106
        %6123 = vst [vmem:[#allocation4 + $0x50] sm:$0xff] %v6107
        %6124 = vst [vmem:[#allocation4 + $0x58] sm:$0xff] %v6108
        %6125 = vst [vmem:[#allocation4 + $0x60] sm:$0xff] %v6109
        %6126 = vst [vmem:[#allocation4 + $0x68] sm:$0xff] %v6110
        %6127 = vst [vmem:[#allocation4 + $0x70] sm:$0xff] %v6111
        %6128 = vst [vmem:[#allocation4 + $0x78] sm:$0xff] %v6112
        %v6129 = vld [vmem:[#allocation4] ss:$2 sm:$0xff]
        %v6130 = vld [vmem:[%s4016] ss:$2 sm:$0xff]
        %v6131 = vld [vmem:[%s4018] ss:$2 sm:$0xff]
        %v6132 = vld [vmem:[%s4020] ss:$2 sm:$0xff]
        %v6133 = vld [vmem:[%s4022] ss:$2 sm:$0xff]
        %v6134 = vld [vmem:[%s4024] ss:$2 sm:$0xff]
        %v6135 = vld [vmem:[%s4026] ss:$2 sm:$0xff]
        %v6136 = vld [vmem:[%s4028] ss:$2 sm:$0xff]
        %v6137 = vld [vmem:[%s4030] ss:$2 sm:$0xff]
        %v6138 = vld [vmem:[%s4032] ss:$2 sm:$0xff]
        %v6139 = vld [vmem:[%s4034] ss:$2 sm:$0xff]
        %v6140 = vld [vmem:[%s4036] ss:$2 sm:$0xff]
        %v6141 = vld [vmem:[%s4038] ss:$2 sm:$0xff]
        %v6142 = vld [vmem:[%s4040] ss:$2 sm:$0xff]
        %v6143 = vld [vmem:[%s4042] ss:$2 sm:$0xff]
        %v6144 = vld [vmem:[%s4044] ss:$2 sm:$0xff]
        %v6145 = vadd.f32 %v6129, %v6137
        %v6146 = vadd.f32 %v6130, %v6138
        %v6147 = vadd.f32 %v6131, %v6139
        %v6148 = vadd.f32 %v6132, %v6140
        %v6149 = vadd.f32 %v6133, %v6141
        %v6150 = vadd.f32 %v6134, %v6142
        %v6151 = vadd.f32 %v6135, %v6143
        %v6152 = vadd.f32 %v6136, %v6144
        %v6153 = vmul.f32 %v6145, 0.25
        %v6154 = vmul.f32 %v6146, 0.25
        %v6155 = vmul.f32 %v6147, 0.25
        %v6156 = vmul.f32 %v6148, 0.25
        %v6157 = vmul.f32 %v6149, 0.25
        %v6158 = vmul.f32 %v6150, 0.25
        %v6159 = vmul.f32 %v6151, 0.25
        %v6160 = vmul.f32 %v6152, 0.25
        %v6161 = vpack.c.bf16 %v6154, %v6153
        %v6162 = vpack.c.bf16 %v6156, %v6155
        %v6163 = vpack.c.bf16 %v6158, %v6157
        %v6164 = vpack.c.bf16 %v6160, %v6159
        %v6165 = vld [vmem:[%s5] sm:$0xff]
        %v6166 = vld [vmem:[%s5 + $0x8] sm:$0xff]
        %v6167 = vld [vmem:[%s5 + $0x10] sm:$0xff]
        %v6168 = vld [vmem:[%s5 + $0x18] sm:$0xff]
        %v6169 = vld [vmem:[%s5 + $0x20] sm:$0xff]
        %v6170 = vld [vmem:[%s5 + $0x28] sm:$0xff]
        %v6171 = vld [vmem:[%s5 + $0x30] sm:$0xff]
        %v6172 = vld [vmem:[%s5 + $0x38] sm:$0xff]
        %v6173 = vld [vmem:[%s5 + $0x40] sm:$0xff]
        %v6174 = vld [vmem:[%s5 + $0x48] sm:$0xff]
        %v6175 = vld [vmem:[%s5 + $0x50] sm:$0xff]
        %v6176 = vld [vmem:[%s5 + $0x58] sm:$0xff]
        %v6177 = vld [vmem:[%s5 + $0x60] sm:$0xff]
        %v6178 = vld [vmem:[%s5 + $0x68] sm:$0xff]
        %v6179 = vld [vmem:[%s5 + $0x70] sm:$0xff]
        %v6180 = vld [vmem:[%s5 + $0x78] sm:$0xff]
        %v6197 = vunpack.c.l.b16 %v6165
        %v6198 = vunpack.c.h.b16 %v6165
        %v6199 = vunpack.c.l.b16 %v6166
        %v6200 = vunpack.c.h.b16 %v6166
        %v6201 = vunpack.c.l.b16 %v6167
        %v6202 = vunpack.c.h.b16 %v6167
        %v6203 = vunpack.c.l.b16 %v6168
        %v6204 = vunpack.c.h.b16 %v6168
        %v6205 = vunpack.c.l.b16 %v6169
        %v6206 = vunpack.c.h.b16 %v6169
        %v6207 = vunpack.c.l.b16 %v6170
        %v6208 = vunpack.c.h.b16 %v6170
        %v6209 = vunpack.c.l.b16 %v6171
        %v6210 = vunpack.c.h.b16 %v6171
        %v6211 = vunpack.c.l.b16 %v6172
        %v6212 = vunpack.c.h.b16 %v6172
        %v6213 = vunpack.c.l.b16 %v6173
        %v6214 = vunpack.c.h.b16 %v6173
        %v6215 = vunpack.c.l.b16 %v6174
        %v6216 = vunpack.c.h.b16 %v6174
        %v6217 = vunpack.c.l.b16 %v6175
        %v6218 = vunpack.c.h.b16 %v6175
        %v6219 = vunpack.c.l.b16 %v6176
        %v6220 = vunpack.c.h.b16 %v6176
        %v6221 = vunpack.c.l.b16 %v6177
        %v6222 = vunpack.c.h.b16 %v6177
        %v6223 = vunpack.c.l.b16 %v6178
        %v6224 = vunpack.c.h.b16 %v6178
        %v6225 = vunpack.c.l.b16 %v6179
        %v6226 = vunpack.c.h.b16 %v6179
        %v6227 = vunpack.c.l.b16 %v6180
        %v6228 = vunpack.c.h.b16 %v6180
        %v6229 = vpack.c.b16 %v6199, %v6197
        %v6230 = vpack.c.b16 %v6200, %v6198
        %v6231 = vpack.c.b16 %v6203, %v6201
        %v6232 = vpack.c.b16 %v6204, %v6202
        %v6233 = vpack.c.b16 %v6207, %v6205
        %v6234 = vpack.c.b16 %v6208, %v6206
        %v6235 = vpack.c.b16 %v6211, %v6209
        %v6236 = vpack.c.b16 %v6212, %v6210
        %v6237 = vpack.c.b16 %v6215, %v6213
        %v6238 = vpack.c.b16 %v6216, %v6214
        %v6239 = vpack.c.b16 %v6219, %v6217
        %v6240 = vpack.c.b16 %v6220, %v6218
        %v6241 = vpack.c.b16 %v6223, %v6221
        %v6242 = vpack.c.b16 %v6224, %v6222
        %v6243 = vpack.c.b16 %v6227, %v6225
        %v6244 = vpack.c.b16 %v6228, %v6226
        %6261 = vmatprep.subr.bf16.mxu0 %v6244
        %6262 = vmatpush1.bf16.msra.mxu0 %v6243
        %6263 = vmatprep.subr.bf16.mxu0 %v6242
        %6264 = vmatpush1.bf16.msra.mxu0 %v6241
        %6265 = vmatprep.subr.bf16.mxu0 %v6240
        %6266 = vmatpush1.bf16.msra.mxu0 %v6239
        %6267 = vmatprep.subr.bf16.mxu0 %v6238
        %6268 = vmatpush1.bf16.msra.mxu0 %v6237
        %6269 = vmatprep.subr.bf16.mxu0 %v6236
        %6270 = vmatpush1.bf16.msra.mxu0 %v6235
        %6271 = vmatprep.subr.bf16.mxu0 %v6234
        %6272 = vmatpush1.bf16.msra.mxu0 %v6233
        %6273 = vmatprep.subr.bf16.mxu0 %v6232
        %6274 = vmatpush1.bf16.msra.mxu0 %v6231
        %6275 = vmatprep.subr.bf16.mxu0 %v6230
        %6276 = vmatpush1.bf16.msra.mxu0 %v6229
        %6277 = vmatprep.subr.bf16.mxu0 0
        %6278 = vmatpush2.bf16.msra.mxu0 0
        %6279 = vmatprep.subr.bf16.mxu0 0
        %6280 = vmatpush2.bf16.msra.mxu0 0
        %6281 = vmatprep.subr.bf16.mxu0 0
        %6282 = vmatpush2.bf16.msra.mxu0 0
        %6283 = vmatprep.subr.bf16.mxu0 0
        %6284 = vmatpush2.bf16.msra.mxu0 0
        %6285 = vmatprep.subr.bf16.mxu0 0
        %6286 = vmatpush2.bf16.msra.mxu0 0
        %6287 = vmatprep.subr.bf16.mxu0 0
        %6288 = vmatpush2.bf16.msra.mxu0 0
        %6289 = vmatprep.subr.bf16.mxu0 0
        %6290 = vmatpush2.bf16.msra.mxu0 0
        %6291 = vmatprep.subr.bf16.mxu0 0
        %6292 = vmatpush2.bf16.msra.mxu0 0
        %6293 = vmatprep.mubr.bf16.mxu0 0
        %6294 = vmatmul.mubr.bf16.gmra.mxu0 %v6161
        %v6295 = vpop.f32.mrf.mxu0
        %v6296 = vadd.f32 0.0, %v6295
        %v6297 = vpop.f32.mrf.mxu0
        %v6298 = vadd.f32 0.0, %v6297
        %v6299 = vpop.f32.mrf.mxu0
        %v6300 = vadd.f32 0.0, %v6299
        %v6301 = vpop.f32.mrf.mxu0
        %v6302 = vadd.f32 0.0, %v6301
        %6303 = vmatprep.mubr.bf16.mxu0 0
        %6304 = vmatmul.mubr.bf16.gmra.mxu0 %v6162
        %v6305 = vpop.f32.mrf.mxu0
        %v6306 = vadd.f32 0.0, %v6305
        %v6307 = vpop.f32.mrf.mxu0
        %v6308 = vadd.f32 0.0, %v6307
        %v6309 = vpop.f32.mrf.mxu0
        %v6310 = vadd.f32 0.0, %v6309
        %v6311 = vpop.f32.mrf.mxu0
        %v6312 = vadd.f32 0.0, %v6311
        %6313 = vmatprep.mubr.bf16.mxu0 0
        %6314 = vmatmul.mubr.bf16.gmra.mxu0 %v6163
        %v6315 = vpop.f32.mrf.mxu0
        %v6316 = vadd.f32 0.0, %v6315
        %v6317 = vpop.f32.mrf.mxu0
        %v6318 = vadd.f32 0.0, %v6317
        %v6319 = vpop.f32.mrf.mxu0
        %v6320 = vadd.f32 0.0, %v6319
        %v6321 = vpop.f32.mrf.mxu0
        %v6322 = vadd.f32 0.0, %v6321
        %6323 = vmatprep.mubr.bf16.mxu0 0
        %6324 = vmatmul.mubr.bf16.gmra.mxu0 %v6164
        %v6325 = vpop.f32.mrf.mxu0
        %v6326 = vadd.f32 0.0, %v6325
        %v6327 = vpop.f32.mrf.mxu0
        %v6328 = vadd.f32 0.0, %v6327
        %v6329 = vpop.f32.mrf.mxu0
        %v6330 = vadd.f32 0.0, %v6329
        %v6331 = vpop.f32.mrf.mxu0
        %v6332 = vadd.f32 0.0, %v6331
        %6333 = vdwg.mxu0
        %v6334 = vadd.f32 %v6296, %v6049
        %v6335 = vadd.f32 %v6298, %v6050
        %v6336 = vadd.f32 %v6300, %v6051
        %v6337 = vadd.f32 %v6302, %v6052
        %v6338 = vadd.f32 %v6306, %v6053
        %v6339 = vadd.f32 %v6308, %v6054
        %v6340 = vadd.f32 %v6310, %v6055
        %v6341 = vadd.f32 %v6312, %v6056
        %v6342 = vadd.f32 %v6316, %v6057
        %v6343 = vadd.f32 %v6318, %v6058
        %v6344 = vadd.f32 %v6320, %v6059
        %v6345 = vadd.f32 %v6322, %v6060
        %v6346 = vadd.f32 %v6326, %v6061
        %v6347 = vadd.f32 %v6328, %v6062
        %v6348 = vadd.f32 %v6330, %v6063
        %v6349 = vadd.f32 %v6332, %v6064
        %v6350 = vmul.f32 %v6334, 0.70710677
        %v6351 = vmul.f32 %v6335, 0.70710677
        %v6352 = vmul.f32 %v6336, 0.70710677
        %v6353 = vmul.f32 %v6337, 0.70710677
        %v6354 = vmul.f32 %v6338, 0.70710677
        %v6355 = vmul.f32 %v6339, 0.70710677
        %v6356 = vmul.f32 %v6340, 0.70710677
        %v6357 = vmul.f32 %v6341, 0.70710677
        %v6358 = vmul.f32 %v6342, 0.70710677
        %v6359 = vmul.f32 %v6343, 0.70710677
        %v6360 = vmul.f32 %v6344, 0.70710677
        %v6361 = vmul.f32 %v6345, 0.70710677
        %v6362 = vmul.f32 %v6346, 0.70710677
        %v6363 = vmul.f32 %v6347, 0.70710677
        %v6364 = vmul.f32 %v6348, 0.70710677
        %v6365 = vmul.f32 %v6349, 0.70710677
        %6366 = vst [vmem:[%s244] sm:$0xff] %v6350
        %6367 = vst [vmem:[%s244 + $0x8] sm:$0xff] %v6351
        %6368 = vst [vmem:[%s244 + $0x10] sm:$0xff] %v6352
        %6369 = vst [vmem:[%s244 + $0x18] sm:$0xff] %v6353
        %6370 = vst [vmem:[%s244 + $0x20] sm:$0xff] %v6354
        %6371 = vst [vmem:[%s244 + $0x28] sm:$0xff] %v6355
        %6372 = vst [vmem:[%s244 + $0x30] sm:$0xff] %v6356
        %6373 = vst [vmem:[%s244 + $0x38] sm:$0xff] %v6357
        %6374 = vst [vmem:[%s244 + $0x40] sm:$0xff] %v6358
        %6375 = vst [vmem:[%s244 + $0x48] sm:$0xff] %v6359
        %6376 = vst [vmem:[%s244 + $0x50] sm:$0xff] %v6360
        %6377 = vst [vmem:[%s244 + $0x58] sm:$0xff] %v6361
        %6378 = vst [vmem:[%s244 + $0x60] sm:$0xff] %v6362
        %6379 = vst [vmem:[%s244 + $0x68] sm:$0xff] %v6363
        %6380 = vst [vmem:[%s244 + $0x70] sm:$0xff] %v6364
        %6381 = vst [vmem:[%s244 + $0x78] sm:$0xff] %v6365
        %s6382 = sand.u32 %s159, 1
        %s6383 = scalar_lea.sflag [#allocation6], %s6382
        %s6384 = sand.u32 %s159, 1
        %s6385 = smul.addr %s6384, 128
        %s6386 = scalar_lea.vmem [#allocation5], %s6385
        // Predicated region
        $region45: #{resblk_forward_nhwc.1} parent=43 // pred_check
          %p6387 = pneg %p169
        $region46: #{resblk_forward_nhwc.1} parent=43 // pred_check_branch
          %6389 = sbr.rel (%p6387) target = $region48
        $region47: #{resblk_forward_nhwc.1} parent=43 // pred_region
          %s6391 = ssub.s32 2048, 2048
          %6392 = vsyncadd %s6383, %s6391
          %s6393 = smul.addr %s20, 16
          %s6394 = smul.addr %s6393, 128
          %s6395 = scalar_lea.hbm %s6, %s6394
          %s6396 = sshll.u32 %s6386, 4
          %s6397 = int_to_ptr.vmem [resolvable:$true] %s6396
          %6402 = dma.vmem_to_hbm [thread:$0]  %s6397, 2048, %s6395, %s6383, 256, 256, 16
        $region48: #{resblk_forward_nhwc.1} parent=43 // pred_fallthru
          _
      $region44: #{resblk_forward_nhwc.1} parent=5 // pred_fallthru
        _
      %p6403 = scmp.le.s32.totalorder 2, %s15
      // Predicated region
      $region49: #{resblk_forward_nhwc.1} parent=5 // pred_check
        %p6404 = pneg %p6403
      $region50: #{resblk_forward_nhwc.1} parent=5 // pred_check_branch
        %6406 = sbr.rel (%p6404) target = $region52
      $region51: #{resblk_forward_nhwc.1} parent=5 // pred_region
        %s6407 = ssub.s32 %s15, 2
        // Predicated region
        $region53: #{resblk_forward_nhwc.1} parent=51 // pred_check
          %p6408 = pneg %p175
        $region54: #{resblk_forward_nhwc.1} parent=51 // pred_check_branch
          %6410 = sbr.rel (%p6408) target = $region56
        $region55: #{resblk_forward_nhwc.1} parent=51 // pred_region
          %s6411 = sand.u32 %s160, 1
          %s6412 = scalar_lea.sflag [#allocation6], %s6411
          %s6413 = sand.u32 %s160, 1
          %s6414 = smul.addr %s6413, 128
          %s6415 = scalar_lea.vmem [#allocation5], %s6414
          %6416 = dma.done %s6412, 2048
        $region56: #{resblk_forward_nhwc.1} parent=51 // pred_fallthru
          _
      $region52: #{resblk_forward_nhwc.1} parent=5 // pred_fallthru
        _
    $region6: #{resblk_forward_nhwc.1} parent=1 // loop_footer
      %s19 = sadd.s32 1, %s15
    $region7: #{resblk_forward_nhwc.1} parent=1 // loop_footer_branch
      %14 = sbr.rel target = $region3
    $region8: #{resblk_forward_nhwc.1} parent=1 // loop_exit
      _
    %6417 = vsyncpa [#allocation6], 1
    %s6418 = scalar_lea.sflag [#allocation6], 1
    %6419 = vsyncpa %s6418, 1

</llo_original>
